<compile_context>
chip_gen: v7x
topology: tpu7x:2x2x1
jax: 0.10.0
libtpu: 0.0.40
codegen_flags: <defaults>
</compile_context>

<pallas_src>
import jax
import jax.numpy as jnp
from jax import lax
from jax.experimental import pallas as pl
from jax.experimental.pallas import tpu as pltpu


def _round_up(x, m):
    return (x + m - 1) // m * m


# ---------------- Pallas kernels ----------------

def conv_pool_kernel(p_ref, w_ref, b_ref, o_ref, acc_ref):
    """Grid = (row_blocks ["parallel"], 4 pooling offsets ["arbitrary"]).

    p_ref: (RB, Kpad) bf16 patches for this (row block, offset)
    w_ref: (Kpad, Cpad) bf16   b_ref: (1, Cpad) f32   o_ref: (RB, Cpad) f32
    acc_ref: (RB, Cpad) f32 running max across the 4 offsets.
    """
    off = pl.program_id(1)
    y = jnp.dot(p_ref[...], w_ref[...], preferred_element_type=jnp.float32)

    @pl.when(off == 0)
    def _():
        acc_ref[...] = y

    @pl.when(off > 0)
    def _():
        acc_ref[...] = jnp.maximum(acc_ref[...], y)

    @pl.when(off == pl.num_programs(1) - 1)
    def _():
        # bias + ReLU once after the pooling max (monotone => identical result).
        o_ref[...] = jnp.maximum(acc_ref[...] + b_ref[...], 0.0).astype(o_ref.dtype)


def make_conv_pool_fc_kernel(n_groups, bpad):
    """conv2 (+ReLU+pool) fused with the final Linear.

    Pooled rows are ordered (n = ph*7+pw, b); on the last offset the bpad-row groups are
    concatenated along lanes -> (bpad, n_groups*Cpad) and fed to one FC matmul against a
    pre-permuted weight.
    """
    def kernel(p_ref, w_ref, b_ref, wf_ref, bf_ref, m_ref, out_ref, acc_ref):
        off = pl.program_id(0)
        y = jnp.dot(p_ref[...], w_ref[...], preferred_element_type=jnp.float32)

        @pl.when(off == 0)
        def _():
            acc_ref[...] = y

        @pl.when(off > 0)
        def _():
            acc_ref[...] = jnp.maximum(acc_ref[...], y)

        @pl.when(off == pl.num_programs(0) - 1)
        def _():
            m = jnp.maximum(acc_ref[...] + b_ref[...], 0.0)
            m_ref[...] = m.astype(m_ref.dtype)
            # Lane-concat of the (n, b) row groups: each piece is one (bpad, 128) slab, so
            # this is pure vreg placement (no intra-vreg shuffles); gives a single lane-dense
            # (bpad, n_groups*128) LHS for the FC matmul.
            pieces = [m_ref[n * bpad:(n + 1) * bpad, :].astype(jnp.bfloat16)
                      for n in range(n_groups)]
            xf = jnp.concatenate(pieces, axis=1)
            logits = jnp.dot(xf, wf_ref[...],
                             preferred_element_type=jnp.float32) + bf_ref[...]
            out_ref[...] = logits.astype(out_ref.dtype)

    return kernel


# ---------------- XLA-side im2col glue ----------------

def _im2col_slabs(x_nhwc, ksize, pad):
    """(B,H,W,Cin) -> (B,H,W,ksize*ksize*Cin), K ordered (kh, kw, ci)."""
    B, H, W, Cin = x_nhwc.shape
    xp = jnp.pad(x_nhwc, ((0, 0), (pad, pad), (pad, pad), (0, 0)))
    slabs = [xp[:, kh:kh + H, kw:kw + W, :]
             for kh in range(ksize) for kw in range(ksize)]
    return jnp.concatenate(slabs, axis=-1)


# ---------------- Layer wrappers ----------------

def conv_relu_pool_pallas(x_nhwc, w_oihw, b):
    """Conv2d(k=5,s=1,p=2) + ReLU + MaxPool2d(2), output (B, H/2, W/2, Cout)."""
    B, H, W, Cin = x_nhwc.shape
    Cout, ks = w_oihw.shape[0], w_oihw.shape[2]
    PH, PW = H // 2, W // 2
    N = B * PH * PW
    K = ks * ks * Cin
    Kp = _round_up(K, 128)                      # lane-dense contraction
    Cp = _round_up(Cout, 128)                   # lane-dense output channels
    RB = 512 if N > 512 else _round_up(N, 16)   # row block (parallel axis)
    rows = _round_up(N, RB)

    pk = _im2col_slabs(x_nhwc, ks, ks // 2)     # (B,H,W,K)
    offs = [pk[:, di::2, dj::2, :].reshape(N, K)
            for di in (0, 1) for dj in (0, 1)]
    patches = jnp.stack(offs, axis=0)                                     # (4, N, K)
    patches = jnp.pad(patches, ((0, 0), (0, rows - N), (0, Kp - K))).astype(jnp.bfloat16)

    w_flat = jnp.transpose(w_oihw, (2, 3, 1, 0)).reshape(K, Cout)         # (kh,kw,ci) order
    w_flat = jnp.pad(w_flat, ((0, Kp - K), (0, Cp - Cout))).astype(jnp.bfloat16)
    b_row = jnp.pad(b.reshape(1, Cout), ((0, 0), (0, Cp - Cout))).astype(jnp.float32)

    flops = 2 * 4 * rows * Kp * Cp
    bytes_accessed = patches.size * 2 + w_flat.size * 2 + b_row.size * 4 + rows * Cp * 4

    out = pl.pallas_call(
        conv_pool_kernel,
        out_shape=jax.ShapeDtypeStruct((rows, Cp), jnp.float32),
        grid_spec=pltpu.PrefetchScalarGridSpec(
            num_scalar_prefetch=0,
            grid=(rows // RB, 4),
            in_specs=[
                pl.BlockSpec((None, RB, Kp), lambda r, o: (o, r, 0)),
                pl.BlockSpec((Kp, Cp), lambda r, o: (0, 0)),
                pl.BlockSpec((1, Cp), lambda r, o: (0, 0)),
            ],
            out_specs=pl.BlockSpec((RB, Cp), lambda r, o: (r, 0)),
            scratch_shapes=[pltpu.VMEM((RB, Cp), jnp.float32)],
        ),
        compiler_params=pltpu.CompilerParams(
            dimension_semantics=("parallel", "arbitrary"),
            vmem_limit_bytes=32 * 1024 * 1024),
        cost_estimate=pl.CostEstimate(flops=flops, transcendentals=0,
                                      bytes_accessed=bytes_accessed),
    )(patches, w_flat, b_row)
    return out[:N, :Cout].reshape(B, PH, PW, Cout)


def conv_relu_pool_fc_pallas(x_nhwc, w_oihw, b, w_fc, b_fc):
    """Conv2 + ReLU + MaxPool2d(2) + Linear fused in one pallas_call.

    Returns (logits (B, O), flat (B, Cout*PH*PW) in torch NCHW-flatten order).
    """
    B, H, W, Cin = x_nhwc.shape
    Cout, ks = w_oihw.shape[0], w_oihw.shape[2]
    PH, PW = H // 2, W // 2
    NG = PH * PW                                  # spatial groups (49)
    Bp = _round_up(B, 8)
    rows = _round_up(NG * Bp, 16)
    K = ks * ks * Cin                             # 400
    Kp = _round_up(K, 128)                        # 512
    Cp = _round_up(Cout, 128)                     # 128
    O = w_fc.shape[0]
    Op = _round_up(O, 128)

    # Patches with rows ordered (n, b) so the fused FC can slice sublane-aligned b-groups.
    pk = _im2col_slabs(x_nhwc, ks, ks // 2)       # (B,H,W,K)
    offs = []
    for di in (0, 1):
        for dj in (0, 1):
            p = pk[:, di::2, dj::2, :]                                    # (B,PH,PW,K)
            p = jnp.transpose(p, (1, 2, 0, 3)).reshape(NG, B, K)          # (n, b, K)
            p = jnp.pad(p, ((0, 0), (0, Bp - B), (0, Kp - K))).reshape(NG * Bp, Kp)
            offs.append(jnp.pad(p, ((0, rows - NG * Bp), (0, 0))))
    patches = jnp.stack(offs, axis=0).astype(jnp.bfloat16)                # (4, rows, Kp)

    w_flat = jnp.transpose(w_oihw, (2, 3, 1, 0)).reshape(K, Cout)
    w_flat = jnp.pad(w_flat, ((0, Kp - K), (0, Cp - Cout))).astype(jnp.bfloat16)
    b_row = jnp.pad(b.reshape(1, Cout), ((0, 0), (0, Cp - Cout))).astype(jnp.float32)

    # FC weight pre-permuted to (n, c, o) and padded -> (NG*Cp, Op): matches the in-kernel
    # lane-concat column order n*Cp + c, so no activation transpose is ever needed.
    wf = jnp.transpose(w_fc.reshape(O, Cout, NG), (2, 1, 0))              # (n, c, o)
    wf = jnp.pad(wf, ((0, 0), (0, Cp - Cout), (0, Op - O)))
    wf = wf.reshape(NG * Cp, Op).astype(jnp.bfloat16)
    bf_row = jnp.pad(b_fc.reshape(1, O), ((0, 0), (0, Op - O))).astype(jnp.float32)

    flops = 2 * 4 * rows * Kp * Cp + 2 * Bp * (NG * Cp) * Op
    bytes_accessed = (patches.size + w_flat.size + wf.size) * 2 \
        + (b_row.size + bf_row.size) * 4 + rows * Cp * 4 + Bp * Op * 4

    kernel = make_conv_pool_fc_kernel(NG, Bp)
    m, logits = pl.pallas_call(
        kernel,
        out_shape=(jax.ShapeDtypeStruct((rows, Cp), jnp.float32),
                   jax.ShapeDtypeStruct((Bp, Op), jnp.float32)),
        grid_spec=pltpu.PrefetchScalarGridSpec(
            num_scalar_prefetch=0,
            grid=(4,),
            in_specs=[
                pl.BlockSpec((None, rows, Kp), lambda o: (o, 0, 0)),
                pl.BlockSpec((Kp, Cp), lambda o: (0, 0)),
                pl.BlockSpec((1, Cp), lambda o: (0, 0)),
                pl.BlockSpec((NG * Cp, Op), lambda o: (0, 0)),
                pl.BlockSpec((1, Op), lambda o: (0, 0)),
            ],
            out_specs=[pl.BlockSpec((rows, Cp), lambda o: (0, 0)),
                       pl.BlockSpec((Bp, Op), lambda o: (0, 0))],
            scratch_shapes=[pltpu.VMEM((rows, Cp), jnp.float32)],
        ),
        compiler_params=pltpu.CompilerParams(
            dimension_semantics=("arbitrary",),
            vmem_limit_bytes=32 * 1024 * 1024),
        cost_estimate=pl.CostEstimate(flops=flops, transcendentals=0,
                                      bytes_accessed=bytes_accessed),
    )(patches, w_flat, b_row, wf, bf_row)

    # Reconstruct torch-order flat activations (module output) from the (n, b, c) layout.
    m3 = m[:NG * Bp].reshape(NG, Bp, Cp)[:, :B, :Cout]     # (NG, B, Cout)
    flat = jnp.transpose(m3, (1, 2, 0)).reshape(B, Cout * NG)
    return logits[:B, :O], flat


def cnn_forward(x_nchw, params):
    x = jnp.transpose(x_nchw, (0, 2, 3, 1))                               # NCHW -> NHWC
    h1 = conv_relu_pool_pallas(x, params["conv1_w"], params["conv1_b"])   # (B,14,14,16)
    logits, flat = conv_relu_pool_fc_pallas(
        h1, params["conv2_w"], params["conv2_b"], params["out_w"], params["out_b"])
    return logits, flat


# ---------------- Pure-JAX f32 reference (for validation) ----------------

def ref_forward(x_nchw, params):
    def conv_block(x, w, b):
        y = lax.conv_general_dilated(
            x, w, window_strides=(1, 1), padding=((2, 2), (2, 2)),
            dimension_numbers=("NCHW", "OIHW", "NCHW"))
        y = jnp.maximum(y + b.reshape(1, -1, 1, 1), 0.0)
        return lax.reduce_window(y, -jnp.inf, lax.max,
                                 window_dimensions=(1, 1, 2, 2),
                                 window_strides=(1, 1, 2, 2), padding="VALID")

    h = conv_block(x_nchw, params["conv1_w"], params["conv1_b"])
    h = conv_block(h, params["conv2_w"], params["conv2_b"])
    flat = h.reshape(h.shape[0], -1)
    out = flat @ params["out_w"].T + params["out_b"]
    return out, flat


# ---------------- Main ----------------

if __name__ == "__main__":
    key = jax.random.PRNGKey(0)
    k_x, k1w, k1b, k2w, k2b, kow, kob = jax.random.split(key, 7)

    # Linear(32*7*7, 10) forces 28x28 spatial input (MNIST-like).
    x = jax.random.normal(k_x, (2, 1, 28, 28), dtype=jnp.float32)

    params = {
        "conv1_w": 0.1 * jax.random.normal(k1w, (16, 1, 5, 5), dtype=jnp.float32),
        "conv1_b": 0.1 * jax.random.normal(k1b, (16,), dtype=jnp.float32),
        "conv2_w": 0.1 * jax.random.normal(k2w, (32, 16, 5, 5), dtype=jnp.float32),
        "conv2_b": 0.1 * jax.random.normal(k2b, (32,), dtype=jnp.float32),
        "out_w": 0.05 * jax.random.normal(kow, (10, 32 * 7 * 7), dtype=jnp.float32),
        "out_b": 0.05 * jax.random.normal(kob, (10,), dtype=jnp.float32),
    }

    out, flat = jax.jit(cnn_forward)(x, params)
    jax.block_until_ready((out, flat))

    ref_out, ref_flat = ref_forward(x, params)
    assert out.shape == (2, 10) and flat.shape == (2, 32 * 7 * 7)
    # bf16 matmul inputs (f32 accumulate) -> loosened tolerance vs f32 reference.
    assert jnp.allclose(out, ref_out, rtol=3e-2, atol=3e-2)
    assert jnp.allclose(flat, ref_flat, rtol=3e-2, atol=3e-2)

    print("KERNEL_OK")
</pallas_src>

<mosaic_0001>
module attributes {stable_mosaic.version = 11 : i64} {
  func.func @conv_pool_kernel(%arg0: i32, %arg1: i32, %arg2: memref<1x400x128xbf16, #tpu.memory_space<vmem>>, %arg3: memref<128x128xbf16, #tpu.memory_space<vmem>>, %arg4: memref<1x128xf32, #tpu.memory_space<vmem>>, %arg5: memref<400x128xf32, #tpu.memory_space<vmem>>, %arg6: memref<400x128xf32, #tpu.memory_space<vmem>>) attributes {dimension_semantics = [#tpu.dimension_semantics<parallel>, #tpu.dimension_semantics<arbitrary>], iteration_bounds = array<i64: 1, 4>, scalar_prefetch = 0 : i64, scratch_operands = 1 : i64, tpu.core_type = #tpu.core_type<tc>, window_params = [{transform_indices = @transform_0, window_bounds = array<i64: 1, 400, 128>}, {pipeline_mode = #tpu.pipeline_mode<synchronous>, transform_indices = @transform_1, window_bounds = array<i64: 128, 128>}, {pipeline_mode = #tpu.pipeline_mode<synchronous>, transform_indices = @transform_2, window_bounds = array<i64: 1, 128>}, {transform_indices = @transform_3, window_bounds = array<i64: 400, 128>}]} {
    %c0 = arith.constant 0 : index
    %c0_0 = arith.constant 0 : index
    %c0_1 = arith.constant 0 : index
    %0 = vector.load %arg2[%c0, %c0_0, %c0_1] : memref<1x400x128xbf16, #tpu.memory_space<vmem>>, vector<1x400x128xbf16>
    %1 = vector.shape_cast %0 : vector<1x400x128xbf16> to vector<400x128xbf16>
    %c0_2 = arith.constant 0 : index
    %c0_3 = arith.constant 0 : index
    %2 = vector.load %arg3[%c0_2, %c0_3] : memref<128x128xbf16, #tpu.memory_space<vmem>>, vector<128x128xbf16>
    %cst = arith.constant dense<0.000000e+00> : vector<400x128xf32>
    %3 = tpu.matmul %1, %2, %cst {dimension_numbers = #tpu.dot_dimension_numbers<[1], [0], [0], [1], [0, 0, 1, 1], [], []>} : vector<400x128xbf16>, vector<128x128xbf16>, vector<400x128xf32> -> vector<400x128xf32>
    %c0_i32 = arith.constant 0 : i32
    %4 = arith.cmpi eq, %arg1, %c0_i32 : i32
    %5 = arith.extui %4 : i1 to i32
    %c0_i32_4 = arith.constant 0 : i32
    %6 = arith.cmpi ne, %5, %c0_i32_4 : i32
    scf.if %6 {
      %c0_8 = arith.constant 0 : index
      %c0_9 = arith.constant 0 : index
      %13 = vector.load %arg6[%c0_8, %c0_9] : memref<400x128xf32, #tpu.memory_space<vmem>>, vector<400x128xf32>
      tpu.vector_store %arg6[%c0_8, %c0_9], %3 {strides = array<i32>} : memref<400x128xf32, #tpu.memory_space<vmem>>, vector<400x128xf32>,
    } else {
    }
    %c0_i32_5 = arith.constant 0 : i32
    %7 = arith.cmpi sgt, %arg1, %c0_i32_5 : i32
    %8 = arith.extui %7 : i1 to i32
    %c0_i32_6 = arith.constant 0 : i32
    %9 = arith.cmpi ne, %8, %c0_i32_6 : i32
    scf.if %9 {
      %c0_8 = arith.constant 0 : index
      %c0_9 = arith.constant 0 : index
      %13 = vector.load %arg6[%c0_8, %c0_9] : memref<400x128xf32, #tpu.memory_space<vmem>>, vector<400x128xf32>
      %14 = arith.maximumf %13, %3 : vector<400x128xf32>
      %c0_10 = arith.constant 0 : index
      %c0_11 = arith.constant 0 : index
      %15 = vector.load %arg6[%c0_10, %c0_11] : memref<400x128xf32, #tpu.memory_space<vmem>>, vector<400x128xf32>
      tpu.vector_store %arg6[%c0_10, %c0_11], %14 {strides = array<i32>} : memref<400x128xf32, #tpu.memory_space<vmem>>, vector<400x128xf32>,
    } else {
    }
    %c3_i32 = arith.constant 3 : i32
    %10 = arith.cmpi eq, %arg1, %c3_i32 : i32
    %11 = arith.extui %10 : i1 to i32
    %c0_i32_7 = arith.constant 0 : i32
    %12 = arith.cmpi ne, %11, %c0_i32_7 : i32
    scf.if %12 {
      %c0_8 = arith.constant 0 : index
      %c0_9 = arith.constant 0 : index
      %13 = vector.load %arg6[%c0_8, %c0_9] : memref<400x128xf32, #tpu.memory_space<vmem>>, vector<400x128xf32>
      %c0_10 = arith.constant 0 : index
      %c0_11 = arith.constant 0 : index
      %14 = vector.load %arg4[%c0_10, %c0_11] : memref<1x128xf32, #tpu.memory_space<vmem>>, vector<1x128xf32>
      %15 = vector.broadcast %14 : vector<1x128xf32> to vector<400x128xf32>
      %16 = arith.addf %13, %15 : vector<400x128xf32>
      %cst_12 = arith.constant 0.000000e+00 : f32
      %17 = vector.broadcast %cst_12 : f32 to vector<400x128xf32>
      %18 = arith.maximumf %16, %17 : vector<400x128xf32>
      %c0_13 = arith.constant 0 : index
      %c0_14 = arith.constant 0 : index
      %19 = vector.load %arg5[%c0_13, %c0_14] : memref<400x128xf32, #tpu.memory_space<vmem>>, vector<400x128xf32>
      tpu.vector_store %arg5[%c0_13, %c0_14], %18 {strides = array<i32>} : memref<400x128xf32, #tpu.memory_space<vmem>>, vector<400x128xf32>,
    } else {
    }
    return
  }
  func.func @transform_0(%arg0: i32, %arg1: i32) -> (i32, i32, i32) {
    %c0_i32 = arith.constant 0 : i32
    %c0_i32_0 = arith.constant 0 : i32
    return %arg1, %arg0, %c0_i32 : i32, i32, i32
  }
  func.func @transform_1(%arg0: i32, %arg1: i32) -> (i32, i32) {
    %c0_i32 = arith.constant 0 : i32
    %c0_i32_0 = arith.constant 0 : i32
    %c0_i32_1 = arith.constant 0 : i32
    return %c0_i32, %c0_i32_0 : i32, i32
  }
  func.func @transform_2(%arg0: i32, %arg1: i32) -> (i32, i32) {
    %c0_i32 = arith.constant 0 : i32
    %c0_i32_0 = arith.constant 0 : i32
    %c0_i32_1 = arith.constant 0 : i32
    return %c0_i32, %c0_i32_0 : i32, i32
  }
  func.func @transform_3(%arg0: i32, %arg1: i32) -> (i32, i32) {
    %c0_i32 = arith.constant 0 : i32
    %c0_i32_0 = arith.constant 0 : i32
    return %arg0, %c0_i32 : i32, i32
  }
}

module attributes {stable_mosaic.version = 11 : i64} {
  func.func @kernel(%arg0: i32, %arg1: memref<1x400x512xbf16, #tpu.memory_space<vmem>>, %arg2: memref<512x128xbf16, #tpu.memory_space<vmem>>, %arg3: memref<1x128xf32, #tpu.memory_space<vmem>>, %arg4: memref<6272x128xbf16, #tpu.memory_space<vmem>>, %arg5: memref<1x128xf32, #tpu.memory_space<vmem>>, %arg6: memref<400x128xf32, #tpu.memory_space<vmem>>, %arg7: memref<8x128xf32, #tpu.memory_space<vmem>>, %arg8: memref<400x128xf32, #tpu.memory_space<vmem>>) attributes {dimension_semantics = [#tpu.dimension_semantics<arbitrary>], iteration_bounds = array<i64: 4>, scalar_prefetch = 0 : i64, scratch_operands = 1 : i64, tpu.core_type = #tpu.core_type<tc>, window_params = [{transform_indices = @transform_0, window_bounds = array<i64: 1, 400, 512>}, {pipeline_mode = #tpu.pipeline_mode<synchronous>, transform_indices = @transform_1, window_bounds = array<i64: 512, 128>}, {pipeline_mode = #tpu.pipeline_mode<synchronous>, transform_indices = @transform_2, window_bounds = array<i64: 1, 128>}, {pipeline_mode = #tpu.pipeline_mode<synchronous>, transform_indices = @transform_3, window_bounds = array<i64: 6272, 128>}, {pipeline_mode = #tpu.pipeline_mode<synchronous>, transform_indices = @transform_4, window_bounds = array<i64: 1, 128>}, {pipeline_mode = #tpu.pipeline_mode<synchronous>, transform_indices = @transform_5, window_bounds = array<i64: 400, 128>}, {pipeline_mode = #tpu.pipeline_mode<synchronous>, transform_indices = @transform_6, window_bounds = array<i64: 8, 128>}]} {
    %c0 = arith.constant 0 : index
    %c0_0 = arith.constant 0 : index
    %c0_1 = arith.constant 0 : index
    %0 = vector.load %arg1[%c0, %c0_0, %c0_1] : memref<1x400x512xbf16, #tpu.memory_space<vmem>>, vector<1x400x512xbf16>
    %1 = vector.shape_cast %0 : vector<1x400x512xbf16> to vector<400x512xbf16>
    %c0_2 = arith.constant 0 : index
    %c0_3 = arith.constant 0 : index
    %2 = vector.load %arg2[%c0_2, %c0_3] : memref<512x128xbf16, #tpu.memory_space<vmem>>, vector<512x128xbf16>
    %cst = arith.constant dense<0.000000e+00> : vector<400x128xf32>
    %3 = tpu.matmul %1, %2, %cst {dimension_numbers = #tpu.dot_dimension_numbers<[1], [0], [0], [1], [0, 0, 1, 1], [], []>} : vector<400x512xbf16>, vector<512x128xbf16>, vector<400x128xf32> -> vector<400x128xf32>
    %c0_i32 = arith.constant 0 : i32
    %4 = arith.cmpi eq, %arg0, %c0_i32 : i32
    %5 = arith.extui %4 : i1 to i32
    %c0_i32_4 = arith.constant 0 : i32
    %6 = arith.cmpi ne, %5, %c0_i32_4 : i32
    scf.if %6 {
      %c0_8 = arith.constant 0 : index
      %c0_9 = arith.constant 0 : index
      %13 = vector.load %arg8[%c0_8, %c0_9] : memref<400x128xf32, #tpu.memory_space<vmem>>, vector<400x128xf32>
      tpu.vector_store %arg8[%c0_8, %c0_9], %3 {strides = array<i32>} : memref<400x128xf32, #tpu.memory_space<vmem>>, vector<400x128xf32>,
    } else {
    }
    %c0_i32_5 = arith.constant 0 : i32
    %7 = arith.cmpi sgt, %arg0, %c0_i32_5 : i32
    %8 = arith.extui %7 : i1 to i32
    %c0_i32_6 = arith.constant 0 : i32
    %9 = arith.cmpi ne, %8, %c0_i32_6 : i32
    scf.if %9 {
      %c0_8 = arith.constant 0 : index
      %c0_9 = arith.constant 0 : index
      %13 = vector.load %arg8[%c0_8, %c0_9] : memref<400x128xf32, #tpu.memory_space<vmem>>, vector<400x128xf32>
      %14 = arith.maximumf %13, %3 : vector<400x128xf32>
      %c0_10 = arith.constant 0 : index
      %c0_11 = arith.constant 0 : index
      %15 = vector.load %arg8[%c0_10, %c0_11] : memref<400x128xf32, #tpu.memory_space<vmem>>, vector<400x128xf32>
      tpu.vector_store %arg8[%c0_10, %c0_11], %14 {strides = array<i32>} : memref<400x128xf32, #tpu.memory_space<vmem>>, vector<400x128xf32>,
    } else {
    }
    %c3_i32 = arith.constant 3 : i32
    %10 = arith.cmpi eq, %arg0, %c3_i32 : i32
    %11 = arith.extui %10 : i1 to i32
    %c0_i32_7 = arith.constant 0 : i32
    %12 = arith.cmpi ne, %11, %c0_i32_7 : i32
    scf.if %12 {
      %c0_8 = arith.constant 0 : index
      %c0_9 = arith.constant 0 : index
      %13 = vector.load %arg8[%c0_8, %c0_9] : memref<400x128xf32, #tpu.memory_space<vmem>>, vector<400x128xf32>
      %c0_10 = arith.constant 0 : index
      %c0_11 = arith.constant 0 : index
      %14 = vector.load %arg3[%c0_10, %c0_11] : memref<1x128xf32, #tpu.memory_space<vmem>>, vector<1x128xf32>
      %15 = vector.broadcast %14 : vector<1x128xf32> to vector<400x128xf32>
      %16 = arith.addf %13, %15 : vector<400x128xf32>
      %cst_12 = arith.constant 0.000000e+00 : f32
      %17 = vector.broadcast %cst_12 : f32 to vector<400x128xf32>
      %18 = arith.maximumf %16, %17 : vector<400x128xf32>
      %c0_13 = arith.constant 0 : index
      %c0_14 = arith.constant 0 : index
      %19 = vector.load %arg6[%c0_13, %c0_14] : memref<400x128xf32, #tpu.memory_space<vmem>>, vector<400x128xf32>
      tpu.vector_store %arg6[%c0_13, %c0_14], %18 {strides = array<i32>} : memref<400x128xf32, #tpu.memory_space<vmem>>, vector<400x128xf32>,
      %c0_15 = arith.constant 0 : index
      %c0_16 = arith.constant 0 : index
      %20 = vector.load %arg6[%c0_15, %c0_16] : memref<400x128xf32, #tpu.memory_space<vmem>>, vector<8x128xf32>
      %21 = arith.truncf %20 : vector<8x128xf32> to vector<8x128xbf16>
      %c8 = arith.constant 8 : index
      %c0_17 = arith.constant 0 : index
      %22 = vector.load %arg6[%c8, %c0_17] : memref<400x128xf32, #tpu.memory_space<vmem>>, vector<8x128xf32>
      %23 = arith.truncf %22 : vector<8x128xf32> to vector<8x128xbf16>
      %c16 = arith.constant 16 : index
      %c0_18 = arith.constant 0 : index
      %24 = vector.load %arg6[%c16, %c0_18] : memref<400x128xf32, #tpu.memory_space<vmem>>, vector<8x128xf32>
      %25 = arith.truncf %24 : vector<8x128xf32> to vector<8x128xbf16>
      %c24 = arith.constant 24 : index
      %c0_19 = arith.constant 0 : index
      %26 = vector.load %arg6[%c24, %c0_19] : memref<400x128xf32, #tpu.memory_space<vmem>>, vector<8x128xf32>
      %27 = arith.truncf %26 : vector<8x128xf32> to vector<8x128xbf16>
      %c32 = arith.constant 32 : index
      %c0_20 = arith.constant 0 : index
      %28 = vector.load %arg6[%c32, %c0_20] : memref<400x128xf32, #tpu.memory_space<vmem>>, vector<8x128xf32>
      %29 = arith.truncf %28 : vector<8x128xf32> to vector<8x128xbf16>
      %c40 = arith.constant 40 : index
      %c0_21 = arith.constant 0 : index
      %30 = vector.load %arg6[%c40, %c0_21] : memref<400x128xf32, #tpu.memory_space<vmem>>, vector<8x128xf32>
      %31 = arith.truncf %30 : vector<8x128xf32> to vector<8x128xbf16>
      %c48 = arith.constant 48 : index
      %c0_22 = arith.constant 0 : index
      %32 = vector.load %arg6[%c48, %c0_22] : memref<400x128xf32, #tpu.memory_space<vmem>>, vector<8x128xf32>
      %33 = arith.truncf %32 : vector<8x128xf32> to vector<8x128xbf16>
      %c56 = arith.constant 56 : index
      %c0_23 = arith.constant 0 : index
      %34 = vector.load %arg6[%c56, %c0_23] : memref<400x128xf32, #tpu.memory_space<vmem>>, vector<8x128xf32>
      %35 = arith.truncf %34 : vector<8x128xf32> to vector<8x128xbf16>
      %c64 = arith.constant 64 : index
      %c0_24 = arith.constant 0 : index
      %36 = vector.load %arg6[%c64, %c0_24] : memref<400x128xf32, #tpu.memory_space<vmem>>, vector<8x128xf32>
      %37 = arith.truncf %36 : vector<8x128xf32> to vector<8x128xbf16>
      %c72 = arith.constant 72 : index
      %c0_25 = arith.constant 0 : index
      %38 = vector.load %arg6[%c72, %c0_25] : memref<400x128xf32, #tpu.memory_space<vmem>>, vector<8x128xf32>
      %39 = arith.truncf %38 : vector<8x128xf32> to vector<8x128xbf16>
      %c80 = arith.constant 80 : index
      %c0_26 = arith.constant 0 : index
      %40 = vector.load %arg6[%c80, %c0_26] : memref<400x128xf32, #tpu.memory_space<vmem>>, vector<8x128xf32>
      %41 = arith.truncf %40 : vector<8x128xf32> to vector<8x128xbf16>
      %c88 = arith.constant 88 : index
      %c0_27 = arith.constant 0 : index
      %42 = vector.load %arg6[%c88, %c0_27] : memref<400x128xf32, #tpu.memory_space<vmem>>, vector<8x128xf32>
      %43 = arith.truncf %42 : vector<8x128xf32> to vector<8x128xbf16>
      %c96 = arith.constant 96 : index
      %c0_28 = arith.constant 0 : index
      %44 = vector.load %arg6[%c96, %c0_28] : memref<400x128xf32, #tpu.memory_space<vmem>>, vector<8x128xf32>
      %45 = arith.truncf %44 : vector<8x128xf32> to vector<8x128xbf16>
      %c104 = arith.constant 104 : index
      %c0_29 = arith.constant 0 : index
      %46 = vector.load %arg6[%c104, %c0_29] : memref<400x128xf32, #tpu.memory_space<vmem>>, vector<8x128xf32>
      %47 = arith.truncf %46 : vector<8x128xf32> to vector<8x128xbf16>
      %c112 = arith.constant 112 : index
      %c0_30 = arith.constant 0 : index
      %48 = vector.load %arg6[%c112, %c0_30] : memref<400x128xf32, #tpu.memory_space<vmem>>, vector<8x128xf32>
      %49 = arith.truncf %48 : vector<8x128xf32> to vector<8x128xbf16>
      %c120 = arith.constant 120 : index
      %c0_31 = arith.constant 0 : index
      %50 = vector.load %arg6[%c120, %c0_31] : memref<400x128xf32, #tpu.memory_space<vmem>>, vector<8x128xf32>
      %51 = arith.truncf %50 : vector<8x128xf32> to vector<8x128xbf16>
      %c128 = arith.constant 128 : index
      %c0_32 = arith.constant 0 : index
      %52 = vector.load %arg6[%c128, %c0_32] : memref<400x128xf32, #tpu.memory_space<vmem>>, vector<8x128xf32>
      %53 = arith.truncf %52 : vector<8x128xf32> to vector<8x128xbf16>
      %c136 = arith.constant 136 : index
      %c0_33 = arith.constant 0 : index
      %54 = vector.load %arg6[%c136, %c0_33] : memref<400x128xf32, #tpu.memory_space<vmem>>, vector<8x128xf32>
      %55 = arith.truncf %54 : vector<8x128xf32> to vector<8x128xbf16>
      %c144 = arith.constant 144 : index
      %c0_34 = arith.constant 0 : index
      %56 = vector.load %arg6[%c144, %c0_34] : memref<400x128xf32, #tpu.memory_space<vmem>>, vector<8x128xf32>
      %57 = arith.truncf %56 : vector<8x128xf32> to vector<8x128xbf16>
      %c152 = arith.constant 152 : index
      %c0_35 = arith.constant 0 : index
      %58 = vector.load %arg6[%c152, %c0_35] : memref<400x128xf32, #tpu.memory_space<vmem>>, vector<8x128xf32>
      %59 = arith.truncf %58 : vector<8x128xf32> to vector<8x128xbf16>
      %c160 = arith.constant 160 : index
      %c0_36 = arith.constant 0 : index
      %60 = vector.load %arg6[%c160, %c0_36] : memref<400x128xf32, #tpu.memory_space<vmem>>, vector<8x128xf32>
      %61 = arith.truncf %60 : vector<8x128xf32> to vector<8x128xbf16>
      %c168 = arith.constant 168 : index
      %c0_37 = arith.constant 0 : index
      %62 = vector.load %arg6[%c168, %c0_37] : memref<400x128xf32, #tpu.memory_space<vmem>>, vector<8x128xf32>
      %63 = arith.truncf %62 : vector<8x128xf32> to vector<8x128xbf16>
      %c176 = arith.constant 176 : index
      %c0_38 = arith.constant 0 : index
      %64 = vector.load %arg6[%c176, %c0_38] : memref<400x128xf32, #tpu.memory_space<vmem>>, vector<8x128xf32>
      %65 = arith.truncf %64 : vector<8x128xf32> to vector<8x128xbf16>
      %c184 = arith.constant 184 : index
      %c0_39 = arith.constant 0 : index
      %66 = vector.load %arg6[%c184, %c0_39] : memref<400x128xf32, #tpu.memory_space<vmem>>, vector<8x128xf32>
      %67 = arith.truncf %66 : vector<8x128xf32> to vector<8x128xbf16>
      %c192 = arith.constant 192 : index
      %c0_40 = arith.constant 0 : index
      %68 = vector.load %arg6[%c192, %c0_40] : memref<400x128xf32, #tpu.memory_space<vmem>>, vector<8x128xf32>
      %69 = arith.truncf %68 : vector<8x128xf32> to vector<8x128xbf16>
      %c200 = arith.constant 200 : index
      %c0_41 = arith.constant 0 : index
      %70 = vector.load %arg6[%c200, %c0_41] : memref<400x128xf32, #tpu.memory_space<vmem>>, vector<8x128xf32>
      %71 = arith.truncf %70 : vector<8x128xf32> to vector<8x128xbf16>
      %c208 = arith.constant 208 : index
      %c0_42 = arith.constant 0 : index
      %72 = vector.load %arg6[%c208, %c0_42] : memref<400x128xf32, #tpu.memory_space<vmem>>, vector<8x128xf32>
      %73 = arith.truncf %72 : vector<8x128xf32> to vector<8x128xbf16>
      %c216 = arith.constant 216 : index
      %c0_43 = arith.constant 0 : index
      %74 = vector.load %arg6[%c216, %c0_43] : memref<400x128xf32, #tpu.memory_space<vmem>>, vector<8x128xf32>
      %75 = arith.truncf %74 : vector<8x128xf32> to vector<8x128xbf16>
      %c224 = arith.constant 224 : index
      %c0_44 = arith.constant 0 : index
      %76 = vector.load %arg6[%c224, %c0_44] : memref<400x128xf32, #tpu.memory_space<vmem>>, vector<8x128xf32>
      %77 = arith.truncf %76 : vector<8x128xf32> to vector<8x128xbf16>
      %c232 = arith.constant 232 : index
      %c0_45 = arith.constant 0 : index
      %78 = vector.load %arg6[%c232, %c0_45] : memref<400x128xf32, #tpu.memory_space<vmem>>, vector<8x128xf32>
      %79 = arith.truncf %78 : vector<8x128xf32> to vector<8x128xbf16>
      %c240 = arith.constant 240 : index
      %c0_46 = arith.constant 0 : index
      %80 = vector.load %arg6[%c240, %c0_46] : memref<400x128xf32, #tpu.memory_space<vmem>>, vector<8x128xf32>
      %81 = arith.truncf %80 : vector<8x128xf32> to vector<8x128xbf16>
      %c248 = arith.constant 248 : index
      %c0_47 = arith.constant 0 : index
      %82 = vector.load %arg6[%c248, %c0_47] : memref<400x128xf32, #tpu.memory_space<vmem>>, vector<8x128xf32>
      %83 = arith.truncf %82 : vector<8x128xf32> to vector<8x128xbf16>
      %c256 = arith.constant 256 : index
      %c0_48 = arith.constant 0 : index
      %84 = vector.load %arg6[%c256, %c0_48] : memref<400x128xf32, #tpu.memory_space<vmem>>, vector<8x128xf32>
      %85 = arith.truncf %84 : vector<8x128xf32> to vector<8x128xbf16>
      %c264 = arith.constant 264 : index
      %c0_49 = arith.constant 0 : index
      %86 = vector.load %arg6[%c264, %c0_49] : memref<400x128xf32, #tpu.memory_space<vmem>>, vector<8x128xf32>
      %87 = arith.truncf %86 : vector<8x128xf32> to vector<8x128xbf16>
      %c272 = arith.constant 272 : index
      %c0_50 = arith.constant 0 : index
      %88 = vector.load %arg6[%c272, %c0_50] : memref<400x128xf32, #tpu.memory_space<vmem>>, vector<8x128xf32>
      %89 = arith.truncf %88 : vector<8x128xf32> to vector<8x128xbf16>
      %c280 = arith.constant 280 : index
      %c0_51 = arith.constant 0 : index
      %90 = vector.load %arg6[%c280, %c0_51] : memref<400x128xf32, #tpu.memory_space<vmem>>, vector<8x128xf32>
      %91 = arith.truncf %90 : vector<8x128xf32> to vector<8x128xbf16>
      %c288 = arith.constant 288 : index
      %c0_52 = arith.constant 0 : index
      %92 = vector.load %arg6[%c288, %c0_52] : memref<400x128xf32, #tpu.memory_space<vmem>>, vector<8x128xf32>
      %93 = arith.truncf %92 : vector<8x128xf32> to vector<8x128xbf16>
      %c296 = arith.constant 296 : index
      %c0_53 = arith.constant 0 : index
      %94 = vector.load %arg6[%c296, %c0_53] : memref<400x128xf32, #tpu.memory_space<vmem>>, vector<8x128xf32>
      %95 = arith.truncf %94 : vector<8x128xf32> to vector<8x128xbf16>
      %c304 = arith.constant 304 : index
      %c0_54 = arith.constant 0 : index
      %96 = vector.load %arg6[%c304, %c0_54] : memref<400x128xf32, #tpu.memory_space<vmem>>, vector<8x128xf32>
      %97 = arith.truncf %96 : vector<8x128xf32> to vector<8x128xbf16>
      %c312 = arith.constant 312 : index
      %c0_55 = arith.constant 0 : index
      %98 = vector.load %arg6[%c312, %c0_55] : memref<400x128xf32, #tpu.memory_space<vmem>>, vector<8x128xf32>
      %99 = arith.truncf %98 : vector<8x128xf32> to vector<8x128xbf16>
      %c320 = arith.constant 320 : index
      %c0_56 = arith.constant 0 : index
      %100 = vector.load %arg6[%c320, %c0_56] : memref<400x128xf32, #tpu.memory_space<vmem>>, vector<8x128xf32>
      %101 = arith.truncf %100 : vector<8x128xf32> to vector<8x128xbf16>
      %c328 = arith.constant 328 : index
      %c0_57 = arith.constant 0 : index
      %102 = vector.load %arg6[%c328, %c0_57] : memref<400x128xf32, #tpu.memory_space<vmem>>, vector<8x128xf32>
      %103 = arith.truncf %102 : vector<8x128xf32> to vector<8x128xbf16>
      %c336 = arith.constant 336 : index
      %c0_58 = arith.constant 0 : index
      %104 = vector.load %arg6[%c336, %c0_58] : memref<400x128xf32, #tpu.memory_space<vmem>>, vector<8x128xf32>
      %105 = arith.truncf %104 : vector<8x128xf32> to vector<8x128xbf16>
      %c344 = arith.constant 344 : index
      %c0_59 = arith.constant 0 : index
      %106 = vector.load %arg6[%c344, %c0_59] : memref<400x128xf32, #tpu.memory_space<vmem>>, vector<8x128xf32>
      %107 = arith.truncf %106 : vector<8x128xf32> to vector<8x128xbf16>
      %c352 = arith.constant 352 : index
      %c0_60 = arith.constant 0 : index
      %108 = vector.load %arg6[%c352, %c0_60] : memref<400x128xf32, #tpu.memory_space<vmem>>, vector<8x128xf32>
      %109 = arith.truncf %108 : vector<8x128xf32> to vector<8x128xbf16>
      %c360 = arith.constant 360 : index
      %c0_61 = arith.constant 0 : index
      %110 = vector.load %arg6[%c360, %c0_61] : memref<400x128xf32, #tpu.memory_space<vmem>>, vector<8x128xf32>
      %111 = arith.truncf %110 : vector<8x128xf32> to vector<8x128xbf16>
      %c368 = arith.constant 368 : index
      %c0_62 = arith.constant 0 : index
      %112 = vector.load %arg6[%c368, %c0_62] : memref<400x128xf32, #tpu.memory_space<vmem>>, vector<8x128xf32>
      %113 = arith.truncf %112 : vector<8x128xf32> to vector<8x128xbf16>
      %c376 = arith.constant 376 : index
      %c0_63 = arith.constant 0 : index
      %114 = vector.load %arg6[%c376, %c0_63] : memref<400x128xf32, #tpu.memory_space<vmem>>, vector<8x128xf32>
      %115 = arith.truncf %114 : vector<8x128xf32> to vector<8x128xbf16>
      %c384 = arith.constant 384 : index
      %c0_64 = arith.constant 0 : index
      %116 = vector.load %arg6[%c384, %c0_64] : memref<400x128xf32, #tpu.memory_space<vmem>>, vector<8x128xf32>
      %117 = arith.truncf %116 : vector<8x128xf32> to vector<8x128xbf16>
      %118 = tpu.concatenate %21, %23, %25, %27, %29, %31, %33, %35, %37, %39, %41, %43, %45, %47, %49, %51 in 1 : vector<8x128xbf16>, vector<8x128xbf16>, vector<8x128xbf16>, vector<8x128xbf16>, vector<8x128xbf16>, vector<8x128xbf16>, vector<8x128xbf16>, vector<8x128xbf16>, vector<8x128xbf16>, vector<8x128xbf16>, vector<8x128xbf16>, vector<8x128xbf16>, vector<8x128xbf16>, vector<8x128xbf16>, vector<8x128xbf16>, vector<8x128xbf16> -> vector<8x2048xbf16>
      %119 = tpu.concatenate %53, %55, %57, %59, %61, %63, %65, %67, %69, %71, %73, %75, %77, %79, %81, %83 in 1 : vector<8x128xbf16>, vector<8x128xbf16>, vector<8x128xbf16>, vector<8x128xbf16>, vector<8x128xbf16>, vector<8x128xbf16>, vector<8x128xbf16>, vector<8x128xbf16>, vector<8x128xbf16>, vector<8x128xbf16>, vector<8x128xbf16>, vector<8x128xbf16>, vector<8x128xbf16>, vector<8x128xbf16>, vector<8x128xbf16>, vector<8x128xbf16> -> vector<8x2048xbf16>
      %120 = tpu.concatenate %85, %87, %89, %91, %93, %95, %97, %99, %101, %103, %105, %107, %109, %111, %113, %115 in 1 : vector<8x128xbf16>, vector<8x128xbf16>, vector<8x128xbf16>, vector<8x128xbf16>, vector<8x128xbf16>, vector<8x128xbf16>, vector<8x128xbf16>, vector<8x128xbf16>, vector<8x128xbf16>, vector<8x128xbf16>, vector<8x128xbf16>, vector<8x128xbf16>, vector<8x128xbf16>, vector<8x128xbf16>, vector<8x128xbf16>, vector<8x128xbf16> -> vector<8x2048xbf16>
      %121 = tpu.concatenate %118, %119, %120, %117 in 1 : vector<8x2048xbf16>, vector<8x2048xbf16>, vector<8x2048xbf16>, vector<8x128xbf16> -> vector<8x6272xbf16>
      %c0_65 = arith.constant 0 : index
      %c0_66 = arith.constant 0 : index
      %122 = vector.load %arg4[%c0_65, %c0_66] : memref<6272x128xbf16, #tpu.memory_space<vmem>>, vector<6272x128xbf16>
      %cst_67 = arith.constant dense<0.000000e+00> : vector<8x128xf32>
      %123 = tpu.matmul %121, %122, %cst_67 {dimension_numbers = #tpu.dot_dimension_numbers<[1], [0], [0], [1], [0, 0, 1, 1], [], []>} : vector<8x6272xbf16>, vector<6272x128xbf16>, vector<8x128xf32> -> vector<8x128xf32>
      %c0_68 = arith.constant 0 : index
      %c0_69 = arith.constant 0 : index
      %124 = vector.load %arg5[%c0_68, %c0_69] : memref<1x128xf32, #tpu.memory_space<vmem>>, vector<1x128xf32>
      %125 = vector.broadcast %124 : vector<1x128xf32> to vector<8x128xf32>
      %126 = arith.addf %123, %125 : vector<8x128xf32>
      %c0_70 = arith.constant 0 : index
      %c0_71 = arith.constant 0 : index
      %127 = vector.load %arg7[%c0_70, %c0_71] : memref<8x128xf32, #tpu.memory_space<vmem>>, vector<8x128xf32>
      tpu.vector_store %arg7[%c0_70, %c0_71], %126 {strides = array<i32>} : memref<8x128xf32, #tpu.memory_space<vmem>>, vector<8x128xf32>,
    } else {
    }
    return
  }
  func.func @transform_0(%arg0: i32) -> (i32, i32, i32) {
    %c0_i32 = arith.constant 0 : i32
    %c0_i32_0 = arith.constant 0 : i32
    %c0_i32_1 = arith.constant 0 : i32
    return %arg0, %c0_i32, %c0_i32_0 : i32, i32, i32
  }
  func.func @transform_1(%arg0: i32) -> (i32, i32) {
    %c0_i32 = arith.constant 0 : i32
    %c0_i32_0 = arith.constant 0 : i32
    %c0_i32_1 = arith.constant 0 : i32
    return %c0_i32, %c0_i32_0 : i32, i32
  }
  func.func @transform_2(%arg0: i32) -> (i32, i32) {
    %c0_i32 = arith.constant 0 : i32
    %c0_i32_0 = arith.constant 0 : i32
    %c0_i32_1 = arith.constant 0 : i32
    return %c0_i32, %c0_i32_0 : i32, i32
  }
  func.func @transform_3(%arg0: i32) -> (i32, i32) {
    %c0_i32 = arith.constant 0 : i32
    %c0_i32_0 = arith.constant 0 : i32
    %c0_i32_1 = arith.constant 0 : i32
    return %c0_i32, %c0_i32_0 : i32, i32
  }
  func.func @transform_4(%arg0: i32) -> (i32, i32) {
    %c0_i32 = arith.constant 0 : i32
    %c0_i32_0 = arith.constant 0 : i32
    %c0_i32_1 = arith.constant 0 : i32
    return %c0_i32, %c0_i32_0 : i32, i32
  }
  func.func @transform_5(%arg0: i32) -> (i32, i32) {
    %c0_i32 = arith.constant 0 : i32
    %c0_i32_0 = arith.constant 0 : i32
    %c0_i32_1 = arith.constant 0 : i32
    return %c0_i32, %c0_i32_0 : i32, i32
  }
  func.func @transform_6(%arg0: i32) -> (i32, i32) {
    %c0_i32 = arith.constant 0 : i32
    %c0_i32_0 = arith.constant 0 : i32
    %c0_i32_1 = arith.constant 0 : i32
    return %c0_i32, %c0_i32_0 : i32, i32
  }
}

</mosaic_0001>

<llo_original>
// kernel: cnn_forward.2
$region0: #{cnn_forward.2}
  #allocation0 [shape = 'u32[]', space=smem, size = 0x4, offset = 0x4, fixed_abs, tag = 'smem constant byte address 0x4 - core index']
  #allocation1 [shape = 'u32[144,128]{1,0:T(1,128)}', space=vmem, size = 0x12000, scoped, tag = 'internal scratch']
  #allocation2 [shape = 'f32[400,128]{1,0:T(8,128)}', space=vmem, size = 0x32000, scoped, tag = 'scratch operand']
  %s0 = inlined_call_operand.vmem [shape: bf16[4,400,128], index: 0, kind: input, shape index: {}]
  %s1 = inlined_call_operand.vmem [shape: bf16[128,128], index: 1, kind: input, shape index: {}]
  %s2 = inlined_call_operand.vmem [shape: f32[1,128], index: 2, kind: input, shape index: {}]
  %s3 = inlined_call_operand.vmem [shape: f32[400,128], index: 3, kind: output, shape index: {}]
  %s4 = sld [smem:[#allocation0]]
  $region57: #{cnn_forward.2} parent=0
    _
  %s6 = ssub.s32 1, %s4
  %s7 = scalar_select 0, %s6, %s4
  loop: start=0, step=1, limit=6
  $region2: #{cnn_forward.2} parent=0 // loop_pre_header
    _
  $region3: #{cnn_forward.2} parent=0 // loop_header
    %s9 = sphi 0, %s13
    %p10 = scmp.ge.s32.totalorder %s9, 6
    %s16 = sphi 0, %s28
    %s17 = sphi 0, %s24
    %s18 = sphi 0, %s16
    %s19 = sphi 0, %s17
    %s20 = sphi 0, %s18
    %s21 = sphi 0, %s19
    %s33 = sphi 0, %s35
    %s36 = sphi 0, %s33
    %s37 = sphi 0, %s36
    %s53 = sphi 0, %s37
    %s57 = sphi 0, %s57
    %s59 = sphi 0, %s57
    %s60 = sphi 0, %s59
    %s74 = sphi 0, %s60
    %s78 = sphi 0, %s78
    %s80 = sphi 0, %s78
    %s81 = sphi 0, %s80
    %s95 = sphi 0, %s81
    %s101 = sphi 0, %s103
    %s104 = sphi 0, %s101
    %s105 = sphi 0, %s104
    %s121 = sphi 0, %s105
  $region4: #{cnn_forward.2} parent=0 // loop_header_branch
    %12 = sbr.rel (%p10) target = $region8
  $region5: #{cnn_forward.2} parent=0 // loop_body
    %s14 = ssub.s32 %s9, 1
    %s15 = ssub.s32 %s9, 2
    %s22 = sadd.s32 1, %s17
    %p23 = scmp.ge.s32.totalorder %s22, 4
    %s24 = scalar_select %p23, 0, %s22
    %s25 = sadd.s32 1, %s16
    %s26 = scalar_select %p23, %s25, %s16
    %p27 = scmp.ge.s32.totalorder %s26, 1
    %s28 = scalar_select %p27, 0, %s26
    %s29 = ssub.s32 %s17, %s24
    %s30 = ssub.s32 %s16, %s28
    %s31 = sor.u32 %s29, %s30
    %p32 = scmp.eq.s32.totalorder %s31, 0
    %s34 = sadd.s32 %s33, 1
    %s35 = scalar_select %p32, %s33, %s34
    %p38 = pneg %p32
    %p39 = scmp.eq.s32.totalorder %s9, 3
    %p40 = por %p38, %p39
    %p41 = scmp.ne.s32.totalorder %s33, %s36
    %p42 = scmp.eq.s32.totalorder %s9, 0
    %p43 = por %p41, %p42
    %p44 = scmp.ne.s32.totalorder %s33, %s36
    %p45 = scmp.eq.s32.totalorder %s14, 3
    %p46 = por %p44, %p45
    %p47 = scmp.ne.s32.totalorder %s36, %s37
    %p48 = scmp.eq.s32.totalorder %s14, 0
    %p49 = por %p47, %p48
    %p50 = scmp.ne.s32.totalorder %s36, %s37
    %p51 = scmp.eq.s32.totalorder %s15, 3
    %p52 = por %p50, %p51
    %p54 = scmp.ne.s32.totalorder %s37, %s53
    %p55 = scmp.eq.s32.totalorder %s15, 0
    %p56 = por %p54, %p55
    %s58 = sadd.s32 %s57, 1
    %p61 = scmp.eq.s32.totalorder %s9, 3
    %p62 = scmp.ne.s32.totalorder %s57, %s59
    %p63 = scmp.eq.s32.totalorder %s9, 0
    %p64 = por %p62, %p63
    %p65 = scmp.ne.s32.totalorder %s57, %s59
    %p66 = scmp.eq.s32.totalorder %s14, 3
    %p67 = por %p65, %p66
    %p68 = scmp.ne.s32.totalorder %s59, %s60
    %p69 = scmp.eq.s32.totalorder %s14, 0
    %p70 = por %p68, %p69
    %p71 = scmp.ne.s32.totalorder %s59, %s60
    %p72 = scmp.eq.s32.totalorder %s15, 3
    %p73 = por %p71, %p72
    %p75 = scmp.ne.s32.totalorder %s60, %s74
    %p76 = scmp.eq.s32.totalorder %s15, 0
    %p77 = por %p75, %p76
    %s79 = sadd.s32 %s78, 1
    %p82 = scmp.eq.s32.totalorder %s9, 3
    %p83 = scmp.ne.s32.totalorder %s78, %s80
    %p84 = scmp.eq.s32.totalorder %s9, 0
    %p85 = por %p83, %p84
    %p86 = scmp.ne.s32.totalorder %s78, %s80
    %p87 = scmp.eq.s32.totalorder %s14, 3
    %p88 = por %p86, %p87
    %p89 = scmp.ne.s32.totalorder %s80, %s81
    %p90 = scmp.eq.s32.totalorder %s14, 0
    %p91 = por %p89, %p90
    %p92 = scmp.ne.s32.totalorder %s80, %s81
    %p93 = scmp.eq.s32.totalorder %s15, 3
    %p94 = por %p92, %p93
    %p96 = scmp.ne.s32.totalorder %s81, %s95
    %p97 = scmp.eq.s32.totalorder %s15, 0
    %p98 = por %p96, %p97
    %s99 = ssub.s32 %s16, %s28
    %p100 = scmp.eq.s32.totalorder %s99, 0
    %s102 = sadd.s32 %s101, 1
    %s103 = scalar_select %p100, %s101, %s102
    %p106 = pneg %p100
    %p107 = scmp.eq.s32.totalorder %s9, 3
    %p108 = por %p106, %p107
    %p109 = scmp.ne.s32.totalorder %s101, %s104
    %p110 = scmp.eq.s32.totalorder %s9, 0
    %p111 = por %p109, %p110
    %p112 = scmp.ne.s32.totalorder %s101, %s104
    %p113 = scmp.eq.s32.totalorder %s14, 3
    %p114 = por %p112, %p113
    %p115 = scmp.ne.s32.totalorder %s104, %s105
    %p116 = scmp.eq.s32.totalorder %s14, 0
    %p117 = por %p115, %p116
    %p118 = scmp.ne.s32.totalorder %s104, %s105
    %p119 = scmp.eq.s32.totalorder %s15, 3
    %p120 = por %p118, %p119
    %p122 = scmp.ne.s32.totalorder %s105, %s121
    %p123 = scmp.eq.s32.totalorder %s15, 0
    %p124 = por %p122, %p123
    %p125 = scmp.le.s32.totalorder 1, %s9
    %p126 = scmp.lt.s32.totalorder %s9, 5
    %p127 = pnand %p125, %p126
    %p128 = pneg %p127
    // Predicated region
    $region9: #{cnn_forward.2} parent=5 // pred_check
      _
    $region10: #{cnn_forward.2} parent=5 // pred_check_branch
      %130 = sbr.rel (%p127) target = $region12
    $region11: #{cnn_forward.2} parent=5 // pred_region
      %s131 = ssub.s32 %s9, 1
      // Predicated region
      $region13: #{cnn_forward.2} parent=11 // pred_check
        %p132 = pneg %p70
      $region14: #{cnn_forward.2} parent=11 // pred_check_branch
        %134 = sbr.rel (%p132) target = $region16
      $region15: #{cnn_forward.2} parent=11 // pred_region
        _
      $region16: #{cnn_forward.2} parent=11 // pred_fallthru
        _
      // Predicated region
      $region17: #{cnn_forward.2} parent=11 // pred_check
        %p135 = pneg %p91
      $region18: #{cnn_forward.2} parent=11 // pred_check_branch
        %137 = sbr.rel (%p135) target = $region20
      $region19: #{cnn_forward.2} parent=11 // pred_region
        _
      $region20: #{cnn_forward.2} parent=11 // pred_fallthru
        _
    $region12: #{cnn_forward.2} parent=5 // pred_fallthru
      _
    %p138 = scmp.lt.s32.totalorder %s9, 4
    // Predicated region
    $region21: #{cnn_forward.2} parent=5 // pred_check
      %p139 = pneg %p138
    $region22: #{cnn_forward.2} parent=5 // pred_check_branch
      %141 = sbr.rel (%p139) target = $region24
    $region23: #{cnn_forward.2} parent=5 // pred_region
      // Predicated region
      $region25: #{cnn_forward.2} parent=23 // pred_check
        %p142 = pneg %p43
      $region26: #{cnn_forward.2} parent=23 // pred_check_branch
        %144 = sbr.rel (%p142) target = $region28
      $region27: #{cnn_forward.2} parent=23 // pred_region
        %s145 = smul.u32 50, %s16
        %p146 = scmp.lt.s32.totalorder %s17, 3
        %s147 = scalar_select %p146, %s17, 3
        %p148 = scmp.lt.s32.totalorder %s145, 49
        %s149 = scalar_select %p148, %s145, 49
        %s150 = smul.addr %s147, 50
        %s151 = sadd.s32 %s149, %s150
        %s152 = smul.addr %s151, 4
        %s153 = scalar_lea.vmem %s0, %s152
        %s154 = smul.u32 50, %s16
      $region28: #{cnn_forward.2} parent=23 // pred_fallthru
        _
    $region24: #{cnn_forward.2} parent=5 // pred_fallthru
      _
    %p155 = scmp.le.s32.totalorder 1, %s9
    %p156 = scmp.lt.s32.totalorder %s9, 5
    %p157 = pnand %p155, %p156
    %p158 = pneg %p157
    // Predicated region
    $region29: #{cnn_forward.2} parent=5 // pred_check
      _
    $region30: #{cnn_forward.2} parent=5 // pred_check_branch
      %160 = sbr.rel (%p157) target = $region32
    $region31: #{cnn_forward.2} parent=5 // pred_region
      %s161 = ssub.s32 %s9, 1
      %s162 = smul.u32 50, %s18
      %p163 = scmp.lt.s32.totalorder %s19, 3
      %s164 = scalar_select %p163, %s19, 3
      %p165 = scmp.lt.s32.totalorder %s162, 49
      %s166 = scalar_select %p165, %s162, 49
      %s167 = smul.addr %s164, 50
      %s168 = sadd.s32 %s166, %s167
      %s169 = smul.addr %s168, 4
      %s170 = scalar_lea.vmem %s0, %s169
      %p171 = pneg %p49
      %p172 = pneg %p46
      %p173 = pneg %p70
      %p174 = pneg %p67
      %p175 = pneg %p91
      %p176 = pneg %p88
      %p177 = pneg %p117
      %p178 = pneg %p114
      %s179 = smul.u32 50, %s18
      %p180 = scmp.lt.s32.totalorder %s179, 49
      %s181 = scalar_select %p180, %s179, 49
      %s182 = smul.addr %s181, 8
      %s183 = scalar_lea.vmem %s3, %s182
      %s184 = smul.u32 50, %s18
      %p185 = scmp.lt.s32.totalorder %s19, 3
      %s186 = scalar_select %p185, %s19, 3
      %p187 = scmp.lt.s32.totalorder %s184, 49
      %s188 = scalar_select %p187, %s184, 49
      %s189 = smul.addr %s186, 50
      %s190 = sadd.s32 %s188, %s189
      %s191 = smul.addr %s190, 4
      %s192 = scalar_lea.vmem %s0, %s191
      %s193 = smul.u32 50, %s18
      %s194 = smul.u32 50, %s18
      %p195 = scmp.lt.s32.totalorder %s194, 49
      %s196 = scalar_select %p195, %s194, 49
      %s197 = smul.addr %s196, 8
      %s198 = scalar_lea.vmem %s3, %s197
      %s199 = smul.u32 50, %s18
      %v201 = vld [vmem:[%s192] sm:$0xf]
      %v202 = vld [vmem:[%s192 + $0x4] sm:$0xf]
      %v203 = vld [vmem:[%s192 + $0x8] sm:$0xf]
      %v204 = vld [vmem:[%s192 + $0xc] sm:$0xf]
      %v205 = vld [vmem:[%s192 + $0x10] sm:$0xf]
      %v206 = vld [vmem:[%s192 + $0x14] sm:$0xf]
      %v207 = vld [vmem:[%s192 + $0x18] sm:$0xf]
      %v208 = vld [vmem:[%s192 + $0x1c] sm:$0xf]
      %v209 = vld [vmem:[%s192 + $0x20] sm:$0xf]
      %v210 = vld [vmem:[%s192 + $0x24] sm:$0xf]
      %v211 = vld [vmem:[%s192 + $0x28] sm:$0xf]
      %v212 = vld [vmem:[%s192 + $0x2c] sm:$0xf]
      %v213 = vld [vmem:[%s192 + $0x30] sm:$0xf]
      %v214 = vld [vmem:[%s192 + $0x34] sm:$0xf]
      %v215 = vld [vmem:[%s192 + $0x38] sm:$0xf]
      %v216 = vld [vmem:[%s192 + $0x3c] sm:$0xf]
      %v217 = vld [vmem:[%s192 + $0x40] sm:$0xf]
      %v218 = vld [vmem:[%s192 + $0x44] sm:$0xf]
      %v219 = vld [vmem:[%s192 + $0x48] sm:$0xf]
      %v220 = vld [vmem:[%s192 + $0x4c] sm:$0xf]
      %v221 = vld [vmem:[%s192 + $0x50] sm:$0xf]
      %v222 = vld [vmem:[%s192 + $0x54] sm:$0xf]
      %v223 = vld [vmem:[%s192 + $0x58] sm:$0xf]
      %v224 = vld [vmem:[%s192 + $0x5c] sm:$0xf]
      %v225 = vld [vmem:[%s192 + $0x60] sm:$0xf]
      %v226 = vld [vmem:[%s192 + $0x64] sm:$0xf]
      %v227 = vld [vmem:[%s192 + $0x68] sm:$0xf]
      %v228 = vld [vmem:[%s192 + $0x6c] sm:$0xf]
      %v229 = vld [vmem:[%s192 + $0x70] sm:$0xf]
      %v230 = vld [vmem:[%s192 + $0x74] sm:$0xf]
      %v231 = vld [vmem:[%s192 + $0x78] sm:$0xf]
      %v232 = vld [vmem:[%s192 + $0x7c] sm:$0xf]
      %v233 = vld [vmem:[%s192 + $0x80] sm:$0xf]
      %v234 = vld [vmem:[%s192 + $0x84] sm:$0xf]
      %v235 = vld [vmem:[%s192 + $0x88] sm:$0xf]
      %v236 = vld [vmem:[%s192 + $0x8c] sm:$0xf]
      %v237 = vld [vmem:[%s192 + $0x90] sm:$0xf]
      %v238 = vld [vmem:[%s192 + $0x94] sm:$0xf]
      %v239 = vld [vmem:[%s192 + $0x98] sm:$0xf]
      %v240 = vld [vmem:[%s192 + $0x9c] sm:$0xf]
      %v241 = vld [vmem:[%s192 + $0xa0] sm:$0xf]
      %v242 = vld [vmem:[%s192 + $0xa4] sm:$0xf]
      %v243 = vld [vmem:[%s192 + $0xa8] sm:$0xf]
      %v244 = vld [vmem:[%s192 + $0xac] sm:$0xf]
      %v245 = vld [vmem:[%s192 + $0xb0] sm:$0xf]
      %v246 = vld [vmem:[%s192 + $0xb4] sm:$0xf]
      %v247 = vld [vmem:[%s192 + $0xb8] sm:$0xf]
      %v248 = vld [vmem:[%s192 + $0xbc] sm:$0xf]
      %v249 = vld [vmem:[%s192 + $0xc0] sm:$0xf]
      %v250 = vld [vmem:[%s192 + $0xc4] sm:$0xf]
      %v251 = vld [vmem:[%s1] sm:$0xf]
      %v252 = vld [vmem:[%s1 + $0x4] sm:$0xf]
      %v253 = vld [vmem:[%s1 + $0x8] sm:$0xf]
      %v254 = vld [vmem:[%s1 + $0xc] sm:$0xf]
      %v255 = vld [vmem:[%s1 + $0x10] sm:$0xf]
      %v256 = vld [vmem:[%s1 + $0x14] sm:$0xf]
      %v257 = vld [vmem:[%s1 + $0x18] sm:$0xf]
      %v258 = vld [vmem:[%s1 + $0x1c] sm:$0xf]
      %v259 = vld [vmem:[%s1 + $0x20] sm:$0xf]
      %v260 = vld [vmem:[%s1 + $0x24] sm:$0xf]
      %v261 = vld [vmem:[%s1 + $0x28] sm:$0xf]
      %v262 = vld [vmem:[%s1 + $0x2c] sm:$0xf]
      %v263 = vld [vmem:[%s1 + $0x30] sm:$0xf]
      %v264 = vld [vmem:[%s1 + $0x34] sm:$0xf]
      %v265 = vld [vmem:[%s1 + $0x38] sm:$0xf]
      %v266 = vld [vmem:[%s1 + $0x3c] sm:$0xf]
      %v317 = vunpack.c.l.b16 %v201
      %v318 = vunpack.c.l.b16 %v202
      %v319 = vunpack.c.l.b16 %v203
      %v320 = vunpack.c.l.b16 %v204
      %v321 = vunpack.c.l.b16 %v205
      %v322 = vunpack.c.l.b16 %v206
      %v323 = vunpack.c.l.b16 %v207
      %v324 = vunpack.c.l.b16 %v208
      %v325 = vunpack.c.l.b16 %v209
      %v326 = vunpack.c.l.b16 %v210
      %v327 = vunpack.c.l.b16 %v211
      %v328 = vunpack.c.l.b16 %v212
      %v329 = vunpack.c.l.b16 %v213
      %v330 = vunpack.c.l.b16 %v214
      %v331 = vunpack.c.l.b16 %v215
      %v332 = vunpack.c.l.b16 %v216
      %v333 = vunpack.c.l.b16 %v217
      %v334 = vunpack.c.l.b16 %v218
      %v335 = vunpack.c.l.b16 %v219
      %v336 = vunpack.c.l.b16 %v220
      %v337 = vunpack.c.l.b16 %v221
      %v338 = vunpack.c.l.b16 %v222
      %v339 = vunpack.c.l.b16 %v223
      %v340 = vunpack.c.l.b16 %v224
      %v341 = vunpack.c.l.b16 %v225
      %v342 = vunpack.c.l.b16 %v226
      %v343 = vunpack.c.l.b16 %v227
      %v344 = vunpack.c.l.b16 %v228
      %v345 = vunpack.c.l.b16 %v229
      %v346 = vunpack.c.l.b16 %v230
      %v347 = vunpack.c.l.b16 %v231
      %v348 = vunpack.c.l.b16 %v232
      %v349 = vunpack.c.l.b16 %v233
      %v350 = vunpack.c.l.b16 %v234
      %v351 = vunpack.c.l.b16 %v235
      %v352 = vunpack.c.l.b16 %v236
      %v353 = vunpack.c.l.b16 %v237
      %v354 = vunpack.c.l.b16 %v238
      %v355 = vunpack.c.l.b16 %v239
      %v356 = vunpack.c.l.b16 %v240
      %v357 = vunpack.c.l.b16 %v241
      %v358 = vunpack.c.l.b16 %v242
      %v359 = vunpack.c.l.b16 %v243
      %v360 = vunpack.c.l.b16 %v244
      %v361 = vunpack.c.l.b16 %v245
      %v362 = vunpack.c.l.b16 %v246
      %v363 = vunpack.c.l.b16 %v247
      %v364 = vunpack.c.l.b16 %v248
      %v365 = vunpack.c.l.b16 %v249
      %v366 = vunpack.c.l.b16 %v250
      %v367 = vpack.c.b16 %v318, %v317
      %v368 = vpack.c.b16 %v320, %v319
      %v369 = vpack.c.b16 %v322, %v321
      %v370 = vpack.c.b16 %v324, %v323
      %v371 = vpack.c.b16 %v326, %v325
      %v372 = vpack.c.b16 %v328, %v327
      %v373 = vpack.c.b16 %v330, %v329
      %v374 = vpack.c.b16 %v332, %v331
      %v375 = vpack.c.b16 %v334, %v333
      %v376 = vpack.c.b16 %v336, %v335
      %v377 = vpack.c.b16 %v338, %v337
      %v378 = vpack.c.b16 %v340, %v339
      %v379 = vpack.c.b16 %v342, %v341
      %v380 = vpack.c.b16 %v344, %v343
      %v381 = vpack.c.b16 %v346, %v345
      %v382 = vpack.c.b16 %v348, %v347
      %v383 = vpack.c.b16 %v350, %v349
      %v384 = vpack.c.b16 %v352, %v351
      %v385 = vpack.c.b16 %v354, %v353
      %v386 = vpack.c.b16 %v356, %v355
      %v387 = vpack.c.b16 %v358, %v357
      %v388 = vpack.c.b16 %v360, %v359
      %v389 = vpack.c.b16 %v362, %v361
      %v390 = vpack.c.b16 %v364, %v363
      %v391 = vpack.c.b16 %v366, %v365
      %v433 = vunpack.c.l.b16 %v251
      %v434 = vunpack.c.l.b16 %v252
      %v435 = vunpack.c.l.b16 %v253
      %v436 = vunpack.c.l.b16 %v254
      %v437 = vunpack.c.l.b16 %v255
      %v438 = vunpack.c.l.b16 %v256
      %v439 = vunpack.c.l.b16 %v257
      %v440 = vunpack.c.l.b16 %v258
      %v441 = vunpack.c.l.b16 %v259
      %v442 = vunpack.c.l.b16 %v260
      %v443 = vunpack.c.l.b16 %v261
      %v444 = vunpack.c.l.b16 %v262
      %v445 = vunpack.c.l.b16 %v263
      %v446 = vunpack.c.l.b16 %v264
      %v447 = vunpack.c.l.b16 %v265
      %v448 = vunpack.c.l.b16 %v266
      %v449 = vpack.c.b16 %v434, %v433
      %v450 = vpack.c.b16 %v436, %v435
      %v451 = vpack.c.b16 %v438, %v437
      %v452 = vpack.c.b16 %v440, %v439
      %v453 = vpack.c.b16 %v442, %v441
      %v454 = vpack.c.b16 %v444, %v443
      %v455 = vpack.c.b16 %v446, %v445
      %v456 = vpack.c.b16 %v448, %v447
      %465 = vmatprep.subr.bf16.mxu0 0
      %466 = vmatpush1.bf16.msra.mxu0 %v449
      %467 = vmatprep.subr.bf16.mxu0 0
      %468 = vmatpush1.bf16.msra.mxu0 %v450
      %469 = vmatprep.subr.bf16.mxu0 0
      %470 = vmatpush1.bf16.msra.mxu0 %v451
      %471 = vmatprep.subr.bf16.mxu0 0
      %472 = vmatpush1.bf16.msra.mxu0 %v452
      %473 = vmatprep.subr.bf16.mxu0 0
      %474 = vmatpush1.bf16.msra.mxu0 %v453
      %475 = vmatprep.subr.bf16.mxu0 0
      %476 = vmatpush1.bf16.msra.mxu0 %v454
      %477 = vmatprep.subr.bf16.mxu0 0
      %478 = vmatpush1.bf16.msra.mxu0 %v455
      %479 = vmatprep.subr.bf16.mxu0 0
      %480 = vmatpush1.bf16.msra.mxu0 %v456
      %481 = vmatprep.subr.bf16.mxu0 0
      %482 = vmatpush1.bf16.msra.mxu0 0
      %483 = vmatprep.subr.bf16.mxu0 0
      %484 = vmatpush1.bf16.msra.mxu0 0
      %485 = vmatprep.subr.bf16.mxu0 0
      %486 = vmatpush1.bf16.msra.mxu0 0
      %487 = vmatprep.subr.bf16.mxu0 0
      %488 = vmatpush1.bf16.msra.mxu0 0
      %489 = vmatprep.subr.bf16.mxu0 0
      %490 = vmatpush1.bf16.msra.mxu0 0
      %491 = vmatprep.subr.bf16.mxu0 0
      %492 = vmatpush1.bf16.msra.mxu0 0
      %493 = vmatprep.subr.bf16.mxu0 0
      %494 = vmatpush1.bf16.msra.mxu0 0
      %495 = vmatprep.subr.bf16.mxu0 0
      %496 = vmatpush1.bf16.msra.mxu0 0
      %497 = vmatprep.mubr.bf16.mxu0 0
      %498 = vmatmul.mubr.bf16.gmra.mrb[0].mxu0 %v367
      %v499 = vpop.f32.mrb[0].mxu0
      %v500 = vadd.f32 0.0, %v499
      %v501 = vpop.f32.mrb[0].mxu0
      %v502 = vpop.f32.mrb[0].mxu0
      %v503 = vadd.f32 0.0, %v502
      %v504 = vpop.f32.mrb[0].mxu0
      %505 = vmatprep.mubr.bf16.mxu0 0
      %506 = vmatmul.mubr.bf16.gmra.mrb[0].mxu0 %v368
      %v507 = vpop.f32.mrb[0].mxu0
      %v508 = vadd.f32 0.0, %v507
      %v509 = vpop.f32.mrb[0].mxu0
      %v510 = vpop.f32.mrb[0].mxu0
      %v511 = vadd.f32 0.0, %v510
      %v512 = vpop.f32.mrb[0].mxu0
      %513 = vmatprep.mubr.bf16.mxu0 0
      %514 = vmatmul.mubr.bf16.gmra.mrb[0].mxu0 %v369
      %v515 = vpop.f32.mrb[0].mxu0
      %v516 = vadd.f32 0.0, %v515
      %v517 = vpop.f32.mrb[0].mxu0
      %v518 = vpop.f32.mrb[0].mxu0
      %v519 = vadd.f32 0.0, %v518
      %v520 = vpop.f32.mrb[0].mxu0
      %521 = vmatprep.mubr.bf16.mxu0 0
      %522 = vmatmul.mubr.bf16.gmra.mrb[0].mxu0 %v370
      %v523 = vpop.f32.mrb[0].mxu0
      %v524 = vadd.f32 0.0, %v523
      %v525 = vpop.f32.mrb[0].mxu0
      %v526 = vpop.f32.mrb[0].mxu0
      %v527 = vadd.f32 0.0, %v526
      %v528 = vpop.f32.mrb[0].mxu0
      %529 = vmatprep.mubr.bf16.mxu0 0
      %530 = vmatmul.mubr.bf16.gmra.mrb[0].mxu0 %v371
      %v531 = vpop.f32.mrb[0].mxu0
      %v532 = vadd.f32 0.0, %v531
      %v533 = vpop.f32.mrb[0].mxu0
      %v534 = vpop.f32.mrb[0].mxu0
      %v535 = vadd.f32 0.0, %v534
      %v536 = vpop.f32.mrb[0].mxu0
      %537 = vmatprep.mubr.bf16.mxu0 0
      %538 = vmatmul.mubr.bf16.gmra.mrb[0].mxu0 %v372
      %v539 = vpop.f32.mrb[0].mxu0
      %v540 = vadd.f32 0.0, %v539
      %v541 = vpop.f32.mrb[0].mxu0
      %v542 = vpop.f32.mrb[0].mxu0
      %v543 = vadd.f32 0.0, %v542
      %v544 = vpop.f32.mrb[0].mxu0
      %545 = vmatprep.mubr.bf16.mxu0 0
      %546 = vmatmul.mubr.bf16.gmra.mrb[0].mxu0 %v373
      %v547 = vpop.f32.mrb[0].mxu0
      %v548 = vadd.f32 0.0, %v547
      %v549 = vpop.f32.mrb[0].mxu0
      %v550 = vpop.f32.mrb[0].mxu0
      %v551 = vadd.f32 0.0, %v550
      %v552 = vpop.f32.mrb[0].mxu0
      %553 = vmatprep.mubr.bf16.mxu0 0
      %554 = vmatmul.mubr.bf16.gmra.mrb[0].mxu0 %v374
      %v555 = vpop.f32.mrb[0].mxu0
      %v556 = vadd.f32 0.0, %v555
      %v557 = vpop.f32.mrb[0].mxu0
      %v558 = vpop.f32.mrb[0].mxu0
      %v559 = vadd.f32 0.0, %v558
      %v560 = vpop.f32.mrb[0].mxu0
      %561 = vmatprep.mubr.bf16.mxu0 0
      %562 = vmatmul.mubr.bf16.gmra.mrb[0].mxu0 %v375
      %v563 = vpop.f32.mrb[0].mxu0
      %v564 = vadd.f32 0.0, %v563
      %v565 = vpop.f32.mrb[0].mxu0
      %v566 = vpop.f32.mrb[0].mxu0
      %v567 = vadd.f32 0.0, %v566
      %v568 = vpop.f32.mrb[0].mxu0
      %569 = vmatprep.mubr.bf16.mxu0 0
      %570 = vmatmul.mubr.bf16.gmra.mrb[0].mxu0 %v376
      %v571 = vpop.f32.mrb[0].mxu0
      %v572 = vadd.f32 0.0, %v571
      %v573 = vpop.f32.mrb[0].mxu0
      %v574 = vpop.f32.mrb[0].mxu0
      %v575 = vadd.f32 0.0, %v574
      %v576 = vpop.f32.mrb[0].mxu0
      %577 = vmatprep.mubr.bf16.mxu0 0
      %578 = vmatmul.mubr.bf16.gmra.mrb[0].mxu0 %v377
      %v579 = vpop.f32.mrb[0].mxu0
      %v580 = vadd.f32 0.0, %v579
      %v581 = vpop.f32.mrb[0].mxu0
      %v582 = vpop.f32.mrb[0].mxu0
      %v583 = vadd.f32 0.0, %v582
      %v584 = vpop.f32.mrb[0].mxu0
      %585 = vmatprep.mubr.bf16.mxu0 0
      %586 = vmatmul.mubr.bf16.gmra.mrb[0].mxu0 %v378
      %v587 = vpop.f32.mrb[0].mxu0
      %v588 = vadd.f32 0.0, %v587
      %v589 = vpop.f32.mrb[0].mxu0
      %v590 = vpop.f32.mrb[0].mxu0
      %v591 = vadd.f32 0.0, %v590
      %v592 = vpop.f32.mrb[0].mxu0
      %593 = vmatprep.mubr.bf16.mxu0 0
      %594 = vmatmul.mubr.bf16.gmra.mrb[0].mxu0 %v379
      %v595 = vpop.f32.mrb[0].mxu0
      %v596 = vadd.f32 0.0, %v595
      %v597 = vpop.f32.mrb[0].mxu0
      %v598 = vpop.f32.mrb[0].mxu0
      %v599 = vadd.f32 0.0, %v598
      %v600 = vpop.f32.mrb[0].mxu0
      %601 = vmatprep.mubr.bf16.mxu0 0
      %602 = vmatmul.mubr.bf16.gmra.mrb[0].mxu0 %v380
      %v603 = vpop.f32.mrb[0].mxu0
      %v604 = vadd.f32 0.0, %v603
      %v605 = vpop.f32.mrb[0].mxu0
      %v606 = vpop.f32.mrb[0].mxu0
      %v607 = vadd.f32 0.0, %v606
      %v608 = vpop.f32.mrb[0].mxu0
      %609 = vmatprep.mubr.bf16.mxu0 0
      %610 = vmatmul.mubr.bf16.gmra.mrb[0].mxu0 %v381
      %v611 = vpop.f32.mrb[0].mxu0
      %v612 = vadd.f32 0.0, %v611
      %v613 = vpop.f32.mrb[0].mxu0
      %v614 = vpop.f32.mrb[0].mxu0
      %v615 = vadd.f32 0.0, %v614
      %v616 = vpop.f32.mrb[0].mxu0
      %617 = vmatprep.mubr.bf16.mxu0 0
      %618 = vmatmul.mubr.bf16.gmra.mrb[0].mxu0 %v382
      %v619 = vpop.f32.mrb[0].mxu0
      %v620 = vadd.f32 0.0, %v619
      %v621 = vpop.f32.mrb[0].mxu0
      %v622 = vpop.f32.mrb[0].mxu0
      %v623 = vadd.f32 0.0, %v622
      %v624 = vpop.f32.mrb[0].mxu0
      %625 = vmatprep.mubr.bf16.mxu0 0
      %626 = vmatmul.mubr.bf16.gmra.mrb[0].mxu0 %v383
      %v627 = vpop.f32.mrb[0].mxu0
      %v628 = vadd.f32 0.0, %v627
      %v629 = vpop.f32.mrb[0].mxu0
      %v630 = vpop.f32.mrb[0].mxu0
      %v631 = vadd.f32 0.0, %v630
      %v632 = vpop.f32.mrb[0].mxu0
      %633 = vmatprep.mubr.bf16.mxu0 0
      %634 = vmatmul.mubr.bf16.gmra.mrb[0].mxu0 %v384
      %v635 = vpop.f32.mrb[0].mxu0
      %v636 = vadd.f32 0.0, %v635
      %v637 = vpop.f32.mrb[0].mxu0
      %v638 = vpop.f32.mrb[0].mxu0
      %v639 = vadd.f32 0.0, %v638
      %v640 = vpop.f32.mrb[0].mxu0
      %641 = vmatprep.mubr.bf16.mxu0 0
      %642 = vmatmul.mubr.bf16.gmra.mrb[0].mxu0 %v385
      %v643 = vpop.f32.mrb[0].mxu0
      %v644 = vadd.f32 0.0, %v643
      %v645 = vpop.f32.mrb[0].mxu0
      %v646 = vpop.f32.mrb[0].mxu0
      %v647 = vadd.f32 0.0, %v646
      %v648 = vpop.f32.mrb[0].mxu0
      %649 = vmatprep.mubr.bf16.mxu0 0
      %650 = vmatmul.mubr.bf16.gmra.mrb[0].mxu0 %v386
      %v651 = vpop.f32.mrb[0].mxu0
      %v652 = vadd.f32 0.0, %v651
      %v653 = vpop.f32.mrb[0].mxu0
      %v654 = vpop.f32.mrb[0].mxu0
      %v655 = vadd.f32 0.0, %v654
      %v656 = vpop.f32.mrb[0].mxu0
      %657 = vmatprep.mubr.bf16.mxu0 0
      %658 = vmatmul.mubr.bf16.gmra.mrb[0].mxu0 %v387
      %v659 = vpop.f32.mrb[0].mxu0
      %v660 = vadd.f32 0.0, %v659
      %v661 = vpop.f32.mrb[0].mxu0
      %v662 = vpop.f32.mrb[0].mxu0
      %v663 = vadd.f32 0.0, %v662
      %v664 = vpop.f32.mrb[0].mxu0
      %665 = vmatprep.mubr.bf16.mxu0 0
      %666 = vmatmul.mubr.bf16.gmra.mrb[0].mxu0 %v388
      %v667 = vpop.f32.mrb[0].mxu0
      %v668 = vadd.f32 0.0, %v667
      %v669 = vpop.f32.mrb[0].mxu0
      %v670 = vpop.f32.mrb[0].mxu0
      %v671 = vadd.f32 0.0, %v670
      %v672 = vpop.f32.mrb[0].mxu0
      %673 = vmatprep.mubr.bf16.mxu0 0
      %674 = vmatmul.mubr.bf16.gmra.mrb[0].mxu0 %v389
      %v675 = vpop.f32.mrb[0].mxu0
      %v676 = vadd.f32 0.0, %v675
      %v677 = vpop.f32.mrb[0].mxu0
      %v678 = vpop.f32.mrb[0].mxu0
      %v679 = vadd.f32 0.0, %v678
      %v680 = vpop.f32.mrb[0].mxu0
      %681 = vmatprep.mubr.bf16.mxu0 0
      %682 = vmatmul.mubr.bf16.gmra.mrb[0].mxu0 %v390
      %v683 = vpop.f32.mrb[0].mxu0
      %v684 = vadd.f32 0.0, %v683
      %v685 = vpop.f32.mrb[0].mxu0
      %v686 = vpop.f32.mrb[0].mxu0
      %v687 = vadd.f32 0.0, %v686
      %v688 = vpop.f32.mrb[0].mxu0
      %689 = vmatprep.mubr.bf16.mxu0 0
      %690 = vmatmul.mubr.bf16.gmra.mrb[0].mxu0 %v391
      %v691 = vpop.f32.mrb[0].mxu0
      %v692 = vadd.f32 0.0, %v691
      %v693 = vpop.f32.mrb[0].mxu0
      %v694 = vpop.f32.mrb[0].mxu0
      %v695 = vadd.f32 0.0, %v694
      %v696 = vpop.f32.mrb[0].mxu0
      %697 = vdwg.mxu0
      %p698 = scmp.eq.s32.totalorder %s19, 0
      // Predicated region
      $region33: #{cnn_forward.2} parent=31 // pred_check
        %p699 = pneg %p698
      $region34: #{cnn_forward.2} parent=31 // pred_check_branch
        %701 = sbr.rel (%p699) target = $region36
      $region35: #{cnn_forward.2} parent=31 // pred_region
        %702 = vst [vmem:[#allocation2] sm:$0xff] %v500
        %703 = vst [vmem:[#allocation2 + $0x8] sm:$0xff] %v503
        %704 = vst [vmem:[#allocation2 + $0x10] sm:$0xff] %v508
        %705 = vst [vmem:[#allocation2 + $0x18] sm:$0xff] %v511
        %706 = vst [vmem:[#allocation2 + $0x20] sm:$0xff] %v516
        %707 = vst [vmem:[#allocation2 + $0x28] sm:$0xff] %v519
        %708 = vst [vmem:[#allocation2 + $0x30] sm:$0xff] %v524
        %709 = vst [vmem:[#allocation2 + $0x38] sm:$0xff] %v527
        %710 = vst [vmem:[#allocation2 + $0x40] sm:$0xff] %v532
        %711 = vst [vmem:[#allocation2 + $0x48] sm:$0xff] %v535
        %712 = vst [vmem:[#allocation2 + $0x50] sm:$0xff] %v540
        %713 = vst [vmem:[#allocation2 + $0x58] sm:$0xff] %v543
        %714 = vst [vmem:[#allocation2 + $0x60] sm:$0xff] %v548
        %715 = vst [vmem:[#allocation2 + $0x68] sm:$0xff] %v551
        %716 = vst [vmem:[#allocation2 + $0x70] sm:$0xff] %v556
        %717 = vst [vmem:[#allocation2 + $0x78] sm:$0xff] %v559
        %718 = vst [vmem:[#allocation2 + $0x80] sm:$0xff] %v564
        %719 = vst [vmem:[#allocation2 + $0x88] sm:$0xff] %v567
        %720 = vst [vmem:[#allocation2 + $0x90] sm:$0xff] %v572
        %721 = vst [vmem:[#allocation2 + $0x98] sm:$0xff] %v575
        %722 = vst [vmem:[#allocation2 + $0xa0] sm:$0xff] %v580
        %723 = vst [vmem:[#allocation2 + $0xa8] sm:$0xff] %v583
        %724 = vst [vmem:[#allocation2 + $0xb0] sm:$0xff] %v588
        %725 = vst [vmem:[#allocation2 + $0xb8] sm:$0xff] %v591
        %726 = vst [vmem:[#allocation2 + $0xc0] sm:$0xff] %v596
        %727 = vst [vmem:[#allocation2 + $0xc8] sm:$0xff] %v599
        %728 = vst [vmem:[#allocation2 + $0xd0] sm:$0xff] %v604
        %729 = vst [vmem:[#allocation2 + $0xd8] sm:$0xff] %v607
        %730 = vst [vmem:[#allocation2 + $0xe0] sm:$0xff] %v612
        %731 = vst [vmem:[#allocation2 + $0xe8] sm:$0xff] %v615
        %732 = vst [vmem:[#allocation2 + $0xf0] sm:$0xff] %v620
        %733 = vst [vmem:[#allocation2 + $0xf8] sm:$0xff] %v623
        %734 = vst [vmem:[#allocation2 + $0x100] sm:$0xff] %v628
        %735 = vst [vmem:[#allocation2 + $0x108] sm:$0xff] %v631
        %736 = vst [vmem:[#allocation2 + $0x110] sm:$0xff] %v636
        %737 = vst [vmem:[#allocation2 + $0x118] sm:$0xff] %v639
        %738 = vst [vmem:[#allocation2 + $0x120] sm:$0xff] %v644
        %739 = vst [vmem:[#allocation2 + $0x128] sm:$0xff] %v647
        %740 = vst [vmem:[#allocation2 + $0x130] sm:$0xff] %v652
        %741 = vst [vmem:[#allocation2 + $0x138] sm:$0xff] %v655
        %742 = vst [vmem:[#allocation2 + $0x140] sm:$0xff] %v660
        %743 = vst [vmem:[#allocation2 + $0x148] sm:$0xff] %v663
        %744 = vst [vmem:[#allocation2 + $0x150] sm:$0xff] %v668
        %745 = vst [vmem:[#allocation2 + $0x158] sm:$0xff] %v671
        %746 = vst [vmem:[#allocation2 + $0x160] sm:$0xff] %v676
        %747 = vst [vmem:[#allocation2 + $0x168] sm:$0xff] %v679
        %748 = vst [vmem:[#allocation2 + $0x170] sm:$0xff] %v684
        %749 = vst [vmem:[#allocation2 + $0x178] sm:$0xff] %v687
        %750 = vst [vmem:[#allocation2 + $0x180] sm:$0xff] %v692
        %751 = vst [vmem:[#allocation2 + $0x188] sm:$0xff] %v695
      $region36: #{cnn_forward.2} parent=31 // pred_fallthru
        _
      %p752 = scmp.gt.s32.totalorder %s19, 0
      // Predicated region
      $region37: #{cnn_forward.2} parent=31 // pred_check
        %p753 = pneg %p752
      $region38: #{cnn_forward.2} parent=31 // pred_check_branch
        %755 = sbr.rel (%p753) target = $region40
      $region39: #{cnn_forward.2} parent=31 // pred_region
        %v756 = vld [vmem:[#allocation2] sm:$0xff]
        %v757 = vld [vmem:[#allocation2 + $0x8] sm:$0xff]
        %v758 = vld [vmem:[#allocation2 + $0x10] sm:$0xff]
        %v759 = vld [vmem:[#allocation2 + $0x18] sm:$0xff]
        %v760 = vld [vmem:[#allocation2 + $0x20] sm:$0xff]
        %v761 = vld [vmem:[#allocation2 + $0x28] sm:$0xff]
        %v762 = vld [vmem:[#allocation2 + $0x30] sm:$0xff]
        %v763 = vld [vmem:[#allocation2 + $0x38] sm:$0xff]
        %v764 = vld [vmem:[#allocation2 + $0x40] sm:$0xff]
        %v765 = vld [vmem:[#allocation2 + $0x48] sm:$0xff]
        %v766 = vld [vmem:[#allocation2 + $0x50] sm:$0xff]
        %v767 = vld [vmem:[#allocation2 + $0x58] sm:$0xff]
        %v768 = vld [vmem:[#allocation2 + $0x60] sm:$0xff]
        %v769 = vld [vmem:[#allocation2 + $0x68] sm:$0xff]
        %v770 = vld [vmem:[#allocation2 + $0x70] sm:$0xff]
        %v771 = vld [vmem:[#allocation2 + $0x78] sm:$0xff]
        %v772 = vld [vmem:[#allocation2 + $0x80] sm:$0xff]
        %v773 = vld [vmem:[#allocation2 + $0x88] sm:$0xff]
        %v774 = vld [vmem:[#allocation2 + $0x90] sm:$0xff]
        %v775 = vld [vmem:[#allocation2 + $0x98] sm:$0xff]
        %v776 = vld [vmem:[#allocation2 + $0xa0] sm:$0xff]
        %v777 = vld [vmem:[#allocation2 + $0xa8] sm:$0xff]
        %v778 = vld [vmem:[#allocation2 + $0xb0] sm:$0xff]
        %v779 = vld [vmem:[#allocation2 + $0xb8] sm:$0xff]
        %v780 = vld [vmem:[#allocation2 + $0xc0] sm:$0xff]
        %v781 = vld [vmem:[#allocation2 + $0xc8] sm:$0xff]
        %v782 = vld [vmem:[#allocation2 + $0xd0] sm:$0xff]
        %v783 = vld [vmem:[#allocation2 + $0xd8] sm:$0xff]
        %v784 = vld [vmem:[#allocation2 + $0xe0] sm:$0xff]
        %v785 = vld [vmem:[#allocation2 + $0xe8] sm:$0xff]
        %v786 = vld [vmem:[#allocation2 + $0xf0] sm:$0xff]
        %v787 = vld [vmem:[#allocation2 + $0xf8] sm:$0xff]
        %v788 = vld [vmem:[#allocation2 + $0x100] sm:$0xff]
        %v789 = vld [vmem:[#allocation2 + $0x108] sm:$0xff]
        %v790 = vld [vmem:[#allocation2 + $0x110] sm:$0xff]
        %v791 = vld [vmem:[#allocation2 + $0x118] sm:$0xff]
        %v792 = vld [vmem:[#allocation2 + $0x120] sm:$0xff]
        %v793 = vld [vmem:[#allocation2 + $0x128] sm:$0xff]
        %v794 = vld [vmem:[#allocation2 + $0x130] sm:$0xff]
        %v795 = vld [vmem:[#allocation2 + $0x138] sm:$0xff]
        %v796 = vld [vmem:[#allocation2 + $0x140] sm:$0xff]
        %v797 = vld [vmem:[#allocation2 + $0x148] sm:$0xff]
        %v798 = vld [vmem:[#allocation2 + $0x150] sm:$0xff]
        %v799 = vld [vmem:[#allocation2 + $0x158] sm:$0xff]
        %v800 = vld [vmem:[#allocation2 + $0x160] sm:$0xff]
        %v801 = vld [vmem:[#allocation2 + $0x168] sm:$0xff]
        %v802 = vld [vmem:[#allocation2 + $0x170] sm:$0xff]
        %v803 = vld [vmem:[#allocation2 + $0x178] sm:$0xff]
        %v804 = vld [vmem:[#allocation2 + $0x180] sm:$0xff]
        %v805 = vld [vmem:[#allocation2 + $0x188] sm:$0xff]
        %v806 = vmax.f32 %v756, %v500
        %v807 = vmax.f32 %v757, %v503
        %v808 = vmax.f32 %v758, %v508
        %v809 = vmax.f32 %v759, %v511
        %v810 = vmax.f32 %v760, %v516
        %v811 = vmax.f32 %v761, %v519
        %v812 = vmax.f32 %v762, %v524
        %v813 = vmax.f32 %v763, %v527
        %v814 = vmax.f32 %v764, %v532
        %v815 = vmax.f32 %v765, %v535
        %v816 = vmax.f32 %v766, %v540
        %v817 = vmax.f32 %v767, %v543
        %v818 = vmax.f32 %v768, %v548
        %v819 = vmax.f32 %v769, %v551
        %v820 = vmax.f32 %v770, %v556
        %v821 = vmax.f32 %v771, %v559
        %v822 = vmax.f32 %v772, %v564
        %v823 = vmax.f32 %v773, %v567
        %v824 = vmax.f32 %v774, %v572
        %v825 = vmax.f32 %v775, %v575
        %v826 = vmax.f32 %v776, %v580
        %v827 = vmax.f32 %v777, %v583
        %v828 = vmax.f32 %v778, %v588
        %v829 = vmax.f32 %v779, %v591
        %v830 = vmax.f32 %v780, %v596
        %v831 = vmax.f32 %v781, %v599
        %v832 = vmax.f32 %v782, %v604
        %v833 = vmax.f32 %v783, %v607
        %v834 = vmax.f32 %v784, %v612
        %v835 = vmax.f32 %v785, %v615
        %v836 = vmax.f32 %v786, %v620
        %v837 = vmax.f32 %v787, %v623
        %v838 = vmax.f32 %v788, %v628
        %v839 = vmax.f32 %v789, %v631
        %v840 = vmax.f32 %v790, %v636
        %v841 = vmax.f32 %v791, %v639
        %v842 = vmax.f32 %v792, %v644
        %v843 = vmax.f32 %v793, %v647
        %v844 = vmax.f32 %v794, %v652
        %v845 = vmax.f32 %v795, %v655
        %v846 = vmax.f32 %v796, %v660
        %v847 = vmax.f32 %v797, %v663
        %v848 = vmax.f32 %v798, %v668
        %v849 = vmax.f32 %v799, %v671
        %v850 = vmax.f32 %v800, %v676
        %v851 = vmax.f32 %v801, %v679
        %v852 = vmax.f32 %v802, %v684
        %v853 = vmax.f32 %v803, %v687
        %v854 = vmax.f32 %v804, %v692
        %v855 = vmax.f32 %v805, %v695
        %856 = vst [vmem:[#allocation2] sm:$0xff] %v806
        %857 = vst [vmem:[#allocation2 + $0x8] sm:$0xff] %v807
        %858 = vst [vmem:[#allocation2 + $0x10] sm:$0xff] %v808
        %859 = vst [vmem:[#allocation2 + $0x18] sm:$0xff] %v809
        %860 = vst [vmem:[#allocation2 + $0x20] sm:$0xff] %v810
        %861 = vst [vmem:[#allocation2 + $0x28] sm:$0xff] %v811
        %862 = vst [vmem:[#allocation2 + $0x30] sm:$0xff] %v812
        %863 = vst [vmem:[#allocation2 + $0x38] sm:$0xff] %v813
        %864 = vst [vmem:[#allocation2 + $0x40] sm:$0xff] %v814
        %865 = vst [vmem:[#allocation2 + $0x48] sm:$0xff] %v815
        %866 = vst [vmem:[#allocation2 + $0x50] sm:$0xff] %v816
        %867 = vst [vmem:[#allocation2 + $0x58] sm:$0xff] %v817
        %868 = vst [vmem:[#allocation2 + $0x60] sm:$0xff] %v818
        %869 = vst [vmem:[#allocation2 + $0x68] sm:$0xff] %v819
        %870 = vst [vmem:[#allocation2 + $0x70] sm:$0xff] %v820
        %871 = vst [vmem:[#allocation2 + $0x78] sm:$0xff] %v821
        %872 = vst [vmem:[#allocation2 + $0x80] sm:$0xff] %v822
        %873 = vst [vmem:[#allocation2 + $0x88] sm:$0xff] %v823
        %874 = vst [vmem:[#allocation2 + $0x90] sm:$0xff] %v824
        %875 = vst [vmem:[#allocation2 + $0x98] sm:$0xff] %v825
        %876 = vst [vmem:[#allocation2 + $0xa0] sm:$0xff] %v826
        %877 = vst [vmem:[#allocation2 + $0xa8] sm:$0xff] %v827
        %878 = vst [vmem:[#allocation2 + $0xb0] sm:$0xff] %v828
        %879 = vst [vmem:[#allocation2 + $0xb8] sm:$0xff] %v829
        %880 = vst [vmem:[#allocation2 + $0xc0] sm:$0xff] %v830
        %881 = vst [vmem:[#allocation2 + $0xc8] sm:$0xff] %v831
        %882 = vst [vmem:[#allocation2 + $0xd0] sm:$0xff] %v832
        %883 = vst [vmem:[#allocation2 + $0xd8] sm:$0xff] %v833
        %884 = vst [vmem:[#allocation2 + $0xe0] sm:$0xff] %v834
        %885 = vst [vmem:[#allocation2 + $0xe8] sm:$0xff] %v835
        %886 = vst [vmem:[#allocation2 + $0xf0] sm:$0xff] %v836
        %887 = vst [vmem:[#allocation2 + $0xf8] sm:$0xff] %v837
        %888 = vst [vmem:[#allocation2 + $0x100] sm:$0xff] %v838
        %889 = vst [vmem:[#allocation2 + $0x108] sm:$0xff] %v839
        %890 = vst [vmem:[#allocation2 + $0x110] sm:$0xff] %v840
        %891 = vst [vmem:[#allocation2 + $0x118] sm:$0xff] %v841
        %892 = vst [vmem:[#allocation2 + $0x120] sm:$0xff] %v842
        %893 = vst [vmem:[#allocation2 + $0x128] sm:$0xff] %v843
        %894 = vst [vmem:[#allocation2 + $0x130] sm:$0xff] %v844
        %895 = vst [vmem:[#allocation2 + $0x138] sm:$0xff] %v845
        %896 = vst [vmem:[#allocation2 + $0x140] sm:$0xff] %v846
        %897 = vst [vmem:[#allocation2 + $0x148] sm:$0xff] %v847
        %898 = vst [vmem:[#allocation2 + $0x150] sm:$0xff] %v848
        %899 = vst [vmem:[#allocation2 + $0x158] sm:$0xff] %v849
        %900 = vst [vmem:[#allocation2 + $0x160] sm:$0xff] %v850
        %901 = vst [vmem:[#allocation2 + $0x168] sm:$0xff] %v851
        %902 = vst [vmem:[#allocation2 + $0x170] sm:$0xff] %v852
        %903 = vst [vmem:[#allocation2 + $0x178] sm:$0xff] %v853
        %904 = vst [vmem:[#allocation2 + $0x180] sm:$0xff] %v854
        %905 = vst [vmem:[#allocation2 + $0x188] sm:$0xff] %v855
      $region40: #{cnn_forward.2} parent=31 // pred_fallthru
        _
      %p906 = scmp.eq.s32.totalorder %s19, 3
      // Predicated region
      $region41: #{cnn_forward.2} parent=31 // pred_check
        %p907 = pneg %p906
      $region42: #{cnn_forward.2} parent=31 // pred_check_branch
        %909 = sbr.rel (%p907) target = $region44
      $region43: #{cnn_forward.2} parent=31 // pred_region
        %v910 = vld [vmem:[#allocation2] sm:$0xff]
        %v911 = vld [vmem:[#allocation2 + $0x8] sm:$0xff]
        %v912 = vld [vmem:[#allocation2 + $0x10] sm:$0xff]
        %v913 = vld [vmem:[#allocation2 + $0x18] sm:$0xff]
        %v914 = vld [vmem:[#allocation2 + $0x20] sm:$0xff]
        %v915 = vld [vmem:[#allocation2 + $0x28] sm:$0xff]
        %v916 = vld [vmem:[#allocation2 + $0x30] sm:$0xff]
        %v917 = vld [vmem:[#allocation2 + $0x38] sm:$0xff]
        %v918 = vld [vmem:[#allocation2 + $0x40] sm:$0xff]
        %v919 = vld [vmem:[#allocation2 + $0x48] sm:$0xff]
        %v920 = vld [vmem:[#allocation2 + $0x50] sm:$0xff]
        %v921 = vld [vmem:[#allocation2 + $0x58] sm:$0xff]
        %v922 = vld [vmem:[#allocation2 + $0x60] sm:$0xff]
        %v923 = vld [vmem:[#allocation2 + $0x68] sm:$0xff]
        %v924 = vld [vmem:[#allocation2 + $0x70] sm:$0xff]
        %v925 = vld [vmem:[#allocation2 + $0x78] sm:$0xff]
        %v926 = vld [vmem:[#allocation2 + $0x80] sm:$0xff]
        %v927 = vld [vmem:[#allocation2 + $0x88] sm:$0xff]
        %v928 = vld [vmem:[#allocation2 + $0x90] sm:$0xff]
        %v929 = vld [vmem:[#allocation2 + $0x98] sm:$0xff]
        %v930 = vld [vmem:[#allocation2 + $0xa0] sm:$0xff]
        %v931 = vld [vmem:[#allocation2 + $0xa8] sm:$0xff]
        %v932 = vld [vmem:[#allocation2 + $0xb0] sm:$0xff]
        %v933 = vld [vmem:[#allocation2 + $0xb8] sm:$0xff]
        %v934 = vld [vmem:[#allocation2 + $0xc0] sm:$0xff]
        %v935 = vld [vmem:[#allocation2 + $0xc8] sm:$0xff]
        %v936 = vld [vmem:[#allocation2 + $0xd0] sm:$0xff]
        %v937 = vld [vmem:[#allocation2 + $0xd8] sm:$0xff]
        %v938 = vld [vmem:[#allocation2 + $0xe0] sm:$0xff]
        %v939 = vld [vmem:[#allocation2 + $0xe8] sm:$0xff]
        %v940 = vld [vmem:[#allocation2 + $0xf0] sm:$0xff]
        %v941 = vld [vmem:[#allocation2 + $0xf8] sm:$0xff]
        %v942 = vld [vmem:[#allocation2 + $0x100] sm:$0xff]
        %v943 = vld [vmem:[#allocation2 + $0x108] sm:$0xff]
        %v944 = vld [vmem:[#allocation2 + $0x110] sm:$0xff]
        %v945 = vld [vmem:[#allocation2 + $0x118] sm:$0xff]
        %v946 = vld [vmem:[#allocation2 + $0x120] sm:$0xff]
        %v947 = vld [vmem:[#allocation2 + $0x128] sm:$0xff]
        %v948 = vld [vmem:[#allocation2 + $0x130] sm:$0xff]
        %v949 = vld [vmem:[#allocation2 + $0x138] sm:$0xff]
        %v950 = vld [vmem:[#allocation2 + $0x140] sm:$0xff]
        %v951 = vld [vmem:[#allocation2 + $0x148] sm:$0xff]
        %v952 = vld [vmem:[#allocation2 + $0x150] sm:$0xff]
        %v953 = vld [vmem:[#allocation2 + $0x158] sm:$0xff]
        %v954 = vld [vmem:[#allocation2 + $0x160] sm:$0xff]
        %v955 = vld [vmem:[#allocation2 + $0x168] sm:$0xff]
        %v956 = vld [vmem:[#allocation2 + $0x170] sm:$0xff]
        %v957 = vld [vmem:[#allocation2 + $0x178] sm:$0xff]
        %v958 = vld [vmem:[#allocation2 + $0x180] sm:$0xff]
        %v959 = vld [vmem:[#allocation2 + $0x188] sm:$0xff]
        %v960 = vld [vmem:[%s2] sm:$0x1]
        %v962 = vlaneseq
        %v963 = vshrl.u32 %v962, 7
        %v964 = vsub.s32 0, %v963
        %v965 = vrot.slane %v960, %v964
        %v967 = vadd.f32 %v910, %v965
        %v968 = vadd.f32 %v911, %v965
        %v969 = vadd.f32 %v912, %v965
        %v970 = vadd.f32 %v913, %v965
        %v971 = vadd.f32 %v914, %v965
        %v972 = vadd.f32 %v915, %v965
        %v973 = vadd.f32 %v916, %v965
        %v974 = vadd.f32 %v917, %v965
        %v975 = vadd.f32 %v918, %v965
        %v976 = vadd.f32 %v919, %v965
        %v977 = vadd.f32 %v920, %v965
        %v978 = vadd.f32 %v921, %v965
        %v979 = vadd.f32 %v922, %v965
        %v980 = vadd.f32 %v923, %v965
        %v981 = vadd.f32 %v924, %v965
        %v982 = vadd.f32 %v925, %v965
        %v983 = vadd.f32 %v926, %v965
        %v984 = vadd.f32 %v927, %v965
        %v985 = vadd.f32 %v928, %v965
        %v986 = vadd.f32 %v929, %v965
        %v987 = vadd.f32 %v930, %v965
        %v988 = vadd.f32 %v931, %v965
        %v989 = vadd.f32 %v932, %v965
        %v990 = vadd.f32 %v933, %v965
        %v991 = vadd.f32 %v934, %v965
        %v992 = vadd.f32 %v935, %v965
        %v993 = vadd.f32 %v936, %v965
        %v994 = vadd.f32 %v937, %v965
        %v995 = vadd.f32 %v938, %v965
        %v996 = vadd.f32 %v939, %v965
        %v997 = vadd.f32 %v940, %v965
        %v998 = vadd.f32 %v941, %v965
        %v999 = vadd.f32 %v942, %v965
        %v1000 = vadd.f32 %v943, %v965
        %v1001 = vadd.f32 %v944, %v965
        %v1002 = vadd.f32 %v945, %v965
        %v1003 = vadd.f32 %v946, %v965
        %v1004 = vadd.f32 %v947, %v965
        %v1005 = vadd.f32 %v948, %v965
        %v1006 = vadd.f32 %v949, %v965
        %v1007 = vadd.f32 %v950, %v965
        %v1008 = vadd.f32 %v951, %v965
        %v1009 = vadd.f32 %v952, %v965
        %v1010 = vadd.f32 %v953, %v965
        %v1011 = vadd.f32 %v954, %v965
        %v1012 = vadd.f32 %v955, %v965
        %v1013 = vadd.f32 %v956, %v965
        %v1014 = vadd.f32 %v957, %v965
        %v1015 = vadd.f32 %v958, %v965
        %v1016 = vadd.f32 %v959, %v965
        %v1017 = vmax.f32 %v967, 0.0
        %v1018 = vmax.f32 %v968, 0.0
        %v1019 = vmax.f32 %v969, 0.0
        %v1020 = vmax.f32 %v970, 0.0
        %v1021 = vmax.f32 %v971, 0.0
        %v1022 = vmax.f32 %v972, 0.0
        %v1023 = vmax.f32 %v973, 0.0
        %v1024 = vmax.f32 %v974, 0.0
        %v1025 = vmax.f32 %v975, 0.0
        %v1026 = vmax.f32 %v976, 0.0
        %v1027 = vmax.f32 %v977, 0.0
        %v1028 = vmax.f32 %v978, 0.0
        %v1029 = vmax.f32 %v979, 0.0
        %v1030 = vmax.f32 %v980, 0.0
        %v1031 = vmax.f32 %v981, 0.0
        %v1032 = vmax.f32 %v982, 0.0
        %v1033 = vmax.f32 %v983, 0.0
        %v1034 = vmax.f32 %v984, 0.0
        %v1035 = vmax.f32 %v985, 0.0
        %v1036 = vmax.f32 %v986, 0.0
        %v1037 = vmax.f32 %v987, 0.0
        %v1038 = vmax.f32 %v988, 0.0
        %v1039 = vmax.f32 %v989, 0.0
        %v1040 = vmax.f32 %v990, 0.0
        %v1041 = vmax.f32 %v991, 0.0
        %v1042 = vmax.f32 %v992, 0.0
        %v1043 = vmax.f32 %v993, 0.0
        %v1044 = vmax.f32 %v994, 0.0
        %v1045 = vmax.f32 %v995, 0.0
        %v1046 = vmax.f32 %v996, 0.0
        %v1047 = vmax.f32 %v997, 0.0
        %v1048 = vmax.f32 %v998, 0.0
        %v1049 = vmax.f32 %v999, 0.0
        %v1050 = vmax.f32 %v1000, 0.0
        %v1051 = vmax.f32 %v1001, 0.0
        %v1052 = vmax.f32 %v1002, 0.0
        %v1053 = vmax.f32 %v1003, 0.0
        %v1054 = vmax.f32 %v1004, 0.0
        %v1055 = vmax.f32 %v1005, 0.0
        %v1056 = vmax.f32 %v1006, 0.0
        %v1057 = vmax.f32 %v1007, 0.0
        %v1058 = vmax.f32 %v1008, 0.0
        %v1059 = vmax.f32 %v1009, 0.0
        %v1060 = vmax.f32 %v1010, 0.0
        %v1061 = vmax.f32 %v1011, 0.0
        %v1062 = vmax.f32 %v1012, 0.0
        %v1063 = vmax.f32 %v1013, 0.0
        %v1064 = vmax.f32 %v1014, 0.0
        %v1065 = vmax.f32 %v1015, 0.0
        %v1066 = vmax.f32 %v1016, 0.0
        %1067 = vst [vmem:[%s198] sm:$0xff] %v1017
        %1068 = vst [vmem:[%s198 + $0x8] sm:$0xff] %v1018
        %1069 = vst [vmem:[%s198 + $0x10] sm:$0xff] %v1019
        %1070 = vst [vmem:[%s198 + $0x18] sm:$0xff] %v1020
        %1071 = vst [vmem:[%s198 + $0x20] sm:$0xff] %v1021
        %1072 = vst [vmem:[%s198 + $0x28] sm:$0xff] %v1022
        %1073 = vst [vmem:[%s198 + $0x30] sm:$0xff] %v1023
        %1074 = vst [vmem:[%s198 + $0x38] sm:$0xff] %v1024
        %1075 = vst [vmem:[%s198 + $0x40] sm:$0xff] %v1025
        %1076 = vst [vmem:[%s198 + $0x48] sm:$0xff] %v1026
        %1077 = vst [vmem:[%s198 + $0x50] sm:$0xff] %v1027
        %1078 = vst [vmem:[%s198 + $0x58] sm:$0xff] %v1028
        %1079 = vst [vmem:[%s198 + $0x60] sm:$0xff] %v1029
        %1080 = vst [vmem:[%s198 + $0x68] sm:$0xff] %v1030
        %1081 = vst [vmem:[%s198 + $0x70] sm:$0xff] %v1031
        %1082 = vst [vmem:[%s198 + $0x78] sm:$0xff] %v1032
        %1083 = vst [vmem:[%s198 + $0x80] sm:$0xff] %v1033
        %1084 = vst [vmem:[%s198 + $0x88] sm:$0xff] %v1034
        %1085 = vst [vmem:[%s198 + $0x90] sm:$0xff] %v1035
        %1086 = vst [vmem:[%s198 + $0x98] sm:$0xff] %v1036
        %1087 = vst [vmem:[%s198 + $0xa0] sm:$0xff] %v1037
        %1088 = vst [vmem:[%s198 + $0xa8] sm:$0xff] %v1038
        %1089 = vst [vmem:[%s198 + $0xb0] sm:$0xff] %v1039
        %1090 = vst [vmem:[%s198 + $0xb8] sm:$0xff] %v1040
        %1091 = vst [vmem:[%s198 + $0xc0] sm:$0xff] %v1041
        %1092 = vst [vmem:[%s198 + $0xc8] sm:$0xff] %v1042
        %1093 = vst [vmem:[%s198 + $0xd0] sm:$0xff] %v1043
        %1094 = vst [vmem:[%s198 + $0xd8] sm:$0xff] %v1044
        %1095 = vst [vmem:[%s198 + $0xe0] sm:$0xff] %v1045
        %1096 = vst [vmem:[%s198 + $0xe8] sm:$0xff] %v1046
        %1097 = vst [vmem:[%s198 + $0xf0] sm:$0xff] %v1047
        %1098 = vst [vmem:[%s198 + $0xf8] sm:$0xff] %v1048
        %1099 = vst [vmem:[%s198 + $0x100] sm:$0xff] %v1049
        %1100 = vst [vmem:[%s198 + $0x108] sm:$0xff] %v1050
        %1101 = vst [vmem:[%s198 + $0x110] sm:$0xff] %v1051
        %1102 = vst [vmem:[%s198 + $0x118] sm:$0xff] %v1052
        %1103 = vst [vmem:[%s198 + $0x120] sm:$0xff] %v1053
        %1104 = vst [vmem:[%s198 + $0x128] sm:$0xff] %v1054
        %1105 = vst [vmem:[%s198 + $0x130] sm:$0xff] %v1055
        %1106 = vst [vmem:[%s198 + $0x138] sm:$0xff] %v1056
        %1107 = vst [vmem:[%s198 + $0x140] sm:$0xff] %v1057
        %1108 = vst [vmem:[%s198 + $0x148] sm:$0xff] %v1058
        %1109 = vst [vmem:[%s198 + $0x150] sm:$0xff] %v1059
        %1110 = vst [vmem:[%s198 + $0x158] sm:$0xff] %v1060
        %1111 = vst [vmem:[%s198 + $0x160] sm:$0xff] %v1061
        %1112 = vst [vmem:[%s198 + $0x168] sm:$0xff] %v1062
        %1113 = vst [vmem:[%s198 + $0x170] sm:$0xff] %v1063
        %1114 = vst [vmem:[%s198 + $0x178] sm:$0xff] %v1064
        %1115 = vst [vmem:[%s198 + $0x180] sm:$0xff] %v1065
        %1116 = vst [vmem:[%s198 + $0x188] sm:$0xff] %v1066
      $region44: #{cnn_forward.2} parent=31 // pred_fallthru
        _
      %s1117 = smul.u32 50, %s18
      %p1118 = scmp.lt.s32.totalorder %s1117, 49
      %s1119 = scalar_select %p1118, %s1117, 49
      %s1120 = smul.addr %s1119, 8
      %s1121 = scalar_lea.vmem %s3, %s1120
      // Predicated region
      $region45: #{cnn_forward.2} parent=31 // pred_check
        %p1122 = pneg %p114
      $region46: #{cnn_forward.2} parent=31 // pred_check_branch
        %1124 = sbr.rel (%p1122) target = $region48
      $region47: #{cnn_forward.2} parent=31 // pred_region
        %s1125 = smul.u32 50, %s18
      $region48: #{cnn_forward.2} parent=31 // pred_fallthru
        _
      // Predicated region
      $region49: #{cnn_forward.2} parent=31 // pred_check
        %p1126 = pneg %p114
      $region50: #{cnn_forward.2} parent=31 // pred_check_branch
        %1128 = sbr.rel (%p1126) target = $region52
      $region51: #{cnn_forward.2} parent=31 // pred_region
        %s1129 = smul.u32 50, %s18
        %p1130 = scmp.lt.s32.totalorder %s1129, 49
        %s1131 = scalar_select %p1130, %s1129, 49
        %s1132 = smul.addr %s1131, 8
        %s1133 = scalar_lea.vmem %s3, %s1132
      $region52: #{cnn_forward.2} parent=31 // pred_fallthru
        _
    $region32: #{cnn_forward.2} parent=5 // pred_fallthru
      _
    %p1134 = scmp.le.s32.totalorder 2, %s9
    // Predicated region
    $region53: #{cnn_forward.2} parent=5 // pred_check
      %p1135 = pneg %p1134
    $region54: #{cnn_forward.2} parent=5 // pred_check_branch
      %1137 = sbr.rel (%p1135) target = $region56
    $region55: #{cnn_forward.2} parent=5 // pred_region
      %s1138 = ssub.s32 %s9, 2
    $region56: #{cnn_forward.2} parent=5 // pred_fallthru
      _
  $region6: #{cnn_forward.2} parent=0 // loop_footer
    %s13 = sadd.s32 1, %s9
  $region7: #{cnn_forward.2} parent=0 // loop_footer_branch
    %8 = sbr.rel target = $region3
  $region8: #{cnn_forward.2} parent=0 // loop_exit
    _

// kernel: cnn_forward.3
$region0: #{cnn_forward.3}
  #allocation0 [shape = 'u32[]', space=smem, size = 0x4, offset = 0x4, fixed_abs, tag = 'smem constant byte address 0x4 - core index']
  #allocation1 [shape = 'u32[144,128]{1,0:T(1,128)}', space=vmem, size = 0x12000, scoped, tag = 'internal scratch']
  #allocation2 [shape = 'f32[400,128]{1,0:T(8,128)}', space=vmem, size = 0x32000, scoped, tag = 'scratch operand']
  %s0 = inlined_call_operand.vmem [shape: bf16[4,400,512], index: 0, kind: input, shape index: {}]
  %s1 = inlined_call_operand.vmem [shape: bf16[512,128], index: 1, kind: input, shape index: {}]
  %s2 = inlined_call_operand.vmem [shape: f32[1,128], index: 2, kind: input, shape index: {}]
  %s3 = inlined_call_operand.vmem [shape: bf16[6272,128], index: 3, kind: input, shape index: {}]
  %s4 = inlined_call_operand.vmem [shape: f32[1,128], index: 4, kind: input, shape index: {}]
  %s5 = inlined_call_operand.vmem [shape: f32[400,128], index: 5, kind: output, shape index: {0}]
  %s6 = inlined_call_operand.vmem [shape: f32[8,128], index: 6, kind: output, shape index: {1}]
  %7 = xla_tuple %s5, %s6
  %s8 = sld [smem:[#allocation0]]
  $region73: #{cnn_forward.3} parent=0
    _
  %s10 = ssub.s32 1, %s8
  %s11 = scalar_select 0, %s10, %s8
  loop: start=0, step=1, limit=6
  $region2: #{cnn_forward.3} parent=0 // loop_pre_header
    _
  $region3: #{cnn_forward.3} parent=0 // loop_header
    %s13 = sphi 0, %s17
    %p14 = scmp.ge.s32.totalorder %s13, 6
    %s23 = sphi 0, %s25
    %s26 = sphi 0, %s23
    %s27 = sphi 0, %s26
    %s43 = sphi 0, %s27
    %s47 = sphi 0, %s47
    %s49 = sphi 0, %s47
    %s50 = sphi 0, %s49
    %s64 = sphi 0, %s50
    %s68 = sphi 0, %s68
    %s70 = sphi 0, %s68
    %s71 = sphi 0, %s70
    %s85 = sphi 0, %s71
    %s89 = sphi 0, %s89
    %s91 = sphi 0, %s89
    %s92 = sphi 0, %s91
    %s106 = sphi 0, %s92
    %s110 = sphi 0, %s110
    %s112 = sphi 0, %s110
    %s113 = sphi 0, %s112
    %s127 = sphi 0, %s113
    %s131 = sphi 0, %s131
    %s133 = sphi 0, %s131
    %s134 = sphi 0, %s133
    %s148 = sphi 0, %s134
    %s152 = sphi 0, %s152
    %s154 = sphi 0, %s152
    %s155 = sphi 0, %s154
    %s169 = sphi 0, %s155
  $region4: #{cnn_forward.3} parent=0 // loop_header_branch
    %16 = sbr.rel (%p14) target = $region8
  $region5: #{cnn_forward.3} parent=0 // loop_body
    %s18 = ssub.s32 %s13, 1
    %s19 = ssub.s32 %s13, 2
    %s20 = sadd.s32 %s13, 1
    %s21 = ssub.s32 %s13, %s20
    %p22 = scmp.eq.s32.totalorder %s21, 0
    %s24 = sadd.s32 %s23, 1
    %s25 = scalar_select %p22, %s23, %s24
    %p28 = pneg %p22
    %p29 = scmp.eq.s32.totalorder %s13, 3
    %p30 = por %p28, %p29
    %p31 = scmp.ne.s32.totalorder %s23, %s26
    %p32 = scmp.eq.s32.totalorder %s13, 0
    %p33 = por %p31, %p32
    %p34 = scmp.ne.s32.totalorder %s23, %s26
    %p35 = scmp.eq.s32.totalorder %s18, 3
    %p36 = por %p34, %p35
    %p37 = scmp.ne.s32.totalorder %s26, %s27
    %p38 = scmp.eq.s32.totalorder %s18, 0
    %p39 = por %p37, %p38
    %p40 = scmp.ne.s32.totalorder %s26, %s27
    %p41 = scmp.eq.s32.totalorder %s19, 3
    %p42 = por %p40, %p41
    %p44 = scmp.ne.s32.totalorder %s27, %s43
    %p45 = scmp.eq.s32.totalorder %s19, 0
    %p46 = por %p44, %p45
    %s48 = sadd.s32 %s47, 1
    %p51 = scmp.eq.s32.totalorder %s13, 3
    %p52 = scmp.ne.s32.totalorder %s47, %s49
    %p53 = scmp.eq.s32.totalorder %s13, 0
    %p54 = por %p52, %p53
    %p55 = scmp.ne.s32.totalorder %s47, %s49
    %p56 = scmp.eq.s32.totalorder %s18, 3
    %p57 = por %p55, %p56
    %p58 = scmp.ne.s32.totalorder %s49, %s50
    %p59 = scmp.eq.s32.totalorder %s18, 0
    %p60 = por %p58, %p59
    %p61 = scmp.ne.s32.totalorder %s49, %s50
    %p62 = scmp.eq.s32.totalorder %s19, 3
    %p63 = por %p61, %p62
    %p65 = scmp.ne.s32.totalorder %s50, %s64
    %p66 = scmp.eq.s32.totalorder %s19, 0
    %p67 = por %p65, %p66
    %s69 = sadd.s32 %s68, 1
    %p72 = scmp.eq.s32.totalorder %s13, 3
    %p73 = scmp.ne.s32.totalorder %s68, %s70
    %p74 = scmp.eq.s32.totalorder %s13, 0
    %p75 = por %p73, %p74
    %p76 = scmp.ne.s32.totalorder %s68, %s70
    %p77 = scmp.eq.s32.totalorder %s18, 3
    %p78 = por %p76, %p77
    %p79 = scmp.ne.s32.totalorder %s70, %s71
    %p80 = scmp.eq.s32.totalorder %s18, 0
    %p81 = por %p79, %p80
    %p82 = scmp.ne.s32.totalorder %s70, %s71
    %p83 = scmp.eq.s32.totalorder %s19, 3
    %p84 = por %p82, %p83
    %p86 = scmp.ne.s32.totalorder %s71, %s85
    %p87 = scmp.eq.s32.totalorder %s19, 0
    %p88 = por %p86, %p87
    %s90 = sadd.s32 %s89, 1
    %p93 = scmp.eq.s32.totalorder %s13, 3
    %p94 = scmp.ne.s32.totalorder %s89, %s91
    %p95 = scmp.eq.s32.totalorder %s13, 0
    %p96 = por %p94, %p95
    %p97 = scmp.ne.s32.totalorder %s89, %s91
    %p98 = scmp.eq.s32.totalorder %s18, 3
    %p99 = por %p97, %p98
    %p100 = scmp.ne.s32.totalorder %s91, %s92
    %p101 = scmp.eq.s32.totalorder %s18, 0
    %p102 = por %p100, %p101
    %p103 = scmp.ne.s32.totalorder %s91, %s92
    %p104 = scmp.eq.s32.totalorder %s19, 3
    %p105 = por %p103, %p104
    %p107 = scmp.ne.s32.totalorder %s92, %s106
    %p108 = scmp.eq.s32.totalorder %s19, 0
    %p109 = por %p107, %p108
    %s111 = sadd.s32 %s110, 1
    %p114 = scmp.eq.s32.totalorder %s13, 3
    %p115 = scmp.ne.s32.totalorder %s110, %s112
    %p116 = scmp.eq.s32.totalorder %s13, 0
    %p117 = por %p115, %p116
    %p118 = scmp.ne.s32.totalorder %s110, %s112
    %p119 = scmp.eq.s32.totalorder %s18, 3
    %p120 = por %p118, %p119
    %p121 = scmp.ne.s32.totalorder %s112, %s113
    %p122 = scmp.eq.s32.totalorder %s18, 0
    %p123 = por %p121, %p122
    %p124 = scmp.ne.s32.totalorder %s112, %s113
    %p125 = scmp.eq.s32.totalorder %s19, 3
    %p126 = por %p124, %p125
    %p128 = scmp.ne.s32.totalorder %s113, %s127
    %p129 = scmp.eq.s32.totalorder %s19, 0
    %p130 = por %p128, %p129
    %s132 = sadd.s32 %s131, 1
    %p135 = scmp.eq.s32.totalorder %s13, 3
    %p136 = scmp.ne.s32.totalorder %s131, %s133
    %p137 = scmp.eq.s32.totalorder %s13, 0
    %p138 = por %p136, %p137
    %p139 = scmp.ne.s32.totalorder %s131, %s133
    %p140 = scmp.eq.s32.totalorder %s18, 3
    %p141 = por %p139, %p140
    %p142 = scmp.ne.s32.totalorder %s133, %s134
    %p143 = scmp.eq.s32.totalorder %s18, 0
    %p144 = por %p142, %p143
    %p145 = scmp.ne.s32.totalorder %s133, %s134
    %p146 = scmp.eq.s32.totalorder %s19, 3
    %p147 = por %p145, %p146
    %p149 = scmp.ne.s32.totalorder %s134, %s148
    %p150 = scmp.eq.s32.totalorder %s19, 0
    %p151 = por %p149, %p150
    %s153 = sadd.s32 %s152, 1
    %p156 = scmp.eq.s32.totalorder %s13, 3
    %p157 = scmp.ne.s32.totalorder %s152, %s154
    %p158 = scmp.eq.s32.totalorder %s13, 0
    %p159 = por %p157, %p158
    %p160 = scmp.ne.s32.totalorder %s152, %s154
    %p161 = scmp.eq.s32.totalorder %s18, 3
    %p162 = por %p160, %p161
    %p163 = scmp.ne.s32.totalorder %s154, %s155
    %p164 = scmp.eq.s32.totalorder %s18, 0
    %p165 = por %p163, %p164
    %p166 = scmp.ne.s32.totalorder %s154, %s155
    %p167 = scmp.eq.s32.totalorder %s19, 3
    %p168 = por %p166, %p167
    %p170 = scmp.ne.s32.totalorder %s155, %s169
    %p171 = scmp.eq.s32.totalorder %s19, 0
    %p172 = por %p170, %p171
    %p173 = scmp.le.s32.totalorder 1, %s13
    %p174 = scmp.lt.s32.totalorder %s13, 5
    %p175 = pnand %p173, %p174
    %p176 = pneg %p175
    // Predicated region
    $region9: #{cnn_forward.3} parent=5 // pred_check
      _
    $region10: #{cnn_forward.3} parent=5 // pred_check_branch
      %178 = sbr.rel (%p175) target = $region12
    $region11: #{cnn_forward.3} parent=5 // pred_region
      %s179 = ssub.s32 %s13, 1
      // Predicated region
      $region13: #{cnn_forward.3} parent=11 // pred_check
        %p180 = pneg %p60
      $region14: #{cnn_forward.3} parent=11 // pred_check_branch
        %182 = sbr.rel (%p180) target = $region16
      $region15: #{cnn_forward.3} parent=11 // pred_region
        _
      $region16: #{cnn_forward.3} parent=11 // pred_fallthru
        _
      // Predicated region
      $region17: #{cnn_forward.3} parent=11 // pred_check
        %p183 = pneg %p81
      $region18: #{cnn_forward.3} parent=11 // pred_check_branch
        %185 = sbr.rel (%p183) target = $region20
      $region19: #{cnn_forward.3} parent=11 // pred_region
        _
      $region20: #{cnn_forward.3} parent=11 // pred_fallthru
        _
      // Predicated region
      $region21: #{cnn_forward.3} parent=11 // pred_check
        %p186 = pneg %p102
      $region22: #{cnn_forward.3} parent=11 // pred_check_branch
        %188 = sbr.rel (%p186) target = $region24
      $region23: #{cnn_forward.3} parent=11 // pred_region
        _
      $region24: #{cnn_forward.3} parent=11 // pred_fallthru
        _
      // Predicated region
      $region25: #{cnn_forward.3} parent=11 // pred_check
        %p189 = pneg %p123
      $region26: #{cnn_forward.3} parent=11 // pred_check_branch
        %191 = sbr.rel (%p189) target = $region28
      $region27: #{cnn_forward.3} parent=11 // pred_region
        _
      $region28: #{cnn_forward.3} parent=11 // pred_fallthru
        _
    $region12: #{cnn_forward.3} parent=5 // pred_fallthru
      _
    %p192 = scmp.lt.s32.totalorder %s13, 4
    // Predicated region
    $region29: #{cnn_forward.3} parent=5 // pred_check
      %p193 = pneg %p192
    $region30: #{cnn_forward.3} parent=5 // pred_check_branch
      %195 = sbr.rel (%p193) target = $region32
    $region31: #{cnn_forward.3} parent=5 // pred_region
      // Predicated region
      $region33: #{cnn_forward.3} parent=31 // pred_check
        %p196 = pneg %p33
      $region34: #{cnn_forward.3} parent=31 // pred_check_branch
        %198 = sbr.rel (%p196) target = $region36
      $region35: #{cnn_forward.3} parent=31 // pred_region
        %p199 = scmp.lt.s32.totalorder %s13, 3
        %s200 = scalar_select %p199, %s13, 3
        %s201 = smul.addr %s200, 200
        %s202 = smul.addr %s201, 4
        %s203 = scalar_lea.vmem %s0, %s202
      $region36: #{cnn_forward.3} parent=31 // pred_fallthru
        _
    $region32: #{cnn_forward.3} parent=5 // pred_fallthru
      _
    %p204 = scmp.le.s32.totalorder 1, %s13
    %p205 = scmp.lt.s32.totalorder %s13, 5
    %p206 = pnand %p204, %p205
    %p207 = pneg %p206
    // Predicated region
    $region37: #{cnn_forward.3} parent=5 // pred_check
      _
    $region38: #{cnn_forward.3} parent=5 // pred_check_branch
      %209 = sbr.rel (%p206) target = $region40
    $region39: #{cnn_forward.3} parent=5 // pred_region
      %s210 = ssub.s32 %s13, 1
      %p211 = scmp.lt.s32.totalorder %s18, 3
      %s212 = scalar_select %p211, %s18, 3
      %s213 = smul.addr %s212, 200
      %s214 = smul.addr %s213, 4
      %s215 = scalar_lea.vmem %s0, %s214
      %p216 = pneg %p39
      %p217 = pneg %p36
      %p218 = pneg %p60
      %p219 = pneg %p57
      %p220 = pneg %p81
      %p221 = pneg %p78
      %p222 = pneg %p102
      %p223 = pneg %p99
      %p224 = pneg %p123
      %p225 = pneg %p120
      %p226 = pneg %p144
      %p227 = pneg %p141
      %p228 = pneg %p165
      %p229 = pneg %p162
      %p230 = scmp.lt.s32.totalorder %s18, 3
      %s231 = scalar_select %p230, %s18, 3
      %s232 = smul.addr %s231, 200
      %s233 = smul.addr %s232, 4
      %s234 = scalar_lea.vmem %s0, %s233
      %v236 = vld [vmem:[%s234] sm:$0xff]
      %v237 = vld [vmem:[%s234 + $0x8] sm:$0xff]
      %v238 = vld [vmem:[%s234 + $0x10] sm:$0xff]
      %v239 = vld [vmem:[%s234 + $0x18] sm:$0xff]
      %v240 = vld [vmem:[%s234 + $0x20] sm:$0xff]
      %v241 = vld [vmem:[%s234 + $0x28] sm:$0xff]
      %v242 = vld [vmem:[%s234 + $0x30] sm:$0xff]
      %v243 = vld [vmem:[%s234 + $0x38] sm:$0xff]
      %v244 = vld [vmem:[%s234 + $0x40] sm:$0xff]
      %v245 = vld [vmem:[%s234 + $0x48] sm:$0xff]
      %v246 = vld [vmem:[%s234 + $0x50] sm:$0xff]
      %v247 = vld [vmem:[%s234 + $0x58] sm:$0xff]
      %v248 = vld [vmem:[%s234 + $0x60] sm:$0xff]
      %v249 = vld [vmem:[%s234 + $0x68] sm:$0xff]
      %v250 = vld [vmem:[%s234 + $0x70] sm:$0xff]
      %v251 = vld [vmem:[%s234 + $0x78] sm:$0xff]
      %v252 = vld [vmem:[%s234 + $0x80] sm:$0xff]
      %v253 = vld [vmem:[%s234 + $0x88] sm:$0xff]
      %v254 = vld [vmem:[%s234 + $0x90] sm:$0xff]
      %v255 = vld [vmem:[%s234 + $0x98] sm:$0xff]
      %v256 = vld [vmem:[%s234 + $0xa0] sm:$0xff]
      %v257 = vld [vmem:[%s234 + $0xa8] sm:$0xff]
      %v258 = vld [vmem:[%s234 + $0xb0] sm:$0xff]
      %v259 = vld [vmem:[%s234 + $0xb8] sm:$0xff]
      %v260 = vld [vmem:[%s234 + $0xc0] sm:$0xff]
      %v261 = vld [vmem:[%s234 + $0xc8] sm:$0xff]
      %v262 = vld [vmem:[%s234 + $0xd0] sm:$0xff]
      %v263 = vld [vmem:[%s234 + $0xd8] sm:$0xff]
      %v264 = vld [vmem:[%s234 + $0xe0] sm:$0xff]
      %v265 = vld [vmem:[%s234 + $0xe8] sm:$0xff]
      %v266 = vld [vmem:[%s234 + $0xf0] sm:$0xff]
      %v267 = vld [vmem:[%s234 + $0xf8] sm:$0xff]
      %v268 = vld [vmem:[%s234 + $0x100] sm:$0xff]
      %v269 = vld [vmem:[%s234 + $0x108] sm:$0xff]
      %v270 = vld [vmem:[%s234 + $0x110] sm:$0xff]
      %v271 = vld [vmem:[%s234 + $0x118] sm:$0xff]
      %v272 = vld [vmem:[%s234 + $0x120] sm:$0xff]
      %v273 = vld [vmem:[%s234 + $0x128] sm:$0xff]
      %v274 = vld [vmem:[%s234 + $0x130] sm:$0xff]
      %v275 = vld [vmem:[%s234 + $0x138] sm:$0xff]
      %v276 = vld [vmem:[%s234 + $0x140] sm:$0xff]
      %v277 = vld [vmem:[%s234 + $0x148] sm:$0xff]
      %v278 = vld [vmem:[%s234 + $0x150] sm:$0xff]
      %v279 = vld [vmem:[%s234 + $0x158] sm:$0xff]
      %v280 = vld [vmem:[%s234 + $0x160] sm:$0xff]
      %v281 = vld [vmem:[%s234 + $0x168] sm:$0xff]
      %v282 = vld [vmem:[%s234 + $0x170] sm:$0xff]
      %v283 = vld [vmem:[%s234 + $0x178] sm:$0xff]
      %v284 = vld [vmem:[%s234 + $0x180] sm:$0xff]
      %v285 = vld [vmem:[%s234 + $0x188] sm:$0xff]
      %v286 = vld [vmem:[%s234 + $0x190] sm:$0xff]
      %v287 = vld [vmem:[%s234 + $0x198] sm:$0xff]
      %v288 = vld [vmem:[%s234 + $0x1a0] sm:$0xff]
      %v289 = vld [vmem:[%s234 + $0x1a8] sm:$0xff]
      %v290 = vld [vmem:[%s234 + $0x1b0] sm:$0xff]
      %v291 = vld [vmem:[%s234 + $0x1b8] sm:$0xff]
      %v292 = vld [vmem:[%s234 + $0x1c0] sm:$0xff]
      %v293 = vld [vmem:[%s234 + $0x1c8] sm:$0xff]
      %v294 = vld [vmem:[%s234 + $0x1d0] sm:$0xff]
      %v295 = vld [vmem:[%s234 + $0x1d8] sm:$0xff]
      %v296 = vld [vmem:[%s234 + $0x1e0] sm:$0xff]
      %v297 = vld [vmem:[%s234 + $0x1e8] sm:$0xff]
      %v298 = vld [vmem:[%s234 + $0x1f0] sm:$0xff]
      %v299 = vld [vmem:[%s234 + $0x1f8] sm:$0xff]
      %v300 = vld [vmem:[%s234 + $0x200] sm:$0xff]
      %v301 = vld [vmem:[%s234 + $0x208] sm:$0xff]
      %v302 = vld [vmem:[%s234 + $0x210] sm:$0xff]
      %v303 = vld [vmem:[%s234 + $0x218] sm:$0xff]
      %v304 = vld [vmem:[%s234 + $0x220] sm:$0xff]
      %v305 = vld [vmem:[%s234 + $0x228] sm:$0xff]
      %v306 = vld [vmem:[%s234 + $0x230] sm:$0xff]
      %v307 = vld [vmem:[%s234 + $0x238] sm:$0xff]
      %v308 = vld [vmem:[%s234 + $0x240] sm:$0xff]
      %v309 = vld [vmem:[%s234 + $0x248] sm:$0xff]
      %v310 = vld [vmem:[%s234 + $0x250] sm:$0xff]
      %v311 = vld [vmem:[%s234 + $0x258] sm:$0xff]
      %v312 = vld [vmem:[%s234 + $0x260] sm:$0xff]
      %v313 = vld [vmem:[%s234 + $0x268] sm:$0xff]
      %v314 = vld [vmem:[%s234 + $0x270] sm:$0xff]
      %v315 = vld [vmem:[%s234 + $0x278] sm:$0xff]
      %v316 = vld [vmem:[%s234 + $0x280] sm:$0xff]
      %v317 = vld [vmem:[%s234 + $0x288] sm:$0xff]
      %v318 = vld [vmem:[%s234 + $0x290] sm:$0xff]
      %v319 = vld [vmem:[%s234 + $0x298] sm:$0xff]
      %v320 = vld [vmem:[%s234 + $0x2a0] sm:$0xff]
      %v321 = vld [vmem:[%s234 + $0x2a8] sm:$0xff]
      %v322 = vld [vmem:[%s234 + $0x2b0] sm:$0xff]
      %v323 = vld [vmem:[%s234 + $0x2b8] sm:$0xff]
      %v324 = vld [vmem:[%s234 + $0x2c0] sm:$0xff]
      %v325 = vld [vmem:[%s234 + $0x2c8] sm:$0xff]
      %v326 = vld [vmem:[%s234 + $0x2d0] sm:$0xff]
      %v327 = vld [vmem:[%s234 + $0x2d8] sm:$0xff]
      %v328 = vld [vmem:[%s234 + $0x2e0] sm:$0xff]
      %v329 = vld [vmem:[%s234 + $0x2e8] sm:$0xff]
      %v330 = vld [vmem:[%s234 + $0x2f0] sm:$0xff]
      %v331 = vld [vmem:[%s234 + $0x2f8] sm:$0xff]
      %v332 = vld [vmem:[%s234 + $0x300] sm:$0xff]
      %v333 = vld [vmem:[%s234 + $0x308] sm:$0xff]
      %v334 = vld [vmem:[%s234 + $0x310] sm:$0xff]
      %v335 = vld [vmem:[%s234 + $0x318] sm:$0xff]
      %v336 = vld [vmem:[%s1] sm:$0xf]
      %v337 = vld [vmem:[%s1 + $0x4] sm:$0xf]
      %v338 = vld [vmem:[%s1 + $0x8] sm:$0xf]
      %v339 = vld [vmem:[%s1 + $0xc] sm:$0xf]
      %v340 = vld [vmem:[%s1 + $0x10] sm:$0xf]
      %v341 = vld [vmem:[%s1 + $0x14] sm:$0xf]
      %v342 = vld [vmem:[%s1 + $0x18] sm:$0xf]
      %v343 = vld [vmem:[%s1 + $0x1c] sm:$0xf]
      %v344 = vld [vmem:[%s1 + $0x20] sm:$0xf]
      %v345 = vld [vmem:[%s1 + $0x24] sm:$0xf]
      %v346 = vld [vmem:[%s1 + $0x28] sm:$0xf]
      %v347 = vld [vmem:[%s1 + $0x2c] sm:$0xf]
      %v348 = vld [vmem:[%s1 + $0x30] sm:$0xf]
      %v349 = vld [vmem:[%s1 + $0x34] sm:$0xf]
      %v350 = vld [vmem:[%s1 + $0x38] sm:$0xf]
      %v351 = vld [vmem:[%s1 + $0x3c] sm:$0xf]
      %v352 = vld [vmem:[%s1 + $0x40] sm:$0xf]
      %v353 = vld [vmem:[%s1 + $0x44] sm:$0xf]
      %v354 = vld [vmem:[%s1 + $0x48] sm:$0xf]
      %v355 = vld [vmem:[%s1 + $0x4c] sm:$0xf]
      %v356 = vld [vmem:[%s1 + $0x50] sm:$0xf]
      %v357 = vld [vmem:[%s1 + $0x54] sm:$0xf]
      %v358 = vld [vmem:[%s1 + $0x58] sm:$0xf]
      %v359 = vld [vmem:[%s1 + $0x5c] sm:$0xf]
      %v360 = vld [vmem:[%s1 + $0x60] sm:$0xf]
      %v361 = vld [vmem:[%s1 + $0x64] sm:$0xf]
      %v362 = vld [vmem:[%s1 + $0x68] sm:$0xf]
      %v363 = vld [vmem:[%s1 + $0x6c] sm:$0xf]
      %v364 = vld [vmem:[%s1 + $0x70] sm:$0xf]
      %v365 = vld [vmem:[%s1 + $0x74] sm:$0xf]
      %v366 = vld [vmem:[%s1 + $0x78] sm:$0xf]
      %v367 = vld [vmem:[%s1 + $0x7c] sm:$0xf]
      %v368 = vld [vmem:[%s1 + $0x80] sm:$0xf]
      %v369 = vld [vmem:[%s1 + $0x84] sm:$0xf]
      %v370 = vld [vmem:[%s1 + $0x88] sm:$0xf]
      %v371 = vld [vmem:[%s1 + $0x8c] sm:$0xf]
      %v372 = vld [vmem:[%s1 + $0x90] sm:$0xf]
      %v373 = vld [vmem:[%s1 + $0x94] sm:$0xf]
      %v374 = vld [vmem:[%s1 + $0x98] sm:$0xf]
      %v375 = vld [vmem:[%s1 + $0x9c] sm:$0xf]
      %v376 = vld [vmem:[%s1 + $0xa0] sm:$0xf]
      %v377 = vld [vmem:[%s1 + $0xa4] sm:$0xf]
      %v378 = vld [vmem:[%s1 + $0xa8] sm:$0xf]
      %v379 = vld [vmem:[%s1 + $0xac] sm:$0xf]
      %v380 = vld [vmem:[%s1 + $0xb0] sm:$0xf]
      %v381 = vld [vmem:[%s1 + $0xb4] sm:$0xf]
      %v382 = vld [vmem:[%s1 + $0xb8] sm:$0xf]
      %v383 = vld [vmem:[%s1 + $0xbc] sm:$0xf]
      %v384 = vld [vmem:[%s1 + $0xc0] sm:$0xf]
      %v385 = vld [vmem:[%s1 + $0xc4] sm:$0xf]
      %v386 = vld [vmem:[%s1 + $0xc8] sm:$0xf]
      %v387 = vld [vmem:[%s1 + $0xcc] sm:$0xf]
      %v388 = vld [vmem:[%s1 + $0xd0] sm:$0xf]
      %v389 = vld [vmem:[%s1 + $0xd4] sm:$0xf]
      %v390 = vld [vmem:[%s1 + $0xd8] sm:$0xf]
      %v391 = vld [vmem:[%s1 + $0xdc] sm:$0xf]
      %v392 = vld [vmem:[%s1 + $0xe0] sm:$0xf]
      %v393 = vld [vmem:[%s1 + $0xe4] sm:$0xf]
      %v394 = vld [vmem:[%s1 + $0xe8] sm:$0xf]
      %v395 = vld [vmem:[%s1 + $0xec] sm:$0xf]
      %v396 = vld [vmem:[%s1 + $0xf0] sm:$0xf]
      %v397 = vld [vmem:[%s1 + $0xf4] sm:$0xf]
      %v398 = vld [vmem:[%s1 + $0xf8] sm:$0xf]
      %v399 = vld [vmem:[%s1 + $0xfc] sm:$0xf]
      %v500 = vunpack.c.l.b16 %v236
      %v501 = vunpack.c.h.b16 %v236
      %v502 = vunpack.c.l.b16 %v237
      %v503 = vunpack.c.h.b16 %v237
      %v504 = vunpack.c.l.b16 %v238
      %v505 = vunpack.c.h.b16 %v238
      %v506 = vunpack.c.l.b16 %v239
      %v507 = vunpack.c.h.b16 %v239
      %v508 = vunpack.c.l.b16 %v240
      %v509 = vunpack.c.h.b16 %v240
      %v510 = vunpack.c.l.b16 %v241
      %v511 = vunpack.c.h.b16 %v241
      %v512 = vunpack.c.l.b16 %v242
      %v513 = vunpack.c.h.b16 %v242
      %v514 = vunpack.c.l.b16 %v243
      %v515 = vunpack.c.h.b16 %v243
      %v516 = vunpack.c.l.b16 %v244
      %v517 = vunpack.c.h.b16 %v244
      %v518 = vunpack.c.l.b16 %v245
      %v519 = vunpack.c.h.b16 %v245
      %v520 = vunpack.c.l.b16 %v246
      %v521 = vunpack.c.h.b16 %v246
      %v522 = vunpack.c.l.b16 %v247
      %v523 = vunpack.c.h.b16 %v247
      %v524 = vunpack.c.l.b16 %v248
      %v525 = vunpack.c.h.b16 %v248
      %v526 = vunpack.c.l.b16 %v249
      %v527 = vunpack.c.h.b16 %v249
      %v528 = vunpack.c.l.b16 %v250
      %v529 = vunpack.c.h.b16 %v250
      %v530 = vunpack.c.l.b16 %v251
      %v531 = vunpack.c.h.b16 %v251
      %v532 = vunpack.c.l.b16 %v252
      %v533 = vunpack.c.h.b16 %v252
      %v534 = vunpack.c.l.b16 %v253
      %v535 = vunpack.c.h.b16 %v253
      %v536 = vunpack.c.l.b16 %v254
      %v537 = vunpack.c.h.b16 %v254
      %v538 = vunpack.c.l.b16 %v255
      %v539 = vunpack.c.h.b16 %v255
      %v540 = vunpack.c.l.b16 %v256
      %v541 = vunpack.c.h.b16 %v256
      %v542 = vunpack.c.l.b16 %v257
      %v543 = vunpack.c.h.b16 %v257
      %v544 = vunpack.c.l.b16 %v258
      %v545 = vunpack.c.h.b16 %v258
      %v546 = vunpack.c.l.b16 %v259
      %v547 = vunpack.c.h.b16 %v259
      %v548 = vunpack.c.l.b16 %v260
      %v549 = vunpack.c.h.b16 %v260
      %v550 = vunpack.c.l.b16 %v261
      %v551 = vunpack.c.h.b16 %v261
      %v552 = vunpack.c.l.b16 %v262
      %v553 = vunpack.c.h.b16 %v262
      %v554 = vunpack.c.l.b16 %v263
      %v555 = vunpack.c.h.b16 %v263
      %v556 = vunpack.c.l.b16 %v264
      %v557 = vunpack.c.h.b16 %v264
      %v558 = vunpack.c.l.b16 %v265
      %v559 = vunpack.c.h.b16 %v265
      %v560 = vunpack.c.l.b16 %v266
      %v561 = vunpack.c.h.b16 %v266
      %v562 = vunpack.c.l.b16 %v267
      %v563 = vunpack.c.h.b16 %v267
      %v564 = vunpack.c.l.b16 %v268
      %v565 = vunpack.c.h.b16 %v268
      %v566 = vunpack.c.l.b16 %v269
      %v567 = vunpack.c.h.b16 %v269
      %v568 = vunpack.c.l.b16 %v270
      %v569 = vunpack.c.h.b16 %v270
      %v570 = vunpack.c.l.b16 %v271
      %v571 = vunpack.c.h.b16 %v271
      %v572 = vunpack.c.l.b16 %v272
      %v573 = vunpack.c.h.b16 %v272
      %v574 = vunpack.c.l.b16 %v273
      %v575 = vunpack.c.h.b16 %v273
      %v576 = vunpack.c.l.b16 %v274
      %v577 = vunpack.c.h.b16 %v274
      %v578 = vunpack.c.l.b16 %v275
      %v579 = vunpack.c.h.b16 %v275
      %v580 = vunpack.c.l.b16 %v276
      %v581 = vunpack.c.h.b16 %v276
      %v582 = vunpack.c.l.b16 %v277
      %v583 = vunpack.c.h.b16 %v277
      %v584 = vunpack.c.l.b16 %v278
      %v585 = vunpack.c.h.b16 %v278
      %v586 = vunpack.c.l.b16 %v279
      %v587 = vunpack.c.h.b16 %v279
      %v588 = vunpack.c.l.b16 %v280
      %v589 = vunpack.c.h.b16 %v280
      %v590 = vunpack.c.l.b16 %v281
      %v591 = vunpack.c.h.b16 %v281
      %v592 = vunpack.c.l.b16 %v282
      %v593 = vunpack.c.h.b16 %v282
      %v594 = vunpack.c.l.b16 %v283
      %v595 = vunpack.c.h.b16 %v283
      %v596 = vunpack.c.l.b16 %v284
      %v597 = vunpack.c.h.b16 %v284
      %v598 = vunpack.c.l.b16 %v285
      %v599 = vunpack.c.h.b16 %v285
      %v600 = vunpack.c.l.b16 %v286
      %v601 = vunpack.c.h.b16 %v286
      %v602 = vunpack.c.l.b16 %v287
      %v603 = vunpack.c.h.b16 %v287
      %v604 = vunpack.c.l.b16 %v288
      %v605 = vunpack.c.h.b16 %v288
      %v606 = vunpack.c.l.b16 %v289
      %v607 = vunpack.c.h.b16 %v289
      %v608 = vunpack.c.l.b16 %v290
      %v609 = vunpack.c.h.b16 %v290
      %v610 = vunpack.c.l.b16 %v291
      %v611 = vunpack.c.h.b16 %v291
      %v612 = vunpack.c.l.b16 %v292
      %v613 = vunpack.c.h.b16 %v292
      %v614 = vunpack.c.l.b16 %v293
      %v615 = vunpack.c.h.b16 %v293
      %v616 = vunpack.c.l.b16 %v294
      %v617 = vunpack.c.h.b16 %v294
      %v618 = vunpack.c.l.b16 %v295
      %v619 = vunpack.c.h.b16 %v295
      %v620 = vunpack.c.l.b16 %v296
      %v621 = vunpack.c.h.b16 %v296
      %v622 = vunpack.c.l.b16 %v297
      %v623 = vunpack.c.h.b16 %v297
      %v624 = vunpack.c.l.b16 %v298
      %v625 = vunpack.c.h.b16 %v298
      %v626 = vunpack.c.l.b16 %v299
      %v627 = vunpack.c.h.b16 %v299
      %v628 = vunpack.c.l.b16 %v300
      %v629 = vunpack.c.h.b16 %v300
      %v630 = vunpack.c.l.b16 %v301
      %v631 = vunpack.c.h.b16 %v301
      %v632 = vunpack.c.l.b16 %v302
      %v633 = vunpack.c.h.b16 %v302
      %v634 = vunpack.c.l.b16 %v303
      %v635 = vunpack.c.h.b16 %v303
      %v636 = vunpack.c.l.b16 %v304
      %v637 = vunpack.c.h.b16 %v304
      %v638 = vunpack.c.l.b16 %v305
      %v639 = vunpack.c.h.b16 %v305
      %v640 = vunpack.c.l.b16 %v306
      %v641 = vunpack.c.h.b16 %v306
      %v642 = vunpack.c.l.b16 %v307
      %v643 = vunpack.c.h.b16 %v307
      %v644 = vunpack.c.l.b16 %v308
      %v645 = vunpack.c.h.b16 %v308
      %v646 = vunpack.c.l.b16 %v309
      %v647 = vunpack.c.h.b16 %v309
      %v648 = vunpack.c.l.b16 %v310
      %v649 = vunpack.c.h.b16 %v310
      %v650 = vunpack.c.l.b16 %v311
      %v651 = vunpack.c.h.b16 %v311
      %v652 = vunpack.c.l.b16 %v312
      %v653 = vunpack.c.h.b16 %v312
      %v654 = vunpack.c.l.b16 %v313
      %v655 = vunpack.c.h.b16 %v313
      %v656 = vunpack.c.l.b16 %v314
      %v657 = vunpack.c.h.b16 %v314
      %v658 = vunpack.c.l.b16 %v315
      %v659 = vunpack.c.h.b16 %v315
      %v660 = vunpack.c.l.b16 %v316
      %v661 = vunpack.c.h.b16 %v316
      %v662 = vunpack.c.l.b16 %v317
      %v663 = vunpack.c.h.b16 %v317
      %v664 = vunpack.c.l.b16 %v318
      %v665 = vunpack.c.h.b16 %v318
      %v666 = vunpack.c.l.b16 %v319
      %v667 = vunpack.c.h.b16 %v319
      %v668 = vunpack.c.l.b16 %v320
      %v669 = vunpack.c.h.b16 %v320
      %v670 = vunpack.c.l.b16 %v321
      %v671 = vunpack.c.h.b16 %v321
      %v672 = vunpack.c.l.b16 %v322
      %v673 = vunpack.c.h.b16 %v322
      %v674 = vunpack.c.l.b16 %v323
      %v675 = vunpack.c.h.b16 %v323
      %v676 = vunpack.c.l.b16 %v324
      %v677 = vunpack.c.h.b16 %v324
      %v678 = vunpack.c.l.b16 %v325
      %v679 = vunpack.c.h.b16 %v325
      %v680 = vunpack.c.l.b16 %v326
      %v681 = vunpack.c.h.b16 %v326
      %v682 = vunpack.c.l.b16 %v327
      %v683 = vunpack.c.h.b16 %v327
      %v684 = vunpack.c.l.b16 %v328
      %v685 = vunpack.c.h.b16 %v328
      %v686 = vunpack.c.l.b16 %v329
      %v687 = vunpack.c.h.b16 %v329
      %v688 = vunpack.c.l.b16 %v330
      %v689 = vunpack.c.h.b16 %v330
      %v690 = vunpack.c.l.b16 %v331
      %v691 = vunpack.c.h.b16 %v331
      %v692 = vunpack.c.l.b16 %v332
      %v693 = vunpack.c.h.b16 %v332
      %v694 = vunpack.c.l.b16 %v333
      %v695 = vunpack.c.h.b16 %v333
      %v696 = vunpack.c.l.b16 %v334
      %v697 = vunpack.c.h.b16 %v334
      %v698 = vunpack.c.l.b16 %v335
      %v699 = vunpack.c.h.b16 %v335
      %v700 = vpack.c.b16 %v504, %v500
      %v701 = vpack.c.b16 %v505, %v501
      %v702 = vpack.c.b16 %v506, %v502
      %v703 = vpack.c.b16 %v507, %v503
      %v704 = vpack.c.b16 %v512, %v508
      %v705 = vpack.c.b16 %v513, %v509
      %v706 = vpack.c.b16 %v514, %v510
      %v707 = vpack.c.b16 %v515, %v511
      %v708 = vpack.c.b16 %v520, %v516
      %v709 = vpack.c.b16 %v521, %v517
      %v710 = vpack.c.b16 %v522, %v518
      %v711 = vpack.c.b16 %v523, %v519
      %v712 = vpack.c.b16 %v528, %v524
      %v713 = vpack.c.b16 %v529, %v525
      %v714 = vpack.c.b16 %v530, %v526
      %v715 = vpack.c.b16 %v531, %v527
      %v716 = vpack.c.b16 %v536, %v532
      %v717 = vpack.c.b16 %v537, %v533
      %v718 = vpack.c.b16 %v538, %v534
      %v719 = vpack.c.b16 %v539, %v535
      %v720 = vpack.c.b16 %v544, %v540
      %v721 = vpack.c.b16 %v545, %v541
      %v722 = vpack.c.b16 %v546, %v542
      %v723 = vpack.c.b16 %v547, %v543
      %v724 = vpack.c.b16 %v552, %v548
      %v725 = vpack.c.b16 %v553, %v549
      %v726 = vpack.c.b16 %v554, %v550
      %v727 = vpack.c.b16 %v555, %v551
      %v728 = vpack.c.b16 %v560, %v556
      %v729 = vpack.c.b16 %v561, %v557
      %v730 = vpack.c.b16 %v562, %v558
      %v731 = vpack.c.b16 %v563, %v559
      %v732 = vpack.c.b16 %v568, %v564
      %v733 = vpack.c.b16 %v569, %v565
      %v734 = vpack.c.b16 %v570, %v566
      %v735 = vpack.c.b16 %v571, %v567
      %v736 = vpack.c.b16 %v576, %v572
      %v737 = vpack.c.b16 %v577, %v573
      %v738 = vpack.c.b16 %v578, %v574
      %v739 = vpack.c.b16 %v579, %v575
      %v740 = vpack.c.b16 %v584, %v580
      %v741 = vpack.c.b16 %v585, %v581
      %v742 = vpack.c.b16 %v586, %v582
      %v743 = vpack.c.b16 %v587, %v583
      %v744 = vpack.c.b16 %v592, %v588
      %v745 = vpack.c.b16 %v593, %v589
      %v746 = vpack.c.b16 %v594, %v590
      %v747 = vpack.c.b16 %v595, %v591
      %v748 = vpack.c.b16 %v600, %v596
      %v749 = vpack.c.b16 %v601, %v597
      %v750 = vpack.c.b16 %v602, %v598
      %v751 = vpack.c.b16 %v603, %v599
      %v752 = vpack.c.b16 %v608, %v604
      %v753 = vpack.c.b16 %v609, %v605
      %v754 = vpack.c.b16 %v610, %v606
      %v755 = vpack.c.b16 %v611, %v607
      %v756 = vpack.c.b16 %v616, %v612
      %v757 = vpack.c.b16 %v617, %v613
      %v758 = vpack.c.b16 %v618, %v614
      %v759 = vpack.c.b16 %v619, %v615
      %v760 = vpack.c.b16 %v624, %v620
      %v761 = vpack.c.b16 %v625, %v621
      %v762 = vpack.c.b16 %v626, %v622
      %v763 = vpack.c.b16 %v627, %v623
      %v764 = vpack.c.b16 %v632, %v628
      %v765 = vpack.c.b16 %v633, %v629
      %v766 = vpack.c.b16 %v634, %v630
      %v767 = vpack.c.b16 %v635, %v631
      %v768 = vpack.c.b16 %v640, %v636
      %v769 = vpack.c.b16 %v641, %v637
      %v770 = vpack.c.b16 %v642, %v638
      %v771 = vpack.c.b16 %v643, %v639
      %v772 = vpack.c.b16 %v648, %v644
      %v773 = vpack.c.b16 %v649, %v645
      %v774 = vpack.c.b16 %v650, %v646
      %v775 = vpack.c.b16 %v651, %v647
      %v776 = vpack.c.b16 %v656, %v652
      %v777 = vpack.c.b16 %v657, %v653
      %v778 = vpack.c.b16 %v658, %v654
      %v779 = vpack.c.b16 %v659, %v655
      %v780 = vpack.c.b16 %v664, %v660
      %v781 = vpack.c.b16 %v665, %v661
      %v782 = vpack.c.b16 %v666, %v662
      %v783 = vpack.c.b16 %v667, %v663
      %v784 = vpack.c.b16 %v672, %v668
      %v785 = vpack.c.b16 %v673, %v669
      %v786 = vpack.c.b16 %v674, %v670
      %v787 = vpack.c.b16 %v675, %v671
      %v788 = vpack.c.b16 %v680, %v676
      %v789 = vpack.c.b16 %v681, %v677
      %v790 = vpack.c.b16 %v682, %v678
      %v791 = vpack.c.b16 %v683, %v679
      %v792 = vpack.c.b16 %v688, %v684
      %v793 = vpack.c.b16 %v689, %v685
      %v794 = vpack.c.b16 %v690, %v686
      %v795 = vpack.c.b16 %v691, %v687
      %v796 = vpack.c.b16 %v696, %v692
      %v797 = vpack.c.b16 %v697, %v693
      %v798 = vpack.c.b16 %v698, %v694
      %v799 = vpack.c.b16 %v699, %v695
      %v964 = vunpack.c.l.b16 %v336
      %v965 = vunpack.c.l.b16 %v337
      %v966 = vunpack.c.l.b16 %v338
      %v967 = vunpack.c.l.b16 %v339
      %v968 = vunpack.c.l.b16 %v340
      %v969 = vunpack.c.l.b16 %v341
      %v970 = vunpack.c.l.b16 %v342
      %v971 = vunpack.c.l.b16 %v343
      %v972 = vunpack.c.l.b16 %v344
      %v973 = vunpack.c.l.b16 %v345
      %v974 = vunpack.c.l.b16 %v346
      %v975 = vunpack.c.l.b16 %v347
      %v976 = vunpack.c.l.b16 %v348
      %v977 = vunpack.c.l.b16 %v349
      %v978 = vunpack.c.l.b16 %v350
      %v979 = vunpack.c.l.b16 %v351
      %v980 = vunpack.c.l.b16 %v352
      %v981 = vunpack.c.l.b16 %v353
      %v982 = vunpack.c.l.b16 %v354
      %v983 = vunpack.c.l.b16 %v355
      %v984 = vunpack.c.l.b16 %v356
      %v985 = vunpack.c.l.b16 %v357
      %v986 = vunpack.c.l.b16 %v358
      %v987 = vunpack.c.l.b16 %v359
      %v988 = vunpack.c.l.b16 %v360
      %v989 = vunpack.c.l.b16 %v361
      %v990 = vunpack.c.l.b16 %v362
      %v991 = vunpack.c.l.b16 %v363
      %v992 = vunpack.c.l.b16 %v364
      %v993 = vunpack.c.l.b16 %v365
      %v994 = vunpack.c.l.b16 %v366
      %v995 = vunpack.c.l.b16 %v367
      %v996 = vunpack.c.l.b16 %v368
      %v997 = vunpack.c.l.b16 %v369
      %v998 = vunpack.c.l.b16 %v370
      %v999 = vunpack.c.l.b16 %v371
      %v1000 = vunpack.c.l.b16 %v372
      %v1001 = vunpack.c.l.b16 %v373
      %v1002 = vunpack.c.l.b16 %v374
      %v1003 = vunpack.c.l.b16 %v375
      %v1004 = vunpack.c.l.b16 %v376
      %v1005 = vunpack.c.l.b16 %v377
      %v1006 = vunpack.c.l.b16 %v378
      %v1007 = vunpack.c.l.b16 %v379
      %v1008 = vunpack.c.l.b16 %v380
      %v1009 = vunpack.c.l.b16 %v381
      %v1010 = vunpack.c.l.b16 %v382
      %v1011 = vunpack.c.l.b16 %v383
      %v1012 = vunpack.c.l.b16 %v384
      %v1013 = vunpack.c.l.b16 %v385
      %v1014 = vunpack.c.l.b16 %v386
      %v1015 = vunpack.c.l.b16 %v387
      %v1016 = vunpack.c.l.b16 %v388
      %v1017 = vunpack.c.l.b16 %v389
      %v1018 = vunpack.c.l.b16 %v390
      %v1019 = vunpack.c.l.b16 %v391
      %v1020 = vunpack.c.l.b16 %v392
      %v1021 = vunpack.c.l.b16 %v393
      %v1022 = vunpack.c.l.b16 %v394
      %v1023 = vunpack.c.l.b16 %v395
      %v1024 = vunpack.c.l.b16 %v396
      %v1025 = vunpack.c.l.b16 %v397
      %v1026 = vunpack.c.l.b16 %v398
      %v1027 = vunpack.c.l.b16 %v399
      %v1028 = vpack.c.b16 %v965, %v964
      %v1029 = vpack.c.b16 %v967, %v966
      %v1030 = vpack.c.b16 %v969, %v968
      %v1031 = vpack.c.b16 %v971, %v970
      %v1032 = vpack.c.b16 %v973, %v972
      %v1033 = vpack.c.b16 %v975, %v974
      %v1034 = vpack.c.b16 %v977, %v976
      %v1035 = vpack.c.b16 %v979, %v978
      %v1036 = vpack.c.b16 %v981, %v980
      %v1037 = vpack.c.b16 %v983, %v982
      %v1038 = vpack.c.b16 %v985, %v984
      %v1039 = vpack.c.b16 %v987, %v986
      %v1040 = vpack.c.b16 %v989, %v988
      %v1041 = vpack.c.b16 %v991, %v990
      %v1042 = vpack.c.b16 %v993, %v992
      %v1043 = vpack.c.b16 %v995, %v994
      %v1044 = vpack.c.b16 %v997, %v996
      %v1045 = vpack.c.b16 %v999, %v998
      %v1046 = vpack.c.b16 %v1001, %v1000
      %v1047 = vpack.c.b16 %v1003, %v1002
      %v1048 = vpack.c.b16 %v1005, %v1004
      %v1049 = vpack.c.b16 %v1007, %v1006
      %v1050 = vpack.c.b16 %v1009, %v1008
      %v1051 = vpack.c.b16 %v1011, %v1010
      %v1052 = vpack.c.b16 %v1013, %v1012
      %v1053 = vpack.c.b16 %v1015, %v1014
      %v1054 = vpack.c.b16 %v1017, %v1016
      %v1055 = vpack.c.b16 %v1019, %v1018
      %v1056 = vpack.c.b16 %v1021, %v1020
      %v1057 = vpack.c.b16 %v1023, %v1022
      %v1058 = vpack.c.b16 %v1025, %v1024
      %v1059 = vpack.c.b16 %v1027, %v1026
      %1092 = vmatprep.subr.bf16.mxu0 0
      %1093 = vmatpush1.bf16.msra.mxu0 %v1028
      %1094 = vmatprep.subr.bf16.mxu0 0
      %1095 = vmatpush1.bf16.msra.mxu0 %v1029
      %1096 = vmatprep.subr.bf16.mxu0 0
      %1097 = vmatpush1.bf16.msra.mxu0 %v1030
      %1098 = vmatprep.subr.bf16.mxu0 0
      %1099 = vmatpush1.bf16.msra.mxu0 %v1031
      %1100 = vmatprep.subr.bf16.mxu0 0
      %1101 = vmatpush1.bf16.msra.mxu0 %v1032
      %1102 = vmatprep.subr.bf16.mxu0 0
      %1103 = vmatpush1.bf16.msra.mxu0 %v1033
      %1104 = vmatprep.subr.bf16.mxu0 0
      %1105 = vmatpush1.bf16.msra.mxu0 %v1034
      %1106 = vmatprep.subr.bf16.mxu0 0
      %1107 = vmatpush1.bf16.msra.mxu0 %v1035
      %1108 = vmatprep.subr.bf16.mxu0 0
      %1109 = vmatpush1.bf16.msra.mxu0 %v1036
      %1110 = vmatprep.subr.bf16.mxu0 0
      %1111 = vmatpush1.bf16.msra.mxu0 %v1037
      %1112 = vmatprep.subr.bf16.mxu0 0
      %1113 = vmatpush1.bf16.msra.mxu0 %v1038
      %1114 = vmatprep.subr.bf16.mxu0 0
      %1115 = vmatpush1.bf16.msra.mxu0 %v1039
      %1116 = vmatprep.subr.bf16.mxu0 0
      %1117 = vmatpush1.bf16.msra.mxu0 %v1040
      %1118 = vmatprep.subr.bf16.mxu0 0
      %1119 = vmatpush1.bf16.msra.mxu0 %v1041
      %1120 = vmatprep.subr.bf16.mxu0 0
      %1121 = vmatpush1.bf16.msra.mxu0 %v1042
      %1122 = vmatprep.subr.bf16.mxu0 0
      %1123 = vmatpush1.bf16.msra.mxu0 %v1043
      %1124 = vmatprep.mubr.bf16.mxu0 %v701
      %1125 = vmatmul.mubr.bf16.gmra.mrb[0].mxu0 %v700
      %v1126 = vpop.f32.mrb[0].mxu0
      %v1127 = vadd.f32 0.0, %v1126
      %v1128 = vpop.f32.mrb[0].mxu0
      %v1129 = vpop.f32.mrb[0].mxu0
      %v1130 = vadd.f32 0.0, %v1129
      %v1131 = vpop.f32.mrb[0].mxu0
      %1132 = vmatprep.mubr.bf16.mxu0 %v705
      %1133 = vmatmul.mubr.bf16.gmra.mrb[0].mxu0 %v704
      %v1134 = vpop.f32.mrb[0].mxu0
      %v1135 = vadd.f32 0.0, %v1134
      %v1136 = vpop.f32.mrb[0].mxu0
      %v1137 = vpop.f32.mrb[0].mxu0
      %v1138 = vadd.f32 0.0, %v1137
      %v1139 = vpop.f32.mrb[0].mxu0
      %1140 = vmatprep.mubr.bf16.mxu0 %v709
      %1141 = vmatmul.mubr.bf16.gmra.mrb[0].mxu0 %v708
      %v1142 = vpop.f32.mrb[0].mxu0
      %v1143 = vadd.f32 0.0, %v1142
      %v1144 = vpop.f32.mrb[0].mxu0
      %v1145 = vpop.f32.mrb[0].mxu0
      %v1146 = vadd.f32 0.0, %v1145
      %v1147 = vpop.f32.mrb[0].mxu0
      %1148 = vmatprep.mubr.bf16.mxu0 %v713
      %1149 = vmatmul.mubr.bf16.gmra.mrb[0].mxu0 %v712
      %v1150 = vpop.f32.mrb[0].mxu0
      %v1151 = vadd.f32 0.0, %v1150
      %v1152 = vpop.f32.mrb[0].mxu0
      %v1153 = vpop.f32.mrb[0].mxu0
      %v1154 = vadd.f32 0.0, %v1153
      %v1155 = vpop.f32.mrb[0].mxu0
      %1156 = vmatprep.mubr.bf16.mxu0 %v717
      %1157 = vmatmul.mubr.bf16.gmra.mrb[0].mxu0 %v716
      %v1158 = vpop.f32.mrb[0].mxu0
      %v1159 = vadd.f32 0.0, %v1158
      %v1160 = vpop.f32.mrb[0].mxu0
      %v1161 = vpop.f32.mrb[0].mxu0
      %v1162 = vadd.f32 0.0, %v1161
      %v1163 = vpop.f32.mrb[0].mxu0
      %1164 = vmatprep.mubr.bf16.mxu0 %v721
      %1165 = vmatmul.mubr.bf16.gmra.mrb[0].mxu0 %v720
      %v1166 = vpop.f32.mrb[0].mxu0
      %v1167 = vadd.f32 0.0, %v1166
      %v1168 = vpop.f32.mrb[0].mxu0
      %v1169 = vpop.f32.mrb[0].mxu0
      %v1170 = vadd.f32 0.0, %v1169
      %v1171 = vpop.f32.mrb[0].mxu0
      %1172 = vmatprep.mubr.bf16.mxu0 %v725
      %1173 = vmatmul.mubr.bf16.gmra.mrb[0].mxu0 %v724
      %v1174 = vpop.f32.mrb[0].mxu0
      %v1175 = vadd.f32 0.0, %v1174
      %v1176 = vpop.f32.mrb[0].mxu0
      %v1177 = vpop.f32.mrb[0].mxu0
      %v1178 = vadd.f32 0.0, %v1177
      %v1179 = vpop.f32.mrb[0].mxu0
      %1180 = vmatprep.mubr.bf16.mxu0 %v729
      %1181 = vmatmul.mubr.bf16.gmra.mrb[0].mxu0 %v728
      %v1182 = vpop.f32.mrb[0].mxu0
      %v1183 = vadd.f32 0.0, %v1182
      %v1184 = vpop.f32.mrb[0].mxu0
      %v1185 = vpop.f32.mrb[0].mxu0
      %v1186 = vadd.f32 0.0, %v1185
      %v1187 = vpop.f32.mrb[0].mxu0
      %1188 = vmatprep.mubr.bf16.mxu0 %v733
      %1189 = vmatmul.mubr.bf16.gmra.mrb[0].mxu0 %v732
      %v1190 = vpop.f32.mrb[0].mxu0
      %v1191 = vadd.f32 0.0, %v1190
      %v1192 = vpop.f32.mrb[0].mxu0
      %v1193 = vpop.f32.mrb[0].mxu0
      %v1194 = vadd.f32 0.0, %v1193
      %v1195 = vpop.f32.mrb[0].mxu0
      %1196 = vmatprep.mubr.bf16.mxu0 %v737
      %1197 = vmatmul.mubr.bf16.gmra.mrb[0].mxu0 %v736
      %v1198 = vpop.f32.mrb[0].mxu0
      %v1199 = vadd.f32 0.0, %v1198
      %v1200 = vpop.f32.mrb[0].mxu0
      %v1201 = vpop.f32.mrb[0].mxu0
      %v1202 = vadd.f32 0.0, %v1201
      %v1203 = vpop.f32.mrb[0].mxu0
      %1204 = vmatprep.mubr.bf16.mxu0 %v741
      %1205 = vmatmul.mubr.bf16.gmra.mrb[0].mxu0 %v740
      %v1206 = vpop.f32.mrb[0].mxu0
      %v1207 = vadd.f32 0.0, %v1206
      %v1208 = vpop.f32.mrb[0].mxu0
      %v1209 = vpop.f32.mrb[0].mxu0
      %v1210 = vadd.f32 0.0, %v1209
      %v1211 = vpop.f32.mrb[0].mxu0
      %1212 = vmatprep.mubr.bf16.mxu0 %v745
      %1213 = vmatmul.mubr.bf16.gmra.mrb[0].mxu0 %v744
      %v1214 = vpop.f32.mrb[0].mxu0
      %v1215 = vadd.f32 0.0, %v1214
      %v1216 = vpop.f32.mrb[0].mxu0
      %v1217 = vpop.f32.mrb[0].mxu0
      %v1218 = vadd.f32 0.0, %v1217
      %v1219 = vpop.f32.mrb[0].mxu0
      %1220 = vmatprep.mubr.bf16.mxu0 %v749
      %1221 = vmatmul.mubr.bf16.gmra.mrb[0].mxu0 %v748
      %v1222 = vpop.f32.mrb[0].mxu0
      %v1223 = vadd.f32 0.0, %v1222
      %v1224 = vpop.f32.mrb[0].mxu0
      %v1225 = vpop.f32.mrb[0].mxu0
      %v1226 = vadd.f32 0.0, %v1225
      %v1227 = vpop.f32.mrb[0].mxu0
      %1228 = vmatprep.mubr.bf16.mxu0 %v753
      %1229 = vmatmul.mubr.bf16.gmra.mrb[0].mxu0 %v752
      %v1230 = vpop.f32.mrb[0].mxu0
      %v1231 = vadd.f32 0.0, %v1230
      %v1232 = vpop.f32.mrb[0].mxu0
      %v1233 = vpop.f32.mrb[0].mxu0
      %v1234 = vadd.f32 0.0, %v1233
      %v1235 = vpop.f32.mrb[0].mxu0
      %1236 = vmatprep.mubr.bf16.mxu0 %v757
      %1237 = vmatmul.mubr.bf16.gmra.mrb[0].mxu0 %v756
      %v1238 = vpop.f32.mrb[0].mxu0
      %v1239 = vadd.f32 0.0, %v1238
      %v1240 = vpop.f32.mrb[0].mxu0
      %v1241 = vpop.f32.mrb[0].mxu0
      %v1242 = vadd.f32 0.0, %v1241
      %v1243 = vpop.f32.mrb[0].mxu0
      %1244 = vmatprep.mubr.bf16.mxu0 %v761
      %1245 = vmatmul.mubr.bf16.gmra.mrb[0].mxu0 %v760
      %v1246 = vpop.f32.mrb[0].mxu0
      %v1247 = vadd.f32 0.0, %v1246
      %v1248 = vpop.f32.mrb[0].mxu0
      %v1249 = vpop.f32.mrb[0].mxu0
      %v1250 = vadd.f32 0.0, %v1249
      %v1251 = vpop.f32.mrb[0].mxu0
      %1252 = vmatprep.mubr.bf16.mxu0 %v765
      %1253 = vmatmul.mubr.bf16.gmra.mrb[0].mxu0 %v764
      %v1254 = vpop.f32.mrb[0].mxu0
      %v1255 = vadd.f32 0.0, %v1254
      %v1256 = vpop.f32.mrb[0].mxu0
      %v1257 = vpop.f32.mrb[0].mxu0
      %v1258 = vadd.f32 0.0, %v1257
      %v1259 = vpop.f32.mrb[0].mxu0
      %1260 = vmatprep.mubr.bf16.mxu0 %v769
      %1261 = vmatmul.mubr.bf16.gmra.mrb[0].mxu0 %v768
      %v1262 = vpop.f32.mrb[0].mxu0
      %v1263 = vadd.f32 0.0, %v1262
      %v1264 = vpop.f32.mrb[0].mxu0
      %v1265 = vpop.f32.mrb[0].mxu0
      %v1266 = vadd.f32 0.0, %v1265
      %v1267 = vpop.f32.mrb[0].mxu0
      %1268 = vmatprep.mubr.bf16.mxu0 %v773
      %1269 = vmatmul.mubr.bf16.gmra.mrb[0].mxu0 %v772
      %v1270 = vpop.f32.mrb[0].mxu0
      %v1271 = vadd.f32 0.0, %v1270
      %v1272 = vpop.f32.mrb[0].mxu0
      %v1273 = vpop.f32.mrb[0].mxu0
      %v1274 = vadd.f32 0.0, %v1273
      %v1275 = vpop.f32.mrb[0].mxu0
      %1276 = vmatprep.mubr.bf16.mxu0 %v777
      %1277 = vmatmul.mubr.bf16.gmra.mrb[0].mxu0 %v776
      %v1278 = vpop.f32.mrb[0].mxu0
      %v1279 = vadd.f32 0.0, %v1278
      %v1280 = vpop.f32.mrb[0].mxu0
      %v1281 = vpop.f32.mrb[0].mxu0
      %v1282 = vadd.f32 0.0, %v1281
      %v1283 = vpop.f32.mrb[0].mxu0
      %1284 = vmatprep.mubr.bf16.mxu0 %v781
      %1285 = vmatmul.mubr.bf16.gmra.mrb[0].mxu0 %v780
      %v1286 = vpop.f32.mrb[0].mxu0
      %v1287 = vadd.f32 0.0, %v1286
      %v1288 = vpop.f32.mrb[0].mxu0
      %v1289 = vpop.f32.mrb[0].mxu0
      %v1290 = vadd.f32 0.0, %v1289
      %v1291 = vpop.f32.mrb[0].mxu0
      %1292 = vmatprep.mubr.bf16.mxu0 %v785
      %1293 = vmatmul.mubr.bf16.gmra.mrb[0].mxu0 %v784
      %v1294 = vpop.f32.mrb[0].mxu0
      %v1295 = vadd.f32 0.0, %v1294
      %v1296 = vpop.f32.mrb[0].mxu0
      %v1297 = vpop.f32.mrb[0].mxu0
      %v1298 = vadd.f32 0.0, %v1297
      %v1299 = vpop.f32.mrb[0].mxu0
      %1300 = vmatprep.mubr.bf16.mxu0 %v789
      %1301 = vmatmul.mubr.bf16.gmra.mrb[0].mxu0 %v788
      %v1302 = vpop.f32.mrb[0].mxu0
      %v1303 = vadd.f32 0.0, %v1302
      %v1304 = vpop.f32.mrb[0].mxu0
      %v1305 = vpop.f32.mrb[0].mxu0
      %v1306 = vadd.f32 0.0, %v1305
      %v1307 = vpop.f32.mrb[0].mxu0
      %1308 = vmatprep.mubr.bf16.mxu0 %v793
      %1309 = vmatmul.mubr.bf16.gmra.mrb[0].mxu0 %v792
      %v1310 = vpop.f32.mrb[0].mxu0
      %v1311 = vadd.f32 0.0, %v1310
      %v1312 = vpop.f32.mrb[0].mxu0
      %v1313 = vpop.f32.mrb[0].mxu0
      %v1314 = vadd.f32 0.0, %v1313
      %v1315 = vpop.f32.mrb[0].mxu0
      %1316 = vmatprep.mubr.bf16.mxu0 %v797
      %1317 = vmatmul.mubr.bf16.gmra.mrb[0].mxu0 %v796
      %v1318 = vpop.f32.mrb[0].mxu0
      %v1319 = vadd.f32 0.0, %v1318
      %v1320 = vpop.f32.mrb[0].mxu0
      %v1321 = vpop.f32.mrb[0].mxu0
      %v1322 = vadd.f32 0.0, %v1321
      %v1323 = vpop.f32.mrb[0].mxu0
      %1324 = vdwg.mxu0
      %1325 = vmatprep.subr.bf16.mxu0 0
      %1326 = vmatpush1.bf16.msra.mxu0 %v1044
      %1327 = vmatprep.subr.bf16.mxu0 0
      %1328 = vmatpush1.bf16.msra.mxu0 %v1045
      %1329 = vmatprep.subr.bf16.mxu0 0
      %1330 = vmatpush1.bf16.msra.mxu0 %v1046
      %1331 = vmatprep.subr.bf16.mxu0 0
      %1332 = vmatpush1.bf16.msra.mxu0 %v1047
      %1333 = vmatprep.subr.bf16.mxu0 0
      %1334 = vmatpush1.bf16.msra.mxu0 %v1048
      %1335 = vmatprep.subr.bf16.mxu0 0
      %1336 = vmatpush1.bf16.msra.mxu0 %v1049
      %1337 = vmatprep.subr.bf16.mxu0 0
      %1338 = vmatpush1.bf16.msra.mxu0 %v1050
      %1339 = vmatprep.subr.bf16.mxu0 0
      %1340 = vmatpush1.bf16.msra.mxu0 %v1051
      %1341 = vmatprep.subr.bf16.mxu0 0
      %1342 = vmatpush1.bf16.msra.mxu0 %v1052
      %1343 = vmatprep.subr.bf16.mxu0 0
      %1344 = vmatpush1.bf16.msra.mxu0 %v1053
      %1345 = vmatprep.subr.bf16.mxu0 0
      %1346 = vmatpush1.bf16.msra.mxu0 %v1054
      %1347 = vmatprep.subr.bf16.mxu0 0
      %1348 = vmatpush1.bf16.msra.mxu0 %v1055
      %1349 = vmatprep.subr.bf16.mxu0 0
      %1350 = vmatpush1.bf16.msra.mxu0 %v1056
      %1351 = vmatprep.subr.bf16.mxu0 0
      %1352 = vmatpush1.bf16.msra.mxu0 %v1057
      %1353 = vmatprep.subr.bf16.mxu0 0
      %1354 = vmatpush1.bf16.msra.mxu0 %v1058
      %1355 = vmatprep.subr.bf16.mxu0 0
      %1356 = vmatpush1.bf16.msra.mxu0 %v1059
      %1357 = vmatprep.mubr.bf16.mxu0 %v703
      %1358 = vmatmul.mubr.bf16.gmra.mrb[0].mxu0 %v702
      %v1359 = vpop.f32.mrb[0].mxu0
      %v1360 = vadd.f32 %v1127, %v1359
      %v1361 = vpop.f32.mrb[0].mxu0
      %v1362 = vpop.f32.mrb[0].mxu0
      %v1363 = vadd.f32 %v1130, %v1362
      %v1364 = vpop.f32.mrb[0].mxu0
      %1365 = vmatprep.mubr.bf16.mxu0 %v707
      %1366 = vmatmul.mubr.bf16.gmra.mrb[0].mxu0 %v706
      %v1367 = vpop.f32.mrb[0].mxu0
      %v1368 = vadd.f32 %v1135, %v1367
      %v1369 = vpop.f32.mrb[0].mxu0
      %v1370 = vpop.f32.mrb[0].mxu0
      %v1371 = vadd.f32 %v1138, %v1370
      %v1372 = vpop.f32.mrb[0].mxu0
      %1373 = vmatprep.mubr.bf16.mxu0 %v711
      %1374 = vmatmul.mubr.bf16.gmra.mrb[0].mxu0 %v710
      %v1375 = vpop.f32.mrb[0].mxu0
      %v1376 = vadd.f32 %v1143, %v1375
      %v1377 = vpop.f32.mrb[0].mxu0
      %v1378 = vpop.f32.mrb[0].mxu0
      %v1379 = vadd.f32 %v1146, %v1378
      %v1380 = vpop.f32.mrb[0].mxu0
      %1381 = vmatprep.mubr.bf16.mxu0 %v715
      %1382 = vmatmul.mubr.bf16.gmra.mrb[0].mxu0 %v714
      %v1383 = vpop.f32.mrb[0].mxu0
      %v1384 = vadd.f32 %v1151, %v1383
      %v1385 = vpop.f32.mrb[0].mxu0
      %v1386 = vpop.f32.mrb[0].mxu0
      %v1387 = vadd.f32 %v1154, %v1386
      %v1388 = vpop.f32.mrb[0].mxu0
      %1389 = vmatprep.mubr.bf16.mxu0 %v719
      %1390 = vmatmul.mubr.bf16.gmra.mrb[0].mxu0 %v718
      %v1391 = vpop.f32.mrb[0].mxu0
      %v1392 = vadd.f32 %v1159, %v1391
      %v1393 = vpop.f32.mrb[0].mxu0
      %v1394 = vpop.f32.mrb[0].mxu0
      %v1395 = vadd.f32 %v1162, %v1394
      %v1396 = vpop.f32.mrb[0].mxu0
      %1397 = vmatprep.mubr.bf16.mxu0 %v723
      %1398 = vmatmul.mubr.bf16.gmra.mrb[0].mxu0 %v722
      %v1399 = vpop.f32.mrb[0].mxu0
      %v1400 = vadd.f32 %v1167, %v1399
      %v1401 = vpop.f32.mrb[0].mxu0
      %v1402 = vpop.f32.mrb[0].mxu0
      %v1403 = vadd.f32 %v1170, %v1402
      %v1404 = vpop.f32.mrb[0].mxu0
      %1405 = vmatprep.mubr.bf16.mxu0 %v727
      %1406 = vmatmul.mubr.bf16.gmra.mrb[0].mxu0 %v726
      %v1407 = vpop.f32.mrb[0].mxu0
      %v1408 = vadd.f32 %v1175, %v1407
      %v1409 = vpop.f32.mrb[0].mxu0
      %v1410 = vpop.f32.mrb[0].mxu0
      %v1411 = vadd.f32 %v1178, %v1410
      %v1412 = vpop.f32.mrb[0].mxu0
      %1413 = vmatprep.mubr.bf16.mxu0 %v731
      %1414 = vmatmul.mubr.bf16.gmra.mrb[0].mxu0 %v730
      %v1415 = vpop.f32.mrb[0].mxu0
      %v1416 = vadd.f32 %v1183, %v1415
      %v1417 = vpop.f32.mrb[0].mxu0
      %v1418 = vpop.f32.mrb[0].mxu0
      %v1419 = vadd.f32 %v1186, %v1418
      %v1420 = vpop.f32.mrb[0].mxu0
      %1421 = vmatprep.mubr.bf16.mxu0 %v735
      %1422 = vmatmul.mubr.bf16.gmra.mrb[0].mxu0 %v734
      %v1423 = vpop.f32.mrb[0].mxu0
      %v1424 = vadd.f32 %v1191, %v1423
      %v1425 = vpop.f32.mrb[0].mxu0
      %v1426 = vpop.f32.mrb[0].mxu0
      %v1427 = vadd.f32 %v1194, %v1426
      %v1428 = vpop.f32.mrb[0].mxu0
      %1429 = vmatprep.mubr.bf16.mxu0 %v739
      %1430 = vmatmul.mubr.bf16.gmra.mrb[0].mxu0 %v738
      %v1431 = vpop.f32.mrb[0].mxu0
      %v1432 = vadd.f32 %v1199, %v1431
      %v1433 = vpop.f32.mrb[0].mxu0
      %v1434 = vpop.f32.mrb[0].mxu0
      %v1435 = vadd.f32 %v1202, %v1434
      %v1436 = vpop.f32.mrb[0].mxu0
      %1437 = vmatprep.mubr.bf16.mxu0 %v743
      %1438 = vmatmul.mubr.bf16.gmra.mrb[0].mxu0 %v742
      %v1439 = vpop.f32.mrb[0].mxu0
      %v1440 = vadd.f32 %v1207, %v1439
      %v1441 = vpop.f32.mrb[0].mxu0
      %v1442 = vpop.f32.mrb[0].mxu0
      %v1443 = vadd.f32 %v1210, %v1442
      %v1444 = vpop.f32.mrb[0].mxu0
      %1445 = vmatprep.mubr.bf16.mxu0 %v747
      %1446 = vmatmul.mubr.bf16.gmra.mrb[0].mxu0 %v746
      %v1447 = vpop.f32.mrb[0].mxu0
      %v1448 = vadd.f32 %v1215, %v1447
      %v1449 = vpop.f32.mrb[0].mxu0
      %v1450 = vpop.f32.mrb[0].mxu0
      %v1451 = vadd.f32 %v1218, %v1450
      %v1452 = vpop.f32.mrb[0].mxu0
      %1453 = vmatprep.mubr.bf16.mxu0 %v751
      %1454 = vmatmul.mubr.bf16.gmra.mrb[0].mxu0 %v750
      %v1455 = vpop.f32.mrb[0].mxu0
      %v1456 = vadd.f32 %v1223, %v1455
      %v1457 = vpop.f32.mrb[0].mxu0
      %v1458 = vpop.f32.mrb[0].mxu0
      %v1459 = vadd.f32 %v1226, %v1458
      %v1460 = vpop.f32.mrb[0].mxu0
      %1461 = vmatprep.mubr.bf16.mxu0 %v755
      %1462 = vmatmul.mubr.bf16.gmra.mrb[0].mxu0 %v754
      %v1463 = vpop.f32.mrb[0].mxu0
      %v1464 = vadd.f32 %v1231, %v1463
      %v1465 = vpop.f32.mrb[0].mxu0
      %v1466 = vpop.f32.mrb[0].mxu0
      %v1467 = vadd.f32 %v1234, %v1466
      %v1468 = vpop.f32.mrb[0].mxu0
      %1469 = vmatprep.mubr.bf16.mxu0 %v759
      %1470 = vmatmul.mubr.bf16.gmra.mrb[0].mxu0 %v758
      %v1471 = vpop.f32.mrb[0].mxu0
      %v1472 = vadd.f32 %v1239, %v1471
      %v1473 = vpop.f32.mrb[0].mxu0
      %v1474 = vpop.f32.mrb[0].mxu0
      %v1475 = vadd.f32 %v1242, %v1474
      %v1476 = vpop.f32.mrb[0].mxu0
      %1477 = vmatprep.mubr.bf16.mxu0 %v763
      %1478 = vmatmul.mubr.bf16.gmra.mrb[0].mxu0 %v762
      %v1479 = vpop.f32.mrb[0].mxu0
      %v1480 = vadd.f32 %v1247, %v1479
      %v1481 = vpop.f32.mrb[0].mxu0
      %v1482 = vpop.f32.mrb[0].mxu0
      %v1483 = vadd.f32 %v1250, %v1482
      %v1484 = vpop.f32.mrb[0].mxu0
      %1485 = vmatprep.mubr.bf16.mxu0 %v767
      %1486 = vmatmul.mubr.bf16.gmra.mrb[0].mxu0 %v766
      %v1487 = vpop.f32.mrb[0].mxu0
      %v1488 = vadd.f32 %v1255, %v1487
      %v1489 = vpop.f32.mrb[0].mxu0
      %v1490 = vpop.f32.mrb[0].mxu0
      %v1491 = vadd.f32 %v1258, %v1490
      %v1492 = vpop.f32.mrb[0].mxu0
      %1493 = vmatprep.mubr.bf16.mxu0 %v771
      %1494 = vmatmul.mubr.bf16.gmra.mrb[0].mxu0 %v770
      %v1495 = vpop.f32.mrb[0].mxu0
      %v1496 = vadd.f32 %v1263, %v1495
      %v1497 = vpop.f32.mrb[0].mxu0
      %v1498 = vpop.f32.mrb[0].mxu0
      %v1499 = vadd.f32 %v1266, %v1498
      %v1500 = vpop.f32.mrb[0].mxu0
      %1501 = vmatprep.mubr.bf16.mxu0 %v775
      %1502 = vmatmul.mubr.bf16.gmra.mrb[0].mxu0 %v774
      %v1503 = vpop.f32.mrb[0].mxu0
      %v1504 = vadd.f32 %v1271, %v1503
      %v1505 = vpop.f32.mrb[0].mxu0
      %v1506 = vpop.f32.mrb[0].mxu0
      %v1507 = vadd.f32 %v1274, %v1506
      %v1508 = vpop.f32.mrb[0].mxu0
      %1509 = vmatprep.mubr.bf16.mxu0 %v779
      %1510 = vmatmul.mubr.bf16.gmra.mrb[0].mxu0 %v778
      %v1511 = vpop.f32.mrb[0].mxu0
      %v1512 = vadd.f32 %v1279, %v1511
      %v1513 = vpop.f32.mrb[0].mxu0
      %v1514 = vpop.f32.mrb[0].mxu0
      %v1515 = vadd.f32 %v1282, %v1514
      %v1516 = vpop.f32.mrb[0].mxu0
      %1517 = vmatprep.mubr.bf16.mxu0 %v783
      %1518 = vmatmul.mubr.bf16.gmra.mrb[0].mxu0 %v782
      %v1519 = vpop.f32.mrb[0].mxu0
      %v1520 = vadd.f32 %v1287, %v1519
      %v1521 = vpop.f32.mrb[0].mxu0
      %v1522 = vpop.f32.mrb[0].mxu0
      %v1523 = vadd.f32 %v1290, %v1522
      %v1524 = vpop.f32.mrb[0].mxu0
      %1525 = vmatprep.mubr.bf16.mxu0 %v787
      %1526 = vmatmul.mubr.bf16.gmra.mrb[0].mxu0 %v786
      %v1527 = vpop.f32.mrb[0].mxu0
      %v1528 = vadd.f32 %v1295, %v1527
      %v1529 = vpop.f32.mrb[0].mxu0
      %v1530 = vpop.f32.mrb[0].mxu0
      %v1531 = vadd.f32 %v1298, %v1530
      %v1532 = vpop.f32.mrb[0].mxu0
      %1533 = vmatprep.mubr.bf16.mxu0 %v791
      %1534 = vmatmul.mubr.bf16.gmra.mrb[0].mxu0 %v790
      %v1535 = vpop.f32.mrb[0].mxu0
      %v1536 = vadd.f32 %v1303, %v1535
      %v1537 = vpop.f32.mrb[0].mxu0
      %v1538 = vpop.f32.mrb[0].mxu0
      %v1539 = vadd.f32 %v1306, %v1538
      %v1540 = vpop.f32.mrb[0].mxu0
      %1541 = vmatprep.mubr.bf16.mxu0 %v795
      %1542 = vmatmul.mubr.bf16.gmra.mrb[0].mxu0 %v794
      %v1543 = vpop.f32.mrb[0].mxu0
      %v1544 = vadd.f32 %v1311, %v1543
      %v1545 = vpop.f32.mrb[0].mxu0
      %v1546 = vpop.f32.mrb[0].mxu0
      %v1547 = vadd.f32 %v1314, %v1546
      %v1548 = vpop.f32.mrb[0].mxu0
      %1549 = vmatprep.mubr.bf16.mxu0 %v799
      %1550 = vmatmul.mubr.bf16.gmra.mrb[0].mxu0 %v798
      %v1551 = vpop.f32.mrb[0].mxu0
      %v1552 = vadd.f32 %v1319, %v1551
      %v1553 = vpop.f32.mrb[0].mxu0
      %v1554 = vpop.f32.mrb[0].mxu0
      %v1555 = vadd.f32 %v1322, %v1554
      %v1556 = vpop.f32.mrb[0].mxu0
      %1557 = vdwg.mxu0
      %p1558 = scmp.eq.s32.totalorder %s18, 0
      // Predicated region
      $region41: #{cnn_forward.3} parent=39 // pred_check
        %p1559 = pneg %p1558
      $region42: #{cnn_forward.3} parent=39 // pred_check_branch
        %1561 = sbr.rel (%p1559) target = $region44
      $region43: #{cnn_forward.3} parent=39 // pred_region
        %1562 = vst [vmem:[#allocation2] sm:$0xff] %v1360
        %1563 = vst [vmem:[#allocation2 + $0x8] sm:$0xff] %v1363
        %1564 = vst [vmem:[#allocation2 + $0x10] sm:$0xff] %v1368
        %1565 = vst [vmem:[#allocation2 + $0x18] sm:$0xff] %v1371
        %1566 = vst [vmem:[#allocation2 + $0x20] sm:$0xff] %v1376
        %1567 = vst [vmem:[#allocation2 + $0x28] sm:$0xff] %v1379
        %1568 = vst [vmem:[#allocation2 + $0x30] sm:$0xff] %v1384
        %1569 = vst [vmem:[#allocation2 + $0x38] sm:$0xff] %v1387
        %1570 = vst [vmem:[#allocation2 + $0x40] sm:$0xff] %v1392
        %1571 = vst [vmem:[#allocation2 + $0x48] sm:$0xff] %v1395
        %1572 = vst [vmem:[#allocation2 + $0x50] sm:$0xff] %v1400
        %1573 = vst [vmem:[#allocation2 + $0x58] sm:$0xff] %v1403
        %1574 = vst [vmem:[#allocation2 + $0x60] sm:$0xff] %v1408
        %1575 = vst [vmem:[#allocation2 + $0x68] sm:$0xff] %v1411
        %1576 = vst [vmem:[#allocation2 + $0x70] sm:$0xff] %v1416
        %1577 = vst [vmem:[#allocation2 + $0x78] sm:$0xff] %v1419
        %1578 = vst [vmem:[#allocation2 + $0x80] sm:$0xff] %v1424
        %1579 = vst [vmem:[#allocation2 + $0x88] sm:$0xff] %v1427
        %1580 = vst [vmem:[#allocation2 + $0x90] sm:$0xff] %v1432
        %1581 = vst [vmem:[#allocation2 + $0x98] sm:$0xff] %v1435
        %1582 = vst [vmem:[#allocation2 + $0xa0] sm:$0xff] %v1440
        %1583 = vst [vmem:[#allocation2 + $0xa8] sm:$0xff] %v1443
        %1584 = vst [vmem:[#allocation2 + $0xb0] sm:$0xff] %v1448
        %1585 = vst [vmem:[#allocation2 + $0xb8] sm:$0xff] %v1451
        %1586 = vst [vmem:[#allocation2 + $0xc0] sm:$0xff] %v1456
        %1587 = vst [vmem:[#allocation2 + $0xc8] sm:$0xff] %v1459
        %1588 = vst [vmem:[#allocation2 + $0xd0] sm:$0xff] %v1464
        %1589 = vst [vmem:[#allocation2 + $0xd8] sm:$0xff] %v1467
        %1590 = vst [vmem:[#allocation2 + $0xe0] sm:$0xff] %v1472
        %1591 = vst [vmem:[#allocation2 + $0xe8] sm:$0xff] %v1475
        %1592 = vst [vmem:[#allocation2 + $0xf0] sm:$0xff] %v1480
        %1593 = vst [vmem:[#allocation2 + $0xf8] sm:$0xff] %v1483
        %1594 = vst [vmem:[#allocation2 + $0x100] sm:$0xff] %v1488
        %1595 = vst [vmem:[#allocation2 + $0x108] sm:$0xff] %v1491
        %1596 = vst [vmem:[#allocation2 + $0x110] sm:$0xff] %v1496
        %1597 = vst [vmem:[#allocation2 + $0x118] sm:$0xff] %v1499
        %1598 = vst [vmem:[#allocation2 + $0x120] sm:$0xff] %v1504
        %1599 = vst [vmem:[#allocation2 + $0x128] sm:$0xff] %v1507
        %1600 = vst [vmem:[#allocation2 + $0x130] sm:$0xff] %v1512
        %1601 = vst [vmem:[#allocation2 + $0x138] sm:$0xff] %v1515
        %1602 = vst [vmem:[#allocation2 + $0x140] sm:$0xff] %v1520
        %1603 = vst [vmem:[#allocation2 + $0x148] sm:$0xff] %v1523
        %1604 = vst [vmem:[#allocation2 + $0x150] sm:$0xff] %v1528
        %1605 = vst [vmem:[#allocation2 + $0x158] sm:$0xff] %v1531
        %1606 = vst [vmem:[#allocation2 + $0x160] sm:$0xff] %v1536
        %1607 = vst [vmem:[#allocation2 + $0x168] sm:$0xff] %v1539
        %1608 = vst [vmem:[#allocation2 + $0x170] sm:$0xff] %v1544
        %1609 = vst [vmem:[#allocation2 + $0x178] sm:$0xff] %v1547
        %1610 = vst [vmem:[#allocation2 + $0x180] sm:$0xff] %v1552
        %1611 = vst [vmem:[#allocation2 + $0x188] sm:$0xff] %v1555
      $region44: #{cnn_forward.3} parent=39 // pred_fallthru
        _
      %p1612 = scmp.gt.s32.totalorder %s18, 0
      // Predicated region
      $region45: #{cnn_forward.3} parent=39 // pred_check
        %p1613 = pneg %p1612
      $region46: #{cnn_forward.3} parent=39 // pred_check_branch
        %1615 = sbr.rel (%p1613) target = $region48
      $region47: #{cnn_forward.3} parent=39 // pred_region
        %v1616 = vld [vmem:[#allocation2] sm:$0xff]
        %v1617 = vld [vmem:[#allocation2 + $0x8] sm:$0xff]
        %v1618 = vld [vmem:[#allocation2 + $0x10] sm:$0xff]
        %v1619 = vld [vmem:[#allocation2 + $0x18] sm:$0xff]
        %v1620 = vld [vmem:[#allocation2 + $0x20] sm:$0xff]
        %v1621 = vld [vmem:[#allocation2 + $0x28] sm:$0xff]
        %v1622 = vld [vmem:[#allocation2 + $0x30] sm:$0xff]
        %v1623 = vld [vmem:[#allocation2 + $0x38] sm:$0xff]
        %v1624 = vld [vmem:[#allocation2 + $0x40] sm:$0xff]
        %v1625 = vld [vmem:[#allocation2 + $0x48] sm:$0xff]
        %v1626 = vld [vmem:[#allocation2 + $0x50] sm:$0xff]
        %v1627 = vld [vmem:[#allocation2 + $0x58] sm:$0xff]
        %v1628 = vld [vmem:[#allocation2 + $0x60] sm:$0xff]
        %v1629 = vld [vmem:[#allocation2 + $0x68] sm:$0xff]
        %v1630 = vld [vmem:[#allocation2 + $0x70] sm:$0xff]
        %v1631 = vld [vmem:[#allocation2 + $0x78] sm:$0xff]
        %v1632 = vld [vmem:[#allocation2 + $0x80] sm:$0xff]
        %v1633 = vld [vmem:[#allocation2 + $0x88] sm:$0xff]
        %v1634 = vld [vmem:[#allocation2 + $0x90] sm:$0xff]
        %v1635 = vld [vmem:[#allocation2 + $0x98] sm:$0xff]
        %v1636 = vld [vmem:[#allocation2 + $0xa0] sm:$0xff]
        %v1637 = vld [vmem:[#allocation2 + $0xa8] sm:$0xff]
        %v1638 = vld [vmem:[#allocation2 + $0xb0] sm:$0xff]
        %v1639 = vld [vmem:[#allocation2 + $0xb8] sm:$0xff]
        %v1640 = vld [vmem:[#allocation2 + $0xc0] sm:$0xff]
        %v1641 = vld [vmem:[#allocation2 + $0xc8] sm:$0xff]
        %v1642 = vld [vmem:[#allocation2 + $0xd0] sm:$0xff]
        %v1643 = vld [vmem:[#allocation2 + $0xd8] sm:$0xff]
        %v1644 = vld [vmem:[#allocation2 + $0xe0] sm:$0xff]
        %v1645 = vld [vmem:[#allocation2 + $0xe8] sm:$0xff]
        %v1646 = vld [vmem:[#allocation2 + $0xf0] sm:$0xff]
        %v1647 = vld [vmem:[#allocation2 + $0xf8] sm:$0xff]
        %v1648 = vld [vmem:[#allocation2 + $0x100] sm:$0xff]
        %v1649 = vld [vmem:[#allocation2 + $0x108] sm:$0xff]
        %v1650 = vld [vmem:[#allocation2 + $0x110] sm:$0xff]
        %v1651 = vld [vmem:[#allocation2 + $0x118] sm:$0xff]
        %v1652 = vld [vmem:[#allocation2 + $0x120] sm:$0xff]
        %v1653 = vld [vmem:[#allocation2 + $0x128] sm:$0xff]
        %v1654 = vld [vmem:[#allocation2 + $0x130] sm:$0xff]
        %v1655 = vld [vmem:[#allocation2 + $0x138] sm:$0xff]
        %v1656 = vld [vmem:[#allocation2 + $0x140] sm:$0xff]
        %v1657 = vld [vmem:[#allocation2 + $0x148] sm:$0xff]
        %v1658 = vld [vmem:[#allocation2 + $0x150] sm:$0xff]
        %v1659 = vld [vmem:[#allocation2 + $0x158] sm:$0xff]
        %v1660 = vld [vmem:[#allocation2 + $0x160] sm:$0xff]
        %v1661 = vld [vmem:[#allocation2 + $0x168] sm:$0xff]
        %v1662 = vld [vmem:[#allocation2 + $0x170] sm:$0xff]
        %v1663 = vld [vmem:[#allocation2 + $0x178] sm:$0xff]
        %v1664 = vld [vmem:[#allocation2 + $0x180] sm:$0xff]
        %v1665 = vld [vmem:[#allocation2 + $0x188] sm:$0xff]
        %v1666 = vmax.f32 %v1616, %v1360
        %v1667 = vmax.f32 %v1617, %v1363
        %v1668 = vmax.f32 %v1618, %v1368
        %v1669 = vmax.f32 %v1619, %v1371
        %v1670 = vmax.f32 %v1620, %v1376
        %v1671 = vmax.f32 %v1621, %v1379
        %v1672 = vmax.f32 %v1622, %v1384
        %v1673 = vmax.f32 %v1623, %v1387
        %v1674 = vmax.f32 %v1624, %v1392
        %v1675 = vmax.f32 %v1625, %v1395
        %v1676 = vmax.f32 %v1626, %v1400
        %v1677 = vmax.f32 %v1627, %v1403
        %v1678 = vmax.f32 %v1628, %v1408
        %v1679 = vmax.f32 %v1629, %v1411
        %v1680 = vmax.f32 %v1630, %v1416
        %v1681 = vmax.f32 %v1631, %v1419
        %v1682 = vmax.f32 %v1632, %v1424
        %v1683 = vmax.f32 %v1633, %v1427
        %v1684 = vmax.f32 %v1634, %v1432
        %v1685 = vmax.f32 %v1635, %v1435
        %v1686 = vmax.f32 %v1636, %v1440
        %v1687 = vmax.f32 %v1637, %v1443
        %v1688 = vmax.f32 %v1638, %v1448
        %v1689 = vmax.f32 %v1639, %v1451
        %v1690 = vmax.f32 %v1640, %v1456
        %v1691 = vmax.f32 %v1641, %v1459
        %v1692 = vmax.f32 %v1642, %v1464
        %v1693 = vmax.f32 %v1643, %v1467
        %v1694 = vmax.f32 %v1644, %v1472
        %v1695 = vmax.f32 %v1645, %v1475
        %v1696 = vmax.f32 %v1646, %v1480
        %v1697 = vmax.f32 %v1647, %v1483
        %v1698 = vmax.f32 %v1648, %v1488
        %v1699 = vmax.f32 %v1649, %v1491
        %v1700 = vmax.f32 %v1650, %v1496
        %v1701 = vmax.f32 %v1651, %v1499
        %v1702 = vmax.f32 %v1652, %v1504
        %v1703 = vmax.f32 %v1653, %v1507
        %v1704 = vmax.f32 %v1654, %v1512
        %v1705 = vmax.f32 %v1655, %v1515
        %v1706 = vmax.f32 %v1656, %v1520
        %v1707 = vmax.f32 %v1657, %v1523
        %v1708 = vmax.f32 %v1658, %v1528
        %v1709 = vmax.f32 %v1659, %v1531
        %v1710 = vmax.f32 %v1660, %v1536
        %v1711 = vmax.f32 %v1661, %v1539
        %v1712 = vmax.f32 %v1662, %v1544
        %v1713 = vmax.f32 %v1663, %v1547
        %v1714 = vmax.f32 %v1664, %v1552
        %v1715 = vmax.f32 %v1665, %v1555
        %1716 = vst [vmem:[#allocation2] sm:$0xff] %v1666
        %1717 = vst [vmem:[#allocation2 + $0x8] sm:$0xff] %v1667
        %1718 = vst [vmem:[#allocation2 + $0x10] sm:$0xff] %v1668
        %1719 = vst [vmem:[#allocation2 + $0x18] sm:$0xff] %v1669
        %1720 = vst [vmem:[#allocation2 + $0x20] sm:$0xff] %v1670
        %1721 = vst [vmem:[#allocation2 + $0x28] sm:$0xff] %v1671
        %1722 = vst [vmem:[#allocation2 + $0x30] sm:$0xff] %v1672
        %1723 = vst [vmem:[#allocation2 + $0x38] sm:$0xff] %v1673
        %1724 = vst [vmem:[#allocation2 + $0x40] sm:$0xff] %v1674
        %1725 = vst [vmem:[#allocation2 + $0x48] sm:$0xff] %v1675
        %1726 = vst [vmem:[#allocation2 + $0x50] sm:$0xff] %v1676
        %1727 = vst [vmem:[#allocation2 + $0x58] sm:$0xff] %v1677
        %1728 = vst [vmem:[#allocation2 + $0x60] sm:$0xff] %v1678
        %1729 = vst [vmem:[#allocation2 + $0x68] sm:$0xff] %v1679
        %1730 = vst [vmem:[#allocation2 + $0x70] sm:$0xff] %v1680
        %1731 = vst [vmem:[#allocation2 + $0x78] sm:$0xff] %v1681
        %1732 = vst [vmem:[#allocation2 + $0x80] sm:$0xff] %v1682
        %1733 = vst [vmem:[#allocation2 + $0x88] sm:$0xff] %v1683
        %1734 = vst [vmem:[#allocation2 + $0x90] sm:$0xff] %v1684
        %1735 = vst [vmem:[#allocation2 + $0x98] sm:$0xff] %v1685
        %1736 = vst [vmem:[#allocation2 + $0xa0] sm:$0xff] %v1686
        %1737 = vst [vmem:[#allocation2 + $0xa8] sm:$0xff] %v1687
        %1738 = vst [vmem:[#allocation2 + $0xb0] sm:$0xff] %v1688
        %1739 = vst [vmem:[#allocation2 + $0xb8] sm:$0xff] %v1689
        %1740 = vst [vmem:[#allocation2 + $0xc0] sm:$0xff] %v1690
        %1741 = vst [vmem:[#allocation2 + $0xc8] sm:$0xff] %v1691
        %1742 = vst [vmem:[#allocation2 + $0xd0] sm:$0xff] %v1692
        %1743 = vst [vmem:[#allocation2 + $0xd8] sm:$0xff] %v1693
        %1744 = vst [vmem:[#allocation2 + $0xe0] sm:$0xff] %v1694
        %1745 = vst [vmem:[#allocation2 + $0xe8] sm:$0xff] %v1695
        %1746 = vst [vmem:[#allocation2 + $0xf0] sm:$0xff] %v1696
        %1747 = vst [vmem:[#allocation2 + $0xf8] sm:$0xff] %v1697
        %1748 = vst [vmem:[#allocation2 + $0x100] sm:$0xff] %v1698
        %1749 = vst [vmem:[#allocation2 + $0x108] sm:$0xff] %v1699
        %1750 = vst [vmem:[#allocation2 + $0x110] sm:$0xff] %v1700
        %1751 = vst [vmem:[#allocation2 + $0x118] sm:$0xff] %v1701
        %1752 = vst [vmem:[#allocation2 + $0x120] sm:$0xff] %v1702
        %1753 = vst [vmem:[#allocation2 + $0x128] sm:$0xff] %v1703
        %1754 = vst [vmem:[#allocation2 + $0x130] sm:$0xff] %v1704
        %1755 = vst [vmem:[#allocation2 + $0x138] sm:$0xff] %v1705
        %1756 = vst [vmem:[#allocation2 + $0x140] sm:$0xff] %v1706
        %1757 = vst [vmem:[#allocation2 + $0x148] sm:$0xff] %v1707
        %1758 = vst [vmem:[#allocation2 + $0x150] sm:$0xff] %v1708
        %1759 = vst [vmem:[#allocation2 + $0x158] sm:$0xff] %v1709
        %1760 = vst [vmem:[#allocation2 + $0x160] sm:$0xff] %v1710
        %1761 = vst [vmem:[#allocation2 + $0x168] sm:$0xff] %v1711
        %1762 = vst [vmem:[#allocation2 + $0x170] sm:$0xff] %v1712
        %1763 = vst [vmem:[#allocation2 + $0x178] sm:$0xff] %v1713
        %1764 = vst [vmem:[#allocation2 + $0x180] sm:$0xff] %v1714
        %1765 = vst [vmem:[#allocation2 + $0x188] sm:$0xff] %v1715
      $region48: #{cnn_forward.3} parent=39 // pred_fallthru
        _
      %p1766 = scmp.eq.s32.totalorder %s18, 3
      // Predicated region
      $region49: #{cnn_forward.3} parent=39 // pred_check
        %p1767 = pneg %p1766
      $region50: #{cnn_forward.3} parent=39 // pred_check_branch
        %1769 = sbr.rel (%p1767) target = $region52
      $region51: #{cnn_forward.3} parent=39 // pred_region
        %v1770 = vld [vmem:[#allocation2] sm:$0xff]
        %v1771 = vld [vmem:[#allocation2 + $0x8] sm:$0xff]
        %v1772 = vld [vmem:[#allocation2 + $0x10] sm:$0xff]
        %v1773 = vld [vmem:[#allocation2 + $0x18] sm:$0xff]
        %v1774 = vld [vmem:[#allocation2 + $0x20] sm:$0xff]
        %v1775 = vld [vmem:[#allocation2 + $0x28] sm:$0xff]
        %v1776 = vld [vmem:[#allocation2 + $0x30] sm:$0xff]
        %v1777 = vld [vmem:[#allocation2 + $0x38] sm:$0xff]
        %v1778 = vld [vmem:[#allocation2 + $0x40] sm:$0xff]
        %v1779 = vld [vmem:[#allocation2 + $0x48] sm:$0xff]
        %v1780 = vld [vmem:[#allocation2 + $0x50] sm:$0xff]
        %v1781 = vld [vmem:[#allocation2 + $0x58] sm:$0xff]
        %v1782 = vld [vmem:[#allocation2 + $0x60] sm:$0xff]
        %v1783 = vld [vmem:[#allocation2 + $0x68] sm:$0xff]
        %v1784 = vld [vmem:[#allocation2 + $0x70] sm:$0xff]
        %v1785 = vld [vmem:[#allocation2 + $0x78] sm:$0xff]
        %v1786 = vld [vmem:[#allocation2 + $0x80] sm:$0xff]
        %v1787 = vld [vmem:[#allocation2 + $0x88] sm:$0xff]
        %v1788 = vld [vmem:[#allocation2 + $0x90] sm:$0xff]
        %v1789 = vld [vmem:[#allocation2 + $0x98] sm:$0xff]
        %v1790 = vld [vmem:[#allocation2 + $0xa0] sm:$0xff]
        %v1791 = vld [vmem:[#allocation2 + $0xa8] sm:$0xff]
        %v1792 = vld [vmem:[#allocation2 + $0xb0] sm:$0xff]
        %v1793 = vld [vmem:[#allocation2 + $0xb8] sm:$0xff]
        %v1794 = vld [vmem:[#allocation2 + $0xc0] sm:$0xff]
        %v1795 = vld [vmem:[#allocation2 + $0xc8] sm:$0xff]
        %v1796 = vld [vmem:[#allocation2 + $0xd0] sm:$0xff]
        %v1797 = vld [vmem:[#allocation2 + $0xd8] sm:$0xff]
        %v1798 = vld [vmem:[#allocation2 + $0xe0] sm:$0xff]
        %v1799 = vld [vmem:[#allocation2 + $0xe8] sm:$0xff]
        %v1800 = vld [vmem:[#allocation2 + $0xf0] sm:$0xff]
        %v1801 = vld [vmem:[#allocation2 + $0xf8] sm:$0xff]
        %v1802 = vld [vmem:[#allocation2 + $0x100] sm:$0xff]
        %v1803 = vld [vmem:[#allocation2 + $0x108] sm:$0xff]
        %v1804 = vld [vmem:[#allocation2 + $0x110] sm:$0xff]
        %v1805 = vld [vmem:[#allocation2 + $0x118] sm:$0xff]
        %v1806 = vld [vmem:[#allocation2 + $0x120] sm:$0xff]
        %v1807 = vld [vmem:[#allocation2 + $0x128] sm:$0xff]
        %v1808 = vld [vmem:[#allocation2 + $0x130] sm:$0xff]
        %v1809 = vld [vmem:[#allocation2 + $0x138] sm:$0xff]
        %v1810 = vld [vmem:[#allocation2 + $0x140] sm:$0xff]
        %v1811 = vld [vmem:[#allocation2 + $0x148] sm:$0xff]
        %v1812 = vld [vmem:[#allocation2 + $0x150] sm:$0xff]
        %v1813 = vld [vmem:[#allocation2 + $0x158] sm:$0xff]
        %v1814 = vld [vmem:[#allocation2 + $0x160] sm:$0xff]
        %v1815 = vld [vmem:[#allocation2 + $0x168] sm:$0xff]
        %v1816 = vld [vmem:[#allocation2 + $0x170] sm:$0xff]
        %v1817 = vld [vmem:[#allocation2 + $0x178] sm:$0xff]
        %v1818 = vld [vmem:[#allocation2 + $0x180] sm:$0xff]
        %v1819 = vld [vmem:[#allocation2 + $0x188] sm:$0xff]
        %v1820 = vld [vmem:[%s2] sm:$0x1]
        %v1822 = vlaneseq
        %v1823 = vshrl.u32 %v1822, 7
        %v1824 = vsub.s32 0, %v1823
        %v1825 = vrot.slane %v1820, %v1824
        %v1827 = vadd.f32 %v1770, %v1825
        %v1828 = vadd.f32 %v1771, %v1825
        %v1829 = vadd.f32 %v1772, %v1825
        %v1830 = vadd.f32 %v1773, %v1825
        %v1831 = vadd.f32 %v1774, %v1825
        %v1832 = vadd.f32 %v1775, %v1825
        %v1833 = vadd.f32 %v1776, %v1825
        %v1834 = vadd.f32 %v1777, %v1825
        %v1835 = vadd.f32 %v1778, %v1825
        %v1836 = vadd.f32 %v1779, %v1825
        %v1837 = vadd.f32 %v1780, %v1825
        %v1838 = vadd.f32 %v1781, %v1825
        %v1839 = vadd.f32 %v1782, %v1825
        %v1840 = vadd.f32 %v1783, %v1825
        %v1841 = vadd.f32 %v1784, %v1825
        %v1842 = vadd.f32 %v1785, %v1825
        %v1843 = vadd.f32 %v1786, %v1825
        %v1844 = vadd.f32 %v1787, %v1825
        %v1845 = vadd.f32 %v1788, %v1825
        %v1846 = vadd.f32 %v1789, %v1825
        %v1847 = vadd.f32 %v1790, %v1825
        %v1848 = vadd.f32 %v1791, %v1825
        %v1849 = vadd.f32 %v1792, %v1825
        %v1850 = vadd.f32 %v1793, %v1825
        %v1851 = vadd.f32 %v1794, %v1825
        %v1852 = vadd.f32 %v1795, %v1825
        %v1853 = vadd.f32 %v1796, %v1825
        %v1854 = vadd.f32 %v1797, %v1825
        %v1855 = vadd.f32 %v1798, %v1825
        %v1856 = vadd.f32 %v1799, %v1825
        %v1857 = vadd.f32 %v1800, %v1825
        %v1858 = vadd.f32 %v1801, %v1825
        %v1859 = vadd.f32 %v1802, %v1825
        %v1860 = vadd.f32 %v1803, %v1825
        %v1861 = vadd.f32 %v1804, %v1825
        %v1862 = vadd.f32 %v1805, %v1825
        %v1863 = vadd.f32 %v1806, %v1825
        %v1864 = vadd.f32 %v1807, %v1825
        %v1865 = vadd.f32 %v1808, %v1825
        %v1866 = vadd.f32 %v1809, %v1825
        %v1867 = vadd.f32 %v1810, %v1825
        %v1868 = vadd.f32 %v1811, %v1825
        %v1869 = vadd.f32 %v1812, %v1825
        %v1870 = vadd.f32 %v1813, %v1825
        %v1871 = vadd.f32 %v1814, %v1825
        %v1872 = vadd.f32 %v1815, %v1825
        %v1873 = vadd.f32 %v1816, %v1825
        %v1874 = vadd.f32 %v1817, %v1825
        %v1875 = vadd.f32 %v1818, %v1825
        %v1876 = vadd.f32 %v1819, %v1825
        %v1877 = vmax.f32 %v1827, 0.0
        %v1878 = vmax.f32 %v1828, 0.0
        %v1879 = vmax.f32 %v1829, 0.0
        %v1880 = vmax.f32 %v1830, 0.0
        %v1881 = vmax.f32 %v1831, 0.0
        %v1882 = vmax.f32 %v1832, 0.0
        %v1883 = vmax.f32 %v1833, 0.0
        %v1884 = vmax.f32 %v1834, 0.0
        %v1885 = vmax.f32 %v1835, 0.0
        %v1886 = vmax.f32 %v1836, 0.0
        %v1887 = vmax.f32 %v1837, 0.0
        %v1888 = vmax.f32 %v1838, 0.0
        %v1889 = vmax.f32 %v1839, 0.0
        %v1890 = vmax.f32 %v1840, 0.0
        %v1891 = vmax.f32 %v1841, 0.0
        %v1892 = vmax.f32 %v1842, 0.0
        %v1893 = vmax.f32 %v1843, 0.0
        %v1894 = vmax.f32 %v1844, 0.0
        %v1895 = vmax.f32 %v1845, 0.0
        %v1896 = vmax.f32 %v1846, 0.0
        %v1897 = vmax.f32 %v1847, 0.0
        %v1898 = vmax.f32 %v1848, 0.0
        %v1899 = vmax.f32 %v1849, 0.0
        %v1900 = vmax.f32 %v1850, 0.0
        %v1901 = vmax.f32 %v1851, 0.0
        %v1902 = vmax.f32 %v1852, 0.0
        %v1903 = vmax.f32 %v1853, 0.0
        %v1904 = vmax.f32 %v1854, 0.0
        %v1905 = vmax.f32 %v1855, 0.0
        %v1906 = vmax.f32 %v1856, 0.0
        %v1907 = vmax.f32 %v1857, 0.0
        %v1908 = vmax.f32 %v1858, 0.0
        %v1909 = vmax.f32 %v1859, 0.0
        %v1910 = vmax.f32 %v1860, 0.0
        %v1911 = vmax.f32 %v1861, 0.0
        %v1912 = vmax.f32 %v1862, 0.0
        %v1913 = vmax.f32 %v1863, 0.0
        %v1914 = vmax.f32 %v1864, 0.0
        %v1915 = vmax.f32 %v1865, 0.0
        %v1916 = vmax.f32 %v1866, 0.0
        %v1917 = vmax.f32 %v1867, 0.0
        %v1918 = vmax.f32 %v1868, 0.0
        %v1919 = vmax.f32 %v1869, 0.0
        %v1920 = vmax.f32 %v1870, 0.0
        %v1921 = vmax.f32 %v1871, 0.0
        %v1922 = vmax.f32 %v1872, 0.0
        %v1923 = vmax.f32 %v1873, 0.0
        %v1924 = vmax.f32 %v1874, 0.0
        %v1925 = vmax.f32 %v1875, 0.0
        %v1926 = vmax.f32 %v1876, 0.0
        %1927 = vst [vmem:[%s5] sm:$0xff] %v1877
        %1928 = vst [vmem:[%s5 + $0x8] sm:$0xff] %v1878
        %1929 = vst [vmem:[%s5 + $0x10] sm:$0xff] %v1879
        %1930 = vst [vmem:[%s5 + $0x18] sm:$0xff] %v1880
        %1931 = vst [vmem:[%s5 + $0x20] sm:$0xff] %v1881
        %1932 = vst [vmem:[%s5 + $0x28] sm:$0xff] %v1882
        %1933 = vst [vmem:[%s5 + $0x30] sm:$0xff] %v1883
        %1934 = vst [vmem:[%s5 + $0x38] sm:$0xff] %v1884
        %1935 = vst [vmem:[%s5 + $0x40] sm:$0xff] %v1885
        %1936 = vst [vmem:[%s5 + $0x48] sm:$0xff] %v1886
        %1937 = vst [vmem:[%s5 + $0x50] sm:$0xff] %v1887
        %1938 = vst [vmem:[%s5 + $0x58] sm:$0xff] %v1888
        %1939 = vst [vmem:[%s5 + $0x60] sm:$0xff] %v1889
        %1940 = vst [vmem:[%s5 + $0x68] sm:$0xff] %v1890
        %1941 = vst [vmem:[%s5 + $0x70] sm:$0xff] %v1891
        %1942 = vst [vmem:[%s5 + $0x78] sm:$0xff] %v1892
        %1943 = vst [vmem:[%s5 + $0x80] sm:$0xff] %v1893
        %1944 = vst [vmem:[%s5 + $0x88] sm:$0xff] %v1894
        %1945 = vst [vmem:[%s5 + $0x90] sm:$0xff] %v1895
        %1946 = vst [vmem:[%s5 + $0x98] sm:$0xff] %v1896
        %1947 = vst [vmem:[%s5 + $0xa0] sm:$0xff] %v1897
        %1948 = vst [vmem:[%s5 + $0xa8] sm:$0xff] %v1898
        %1949 = vst [vmem:[%s5 + $0xb0] sm:$0xff] %v1899
        %1950 = vst [vmem:[%s5 + $0xb8] sm:$0xff] %v1900
        %1951 = vst [vmem:[%s5 + $0xc0] sm:$0xff] %v1901
        %1952 = vst [vmem:[%s5 + $0xc8] sm:$0xff] %v1902
        %1953 = vst [vmem:[%s5 + $0xd0] sm:$0xff] %v1903
        %1954 = vst [vmem:[%s5 + $0xd8] sm:$0xff] %v1904
        %1955 = vst [vmem:[%s5 + $0xe0] sm:$0xff] %v1905
        %1956 = vst [vmem:[%s5 + $0xe8] sm:$0xff] %v1906
        %1957 = vst [vmem:[%s5 + $0xf0] sm:$0xff] %v1907
        %1958 = vst [vmem:[%s5 + $0xf8] sm:$0xff] %v1908
        %1959 = vst [vmem:[%s5 + $0x100] sm:$0xff] %v1909
        %1960 = vst [vmem:[%s5 + $0x108] sm:$0xff] %v1910
        %1961 = vst [vmem:[%s5 + $0x110] sm:$0xff] %v1911
        %1962 = vst [vmem:[%s5 + $0x118] sm:$0xff] %v1912
        %1963 = vst [vmem:[%s5 + $0x120] sm:$0xff] %v1913
        %1964 = vst [vmem:[%s5 + $0x128] sm:$0xff] %v1914
        %1965 = vst [vmem:[%s5 + $0x130] sm:$0xff] %v1915
        %1966 = vst [vmem:[%s5 + $0x138] sm:$0xff] %v1916
        %1967 = vst [vmem:[%s5 + $0x140] sm:$0xff] %v1917
        %1968 = vst [vmem:[%s5 + $0x148] sm:$0xff] %v1918
        %1969 = vst [vmem:[%s5 + $0x150] sm:$0xff] %v1919
        %1970 = vst [vmem:[%s5 + $0x158] sm:$0xff] %v1920
        %1971 = vst [vmem:[%s5 + $0x160] sm:$0xff] %v1921
        %1972 = vst [vmem:[%s5 + $0x168] sm:$0xff] %v1922
        %1973 = vst [vmem:[%s5 + $0x170] sm:$0xff] %v1923
        %1974 = vst [vmem:[%s5 + $0x178] sm:$0xff] %v1924
        %1975 = vst [vmem:[%s5 + $0x180] sm:$0xff] %v1925
        %1976 = vst [vmem:[%s5 + $0x188] sm:$0xff] %v1926
        %v1977 = vld [vmem:[%s5] sm:$0xff]
        %v1978 = vpack.c.bf16 %v1977, %v1977
        %v1979 = vld [vmem:[%s5 + $0x8] sm:$0xff]
        %v1980 = vpack.c.bf16 %v1979, %v1979
        %v1981 = vld [vmem:[%s5 + $0x10] sm:$0xff]
        %v1982 = vpack.c.bf16 %v1981, %v1981
        %v1983 = vld [vmem:[%s5 + $0x18] sm:$0xff]
        %v1984 = vpack.c.bf16 %v1983, %v1983
        %v1985 = vld [vmem:[%s5 + $0x20] sm:$0xff]
        %v1986 = vpack.c.bf16 %v1985, %v1985
        %v1987 = vld [vmem:[%s5 + $0x28] sm:$0xff]
        %v1988 = vpack.c.bf16 %v1987, %v1987
        %v1989 = vld [vmem:[%s5 + $0x30] sm:$0xff]
        %v1990 = vpack.c.bf16 %v1989, %v1989
        %v1991 = vld [vmem:[%s5 + $0x38] sm:$0xff]
        %v1992 = vpack.c.bf16 %v1991, %v1991
        %v1993 = vld [vmem:[%s5 + $0x40] sm:$0xff]
        %v1994 = vpack.c.bf16 %v1993, %v1993
        %v1995 = vld [vmem:[%s5 + $0x48] sm:$0xff]
        %v1996 = vpack.c.bf16 %v1995, %v1995
        %v1997 = vld [vmem:[%s5 + $0x50] sm:$0xff]
        %v1998 = vpack.c.bf16 %v1997, %v1997
        %v1999 = vld [vmem:[%s5 + $0x58] sm:$0xff]
        %v2000 = vpack.c.bf16 %v1999, %v1999
        %v2001 = vld [vmem:[%s5 + $0x60] sm:$0xff]
        %v2002 = vpack.c.bf16 %v2001, %v2001
        %v2003 = vld [vmem:[%s5 + $0x68] sm:$0xff]
        %v2004 = vpack.c.bf16 %v2003, %v2003
        %v2005 = vld [vmem:[%s5 + $0x70] sm:$0xff]
        %v2006 = vpack.c.bf16 %v2005, %v2005
        %v2007 = vld [vmem:[%s5 + $0x78] sm:$0xff]
        %v2008 = vpack.c.bf16 %v2007, %v2007
        %v2009 = vld [vmem:[%s5 + $0x80] sm:$0xff]
        %v2010 = vpack.c.bf16 %v2009, %v2009
        %v2011 = vld [vmem:[%s5 + $0x88] sm:$0xff]
        %v2012 = vpack.c.bf16 %v2011, %v2011
        %v2013 = vld [vmem:[%s5 + $0x90] sm:$0xff]
        %v2014 = vpack.c.bf16 %v2013, %v2013
        %v2015 = vld [vmem:[%s5 + $0x98] sm:$0xff]
        %v2016 = vpack.c.bf16 %v2015, %v2015
        %v2017 = vld [vmem:[%s5 + $0xa0] sm:$0xff]
        %v2018 = vpack.c.bf16 %v2017, %v2017
        %v2019 = vld [vmem:[%s5 + $0xa8] sm:$0xff]
        %v2020 = vpack.c.bf16 %v2019, %v2019
        %v2021 = vld [vmem:[%s5 + $0xb0] sm:$0xff]
        %v2022 = vpack.c.bf16 %v2021, %v2021
        %v2023 = vld [vmem:[%s5 + $0xb8] sm:$0xff]
        %v2024 = vpack.c.bf16 %v2023, %v2023
        %v2025 = vld [vmem:[%s5 + $0xc0] sm:$0xff]
        %v2026 = vpack.c.bf16 %v2025, %v2025
        %v2027 = vld [vmem:[%s5 + $0xc8] sm:$0xff]
        %v2028 = vpack.c.bf16 %v2027, %v2027
        %v2029 = vld [vmem:[%s5 + $0xd0] sm:$0xff]
        %v2030 = vpack.c.bf16 %v2029, %v2029
        %v2031 = vld [vmem:[%s5 + $0xd8] sm:$0xff]
        %v2032 = vpack.c.bf16 %v2031, %v2031
        %v2033 = vld [vmem:[%s5 + $0xe0] sm:$0xff]
        %v2034 = vpack.c.bf16 %v2033, %v2033
        %v2035 = vld [vmem:[%s5 + $0xe8] sm:$0xff]
        %v2036 = vpack.c.bf16 %v2035, %v2035
        %v2037 = vld [vmem:[%s5 + $0xf0] sm:$0xff]
        %v2038 = vpack.c.bf16 %v2037, %v2037
        %v2039 = vld [vmem:[%s5 + $0xf8] sm:$0xff]
        %v2040 = vpack.c.bf16 %v2039, %v2039
        %v2041 = vld [vmem:[%s5 + $0x100] sm:$0xff]
        %v2042 = vpack.c.bf16 %v2041, %v2041
        %v2043 = vld [vmem:[%s5 + $0x108] sm:$0xff]
        %v2044 = vpack.c.bf16 %v2043, %v2043
        %v2045 = vld [vmem:[%s5 + $0x110] sm:$0xff]
        %v2046 = vpack.c.bf16 %v2045, %v2045
        %v2047 = vld [vmem:[%s5 + $0x118] sm:$0xff]
        %v2048 = vpack.c.bf16 %v2047, %v2047
        %v2049 = vld [vmem:[%s5 + $0x120] sm:$0xff]
        %v2050 = vpack.c.bf16 %v2049, %v2049
        %v2051 = vld [vmem:[%s5 + $0x128] sm:$0xff]
        %v2052 = vpack.c.bf16 %v2051, %v2051
        %v2053 = vld [vmem:[%s5 + $0x130] sm:$0xff]
        %v2054 = vpack.c.bf16 %v2053, %v2053
        %v2055 = vld [vmem:[%s5 + $0x138] sm:$0xff]
        %v2056 = vpack.c.bf16 %v2055, %v2055
        %v2057 = vld [vmem:[%s5 + $0x140] sm:$0xff]
        %v2058 = vpack.c.bf16 %v2057, %v2057
        %v2059 = vld [vmem:[%s5 + $0x148] sm:$0xff]
        %v2060 = vpack.c.bf16 %v2059, %v2059
        %v2061 = vld [vmem:[%s5 + $0x150] sm:$0xff]
        %v2062 = vpack.c.bf16 %v2061, %v2061
        %v2063 = vld [vmem:[%s5 + $0x158] sm:$0xff]
        %v2064 = vpack.c.bf16 %v2063, %v2063
        %v2065 = vld [vmem:[%s5 + $0x160] sm:$0xff]
        %v2066 = vpack.c.bf16 %v2065, %v2065
        %v2067 = vld [vmem:[%s5 + $0x168] sm:$0xff]
        %v2068 = vpack.c.bf16 %v2067, %v2067
        %v2069 = vld [vmem:[%s5 + $0x170] sm:$0xff]
        %v2070 = vpack.c.bf16 %v2069, %v2069
        %v2071 = vld [vmem:[%s5 + $0x178] sm:$0xff]
        %v2072 = vpack.c.bf16 %v2071, %v2071
        %v2073 = vld [vmem:[%s5 + $0x180] sm:$0xff]
        %v2074 = vpack.c.bf16 %v2073, %v2073
        %v2075 = vld [vmem:[%s3] sm:$0xf]
        %v2076 = vld [vmem:[%s3 + $0x4] sm:$0xf]
        %v2077 = vld [vmem:[%s3 + $0x8] sm:$0xf]
        %v2078 = vld [vmem:[%s3 + $0xc] sm:$0xf]
        %v2079 = vld [vmem:[%s3 + $0x10] sm:$0xf]
        %v2080 = vld [vmem:[%s3 + $0x14] sm:$0xf]
        %v2081 = vld [vmem:[%s3 + $0x18] sm:$0xf]
        %v2082 = vld [vmem:[%s3 + $0x1c] sm:$0xf]
        %v2083 = vld [vmem:[%s3 + $0x20] sm:$0xf]
        %v2084 = vld [vmem:[%s3 + $0x24] sm:$0xf]
        %v2085 = vld [vmem:[%s3 + $0x28] sm:$0xf]
        %v2086 = vld [vmem:[%s3 + $0x2c] sm:$0xf]
        %v2087 = vld [vmem:[%s3 + $0x30] sm:$0xf]
        %v2088 = vld [vmem:[%s3 + $0x34] sm:$0xf]
        %v2089 = vld [vmem:[%s3 + $0x38] sm:$0xf]
        %v2090 = vld [vmem:[%s3 + $0x3c] sm:$0xf]
        %v2091 = vld [vmem:[%s3 + $0x40] sm:$0xf]
        %v2092 = vld [vmem:[%s3 + $0x44] sm:$0xf]
        %v2093 = vld [vmem:[%s3 + $0x48] sm:$0xf]
        %v2094 = vld [vmem:[%s3 + $0x4c] sm:$0xf]
        %v2095 = vld [vmem:[%s3 + $0x50] sm:$0xf]
        %v2096 = vld [vmem:[%s3 + $0x54] sm:$0xf]
        %v2097 = vld [vmem:[%s3 + $0x58] sm:$0xf]
        %v2098 = vld [vmem:[%s3 + $0x5c] sm:$0xf]
        %v2099 = vld [vmem:[%s3 + $0x60] sm:$0xf]
        %v2100 = vld [vmem:[%s3 + $0x64] sm:$0xf]
        %v2101 = vld [vmem:[%s3 + $0x68] sm:$0xf]
        %v2102 = vld [vmem:[%s3 + $0x6c] sm:$0xf]
        %v2103 = vld [vmem:[%s3 + $0x70] sm:$0xf]
        %v2104 = vld [vmem:[%s3 + $0x74] sm:$0xf]
        %v2105 = vld [vmem:[%s3 + $0x78] sm:$0xf]
        %v2106 = vld [vmem:[%s3 + $0x7c] sm:$0xf]
        %v2107 = vld [vmem:[%s3 + $0x80] sm:$0xf]
        %v2108 = vld [vmem:[%s3 + $0x84] sm:$0xf]
        %v2109 = vld [vmem:[%s3 + $0x88] sm:$0xf]
        %v2110 = vld [vmem:[%s3 + $0x8c] sm:$0xf]
        %v2111 = vld [vmem:[%s3 + $0x90] sm:$0xf]
        %v2112 = vld [vmem:[%s3 + $0x94] sm:$0xf]
        %v2113 = vld [vmem:[%s3 + $0x98] sm:$0xf]
        %v2114 = vld [vmem:[%s3 + $0x9c] sm:$0xf]
        %v2115 = vld [vmem:[%s3 + $0xa0] sm:$0xf]
        %v2116 = vld [vmem:[%s3 + $0xa4] sm:$0xf]
        %v2117 = vld [vmem:[%s3 + $0xa8] sm:$0xf]
        %v2118 = vld [vmem:[%s3 + $0xac] sm:$0xf]
        %v2119 = vld [vmem:[%s3 + $0xb0] sm:$0xf]
        %v2120 = vld [vmem:[%s3 + $0xb4] sm:$0xf]
        %v2121 = vld [vmem:[%s3 + $0xb8] sm:$0xf]
        %v2122 = vld [vmem:[%s3 + $0xbc] sm:$0xf]
        %v2123 = vld [vmem:[%s3 + $0xc0] sm:$0xf]
        %v2124 = vld [vmem:[%s3 + $0xc4] sm:$0xf]
        %v2125 = vld [vmem:[%s3 + $0xc8] sm:$0xf]
        %v2126 = vld [vmem:[%s3 + $0xcc] sm:$0xf]
        %v2127 = vld [vmem:[%s3 + $0xd0] sm:$0xf]
        %v2128 = vld [vmem:[%s3 + $0xd4] sm:$0xf]
        %v2129 = vld [vmem:[%s3 + $0xd8] sm:$0xf]
        %v2130 = vld [vmem:[%s3 + $0xdc] sm:$0xf]
        %v2131 = vld [vmem:[%s3 + $0xe0] sm:$0xf]
        %v2132 = vld [vmem:[%s3 + $0xe4] sm:$0xf]
        %v2133 = vld [vmem:[%s3 + $0xe8] sm:$0xf]
        %v2134 = vld [vmem:[%s3 + $0xec] sm:$0xf]
        %v2135 = vld [vmem:[%s3 + $0xf0] sm:$0xf]
        %v2136 = vld [vmem:[%s3 + $0xf4] sm:$0xf]
        %v2137 = vld [vmem:[%s3 + $0xf8] sm:$0xf]
        %v2138 = vld [vmem:[%s3 + $0xfc] sm:$0xf]
        %v2139 = vld [vmem:[%s3 + $0x100] sm:$0xf]
        %v2140 = vld [vmem:[%s3 + $0x104] sm:$0xf]
        %v2141 = vld [vmem:[%s3 + $0x108] sm:$0xf]
        %v2142 = vld [vmem:[%s3 + $0x10c] sm:$0xf]
        %v2143 = vld [vmem:[%s3 + $0x110] sm:$0xf]
        %v2144 = vld [vmem:[%s3 + $0x114] sm:$0xf]
        %v2145 = vld [vmem:[%s3 + $0x118] sm:$0xf]
        %v2146 = vld [vmem:[%s3 + $0x11c] sm:$0xf]
        %v2147 = vld [vmem:[%s3 + $0x120] sm:$0xf]
        %v2148 = vld [vmem:[%s3 + $0x124] sm:$0xf]
        %v2149 = vld [vmem:[%s3 + $0x128] sm:$0xf]
        %v2150 = vld [vmem:[%s3 + $0x12c] sm:$0xf]
        %v2151 = vld [vmem:[%s3 + $0x130] sm:$0xf]
        %v2152 = vld [vmem:[%s3 + $0x134] sm:$0xf]
        %v2153 = vld [vmem:[%s3 + $0x138] sm:$0xf]
        %v2154 = vld [vmem:[%s3 + $0x13c] sm:$0xf]
        %v2155 = vld [vmem:[%s3 + $0x140] sm:$0xf]
        %v2156 = vld [vmem:[%s3 + $0x144] sm:$0xf]
        %v2157 = vld [vmem:[%s3 + $0x148] sm:$0xf]
        %v2158 = vld [vmem:[%s3 + $0x14c] sm:$0xf]
        %v2159 = vld [vmem:[%s3 + $0x150] sm:$0xf]
        %v2160 = vld [vmem:[%s3 + $0x154] sm:$0xf]
        %v2161 = vld [vmem:[%s3 + $0x158] sm:$0xf]
        %v2162 = vld [vmem:[%s3 + $0x15c] sm:$0xf]
        %v2163 = vld [vmem:[%s3 + $0x160] sm:$0xf]
        %v2164 = vld [vmem:[%s3 + $0x164] sm:$0xf]
        %v2165 = vld [vmem:[%s3 + $0x168] sm:$0xf]
        %v2166 = vld [vmem:[%s3 + $0x16c] sm:$0xf]
        %v2167 = vld [vmem:[%s3 + $0x170] sm:$0xf]
        %v2168 = vld [vmem:[%s3 + $0x174] sm:$0xf]
        %v2169 = vld [vmem:[%s3 + $0x178] sm:$0xf]
        %v2170 = vld [vmem:[%s3 + $0x17c] sm:$0xf]
        %v2171 = vld [vmem:[%s3 + $0x180] sm:$0xf]
        %v2172 = vld [vmem:[%s3 + $0x184] sm:$0xf]
        %v2173 = vld [vmem:[%s3 + $0x188] sm:$0xf]
        %v2174 = vld [vmem:[%s3 + $0x18c] sm:$0xf]
        %v2175 = vld [vmem:[%s3 + $0x190] sm:$0xf]
        %v2176 = vld [vmem:[%s3 + $0x194] sm:$0xf]
        %v2177 = vld [vmem:[%s3 + $0x198] sm:$0xf]
        %v2178 = vld [vmem:[%s3 + $0x19c] sm:$0xf]
        %v2179 = vld [vmem:[%s3 + $0x1a0] sm:$0xf]
        %v2180 = vld [vmem:[%s3 + $0x1a4] sm:$0xf]
        %v2181 = vld [vmem:[%s3 + $0x1a8] sm:$0xf]
        %v2182 = vld [vmem:[%s3 + $0x1ac] sm:$0xf]
        %v2183 = vld [vmem:[%s3 + $0x1b0] sm:$0xf]
        %v2184 = vld [vmem:[%s3 + $0x1b4] sm:$0xf]
        %v2185 = vld [vmem:[%s3 + $0x1b8] sm:$0xf]
        %v2186 = vld [vmem:[%s3 + $0x1bc] sm:$0xf]
        %v2187 = vld [vmem:[%s3 + $0x1c0] sm:$0xf]
        %v2188 = vld [vmem:[%s3 + $0x1c4] sm:$0xf]
        %v2189 = vld [vmem:[%s3 + $0x1c8] sm:$0xf]
        %v2190 = vld [vmem:[%s3 + $0x1cc] sm:$0xf]
        %v2191 = vld [vmem:[%s3 + $0x1d0] sm:$0xf]
        %v2192 = vld [vmem:[%s3 + $0x1d4] sm:$0xf]
        %v2193 = vld [vmem:[%s3 + $0x1d8] sm:$0xf]
        %v2194 = vld [vmem:[%s3 + $0x1dc] sm:$0xf]
        %v2195 = vld [vmem:[%s3 + $0x1e0] sm:$0xf]
        %v2196 = vld [vmem:[%s3 + $0x1e4] sm:$0xf]
        %v2197 = vld [vmem:[%s3 + $0x1e8] sm:$0xf]
        %v2198 = vld [vmem:[%s3 + $0x1ec] sm:$0xf]
        %v2199 = vld [vmem:[%s3 + $0x1f0] sm:$0xf]
        %v2200 = vld [vmem:[%s3 + $0x1f4] sm:$0xf]
        %v2201 = vld [vmem:[%s3 + $0x1f8] sm:$0xf]
        %v2202 = vld [vmem:[%s3 + $0x1fc] sm:$0xf]
        %v2203 = vld [vmem:[%s3 + $0x200] sm:$0xf]
        %v2204 = vld [vmem:[%s3 + $0x204] sm:$0xf]
        %v2205 = vld [vmem:[%s3 + $0x208] sm:$0xf]
        %v2206 = vld [vmem:[%s3 + $0x20c] sm:$0xf]
        %v2207 = vld [vmem:[%s3 + $0x210] sm:$0xf]
        %v2208 = vld [vmem:[%s3 + $0x214] sm:$0xf]
        %v2209 = vld [vmem:[%s3 + $0x218] sm:$0xf]
        %v2210 = vld [vmem:[%s3 + $0x21c] sm:$0xf]
        %v2211 = vld [vmem:[%s3 + $0x220] sm:$0xf]
        %v2212 = vld [vmem:[%s3 + $0x224] sm:$0xf]
        %v2213 = vld [vmem:[%s3 + $0x228] sm:$0xf]
        %v2214 = vld [vmem:[%s3 + $0x22c] sm:$0xf]
        %v2215 = vld [vmem:[%s3 + $0x230] sm:$0xf]
        %v2216 = vld [vmem:[%s3 + $0x234] sm:$0xf]
        %v2217 = vld [vmem:[%s3 + $0x238] sm:$0xf]
        %v2218 = vld [vmem:[%s3 + $0x23c] sm:$0xf]
        %v2219 = vld [vmem:[%s3 + $0x240] sm:$0xf]
        %v2220 = vld [vmem:[%s3 + $0x244] sm:$0xf]
        %v2221 = vld [vmem:[%s3 + $0x248] sm:$0xf]
        %v2222 = vld [vmem:[%s3 + $0x24c] sm:$0xf]
        %v2223 = vld [vmem:[%s3 + $0x250] sm:$0xf]
        %v2224 = vld [vmem:[%s3 + $0x254] sm:$0xf]
        %v2225 = vld [vmem:[%s3 + $0x258] sm:$0xf]
        %v2226 = vld [vmem:[%s3 + $0x25c] sm:$0xf]
        %v2227 = vld [vmem:[%s3 + $0x260] sm:$0xf]
        %v2228 = vld [vmem:[%s3 + $0x264] sm:$0xf]
        %v2229 = vld [vmem:[%s3 + $0x268] sm:$0xf]
        %v2230 = vld [vmem:[%s3 + $0x26c] sm:$0xf]
        %v2231 = vld [vmem:[%s3 + $0x270] sm:$0xf]
        %v2232 = vld [vmem:[%s3 + $0x274] sm:$0xf]
        %v2233 = vld [vmem:[%s3 + $0x278] sm:$0xf]
        %v2234 = vld [vmem:[%s3 + $0x27c] sm:$0xf]
        %v2235 = vld [vmem:[%s3 + $0x280] sm:$0xf]
        %v2236 = vld [vmem:[%s3 + $0x284] sm:$0xf]
        %v2237 = vld [vmem:[%s3 + $0x288] sm:$0xf]
        %v2238 = vld [vmem:[%s3 + $0x28c] sm:$0xf]
        %v2239 = vld [vmem:[%s3 + $0x290] sm:$0xf]
        %v2240 = vld [vmem:[%s3 + $0x294] sm:$0xf]
        %v2241 = vld [vmem:[%s3 + $0x298] sm:$0xf]
        %v2242 = vld [vmem:[%s3 + $0x29c] sm:$0xf]
        %v2243 = vld [vmem:[%s3 + $0x2a0] sm:$0xf]
        %v2244 = vld [vmem:[%s3 + $0x2a4] sm:$0xf]
        %v2245 = vld [vmem:[%s3 + $0x2a8] sm:$0xf]
        %v2246 = vld [vmem:[%s3 + $0x2ac] sm:$0xf]
        %v2247 = vld [vmem:[%s3 + $0x2b0] sm:$0xf]
        %v2248 = vld [vmem:[%s3 + $0x2b4] sm:$0xf]
        %v2249 = vld [vmem:[%s3 + $0x2b8] sm:$0xf]
        %v2250 = vld [vmem:[%s3 + $0x2bc] sm:$0xf]
        %v2251 = vld [vmem:[%s3 + $0x2c0] sm:$0xf]
        %v2252 = vld [vmem:[%s3 + $0x2c4] sm:$0xf]
        %v2253 = vld [vmem:[%s3 + $0x2c8] sm:$0xf]
        %v2254 = vld [vmem:[%s3 + $0x2cc] sm:$0xf]
        %v2255 = vld [vmem:[%s3 + $0x2d0] sm:$0xf]
        %v2256 = vld [vmem:[%s3 + $0x2d4] sm:$0xf]
        %v2257 = vld [vmem:[%s3 + $0x2d8] sm:$0xf]
        %v2258 = vld [vmem:[%s3 + $0x2dc] sm:$0xf]
        %v2259 = vld [vmem:[%s3 + $0x2e0] sm:$0xf]
        %v2260 = vld [vmem:[%s3 + $0x2e4] sm:$0xf]
        %v2261 = vld [vmem:[%s3 + $0x2e8] sm:$0xf]
        %v2262 = vld [vmem:[%s3 + $0x2ec] sm:$0xf]
        %v2263 = vld [vmem:[%s3 + $0x2f0] sm:$0xf]
        %v2264 = vld [vmem:[%s3 + $0x2f4] sm:$0xf]
        %v2265 = vld [vmem:[%s3 + $0x2f8] sm:$0xf]
        %v2266 = vld [vmem:[%s3 + $0x2fc] sm:$0xf]
        %v2267 = vld [vmem:[%s3 + $0x300] sm:$0xf]
        %v2268 = vld [vmem:[%s3 + $0x304] sm:$0xf]
        %v2269 = vld [vmem:[%s3 + $0x308] sm:$0xf]
        %v2270 = vld [vmem:[%s3 + $0x30c] sm:$0xf]
        %v2271 = vld [vmem:[%s3 + $0x310] sm:$0xf]
        %v2272 = vld [vmem:[%s3 + $0x314] sm:$0xf]
        %v2273 = vld [vmem:[%s3 + $0x318] sm:$0xf]
        %v2274 = vld [vmem:[%s3 + $0x31c] sm:$0xf]
        %v2275 = vld [vmem:[%s3 + $0x320] sm:$0xf]
        %v2276 = vld [vmem:[%s3 + $0x324] sm:$0xf]
        %v2277 = vld [vmem:[%s3 + $0x328] sm:$0xf]
        %v2278 = vld [vmem:[%s3 + $0x32c] sm:$0xf]
        %v2279 = vld [vmem:[%s3 + $0x330] sm:$0xf]
        %v2280 = vld [vmem:[%s3 + $0x334] sm:$0xf]
        %v2281 = vld [vmem:[%s3 + $0x338] sm:$0xf]
        %v2282 = vld [vmem:[%s3 + $0x33c] sm:$0xf]
        %v2283 = vld [vmem:[%s3 + $0x340] sm:$0xf]
        %v2284 = vld [vmem:[%s3 + $0x344] sm:$0xf]
        %v2285 = vld [vmem:[%s3 + $0x348] sm:$0xf]
        %v2286 = vld [vmem:[%s3 + $0x34c] sm:$0xf]
        %v2287 = vld [vmem:[%s3 + $0x350] sm:$0xf]
        %v2288 = vld [vmem:[%s3 + $0x354] sm:$0xf]
        %v2289 = vld [vmem:[%s3 + $0x358] sm:$0xf]
        %v2290 = vld [vmem:[%s3 + $0x35c] sm:$0xf]
        %v2291 = vld [vmem:[%s3 + $0x360] sm:$0xf]
        %v2292 = vld [vmem:[%s3 + $0x364] sm:$0xf]
        %v2293 = vld [vmem:[%s3 + $0x368] sm:$0xf]
        %v2294 = vld [vmem:[%s3 + $0x36c] sm:$0xf]
        %v2295 = vld [vmem:[%s3 + $0x370] sm:$0xf]
        %v2296 = vld [vmem:[%s3 + $0x374] sm:$0xf]
        %v2297 = vld [vmem:[%s3 + $0x378] sm:$0xf]
        %v2298 = vld [vmem:[%s3 + $0x37c] sm:$0xf]
        %v2299 = vld [vmem:[%s3 + $0x380] sm:$0xf]
        %v2300 = vld [vmem:[%s3 + $0x384] sm:$0xf]
        %v2301 = vld [vmem:[%s3 + $0x388] sm:$0xf]
        %v2302 = vld [vmem:[%s3 + $0x38c] sm:$0xf]
        %v2303 = vld [vmem:[%s3 + $0x390] sm:$0xf]
        %v2304 = vld [vmem:[%s3 + $0x394] sm:$0xf]
        %v2305 = vld [vmem:[%s3 + $0x398] sm:$0xf]
        %v2306 = vld [vmem:[%s3 + $0x39c] sm:$0xf]
        %v2307 = vld [vmem:[%s3 + $0x3a0] sm:$0xf]
        %v2308 = vld [vmem:[%s3 + $0x3a4] sm:$0xf]
        %v2309 = vld [vmem:[%s3 + $0x3a8] sm:$0xf]
        %v2310 = vld [vmem:[%s3 + $0x3ac] sm:$0xf]
        %v2311 = vld [vmem:[%s3 + $0x3b0] sm:$0xf]
        %v2312 = vld [vmem:[%s3 + $0x3b4] sm:$0xf]
        %v2313 = vld [vmem:[%s3 + $0x3b8] sm:$0xf]
        %v2314 = vld [vmem:[%s3 + $0x3bc] sm:$0xf]
        %v2315 = vld [vmem:[%s3 + $0x3c0] sm:$0xf]
        %v2316 = vld [vmem:[%s3 + $0x3c4] sm:$0xf]
        %v2317 = vld [vmem:[%s3 + $0x3c8] sm:$0xf]
        %v2318 = vld [vmem:[%s3 + $0x3cc] sm:$0xf]
        %v2319 = vld [vmem:[%s3 + $0x3d0] sm:$0xf]
        %v2320 = vld [vmem:[%s3 + $0x3d4] sm:$0xf]
        %v2321 = vld [vmem:[%s3 + $0x3d8] sm:$0xf]
        %v2322 = vld [vmem:[%s3 + $0x3dc] sm:$0xf]
        %v2323 = vld [vmem:[%s3 + $0x3e0] sm:$0xf]
        %v2324 = vld [vmem:[%s3 + $0x3e4] sm:$0xf]
        %v2325 = vld [vmem:[%s3 + $0x3e8] sm:$0xf]
        %v2326 = vld [vmem:[%s3 + $0x3ec] sm:$0xf]
        %v2327 = vld [vmem:[%s3 + $0x3f0] sm:$0xf]
        %v2328 = vld [vmem:[%s3 + $0x3f4] sm:$0xf]
        %v2329 = vld [vmem:[%s3 + $0x3f8] sm:$0xf]
        %v2330 = vld [vmem:[%s3 + $0x3fc] sm:$0xf]
        %v2331 = vld [vmem:[%s3 + $0x400] sm:$0xf]
        %v2332 = vld [vmem:[%s3 + $0x404] sm:$0xf]
        %v2333 = vld [vmem:[%s3 + $0x408] sm:$0xf]
        %v2334 = vld [vmem:[%s3 + $0x40c] sm:$0xf]
        %v2335 = vld [vmem:[%s3 + $0x410] sm:$0xf]
        %v2336 = vld [vmem:[%s3 + $0x414] sm:$0xf]
        %v2337 = vld [vmem:[%s3 + $0x418] sm:$0xf]
        %v2338 = vld [vmem:[%s3 + $0x41c] sm:$0xf]
        %v2339 = vld [vmem:[%s3 + $0x420] sm:$0xf]
        %v2340 = vld [vmem:[%s3 + $0x424] sm:$0xf]
        %v2341 = vld [vmem:[%s3 + $0x428] sm:$0xf]
        %v2342 = vld [vmem:[%s3 + $0x42c] sm:$0xf]
        %v2343 = vld [vmem:[%s3 + $0x430] sm:$0xf]
        %v2344 = vld [vmem:[%s3 + $0x434] sm:$0xf]
        %v2345 = vld [vmem:[%s3 + $0x438] sm:$0xf]
        %v2346 = vld [vmem:[%s3 + $0x43c] sm:$0xf]
        %v2347 = vld [vmem:[%s3 + $0x440] sm:$0xf]
        %v2348 = vld [vmem:[%s3 + $0x444] sm:$0xf]
        %v2349 = vld [vmem:[%s3 + $0x448] sm:$0xf]
        %v2350 = vld [vmem:[%s3 + $0x44c] sm:$0xf]
        %v2351 = vld [vmem:[%s3 + $0x450] sm:$0xf]
        %v2352 = vld [vmem:[%s3 + $0x454] sm:$0xf]
        %v2353 = vld [vmem:[%s3 + $0x458] sm:$0xf]
        %v2354 = vld [vmem:[%s3 + $0x45c] sm:$0xf]
        %v2355 = vld [vmem:[%s3 + $0x460] sm:$0xf]
        %v2356 = vld [vmem:[%s3 + $0x464] sm:$0xf]
        %v2357 = vld [vmem:[%s3 + $0x468] sm:$0xf]
        %v2358 = vld [vmem:[%s3 + $0x46c] sm:$0xf]
        %v2359 = vld [vmem:[%s3 + $0x470] sm:$0xf]
        %v2360 = vld [vmem:[%s3 + $0x474] sm:$0xf]
        %v2361 = vld [vmem:[%s3 + $0x478] sm:$0xf]
        %v2362 = vld [vmem:[%s3 + $0x47c] sm:$0xf]
        %v2363 = vld [vmem:[%s3 + $0x480] sm:$0xf]
        %v2364 = vld [vmem:[%s3 + $0x484] sm:$0xf]
        %v2365 = vld [vmem:[%s3 + $0x488] sm:$0xf]
        %v2366 = vld [vmem:[%s3 + $0x48c] sm:$0xf]
        %v2367 = vld [vmem:[%s3 + $0x490] sm:$0xf]
        %v2368 = vld [vmem:[%s3 + $0x494] sm:$0xf]
        %v2369 = vld [vmem:[%s3 + $0x498] sm:$0xf]
        %v2370 = vld [vmem:[%s3 + $0x49c] sm:$0xf]
        %v2371 = vld [vmem:[%s3 + $0x4a0] sm:$0xf]
        %v2372 = vld [vmem:[%s3 + $0x4a4] sm:$0xf]
        %v2373 = vld [vmem:[%s3 + $0x4a8] sm:$0xf]
        %v2374 = vld [vmem:[%s3 + $0x4ac] sm:$0xf]
        %v2375 = vld [vmem:[%s3 + $0x4b0] sm:$0xf]
        %v2376 = vld [vmem:[%s3 + $0x4b4] sm:$0xf]
        %v2377 = vld [vmem:[%s3 + $0x4b8] sm:$0xf]
        %v2378 = vld [vmem:[%s3 + $0x4bc] sm:$0xf]
        %v2379 = vld [vmem:[%s3 + $0x4c0] sm:$0xf]
        %v2380 = vld [vmem:[%s3 + $0x4c4] sm:$0xf]
        %v2381 = vld [vmem:[%s3 + $0x4c8] sm:$0xf]
        %v2382 = vld [vmem:[%s3 + $0x4cc] sm:$0xf]
        %v2383 = vld [vmem:[%s3 + $0x4d0] sm:$0xf]
        %v2384 = vld [vmem:[%s3 + $0x4d4] sm:$0xf]
        %v2385 = vld [vmem:[%s3 + $0x4d8] sm:$0xf]
        %v2386 = vld [vmem:[%s3 + $0x4dc] sm:$0xf]
        %v2387 = vld [vmem:[%s3 + $0x4e0] sm:$0xf]
        %v2388 = vld [vmem:[%s3 + $0x4e4] sm:$0xf]
        %v2389 = vld [vmem:[%s3 + $0x4e8] sm:$0xf]
        %v2390 = vld [vmem:[%s3 + $0x4ec] sm:$0xf]
        %v2391 = vld [vmem:[%s3 + $0x4f0] sm:$0xf]
        %v2392 = vld [vmem:[%s3 + $0x4f4] sm:$0xf]
        %v2393 = vld [vmem:[%s3 + $0x4f8] sm:$0xf]
        %v2394 = vld [vmem:[%s3 + $0x4fc] sm:$0xf]
        %v2395 = vld [vmem:[%s3 + $0x500] sm:$0xf]
        %v2396 = vld [vmem:[%s3 + $0x504] sm:$0xf]
        %v2397 = vld [vmem:[%s3 + $0x508] sm:$0xf]
        %v2398 = vld [vmem:[%s3 + $0x50c] sm:$0xf]
        %v2399 = vld [vmem:[%s3 + $0x510] sm:$0xf]
        %v2400 = vld [vmem:[%s3 + $0x514] sm:$0xf]
        %v2401 = vld [vmem:[%s3 + $0x518] sm:$0xf]
        %v2402 = vld [vmem:[%s3 + $0x51c] sm:$0xf]
        %v2403 = vld [vmem:[%s3 + $0x520] sm:$0xf]
        %v2404 = vld [vmem:[%s3 + $0x524] sm:$0xf]
        %v2405 = vld [vmem:[%s3 + $0x528] sm:$0xf]
        %v2406 = vld [vmem:[%s3 + $0x52c] sm:$0xf]
        %v2407 = vld [vmem:[%s3 + $0x530] sm:$0xf]
        %v2408 = vld [vmem:[%s3 + $0x534] sm:$0xf]
        %v2409 = vld [vmem:[%s3 + $0x538] sm:$0xf]
        %v2410 = vld [vmem:[%s3 + $0x53c] sm:$0xf]
        %v2411 = vld [vmem:[%s3 + $0x540] sm:$0xf]
        %v2412 = vld [vmem:[%s3 + $0x544] sm:$0xf]
        %v2413 = vld [vmem:[%s3 + $0x548] sm:$0xf]
        %v2414 = vld [vmem:[%s3 + $0x54c] sm:$0xf]
        %v2415 = vld [vmem:[%s3 + $0x550] sm:$0xf]
        %v2416 = vld [vmem:[%s3 + $0x554] sm:$0xf]
        %v2417 = vld [vmem:[%s3 + $0x558] sm:$0xf]
        %v2418 = vld [vmem:[%s3 + $0x55c] sm:$0xf]
        %v2419 = vld [vmem:[%s3 + $0x560] sm:$0xf]
        %v2420 = vld [vmem:[%s3 + $0x564] sm:$0xf]
        %v2421 = vld [vmem:[%s3 + $0x568] sm:$0xf]
        %v2422 = vld [vmem:[%s3 + $0x56c] sm:$0xf]
        %v2423 = vld [vmem:[%s3 + $0x570] sm:$0xf]
        %v2424 = vld [vmem:[%s3 + $0x574] sm:$0xf]
        %v2425 = vld [vmem:[%s3 + $0x578] sm:$0xf]
        %v2426 = vld [vmem:[%s3 + $0x57c] sm:$0xf]
        %v2427 = vld [vmem:[%s3 + $0x580] sm:$0xf]
        %v2428 = vld [vmem:[%s3 + $0x584] sm:$0xf]
        %v2429 = vld [vmem:[%s3 + $0x588] sm:$0xf]
        %v2430 = vld [vmem:[%s3 + $0x58c] sm:$0xf]
        %v2431 = vld [vmem:[%s3 + $0x590] sm:$0xf]
        %v2432 = vld [vmem:[%s3 + $0x594] sm:$0xf]
        %v2433 = vld [vmem:[%s3 + $0x598] sm:$0xf]
        %v2434 = vld [vmem:[%s3 + $0x59c] sm:$0xf]
        %v2435 = vld [vmem:[%s3 + $0x5a0] sm:$0xf]
        %v2436 = vld [vmem:[%s3 + $0x5a4] sm:$0xf]
        %v2437 = vld [vmem:[%s3 + $0x5a8] sm:$0xf]
        %v2438 = vld [vmem:[%s3 + $0x5ac] sm:$0xf]
        %v2439 = vld [vmem:[%s3 + $0x5b0] sm:$0xf]
        %v2440 = vld [vmem:[%s3 + $0x5b4] sm:$0xf]
        %v2441 = vld [vmem:[%s3 + $0x5b8] sm:$0xf]
        %v2442 = vld [vmem:[%s3 + $0x5bc] sm:$0xf]
        %v2443 = vld [vmem:[%s3 + $0x5c0] sm:$0xf]
        %v2444 = vld [vmem:[%s3 + $0x5c4] sm:$0xf]
        %v2445 = vld [vmem:[%s3 + $0x5c8] sm:$0xf]
        %v2446 = vld [vmem:[%s3 + $0x5cc] sm:$0xf]
        %v2447 = vld [vmem:[%s3 + $0x5d0] sm:$0xf]
        %v2448 = vld [vmem:[%s3 + $0x5d4] sm:$0xf]
        %v2449 = vld [vmem:[%s3 + $0x5d8] sm:$0xf]
        %v2450 = vld [vmem:[%s3 + $0x5dc] sm:$0xf]
        %v2451 = vld [vmem:[%s3 + $0x5e0] sm:$0xf]
        %v2452 = vld [vmem:[%s3 + $0x5e4] sm:$0xf]
        %v2453 = vld [vmem:[%s3 + $0x5e8] sm:$0xf]
        %v2454 = vld [vmem:[%s3 + $0x5ec] sm:$0xf]
        %v2455 = vld [vmem:[%s3 + $0x5f0] sm:$0xf]
        %v2456 = vld [vmem:[%s3 + $0x5f4] sm:$0xf]
        %v2457 = vld [vmem:[%s3 + $0x5f8] sm:$0xf]
        %v2458 = vld [vmem:[%s3 + $0x5fc] sm:$0xf]
        %v2459 = vld [vmem:[%s3 + $0x600] sm:$0xf]
        %v2460 = vld [vmem:[%s3 + $0x604] sm:$0xf]
        %v2461 = vld [vmem:[%s3 + $0x608] sm:$0xf]
        %v2462 = vld [vmem:[%s3 + $0x60c] sm:$0xf]
        %v2463 = vld [vmem:[%s3 + $0x610] sm:$0xf]
        %v2464 = vld [vmem:[%s3 + $0x614] sm:$0xf]
        %v2465 = vld [vmem:[%s3 + $0x618] sm:$0xf]
        %v2466 = vld [vmem:[%s3 + $0x61c] sm:$0xf]
        %v2467 = vld [vmem:[%s3 + $0x620] sm:$0xf]
        %v2468 = vld [vmem:[%s3 + $0x624] sm:$0xf]
        %v2469 = vld [vmem:[%s3 + $0x628] sm:$0xf]
        %v2470 = vld [vmem:[%s3 + $0x62c] sm:$0xf]
        %v2471 = vld [vmem:[%s3 + $0x630] sm:$0xf]
        %v2472 = vld [vmem:[%s3 + $0x634] sm:$0xf]
        %v2473 = vld [vmem:[%s3 + $0x638] sm:$0xf]
        %v2474 = vld [vmem:[%s3 + $0x63c] sm:$0xf]
        %v2475 = vld [vmem:[%s3 + $0x640] sm:$0xf]
        %v2476 = vld [vmem:[%s3 + $0x644] sm:$0xf]
        %v2477 = vld [vmem:[%s3 + $0x648] sm:$0xf]
        %v2478 = vld [vmem:[%s3 + $0x64c] sm:$0xf]
        %v2479 = vld [vmem:[%s3 + $0x650] sm:$0xf]
        %v2480 = vld [vmem:[%s3 + $0x654] sm:$0xf]
        %v2481 = vld [vmem:[%s3 + $0x658] sm:$0xf]
        %v2482 = vld [vmem:[%s3 + $0x65c] sm:$0xf]
        %v2483 = vld [vmem:[%s3 + $0x660] sm:$0xf]
        %v2484 = vld [vmem:[%s3 + $0x664] sm:$0xf]
        %v2485 = vld [vmem:[%s3 + $0x668] sm:$0xf]
        %v2486 = vld [vmem:[%s3 + $0x66c] sm:$0xf]
        %v2487 = vld [vmem:[%s3 + $0x670] sm:$0xf]
        %v2488 = vld [vmem:[%s3 + $0x674] sm:$0xf]
        %v2489 = vld [vmem:[%s3 + $0x678] sm:$0xf]
        %v2490 = vld [vmem:[%s3 + $0x67c] sm:$0xf]
        %v2491 = vld [vmem:[%s3 + $0x680] sm:$0xf]
        %v2492 = vld [vmem:[%s3 + $0x684] sm:$0xf]
        %v2493 = vld [vmem:[%s3 + $0x688] sm:$0xf]
        %v2494 = vld [vmem:[%s3 + $0x68c] sm:$0xf]
        %v2495 = vld [vmem:[%s3 + $0x690] sm:$0xf]
        %v2496 = vld [vmem:[%s3 + $0x694] sm:$0xf]
        %v2497 = vld [vmem:[%s3 + $0x698] sm:$0xf]
        %v2498 = vld [vmem:[%s3 + $0x69c] sm:$0xf]
        %v2499 = vld [vmem:[%s3 + $0x6a0] sm:$0xf]
        %v2500 = vld [vmem:[%s3 + $0x6a4] sm:$0xf]
        %v2501 = vld [vmem:[%s3 + $0x6a8] sm:$0xf]
        %v2502 = vld [vmem:[%s3 + $0x6ac] sm:$0xf]
        %v2503 = vld [vmem:[%s3 + $0x6b0] sm:$0xf]
        %v2504 = vld [vmem:[%s3 + $0x6b4] sm:$0xf]
        %v2505 = vld [vmem:[%s3 + $0x6b8] sm:$0xf]
        %v2506 = vld [vmem:[%s3 + $0x6bc] sm:$0xf]
        %v2507 = vld [vmem:[%s3 + $0x6c0] sm:$0xf]
        %v2508 = vld [vmem:[%s3 + $0x6c4] sm:$0xf]
        %v2509 = vld [vmem:[%s3 + $0x6c8] sm:$0xf]
        %v2510 = vld [vmem:[%s3 + $0x6cc] sm:$0xf]
        %v2511 = vld [vmem:[%s3 + $0x6d0] sm:$0xf]
        %v2512 = vld [vmem:[%s3 + $0x6d4] sm:$0xf]
        %v2513 = vld [vmem:[%s3 + $0x6d8] sm:$0xf]
        %v2514 = vld [vmem:[%s3 + $0x6dc] sm:$0xf]
        %v2515 = vld [vmem:[%s3 + $0x6e0] sm:$0xf]
        %v2516 = vld [vmem:[%s3 + $0x6e4] sm:$0xf]
        %v2517 = vld [vmem:[%s3 + $0x6e8] sm:$0xf]
        %v2518 = vld [vmem:[%s3 + $0x6ec] sm:$0xf]
        %v2519 = vld [vmem:[%s3 + $0x6f0] sm:$0xf]
        %v2520 = vld [vmem:[%s3 + $0x6f4] sm:$0xf]
        %v2521 = vld [vmem:[%s3 + $0x6f8] sm:$0xf]
        %v2522 = vld [vmem:[%s3 + $0x6fc] sm:$0xf]
        %v2523 = vld [vmem:[%s3 + $0x700] sm:$0xf]
        %v2524 = vld [vmem:[%s3 + $0x704] sm:$0xf]
        %v2525 = vld [vmem:[%s3 + $0x708] sm:$0xf]
        %v2526 = vld [vmem:[%s3 + $0x70c] sm:$0xf]
        %v2527 = vld [vmem:[%s3 + $0x710] sm:$0xf]
        %v2528 = vld [vmem:[%s3 + $0x714] sm:$0xf]
        %v2529 = vld [vmem:[%s3 + $0x718] sm:$0xf]
        %v2530 = vld [vmem:[%s3 + $0x71c] sm:$0xf]
        %v2531 = vld [vmem:[%s3 + $0x720] sm:$0xf]
        %v2532 = vld [vmem:[%s3 + $0x724] sm:$0xf]
        %v2533 = vld [vmem:[%s3 + $0x728] sm:$0xf]
        %v2534 = vld [vmem:[%s3 + $0x72c] sm:$0xf]
        %v2535 = vld [vmem:[%s3 + $0x730] sm:$0xf]
        %v2536 = vld [vmem:[%s3 + $0x734] sm:$0xf]
        %v2537 = vld [vmem:[%s3 + $0x738] sm:$0xf]
        %v2538 = vld [vmem:[%s3 + $0x73c] sm:$0xf]
        %v2539 = vld [vmem:[%s3 + $0x740] sm:$0xf]
        %v2540 = vld [vmem:[%s3 + $0x744] sm:$0xf]
        %v2541 = vld [vmem:[%s3 + $0x748] sm:$0xf]
        %v2542 = vld [vmem:[%s3 + $0x74c] sm:$0xf]
        %v2543 = vld [vmem:[%s3 + $0x750] sm:$0xf]
        %v2544 = vld [vmem:[%s3 + $0x754] sm:$0xf]
        %v2545 = vld [vmem:[%s3 + $0x758] sm:$0xf]
        %v2546 = vld [vmem:[%s3 + $0x75c] sm:$0xf]
        %v2547 = vld [vmem:[%s3 + $0x760] sm:$0xf]
        %v2548 = vld [vmem:[%s3 + $0x764] sm:$0xf]
        %v2549 = vld [vmem:[%s3 + $0x768] sm:$0xf]
        %v2550 = vld [vmem:[%s3 + $0x76c] sm:$0xf]
        %v2551 = vld [vmem:[%s3 + $0x770] sm:$0xf]
        %v2552 = vld [vmem:[%s3 + $0x774] sm:$0xf]
        %v2553 = vld [vmem:[%s3 + $0x778] sm:$0xf]
        %v2554 = vld [vmem:[%s3 + $0x77c] sm:$0xf]
        %v2555 = vld [vmem:[%s3 + $0x780] sm:$0xf]
        %v2556 = vld [vmem:[%s3 + $0x784] sm:$0xf]
        %v2557 = vld [vmem:[%s3 + $0x788] sm:$0xf]
        %v2558 = vld [vmem:[%s3 + $0x78c] sm:$0xf]
        %v2559 = vld [vmem:[%s3 + $0x790] sm:$0xf]
        %v2560 = vld [vmem:[%s3 + $0x794] sm:$0xf]
        %v2561 = vld [vmem:[%s3 + $0x798] sm:$0xf]
        %v2562 = vld [vmem:[%s3 + $0x79c] sm:$0xf]
        %v2563 = vld [vmem:[%s3 + $0x7a0] sm:$0xf]
        %v2564 = vld [vmem:[%s3 + $0x7a4] sm:$0xf]
        %v2565 = vld [vmem:[%s3 + $0x7a8] sm:$0xf]
        %v2566 = vld [vmem:[%s3 + $0x7ac] sm:$0xf]
        %v2567 = vld [vmem:[%s3 + $0x7b0] sm:$0xf]
        %v2568 = vld [vmem:[%s3 + $0x7b4] sm:$0xf]
        %v2569 = vld [vmem:[%s3 + $0x7b8] sm:$0xf]
        %v2570 = vld [vmem:[%s3 + $0x7bc] sm:$0xf]
        %v2571 = vld [vmem:[%s3 + $0x7c0] sm:$0xf]
        %v2572 = vld [vmem:[%s3 + $0x7c4] sm:$0xf]
        %v2573 = vld [vmem:[%s3 + $0x7c8] sm:$0xf]
        %v2574 = vld [vmem:[%s3 + $0x7cc] sm:$0xf]
        %v2575 = vld [vmem:[%s3 + $0x7d0] sm:$0xf]
        %v2576 = vld [vmem:[%s3 + $0x7d4] sm:$0xf]
        %v2577 = vld [vmem:[%s3 + $0x7d8] sm:$0xf]
        %v2578 = vld [vmem:[%s3 + $0x7dc] sm:$0xf]
        %v2579 = vld [vmem:[%s3 + $0x7e0] sm:$0xf]
        %v2580 = vld [vmem:[%s3 + $0x7e4] sm:$0xf]
        %v2581 = vld [vmem:[%s3 + $0x7e8] sm:$0xf]
        %v2582 = vld [vmem:[%s3 + $0x7ec] sm:$0xf]
        %v2583 = vld [vmem:[%s3 + $0x7f0] sm:$0xf]
        %v2584 = vld [vmem:[%s3 + $0x7f4] sm:$0xf]
        %v2585 = vld [vmem:[%s3 + $0x7f8] sm:$0xf]
        %v2586 = vld [vmem:[%s3 + $0x7fc] sm:$0xf]
        %v2587 = vld [vmem:[%s3 + $0x800] sm:$0xf]
        %v2588 = vld [vmem:[%s3 + $0x804] sm:$0xf]
        %v2589 = vld [vmem:[%s3 + $0x808] sm:$0xf]
        %v2590 = vld [vmem:[%s3 + $0x80c] sm:$0xf]
        %v2591 = vld [vmem:[%s3 + $0x810] sm:$0xf]
        %v2592 = vld [vmem:[%s3 + $0x814] sm:$0xf]
        %v2593 = vld [vmem:[%s3 + $0x818] sm:$0xf]
        %v2594 = vld [vmem:[%s3 + $0x81c] sm:$0xf]
        %v2595 = vld [vmem:[%s3 + $0x820] sm:$0xf]
        %v2596 = vld [vmem:[%s3 + $0x824] sm:$0xf]
        %v2597 = vld [vmem:[%s3 + $0x828] sm:$0xf]
        %v2598 = vld [vmem:[%s3 + $0x82c] sm:$0xf]
        %v2599 = vld [vmem:[%s3 + $0x830] sm:$0xf]
        %v2600 = vld [vmem:[%s3 + $0x834] sm:$0xf]
        %v2601 = vld [vmem:[%s3 + $0x838] sm:$0xf]
        %v2602 = vld [vmem:[%s3 + $0x83c] sm:$0xf]
        %v2603 = vld [vmem:[%s3 + $0x840] sm:$0xf]
        %v2604 = vld [vmem:[%s3 + $0x844] sm:$0xf]
        %v2605 = vld [vmem:[%s3 + $0x848] sm:$0xf]
        %v2606 = vld [vmem:[%s3 + $0x84c] sm:$0xf]
        %v2607 = vld [vmem:[%s3 + $0x850] sm:$0xf]
        %v2608 = vld [vmem:[%s3 + $0x854] sm:$0xf]
        %v2609 = vld [vmem:[%s3 + $0x858] sm:$0xf]
        %v2610 = vld [vmem:[%s3 + $0x85c] sm:$0xf]
        %v2611 = vld [vmem:[%s3 + $0x860] sm:$0xf]
        %v2612 = vld [vmem:[%s3 + $0x864] sm:$0xf]
        %v2613 = vld [vmem:[%s3 + $0x868] sm:$0xf]
        %v2614 = vld [vmem:[%s3 + $0x86c] sm:$0xf]
        %v2615 = vld [vmem:[%s3 + $0x870] sm:$0xf]
        %v2616 = vld [vmem:[%s3 + $0x874] sm:$0xf]
        %v2617 = vld [vmem:[%s3 + $0x878] sm:$0xf]
        %v2618 = vld [vmem:[%s3 + $0x87c] sm:$0xf]
        %v2619 = vld [vmem:[%s3 + $0x880] sm:$0xf]
        %v2620 = vld [vmem:[%s3 + $0x884] sm:$0xf]
        %v2621 = vld [vmem:[%s3 + $0x888] sm:$0xf]
        %v2622 = vld [vmem:[%s3 + $0x88c] sm:$0xf]
        %v2623 = vld [vmem:[%s3 + $0x890] sm:$0xf]
        %v2624 = vld [vmem:[%s3 + $0x894] sm:$0xf]
        %v2625 = vld [vmem:[%s3 + $0x898] sm:$0xf]
        %v2626 = vld [vmem:[%s3 + $0x89c] sm:$0xf]
        %v2627 = vld [vmem:[%s3 + $0x8a0] sm:$0xf]
        %v2628 = vld [vmem:[%s3 + $0x8a4] sm:$0xf]
        %v2629 = vld [vmem:[%s3 + $0x8a8] sm:$0xf]
        %v2630 = vld [vmem:[%s3 + $0x8ac] sm:$0xf]
        %v2631 = vld [vmem:[%s3 + $0x8b0] sm:$0xf]
        %v2632 = vld [vmem:[%s3 + $0x8b4] sm:$0xf]
        %v2633 = vld [vmem:[%s3 + $0x8b8] sm:$0xf]
        %v2634 = vld [vmem:[%s3 + $0x8bc] sm:$0xf]
        %v2635 = vld [vmem:[%s3 + $0x8c0] sm:$0xf]
        %v2636 = vld [vmem:[%s3 + $0x8c4] sm:$0xf]
        %v2637 = vld [vmem:[%s3 + $0x8c8] sm:$0xf]
        %v2638 = vld [vmem:[%s3 + $0x8cc] sm:$0xf]
        %v2639 = vld [vmem:[%s3 + $0x8d0] sm:$0xf]
        %v2640 = vld [vmem:[%s3 + $0x8d4] sm:$0xf]
        %v2641 = vld [vmem:[%s3 + $0x8d8] sm:$0xf]
        %v2642 = vld [vmem:[%s3 + $0x8dc] sm:$0xf]
        %v2643 = vld [vmem:[%s3 + $0x8e0] sm:$0xf]
        %v2644 = vld [vmem:[%s3 + $0x8e4] sm:$0xf]
        %v2645 = vld [vmem:[%s3 + $0x8e8] sm:$0xf]
        %v2646 = vld [vmem:[%s3 + $0x8ec] sm:$0xf]
        %v2647 = vld [vmem:[%s3 + $0x8f0] sm:$0xf]
        %v2648 = vld [vmem:[%s3 + $0x8f4] sm:$0xf]
        %v2649 = vld [vmem:[%s3 + $0x8f8] sm:$0xf]
        %v2650 = vld [vmem:[%s3 + $0x8fc] sm:$0xf]
        %v2651 = vld [vmem:[%s3 + $0x900] sm:$0xf]
        %v2652 = vld [vmem:[%s3 + $0x904] sm:$0xf]
        %v2653 = vld [vmem:[%s3 + $0x908] sm:$0xf]
        %v2654 = vld [vmem:[%s3 + $0x90c] sm:$0xf]
        %v2655 = vld [vmem:[%s3 + $0x910] sm:$0xf]
        %v2656 = vld [vmem:[%s3 + $0x914] sm:$0xf]
        %v2657 = vld [vmem:[%s3 + $0x918] sm:$0xf]
        %v2658 = vld [vmem:[%s3 + $0x91c] sm:$0xf]
        %v2659 = vld [vmem:[%s3 + $0x920] sm:$0xf]
        %v2660 = vld [vmem:[%s3 + $0x924] sm:$0xf]
        %v2661 = vld [vmem:[%s3 + $0x928] sm:$0xf]
        %v2662 = vld [vmem:[%s3 + $0x92c] sm:$0xf]
        %v2663 = vld [vmem:[%s3 + $0x930] sm:$0xf]
        %v2664 = vld [vmem:[%s3 + $0x934] sm:$0xf]
        %v2665 = vld [vmem:[%s3 + $0x938] sm:$0xf]
        %v2666 = vld [vmem:[%s3 + $0x93c] sm:$0xf]
        %v2667 = vld [vmem:[%s3 + $0x940] sm:$0xf]
        %v2668 = vld [vmem:[%s3 + $0x944] sm:$0xf]
        %v2669 = vld [vmem:[%s3 + $0x948] sm:$0xf]
        %v2670 = vld [vmem:[%s3 + $0x94c] sm:$0xf]
        %v2671 = vld [vmem:[%s3 + $0x950] sm:$0xf]
        %v2672 = vld [vmem:[%s3 + $0x954] sm:$0xf]
        %v2673 = vld [vmem:[%s3 + $0x958] sm:$0xf]
        %v2674 = vld [vmem:[%s3 + $0x95c] sm:$0xf]
        %v2675 = vld [vmem:[%s3 + $0x960] sm:$0xf]
        %v2676 = vld [vmem:[%s3 + $0x964] sm:$0xf]
        %v2677 = vld [vmem:[%s3 + $0x968] sm:$0xf]
        %v2678 = vld [vmem:[%s3 + $0x96c] sm:$0xf]
        %v2679 = vld [vmem:[%s3 + $0x970] sm:$0xf]
        %v2680 = vld [vmem:[%s3 + $0x974] sm:$0xf]
        %v2681 = vld [vmem:[%s3 + $0x978] sm:$0xf]
        %v2682 = vld [vmem:[%s3 + $0x97c] sm:$0xf]
        %v2683 = vld [vmem:[%s3 + $0x980] sm:$0xf]
        %v2684 = vld [vmem:[%s3 + $0x984] sm:$0xf]
        %v2685 = vld [vmem:[%s3 + $0x988] sm:$0xf]
        %v2686 = vld [vmem:[%s3 + $0x98c] sm:$0xf]
        %v2687 = vld [vmem:[%s3 + $0x990] sm:$0xf]
        %v2688 = vld [vmem:[%s3 + $0x994] sm:$0xf]
        %v2689 = vld [vmem:[%s3 + $0x998] sm:$0xf]
        %v2690 = vld [vmem:[%s3 + $0x99c] sm:$0xf]
        %v2691 = vld [vmem:[%s3 + $0x9a0] sm:$0xf]
        %v2692 = vld [vmem:[%s3 + $0x9a4] sm:$0xf]
        %v2693 = vld [vmem:[%s3 + $0x9a8] sm:$0xf]
        %v2694 = vld [vmem:[%s3 + $0x9ac] sm:$0xf]
        %v2695 = vld [vmem:[%s3 + $0x9b0] sm:$0xf]
        %v2696 = vld [vmem:[%s3 + $0x9b4] sm:$0xf]
        %v2697 = vld [vmem:[%s3 + $0x9b8] sm:$0xf]
        %v2698 = vld [vmem:[%s3 + $0x9bc] sm:$0xf]
        %v2699 = vld [vmem:[%s3 + $0x9c0] sm:$0xf]
        %v2700 = vld [vmem:[%s3 + $0x9c4] sm:$0xf]
        %v2701 = vld [vmem:[%s3 + $0x9c8] sm:$0xf]
        %v2702 = vld [vmem:[%s3 + $0x9cc] sm:$0xf]
        %v2703 = vld [vmem:[%s3 + $0x9d0] sm:$0xf]
        %v2704 = vld [vmem:[%s3 + $0x9d4] sm:$0xf]
        %v2705 = vld [vmem:[%s3 + $0x9d8] sm:$0xf]
        %v2706 = vld [vmem:[%s3 + $0x9dc] sm:$0xf]
        %v2707 = vld [vmem:[%s3 + $0x9e0] sm:$0xf]
        %v2708 = vld [vmem:[%s3 + $0x9e4] sm:$0xf]
        %v2709 = vld [vmem:[%s3 + $0x9e8] sm:$0xf]
        %v2710 = vld [vmem:[%s3 + $0x9ec] sm:$0xf]
        %v2711 = vld [vmem:[%s3 + $0x9f0] sm:$0xf]
        %v2712 = vld [vmem:[%s3 + $0x9f4] sm:$0xf]
        %v2713 = vld [vmem:[%s3 + $0x9f8] sm:$0xf]
        %v2714 = vld [vmem:[%s3 + $0x9fc] sm:$0xf]
        %v2715 = vld [vmem:[%s3 + $0xa00] sm:$0xf]
        %v2716 = vld [vmem:[%s3 + $0xa04] sm:$0xf]
        %v2717 = vld [vmem:[%s3 + $0xa08] sm:$0xf]
        %v2718 = vld [vmem:[%s3 + $0xa0c] sm:$0xf]
        %v2719 = vld [vmem:[%s3 + $0xa10] sm:$0xf]
        %v2720 = vld [vmem:[%s3 + $0xa14] sm:$0xf]
        %v2721 = vld [vmem:[%s3 + $0xa18] sm:$0xf]
        %v2722 = vld [vmem:[%s3 + $0xa1c] sm:$0xf]
        %v2723 = vld [vmem:[%s3 + $0xa20] sm:$0xf]
        %v2724 = vld [vmem:[%s3 + $0xa24] sm:$0xf]
        %v2725 = vld [vmem:[%s3 + $0xa28] sm:$0xf]
        %v2726 = vld [vmem:[%s3 + $0xa2c] sm:$0xf]
        %v2727 = vld [vmem:[%s3 + $0xa30] sm:$0xf]
        %v2728 = vld [vmem:[%s3 + $0xa34] sm:$0xf]
        %v2729 = vld [vmem:[%s3 + $0xa38] sm:$0xf]
        %v2730 = vld [vmem:[%s3 + $0xa3c] sm:$0xf]
        %v2731 = vld [vmem:[%s3 + $0xa40] sm:$0xf]
        %v2732 = vld [vmem:[%s3 + $0xa44] sm:$0xf]
        %v2733 = vld [vmem:[%s3 + $0xa48] sm:$0xf]
        %v2734 = vld [vmem:[%s3 + $0xa4c] sm:$0xf]
        %v2735 = vld [vmem:[%s3 + $0xa50] sm:$0xf]
        %v2736 = vld [vmem:[%s3 + $0xa54] sm:$0xf]
        %v2737 = vld [vmem:[%s3 + $0xa58] sm:$0xf]
        %v2738 = vld [vmem:[%s3 + $0xa5c] sm:$0xf]
        %v2739 = vld [vmem:[%s3 + $0xa60] sm:$0xf]
        %v2740 = vld [vmem:[%s3 + $0xa64] sm:$0xf]
        %v2741 = vld [vmem:[%s3 + $0xa68] sm:$0xf]
        %v2742 = vld [vmem:[%s3 + $0xa6c] sm:$0xf]
        %v2743 = vld [vmem:[%s3 + $0xa70] sm:$0xf]
        %v2744 = vld [vmem:[%s3 + $0xa74] sm:$0xf]
        %v2745 = vld [vmem:[%s3 + $0xa78] sm:$0xf]
        %v2746 = vld [vmem:[%s3 + $0xa7c] sm:$0xf]
        %v2747 = vld [vmem:[%s3 + $0xa80] sm:$0xf]
        %v2748 = vld [vmem:[%s3 + $0xa84] sm:$0xf]
        %v2749 = vld [vmem:[%s3 + $0xa88] sm:$0xf]
        %v2750 = vld [vmem:[%s3 + $0xa8c] sm:$0xf]
        %v2751 = vld [vmem:[%s3 + $0xa90] sm:$0xf]
        %v2752 = vld [vmem:[%s3 + $0xa94] sm:$0xf]
        %v2753 = vld [vmem:[%s3 + $0xa98] sm:$0xf]
        %v2754 = vld [vmem:[%s3 + $0xa9c] sm:$0xf]
        %v2755 = vld [vmem:[%s3 + $0xaa0] sm:$0xf]
        %v2756 = vld [vmem:[%s3 + $0xaa4] sm:$0xf]
        %v2757 = vld [vmem:[%s3 + $0xaa8] sm:$0xf]
        %v2758 = vld [vmem:[%s3 + $0xaac] sm:$0xf]
        %v2759 = vld [vmem:[%s3 + $0xab0] sm:$0xf]
        %v2760 = vld [vmem:[%s3 + $0xab4] sm:$0xf]
        %v2761 = vld [vmem:[%s3 + $0xab8] sm:$0xf]
        %v2762 = vld [vmem:[%s3 + $0xabc] sm:$0xf]
        %v2763 = vld [vmem:[%s3 + $0xac0] sm:$0xf]
        %v2764 = vld [vmem:[%s3 + $0xac4] sm:$0xf]
        %v2765 = vld [vmem:[%s3 + $0xac8] sm:$0xf]
        %v2766 = vld [vmem:[%s3 + $0xacc] sm:$0xf]
        %v2767 = vld [vmem:[%s3 + $0xad0] sm:$0xf]
        %v2768 = vld [vmem:[%s3 + $0xad4] sm:$0xf]
        %v2769 = vld [vmem:[%s3 + $0xad8] sm:$0xf]
        %v2770 = vld [vmem:[%s3 + $0xadc] sm:$0xf]
        %v2771 = vld [vmem:[%s3 + $0xae0] sm:$0xf]
        %v2772 = vld [vmem:[%s3 + $0xae4] sm:$0xf]
        %v2773 = vld [vmem:[%s3 + $0xae8] sm:$0xf]
        %v2774 = vld [vmem:[%s3 + $0xaec] sm:$0xf]
        %v2775 = vld [vmem:[%s3 + $0xaf0] sm:$0xf]
        %v2776 = vld [vmem:[%s3 + $0xaf4] sm:$0xf]
        %v2777 = vld [vmem:[%s3 + $0xaf8] sm:$0xf]
        %v2778 = vld [vmem:[%s3 + $0xafc] sm:$0xf]
        %v2779 = vld [vmem:[%s3 + $0xb00] sm:$0xf]
        %v2780 = vld [vmem:[%s3 + $0xb04] sm:$0xf]
        %v2781 = vld [vmem:[%s3 + $0xb08] sm:$0xf]
        %v2782 = vld [vmem:[%s3 + $0xb0c] sm:$0xf]
        %v2783 = vld [vmem:[%s3 + $0xb10] sm:$0xf]
        %v2784 = vld [vmem:[%s3 + $0xb14] sm:$0xf]
        %v2785 = vld [vmem:[%s3 + $0xb18] sm:$0xf]
        %v2786 = vld [vmem:[%s3 + $0xb1c] sm:$0xf]
        %v2787 = vld [vmem:[%s3 + $0xb20] sm:$0xf]
        %v2788 = vld [vmem:[%s3 + $0xb24] sm:$0xf]
        %v2789 = vld [vmem:[%s3 + $0xb28] sm:$0xf]
        %v2790 = vld [vmem:[%s3 + $0xb2c] sm:$0xf]
        %v2791 = vld [vmem:[%s3 + $0xb30] sm:$0xf]
        %v2792 = vld [vmem:[%s3 + $0xb34] sm:$0xf]
        %v2793 = vld [vmem:[%s3 + $0xb38] sm:$0xf]
        %v2794 = vld [vmem:[%s3 + $0xb3c] sm:$0xf]
        %v2795 = vld [vmem:[%s3 + $0xb40] sm:$0xf]
        %v2796 = vld [vmem:[%s3 + $0xb44] sm:$0xf]
        %v2797 = vld [vmem:[%s3 + $0xb48] sm:$0xf]
        %v2798 = vld [vmem:[%s3 + $0xb4c] sm:$0xf]
        %v2799 = vld [vmem:[%s3 + $0xb50] sm:$0xf]
        %v2800 = vld [vmem:[%s3 + $0xb54] sm:$0xf]
        %v2801 = vld [vmem:[%s3 + $0xb58] sm:$0xf]
        %v2802 = vld [vmem:[%s3 + $0xb5c] sm:$0xf]
        %v2803 = vld [vmem:[%s3 + $0xb60] sm:$0xf]
        %v2804 = vld [vmem:[%s3 + $0xb64] sm:$0xf]
        %v2805 = vld [vmem:[%s3 + $0xb68] sm:$0xf]
        %v2806 = vld [vmem:[%s3 + $0xb6c] sm:$0xf]
        %v2807 = vld [vmem:[%s3 + $0xb70] sm:$0xf]
        %v2808 = vld [vmem:[%s3 + $0xb74] sm:$0xf]
        %v2809 = vld [vmem:[%s3 + $0xb78] sm:$0xf]
        %v2810 = vld [vmem:[%s3 + $0xb7c] sm:$0xf]
        %v2811 = vld [vmem:[%s3 + $0xb80] sm:$0xf]
        %v2812 = vld [vmem:[%s3 + $0xb84] sm:$0xf]
        %v2813 = vld [vmem:[%s3 + $0xb88] sm:$0xf]
        %v2814 = vld [vmem:[%s3 + $0xb8c] sm:$0xf]
        %v2815 = vld [vmem:[%s3 + $0xb90] sm:$0xf]
        %v2816 = vld [vmem:[%s3 + $0xb94] sm:$0xf]
        %v2817 = vld [vmem:[%s3 + $0xb98] sm:$0xf]
        %v2818 = vld [vmem:[%s3 + $0xb9c] sm:$0xf]
        %v2819 = vld [vmem:[%s3 + $0xba0] sm:$0xf]
        %v2820 = vld [vmem:[%s3 + $0xba4] sm:$0xf]
        %v2821 = vld [vmem:[%s3 + $0xba8] sm:$0xf]
        %v2822 = vld [vmem:[%s3 + $0xbac] sm:$0xf]
        %v2823 = vld [vmem:[%s3 + $0xbb0] sm:$0xf]
        %v2824 = vld [vmem:[%s3 + $0xbb4] sm:$0xf]
        %v2825 = vld [vmem:[%s3 + $0xbb8] sm:$0xf]
        %v2826 = vld [vmem:[%s3 + $0xbbc] sm:$0xf]
        %v2827 = vld [vmem:[%s3 + $0xbc0] sm:$0xf]
        %v2828 = vld [vmem:[%s3 + $0xbc4] sm:$0xf]
        %v2829 = vld [vmem:[%s3 + $0xbc8] sm:$0xf]
        %v2830 = vld [vmem:[%s3 + $0xbcc] sm:$0xf]
        %v2831 = vld [vmem:[%s3 + $0xbd0] sm:$0xf]
        %v2832 = vld [vmem:[%s3 + $0xbd4] sm:$0xf]
        %v2833 = vld [vmem:[%s3 + $0xbd8] sm:$0xf]
        %v2834 = vld [vmem:[%s3 + $0xbdc] sm:$0xf]
        %v2835 = vld [vmem:[%s3 + $0xbe0] sm:$0xf]
        %v2836 = vld [vmem:[%s3 + $0xbe4] sm:$0xf]
        %v2837 = vld [vmem:[%s3 + $0xbe8] sm:$0xf]
        %v2838 = vld [vmem:[%s3 + $0xbec] sm:$0xf]
        %v2839 = vld [vmem:[%s3 + $0xbf0] sm:$0xf]
        %v2840 = vld [vmem:[%s3 + $0xbf4] sm:$0xf]
        %v2841 = vld [vmem:[%s3 + $0xbf8] sm:$0xf]
        %v2842 = vld [vmem:[%s3 + $0xbfc] sm:$0xf]
        %v2843 = vld [vmem:[%s3 + $0xc00] sm:$0xf]
        %v2844 = vld [vmem:[%s3 + $0xc04] sm:$0xf]
        %v2845 = vld [vmem:[%s3 + $0xc08] sm:$0xf]
        %v2846 = vld [vmem:[%s3 + $0xc0c] sm:$0xf]
        %v2847 = vld [vmem:[%s3 + $0xc10] sm:$0xf]
        %v2848 = vld [vmem:[%s3 + $0xc14] sm:$0xf]
        %v2849 = vld [vmem:[%s3 + $0xc18] sm:$0xf]
        %v2850 = vld [vmem:[%s3 + $0xc1c] sm:$0xf]
        %v2851 = vld [vmem:[%s3 + $0xc20] sm:$0xf]
        %v2852 = vld [vmem:[%s3 + $0xc24] sm:$0xf]
        %v2853 = vld [vmem:[%s3 + $0xc28] sm:$0xf]
        %v2854 = vld [vmem:[%s3 + $0xc2c] sm:$0xf]
        %v2855 = vld [vmem:[%s3 + $0xc30] sm:$0xf]
        %v2856 = vld [vmem:[%s3 + $0xc34] sm:$0xf]
        %v2857 = vld [vmem:[%s3 + $0xc38] sm:$0xf]
        %v2858 = vld [vmem:[%s3 + $0xc3c] sm:$0xf]
        %v2859 = vld [vmem:[%s4] sm:$0x1]
        %v2861 = vlaneseq
        %v2862 = vshrl.u32 %v2861, 7
        %v2863 = vsub.s32 0, %v2862
        %v2864 = vrot.slane %v2859, %v2863
        %v3650 = vunpack.c.l.b16 %v2075
        %v3651 = vunpack.c.l.b16 %v2076
        %v3652 = vunpack.c.l.b16 %v2077
        %v3653 = vunpack.c.l.b16 %v2078
        %v3654 = vunpack.c.l.b16 %v2079
        %v3655 = vunpack.c.l.b16 %v2080
        %v3656 = vunpack.c.l.b16 %v2081
        %v3657 = vunpack.c.l.b16 %v2082
        %v3658 = vunpack.c.l.b16 %v2083
        %v3659 = vunpack.c.l.b16 %v2084
        %v3660 = vunpack.c.l.b16 %v2085
        %v3661 = vunpack.c.l.b16 %v2086
        %v3662 = vunpack.c.l.b16 %v2087
        %v3663 = vunpack.c.l.b16 %v2088
        %v3664 = vunpack.c.l.b16 %v2089
        %v3665 = vunpack.c.l.b16 %v2090
        %v3666 = vunpack.c.l.b16 %v2091
        %v3667 = vunpack.c.l.b16 %v2092
        %v3668 = vunpack.c.l.b16 %v2093
        %v3669 = vunpack.c.l.b16 %v2094
        %v3670 = vunpack.c.l.b16 %v2095
        %v3671 = vunpack.c.l.b16 %v2096
        %v3672 = vunpack.c.l.b16 %v2097
        %v3673 = vunpack.c.l.b16 %v2098
        %v3674 = vunpack.c.l.b16 %v2099
        %v3675 = vunpack.c.l.b16 %v2100
        %v3676 = vunpack.c.l.b16 %v2101
        %v3677 = vunpack.c.l.b16 %v2102
        %v3678 = vunpack.c.l.b16 %v2103
        %v3679 = vunpack.c.l.b16 %v2104
        %v3680 = vunpack.c.l.b16 %v2105
        %v3681 = vunpack.c.l.b16 %v2106
        %v3682 = vunpack.c.l.b16 %v2107
        %v3683 = vunpack.c.l.b16 %v2108
        %v3684 = vunpack.c.l.b16 %v2109
        %v3685 = vunpack.c.l.b16 %v2110
        %v3686 = vunpack.c.l.b16 %v2111
        %v3687 = vunpack.c.l.b16 %v2112
        %v3688 = vunpack.c.l.b16 %v2113
        %v3689 = vunpack.c.l.b16 %v2114
        %v3690 = vunpack.c.l.b16 %v2115
        %v3691 = vunpack.c.l.b16 %v2116
        %v3692 = vunpack.c.l.b16 %v2117
        %v3693 = vunpack.c.l.b16 %v2118
        %v3694 = vunpack.c.l.b16 %v2119
        %v3695 = vunpack.c.l.b16 %v2120
        %v3696 = vunpack.c.l.b16 %v2121
        %v3697 = vunpack.c.l.b16 %v2122
        %v3698 = vunpack.c.l.b16 %v2123
        %v3699 = vunpack.c.l.b16 %v2124
        %v3700 = vunpack.c.l.b16 %v2125
        %v3701 = vunpack.c.l.b16 %v2126
        %v3702 = vunpack.c.l.b16 %v2127
        %v3703 = vunpack.c.l.b16 %v2128
        %v3704 = vunpack.c.l.b16 %v2129
        %v3705 = vunpack.c.l.b16 %v2130
        %v3706 = vunpack.c.l.b16 %v2131
        %v3707 = vunpack.c.l.b16 %v2132
        %v3708 = vunpack.c.l.b16 %v2133
        %v3709 = vunpack.c.l.b16 %v2134
        %v3710 = vunpack.c.l.b16 %v2135
        %v3711 = vunpack.c.l.b16 %v2136
        %v3712 = vunpack.c.l.b16 %v2137
        %v3713 = vunpack.c.l.b16 %v2138
        %v3714 = vunpack.c.l.b16 %v2139
        %v3715 = vunpack.c.l.b16 %v2140
        %v3716 = vunpack.c.l.b16 %v2141
        %v3717 = vunpack.c.l.b16 %v2142
        %v3718 = vunpack.c.l.b16 %v2143
        %v3719 = vunpack.c.l.b16 %v2144
        %v3720 = vunpack.c.l.b16 %v2145
        %v3721 = vunpack.c.l.b16 %v2146
        %v3722 = vunpack.c.l.b16 %v2147
        %v3723 = vunpack.c.l.b16 %v2148
        %v3724 = vunpack.c.l.b16 %v2149
        %v3725 = vunpack.c.l.b16 %v2150
        %v3726 = vunpack.c.l.b16 %v2151
        %v3727 = vunpack.c.l.b16 %v2152
        %v3728 = vunpack.c.l.b16 %v2153
        %v3729 = vunpack.c.l.b16 %v2154
        %v3730 = vunpack.c.l.b16 %v2155
        %v3731 = vunpack.c.l.b16 %v2156
        %v3732 = vunpack.c.l.b16 %v2157
        %v3733 = vunpack.c.l.b16 %v2158
        %v3734 = vunpack.c.l.b16 %v2159
        %v3735 = vunpack.c.l.b16 %v2160
        %v3736 = vunpack.c.l.b16 %v2161
        %v3737 = vunpack.c.l.b16 %v2162
        %v3738 = vunpack.c.l.b16 %v2163
        %v3739 = vunpack.c.l.b16 %v2164
        %v3740 = vunpack.c.l.b16 %v2165
        %v3741 = vunpack.c.l.b16 %v2166
        %v3742 = vunpack.c.l.b16 %v2167
        %v3743 = vunpack.c.l.b16 %v2168
        %v3744 = vunpack.c.l.b16 %v2169
        %v3745 = vunpack.c.l.b16 %v2170
        %v3746 = vunpack.c.l.b16 %v2171
        %v3747 = vunpack.c.l.b16 %v2172
        %v3748 = vunpack.c.l.b16 %v2173
        %v3749 = vunpack.c.l.b16 %v2174
        %v3750 = vunpack.c.l.b16 %v2175
        %v3751 = vunpack.c.l.b16 %v2176
        %v3752 = vunpack.c.l.b16 %v2177
        %v3753 = vunpack.c.l.b16 %v2178
        %v3754 = vunpack.c.l.b16 %v2179
        %v3755 = vunpack.c.l.b16 %v2180
        %v3756 = vunpack.c.l.b16 %v2181
        %v3757 = vunpack.c.l.b16 %v2182
        %v3758 = vunpack.c.l.b16 %v2183
        %v3759 = vunpack.c.l.b16 %v2184
        %v3760 = vunpack.c.l.b16 %v2185
        %v3761 = vunpack.c.l.b16 %v2186
        %v3762 = vunpack.c.l.b16 %v2187
        %v3763 = vunpack.c.l.b16 %v2188
        %v3764 = vunpack.c.l.b16 %v2189
        %v3765 = vunpack.c.l.b16 %v2190
        %v3766 = vunpack.c.l.b16 %v2191
        %v3767 = vunpack.c.l.b16 %v2192
        %v3768 = vunpack.c.l.b16 %v2193
        %v3769 = vunpack.c.l.b16 %v2194
        %v3770 = vunpack.c.l.b16 %v2195
        %v3771 = vunpack.c.l.b16 %v2196
        %v3772 = vunpack.c.l.b16 %v2197
        %v3773 = vunpack.c.l.b16 %v2198
        %v3774 = vunpack.c.l.b16 %v2199
        %v3775 = vunpack.c.l.b16 %v2200
        %v3776 = vunpack.c.l.b16 %v2201
        %v3777 = vunpack.c.l.b16 %v2202
        %v3778 = vunpack.c.l.b16 %v2203
        %v3779 = vunpack.c.l.b16 %v2204
        %v3780 = vunpack.c.l.b16 %v2205
        %v3781 = vunpack.c.l.b16 %v2206
        %v3782 = vunpack.c.l.b16 %v2207
        %v3783 = vunpack.c.l.b16 %v2208
        %v3784 = vunpack.c.l.b16 %v2209
        %v3785 = vunpack.c.l.b16 %v2210
        %v3786 = vunpack.c.l.b16 %v2211
        %v3787 = vunpack.c.l.b16 %v2212
        %v3788 = vunpack.c.l.b16 %v2213
        %v3789 = vunpack.c.l.b16 %v2214
        %v3790 = vunpack.c.l.b16 %v2215
        %v3791 = vunpack.c.l.b16 %v2216
        %v3792 = vunpack.c.l.b16 %v2217
        %v3793 = vunpack.c.l.b16 %v2218
        %v3794 = vunpack.c.l.b16 %v2219
        %v3795 = vunpack.c.l.b16 %v2220
        %v3796 = vunpack.c.l.b16 %v2221
        %v3797 = vunpack.c.l.b16 %v2222
        %v3798 = vunpack.c.l.b16 %v2223
        %v3799 = vunpack.c.l.b16 %v2224
        %v3800 = vunpack.c.l.b16 %v2225
        %v3801 = vunpack.c.l.b16 %v2226
        %v3802 = vunpack.c.l.b16 %v2227
        %v3803 = vunpack.c.l.b16 %v2228
        %v3804 = vunpack.c.l.b16 %v2229
        %v3805 = vunpack.c.l.b16 %v2230
        %v3806 = vunpack.c.l.b16 %v2231
        %v3807 = vunpack.c.l.b16 %v2232
        %v3808 = vunpack.c.l.b16 %v2233
        %v3809 = vunpack.c.l.b16 %v2234
        %v3810 = vunpack.c.l.b16 %v2235
        %v3811 = vunpack.c.l.b16 %v2236
        %v3812 = vunpack.c.l.b16 %v2237
        %v3813 = vunpack.c.l.b16 %v2238
        %v3814 = vunpack.c.l.b16 %v2239
        %v3815 = vunpack.c.l.b16 %v2240
        %v3816 = vunpack.c.l.b16 %v2241
        %v3817 = vunpack.c.l.b16 %v2242
        %v3818 = vunpack.c.l.b16 %v2243
        %v3819 = vunpack.c.l.b16 %v2244
        %v3820 = vunpack.c.l.b16 %v2245
        %v3821 = vunpack.c.l.b16 %v2246
        %v3822 = vunpack.c.l.b16 %v2247
        %v3823 = vunpack.c.l.b16 %v2248
        %v3824 = vunpack.c.l.b16 %v2249
        %v3825 = vunpack.c.l.b16 %v2250
        %v3826 = vunpack.c.l.b16 %v2251
        %v3827 = vunpack.c.l.b16 %v2252
        %v3828 = vunpack.c.l.b16 %v2253
        %v3829 = vunpack.c.l.b16 %v2254
        %v3830 = vunpack.c.l.b16 %v2255
        %v3831 = vunpack.c.l.b16 %v2256
        %v3832 = vunpack.c.l.b16 %v2257
        %v3833 = vunpack.c.l.b16 %v2258
        %v3834 = vunpack.c.l.b16 %v2259
        %v3835 = vunpack.c.l.b16 %v2260
        %v3836 = vunpack.c.l.b16 %v2261
        %v3837 = vunpack.c.l.b16 %v2262
        %v3838 = vunpack.c.l.b16 %v2263
        %v3839 = vunpack.c.l.b16 %v2264
        %v3840 = vunpack.c.l.b16 %v2265
        %v3841 = vunpack.c.l.b16 %v2266
        %v3842 = vunpack.c.l.b16 %v2267
        %v3843 = vunpack.c.l.b16 %v2268
        %v3844 = vunpack.c.l.b16 %v2269
        %v3845 = vunpack.c.l.b16 %v2270
        %v3846 = vunpack.c.l.b16 %v2271
        %v3847 = vunpack.c.l.b16 %v2272
        %v3848 = vunpack.c.l.b16 %v2273
        %v3849 = vunpack.c.l.b16 %v2274
        %v3850 = vunpack.c.l.b16 %v2275
        %v3851 = vunpack.c.l.b16 %v2276
        %v3852 = vunpack.c.l.b16 %v2277
        %v3853 = vunpack.c.l.b16 %v2278
        %v3854 = vunpack.c.l.b16 %v2279
        %v3855 = vunpack.c.l.b16 %v2280
        %v3856 = vunpack.c.l.b16 %v2281
        %v3857 = vunpack.c.l.b16 %v2282
        %v3858 = vunpack.c.l.b16 %v2283
        %v3859 = vunpack.c.l.b16 %v2284
        %v3860 = vunpack.c.l.b16 %v2285
        %v3861 = vunpack.c.l.b16 %v2286
        %v3862 = vunpack.c.l.b16 %v2287
        %v3863 = vunpack.c.l.b16 %v2288
        %v3864 = vunpack.c.l.b16 %v2289
        %v3865 = vunpack.c.l.b16 %v2290
        %v3866 = vunpack.c.l.b16 %v2291
        %v3867 = vunpack.c.l.b16 %v2292
        %v3868 = vunpack.c.l.b16 %v2293
        %v3869 = vunpack.c.l.b16 %v2294
        %v3870 = vunpack.c.l.b16 %v2295
        %v3871 = vunpack.c.l.b16 %v2296
        %v3872 = vunpack.c.l.b16 %v2297
        %v3873 = vunpack.c.l.b16 %v2298
        %v3874 = vunpack.c.l.b16 %v2299
        %v3875 = vunpack.c.l.b16 %v2300
        %v3876 = vunpack.c.l.b16 %v2301
        %v3877 = vunpack.c.l.b16 %v2302
        %v3878 = vunpack.c.l.b16 %v2303
        %v3879 = vunpack.c.l.b16 %v2304
        %v3880 = vunpack.c.l.b16 %v2305
        %v3881 = vunpack.c.l.b16 %v2306
        %v3882 = vunpack.c.l.b16 %v2307
        %v3883 = vunpack.c.l.b16 %v2308
        %v3884 = vunpack.c.l.b16 %v2309
        %v3885 = vunpack.c.l.b16 %v2310
        %v3886 = vunpack.c.l.b16 %v2311
        %v3887 = vunpack.c.l.b16 %v2312
        %v3888 = vunpack.c.l.b16 %v2313
        %v3889 = vunpack.c.l.b16 %v2314
        %v3890 = vunpack.c.l.b16 %v2315
        %v3891 = vunpack.c.l.b16 %v2316
        %v3892 = vunpack.c.l.b16 %v2317
        %v3893 = vunpack.c.l.b16 %v2318
        %v3894 = vunpack.c.l.b16 %v2319
        %v3895 = vunpack.c.l.b16 %v2320
        %v3896 = vunpack.c.l.b16 %v2321
        %v3897 = vunpack.c.l.b16 %v2322
        %v3898 = vunpack.c.l.b16 %v2323
        %v3899 = vunpack.c.l.b16 %v2324
        %v3900 = vunpack.c.l.b16 %v2325
        %v3901 = vunpack.c.l.b16 %v2326
        %v3902 = vunpack.c.l.b16 %v2327
        %v3903 = vunpack.c.l.b16 %v2328
        %v3904 = vunpack.c.l.b16 %v2329
        %v3905 = vunpack.c.l.b16 %v2330
        %v3906 = vunpack.c.l.b16 %v2331
        %v3907 = vunpack.c.l.b16 %v2332
        %v3908 = vunpack.c.l.b16 %v2333
        %v3909 = vunpack.c.l.b16 %v2334
        %v3910 = vunpack.c.l.b16 %v2335
        %v3911 = vunpack.c.l.b16 %v2336
        %v3912 = vunpack.c.l.b16 %v2337
        %v3913 = vunpack.c.l.b16 %v2338
        %v3914 = vunpack.c.l.b16 %v2339
        %v3915 = vunpack.c.l.b16 %v2340
        %v3916 = vunpack.c.l.b16 %v2341
        %v3917 = vunpack.c.l.b16 %v2342
        %v3918 = vunpack.c.l.b16 %v2343
        %v3919 = vunpack.c.l.b16 %v2344
        %v3920 = vunpack.c.l.b16 %v2345
        %v3921 = vunpack.c.l.b16 %v2346
        %v3922 = vunpack.c.l.b16 %v2347
        %v3923 = vunpack.c.l.b16 %v2348
        %v3924 = vunpack.c.l.b16 %v2349
        %v3925 = vunpack.c.l.b16 %v2350
        %v3926 = vunpack.c.l.b16 %v2351
        %v3927 = vunpack.c.l.b16 %v2352
        %v3928 = vunpack.c.l.b16 %v2353
        %v3929 = vunpack.c.l.b16 %v2354
        %v3930 = vunpack.c.l.b16 %v2355
        %v3931 = vunpack.c.l.b16 %v2356
        %v3932 = vunpack.c.l.b16 %v2357
        %v3933 = vunpack.c.l.b16 %v2358
        %v3934 = vunpack.c.l.b16 %v2359
        %v3935 = vunpack.c.l.b16 %v2360
        %v3936 = vunpack.c.l.b16 %v2361
        %v3937 = vunpack.c.l.b16 %v2362
        %v3938 = vunpack.c.l.b16 %v2363
        %v3939 = vunpack.c.l.b16 %v2364
        %v3940 = vunpack.c.l.b16 %v2365
        %v3941 = vunpack.c.l.b16 %v2366
        %v3942 = vunpack.c.l.b16 %v2367
        %v3943 = vunpack.c.l.b16 %v2368
        %v3944 = vunpack.c.l.b16 %v2369
        %v3945 = vunpack.c.l.b16 %v2370
        %v3946 = vunpack.c.l.b16 %v2371
        %v3947 = vunpack.c.l.b16 %v2372
        %v3948 = vunpack.c.l.b16 %v2373
        %v3949 = vunpack.c.l.b16 %v2374
        %v3950 = vunpack.c.l.b16 %v2375
        %v3951 = vunpack.c.l.b16 %v2376
        %v3952 = vunpack.c.l.b16 %v2377
        %v3953 = vunpack.c.l.b16 %v2378
        %v3954 = vunpack.c.l.b16 %v2379
        %v3955 = vunpack.c.l.b16 %v2380
        %v3956 = vunpack.c.l.b16 %v2381
        %v3957 = vunpack.c.l.b16 %v2382
        %v3958 = vunpack.c.l.b16 %v2383
        %v3959 = vunpack.c.l.b16 %v2384
        %v3960 = vunpack.c.l.b16 %v2385
        %v3961 = vunpack.c.l.b16 %v2386
        %v3962 = vunpack.c.l.b16 %v2387
        %v3963 = vunpack.c.l.b16 %v2388
        %v3964 = vunpack.c.l.b16 %v2389
        %v3965 = vunpack.c.l.b16 %v2390
        %v3966 = vunpack.c.l.b16 %v2391
        %v3967 = vunpack.c.l.b16 %v2392
        %v3968 = vunpack.c.l.b16 %v2393
        %v3969 = vunpack.c.l.b16 %v2394
        %v3970 = vunpack.c.l.b16 %v2395
        %v3971 = vunpack.c.l.b16 %v2396
        %v3972 = vunpack.c.l.b16 %v2397
        %v3973 = vunpack.c.l.b16 %v2398
        %v3974 = vunpack.c.l.b16 %v2399
        %v3975 = vunpack.c.l.b16 %v2400
        %v3976 = vunpack.c.l.b16 %v2401
        %v3977 = vunpack.c.l.b16 %v2402
        %v3978 = vunpack.c.l.b16 %v2403
        %v3979 = vunpack.c.l.b16 %v2404
        %v3980 = vunpack.c.l.b16 %v2405
        %v3981 = vunpack.c.l.b16 %v2406
        %v3982 = vunpack.c.l.b16 %v2407
        %v3983 = vunpack.c.l.b16 %v2408
        %v3984 = vunpack.c.l.b16 %v2409
        %v3985 = vunpack.c.l.b16 %v2410
        %v3986 = vunpack.c.l.b16 %v2411
        %v3987 = vunpack.c.l.b16 %v2412
        %v3988 = vunpack.c.l.b16 %v2413
        %v3989 = vunpack.c.l.b16 %v2414
        %v3990 = vunpack.c.l.b16 %v2415
        %v3991 = vunpack.c.l.b16 %v2416
        %v3992 = vunpack.c.l.b16 %v2417
        %v3993 = vunpack.c.l.b16 %v2418
        %v3994 = vunpack.c.l.b16 %v2419
        %v3995 = vunpack.c.l.b16 %v2420
        %v3996 = vunpack.c.l.b16 %v2421
        %v3997 = vunpack.c.l.b16 %v2422
        %v3998 = vunpack.c.l.b16 %v2423
        %v3999 = vunpack.c.l.b16 %v2424
        %v4000 = vunpack.c.l.b16 %v2425
        %v4001 = vunpack.c.l.b16 %v2426
        %v4002 = vunpack.c.l.b16 %v2427
        %v4003 = vunpack.c.l.b16 %v2428
        %v4004 = vunpack.c.l.b16 %v2429
        %v4005 = vunpack.c.l.b16 %v2430
        %v4006 = vunpack.c.l.b16 %v2431
        %v4007 = vunpack.c.l.b16 %v2432
        %v4008 = vunpack.c.l.b16 %v2433
        %v4009 = vunpack.c.l.b16 %v2434
        %v4010 = vunpack.c.l.b16 %v2435
        %v4011 = vunpack.c.l.b16 %v2436
        %v4012 = vunpack.c.l.b16 %v2437
        %v4013 = vunpack.c.l.b16 %v2438
        %v4014 = vunpack.c.l.b16 %v2439
        %v4015 = vunpack.c.l.b16 %v2440
        %v4016 = vunpack.c.l.b16 %v2441
        %v4017 = vunpack.c.l.b16 %v2442
        %v4018 = vunpack.c.l.b16 %v2443
        %v4019 = vunpack.c.l.b16 %v2444
        %v4020 = vunpack.c.l.b16 %v2445
        %v4021 = vunpack.c.l.b16 %v2446
        %v4022 = vunpack.c.l.b16 %v2447
        %v4023 = vunpack.c.l.b16 %v2448
        %v4024 = vunpack.c.l.b16 %v2449
        %v4025 = vunpack.c.l.b16 %v2450
        %v4026 = vunpack.c.l.b16 %v2451
        %v4027 = vunpack.c.l.b16 %v2452
        %v4028 = vunpack.c.l.b16 %v2453
        %v4029 = vunpack.c.l.b16 %v2454
        %v4030 = vunpack.c.l.b16 %v2455
        %v4031 = vunpack.c.l.b16 %v2456
        %v4032 = vunpack.c.l.b16 %v2457
        %v4033 = vunpack.c.l.b16 %v2458
        %v4034 = vunpack.c.l.b16 %v2459
        %v4035 = vunpack.c.l.b16 %v2460
        %v4036 = vunpack.c.l.b16 %v2461
        %v4037 = vunpack.c.l.b16 %v2462
        %v4038 = vunpack.c.l.b16 %v2463
        %v4039 = vunpack.c.l.b16 %v2464
        %v4040 = vunpack.c.l.b16 %v2465
        %v4041 = vunpack.c.l.b16 %v2466
        %v4042 = vunpack.c.l.b16 %v2467
        %v4043 = vunpack.c.l.b16 %v2468
        %v4044 = vunpack.c.l.b16 %v2469
        %v4045 = vunpack.c.l.b16 %v2470
        %v4046 = vunpack.c.l.b16 %v2471
        %v4047 = vunpack.c.l.b16 %v2472
        %v4048 = vunpack.c.l.b16 %v2473
        %v4049 = vunpack.c.l.b16 %v2474
        %v4050 = vunpack.c.l.b16 %v2475
        %v4051 = vunpack.c.l.b16 %v2476
        %v4052 = vunpack.c.l.b16 %v2477
        %v4053 = vunpack.c.l.b16 %v2478
        %v4054 = vunpack.c.l.b16 %v2479
        %v4055 = vunpack.c.l.b16 %v2480
        %v4056 = vunpack.c.l.b16 %v2481
        %v4057 = vunpack.c.l.b16 %v2482
        %v4058 = vunpack.c.l.b16 %v2483
        %v4059 = vunpack.c.l.b16 %v2484
        %v4060 = vunpack.c.l.b16 %v2485
        %v4061 = vunpack.c.l.b16 %v2486
        %v4062 = vunpack.c.l.b16 %v2487
        %v4063 = vunpack.c.l.b16 %v2488
        %v4064 = vunpack.c.l.b16 %v2489
        %v4065 = vunpack.c.l.b16 %v2490
        %v4066 = vunpack.c.l.b16 %v2491
        %v4067 = vunpack.c.l.b16 %v2492
        %v4068 = vunpack.c.l.b16 %v2493
        %v4069 = vunpack.c.l.b16 %v2494
        %v4070 = vunpack.c.l.b16 %v2495
        %v4071 = vunpack.c.l.b16 %v2496
        %v4072 = vunpack.c.l.b16 %v2497
        %v4073 = vunpack.c.l.b16 %v2498
        %v4074 = vunpack.c.l.b16 %v2499
        %v4075 = vunpack.c.l.b16 %v2500
        %v4076 = vunpack.c.l.b16 %v2501
        %v4077 = vunpack.c.l.b16 %v2502
        %v4078 = vunpack.c.l.b16 %v2503
        %v4079 = vunpack.c.l.b16 %v2504
        %v4080 = vunpack.c.l.b16 %v2505
        %v4081 = vunpack.c.l.b16 %v2506
        %v4082 = vunpack.c.l.b16 %v2507
        %v4083 = vunpack.c.l.b16 %v2508
        %v4084 = vunpack.c.l.b16 %v2509
        %v4085 = vunpack.c.l.b16 %v2510
        %v4086 = vunpack.c.l.b16 %v2511
        %v4087 = vunpack.c.l.b16 %v2512
        %v4088 = vunpack.c.l.b16 %v2513
        %v4089 = vunpack.c.l.b16 %v2514
        %v4090 = vunpack.c.l.b16 %v2515
        %v4091 = vunpack.c.l.b16 %v2516
        %v4092 = vunpack.c.l.b16 %v2517
        %v4093 = vunpack.c.l.b16 %v2518
        %v4094 = vunpack.c.l.b16 %v2519
        %v4095 = vunpack.c.l.b16 %v2520
        %v4096 = vunpack.c.l.b16 %v2521
        %v4097 = vunpack.c.l.b16 %v2522
        %v4098 = vunpack.c.l.b16 %v2523
        %v4099 = vunpack.c.l.b16 %v2524
        %v4100 = vunpack.c.l.b16 %v2525
        %v4101 = vunpack.c.l.b16 %v2526
        %v4102 = vunpack.c.l.b16 %v2527
        %v4103 = vunpack.c.l.b16 %v2528
        %v4104 = vunpack.c.l.b16 %v2529
        %v4105 = vunpack.c.l.b16 %v2530
        %v4106 = vunpack.c.l.b16 %v2531
        %v4107 = vunpack.c.l.b16 %v2532
        %v4108 = vunpack.c.l.b16 %v2533
        %v4109 = vunpack.c.l.b16 %v2534
        %v4110 = vunpack.c.l.b16 %v2535
        %v4111 = vunpack.c.l.b16 %v2536
        %v4112 = vunpack.c.l.b16 %v2537
        %v4113 = vunpack.c.l.b16 %v2538
        %v4114 = vunpack.c.l.b16 %v2539
        %v4115 = vunpack.c.l.b16 %v2540
        %v4116 = vunpack.c.l.b16 %v2541
        %v4117 = vunpack.c.l.b16 %v2542
        %v4118 = vunpack.c.l.b16 %v2543
        %v4119 = vunpack.c.l.b16 %v2544
        %v4120 = vunpack.c.l.b16 %v2545
        %v4121 = vunpack.c.l.b16 %v2546
        %v4122 = vunpack.c.l.b16 %v2547
        %v4123 = vunpack.c.l.b16 %v2548
        %v4124 = vunpack.c.l.b16 %v2549
        %v4125 = vunpack.c.l.b16 %v2550
        %v4126 = vunpack.c.l.b16 %v2551
        %v4127 = vunpack.c.l.b16 %v2552
        %v4128 = vunpack.c.l.b16 %v2553
        %v4129 = vunpack.c.l.b16 %v2554
        %v4130 = vunpack.c.l.b16 %v2555
        %v4131 = vunpack.c.l.b16 %v2556
        %v4132 = vunpack.c.l.b16 %v2557
        %v4133 = vunpack.c.l.b16 %v2558
        %v4134 = vunpack.c.l.b16 %v2559
        %v4135 = vunpack.c.l.b16 %v2560
        %v4136 = vunpack.c.l.b16 %v2561
        %v4137 = vunpack.c.l.b16 %v2562
        %v4138 = vunpack.c.l.b16 %v2563
        %v4139 = vunpack.c.l.b16 %v2564
        %v4140 = vunpack.c.l.b16 %v2565
        %v4141 = vunpack.c.l.b16 %v2566
        %v4142 = vunpack.c.l.b16 %v2567
        %v4143 = vunpack.c.l.b16 %v2568
        %v4144 = vunpack.c.l.b16 %v2569
        %v4145 = vunpack.c.l.b16 %v2570
        %v4146 = vunpack.c.l.b16 %v2571
        %v4147 = vunpack.c.l.b16 %v2572
        %v4148 = vunpack.c.l.b16 %v2573
        %v4149 = vunpack.c.l.b16 %v2574
        %v4150 = vunpack.c.l.b16 %v2575
        %v4151 = vunpack.c.l.b16 %v2576
        %v4152 = vunpack.c.l.b16 %v2577
        %v4153 = vunpack.c.l.b16 %v2578
        %v4154 = vunpack.c.l.b16 %v2579
        %v4155 = vunpack.c.l.b16 %v2580
        %v4156 = vunpack.c.l.b16 %v2581
        %v4157 = vunpack.c.l.b16 %v2582
        %v4158 = vunpack.c.l.b16 %v2583
        %v4159 = vunpack.c.l.b16 %v2584
        %v4160 = vunpack.c.l.b16 %v2585
        %v4161 = vunpack.c.l.b16 %v2586
        %v4162 = vunpack.c.l.b16 %v2587
        %v4163 = vunpack.c.l.b16 %v2588
        %v4164 = vunpack.c.l.b16 %v2589
        %v4165 = vunpack.c.l.b16 %v2590
        %v4166 = vunpack.c.l.b16 %v2591
        %v4167 = vunpack.c.l.b16 %v2592
        %v4168 = vunpack.c.l.b16 %v2593
        %v4169 = vunpack.c.l.b16 %v2594
        %v4170 = vunpack.c.l.b16 %v2595
        %v4171 = vunpack.c.l.b16 %v2596
        %v4172 = vunpack.c.l.b16 %v2597
        %v4173 = vunpack.c.l.b16 %v2598
        %v4174 = vunpack.c.l.b16 %v2599
        %v4175 = vunpack.c.l.b16 %v2600
        %v4176 = vunpack.c.l.b16 %v2601
        %v4177 = vunpack.c.l.b16 %v2602
        %v4178 = vunpack.c.l.b16 %v2603
        %v4179 = vunpack.c.l.b16 %v2604
        %v4180 = vunpack.c.l.b16 %v2605
        %v4181 = vunpack.c.l.b16 %v2606
        %v4182 = vunpack.c.l.b16 %v2607
        %v4183 = vunpack.c.l.b16 %v2608
        %v4184 = vunpack.c.l.b16 %v2609
        %v4185 = vunpack.c.l.b16 %v2610
        %v4186 = vunpack.c.l.b16 %v2611
        %v4187 = vunpack.c.l.b16 %v2612
        %v4188 = vunpack.c.l.b16 %v2613
        %v4189 = vunpack.c.l.b16 %v2614
        %v4190 = vunpack.c.l.b16 %v2615
        %v4191 = vunpack.c.l.b16 %v2616
        %v4192 = vunpack.c.l.b16 %v2617
        %v4193 = vunpack.c.l.b16 %v2618
        %v4194 = vunpack.c.l.b16 %v2619
        %v4195 = vunpack.c.l.b16 %v2620
        %v4196 = vunpack.c.l.b16 %v2621
        %v4197 = vunpack.c.l.b16 %v2622
        %v4198 = vunpack.c.l.b16 %v2623
        %v4199 = vunpack.c.l.b16 %v2624
        %v4200 = vunpack.c.l.b16 %v2625
        %v4201 = vunpack.c.l.b16 %v2626
        %v4202 = vunpack.c.l.b16 %v2627
        %v4203 = vunpack.c.l.b16 %v2628
        %v4204 = vunpack.c.l.b16 %v2629
        %v4205 = vunpack.c.l.b16 %v2630
        %v4206 = vunpack.c.l.b16 %v2631
        %v4207 = vunpack.c.l.b16 %v2632
        %v4208 = vunpack.c.l.b16 %v2633
        %v4209 = vunpack.c.l.b16 %v2634
        %v4210 = vunpack.c.l.b16 %v2635
        %v4211 = vunpack.c.l.b16 %v2636
        %v4212 = vunpack.c.l.b16 %v2637
        %v4213 = vunpack.c.l.b16 %v2638
        %v4214 = vunpack.c.l.b16 %v2639
        %v4215 = vunpack.c.l.b16 %v2640
        %v4216 = vunpack.c.l.b16 %v2641
        %v4217 = vunpack.c.l.b16 %v2642
        %v4218 = vunpack.c.l.b16 %v2643
        %v4219 = vunpack.c.l.b16 %v2644
        %v4220 = vunpack.c.l.b16 %v2645
        %v4221 = vunpack.c.l.b16 %v2646
        %v4222 = vunpack.c.l.b16 %v2647
        %v4223 = vunpack.c.l.b16 %v2648
        %v4224 = vunpack.c.l.b16 %v2649
        %v4225 = vunpack.c.l.b16 %v2650
        %v4226 = vunpack.c.l.b16 %v2651
        %v4227 = vunpack.c.l.b16 %v2652
        %v4228 = vunpack.c.l.b16 %v2653
        %v4229 = vunpack.c.l.b16 %v2654
        %v4230 = vunpack.c.l.b16 %v2655
        %v4231 = vunpack.c.l.b16 %v2656
        %v4232 = vunpack.c.l.b16 %v2657
        %v4233 = vunpack.c.l.b16 %v2658
        %v4234 = vunpack.c.l.b16 %v2659
        %v4235 = vunpack.c.l.b16 %v2660
        %v4236 = vunpack.c.l.b16 %v2661
        %v4237 = vunpack.c.l.b16 %v2662
        %v4238 = vunpack.c.l.b16 %v2663
        %v4239 = vunpack.c.l.b16 %v2664
        %v4240 = vunpack.c.l.b16 %v2665
        %v4241 = vunpack.c.l.b16 %v2666
        %v4242 = vunpack.c.l.b16 %v2667
        %v4243 = vunpack.c.l.b16 %v2668
        %v4244 = vunpack.c.l.b16 %v2669
        %v4245 = vunpack.c.l.b16 %v2670
        %v4246 = vunpack.c.l.b16 %v2671
        %v4247 = vunpack.c.l.b16 %v2672
        %v4248 = vunpack.c.l.b16 %v2673
        %v4249 = vunpack.c.l.b16 %v2674
        %v4250 = vunpack.c.l.b16 %v2675
        %v4251 = vunpack.c.l.b16 %v2676
        %v4252 = vunpack.c.l.b16 %v2677
        %v4253 = vunpack.c.l.b16 %v2678
        %v4254 = vunpack.c.l.b16 %v2679
        %v4255 = vunpack.c.l.b16 %v2680
        %v4256 = vunpack.c.l.b16 %v2681
        %v4257 = vunpack.c.l.b16 %v2682
        %v4258 = vunpack.c.l.b16 %v2683
        %v4259 = vunpack.c.l.b16 %v2684
        %v4260 = vunpack.c.l.b16 %v2685
        %v4261 = vunpack.c.l.b16 %v2686
        %v4262 = vunpack.c.l.b16 %v2687
        %v4263 = vunpack.c.l.b16 %v2688
        %v4264 = vunpack.c.l.b16 %v2689
        %v4265 = vunpack.c.l.b16 %v2690
        %v4266 = vunpack.c.l.b16 %v2691
        %v4267 = vunpack.c.l.b16 %v2692
        %v4268 = vunpack.c.l.b16 %v2693
        %v4269 = vunpack.c.l.b16 %v2694
        %v4270 = vunpack.c.l.b16 %v2695
        %v4271 = vunpack.c.l.b16 %v2696
        %v4272 = vunpack.c.l.b16 %v2697
        %v4273 = vunpack.c.l.b16 %v2698
        %v4274 = vunpack.c.l.b16 %v2699
        %v4275 = vunpack.c.l.b16 %v2700
        %v4276 = vunpack.c.l.b16 %v2701
        %v4277 = vunpack.c.l.b16 %v2702
        %v4278 = vunpack.c.l.b16 %v2703
        %v4279 = vunpack.c.l.b16 %v2704
        %v4280 = vunpack.c.l.b16 %v2705
        %v4281 = vunpack.c.l.b16 %v2706
        %v4282 = vunpack.c.l.b16 %v2707
        %v4283 = vunpack.c.l.b16 %v2708
        %v4284 = vunpack.c.l.b16 %v2709
        %v4285 = vunpack.c.l.b16 %v2710
        %v4286 = vunpack.c.l.b16 %v2711
        %v4287 = vunpack.c.l.b16 %v2712
        %v4288 = vunpack.c.l.b16 %v2713
        %v4289 = vunpack.c.l.b16 %v2714
        %v4290 = vunpack.c.l.b16 %v2715
        %v4291 = vunpack.c.l.b16 %v2716
        %v4292 = vunpack.c.l.b16 %v2717
        %v4293 = vunpack.c.l.b16 %v2718
        %v4294 = vunpack.c.l.b16 %v2719
        %v4295 = vunpack.c.l.b16 %v2720
        %v4296 = vunpack.c.l.b16 %v2721
        %v4297 = vunpack.c.l.b16 %v2722
        %v4298 = vunpack.c.l.b16 %v2723
        %v4299 = vunpack.c.l.b16 %v2724
        %v4300 = vunpack.c.l.b16 %v2725
        %v4301 = vunpack.c.l.b16 %v2726
        %v4302 = vunpack.c.l.b16 %v2727
        %v4303 = vunpack.c.l.b16 %v2728
        %v4304 = vunpack.c.l.b16 %v2729
        %v4305 = vunpack.c.l.b16 %v2730
        %v4306 = vunpack.c.l.b16 %v2731
        %v4307 = vunpack.c.l.b16 %v2732
        %v4308 = vunpack.c.l.b16 %v2733
        %v4309 = vunpack.c.l.b16 %v2734
        %v4310 = vunpack.c.l.b16 %v2735
        %v4311 = vunpack.c.l.b16 %v2736
        %v4312 = vunpack.c.l.b16 %v2737
        %v4313 = vunpack.c.l.b16 %v2738
        %v4314 = vunpack.c.l.b16 %v2739
        %v4315 = vunpack.c.l.b16 %v2740
        %v4316 = vunpack.c.l.b16 %v2741
        %v4317 = vunpack.c.l.b16 %v2742
        %v4318 = vunpack.c.l.b16 %v2743
        %v4319 = vunpack.c.l.b16 %v2744
        %v4320 = vunpack.c.l.b16 %v2745
        %v4321 = vunpack.c.l.b16 %v2746
        %v4322 = vunpack.c.l.b16 %v2747
        %v4323 = vunpack.c.l.b16 %v2748
        %v4324 = vunpack.c.l.b16 %v2749
        %v4325 = vunpack.c.l.b16 %v2750
        %v4326 = vunpack.c.l.b16 %v2751
        %v4327 = vunpack.c.l.b16 %v2752
        %v4328 = vunpack.c.l.b16 %v2753
        %v4329 = vunpack.c.l.b16 %v2754
        %v4330 = vunpack.c.l.b16 %v2755
        %v4331 = vunpack.c.l.b16 %v2756
        %v4332 = vunpack.c.l.b16 %v2757
        %v4333 = vunpack.c.l.b16 %v2758
        %v4334 = vunpack.c.l.b16 %v2759
        %v4335 = vunpack.c.l.b16 %v2760
        %v4336 = vunpack.c.l.b16 %v2761
        %v4337 = vunpack.c.l.b16 %v2762
        %v4338 = vunpack.c.l.b16 %v2763
        %v4339 = vunpack.c.l.b16 %v2764
        %v4340 = vunpack.c.l.b16 %v2765
        %v4341 = vunpack.c.l.b16 %v2766
        %v4342 = vunpack.c.l.b16 %v2767
        %v4343 = vunpack.c.l.b16 %v2768
        %v4344 = vunpack.c.l.b16 %v2769
        %v4345 = vunpack.c.l.b16 %v2770
        %v4346 = vunpack.c.l.b16 %v2771
        %v4347 = vunpack.c.l.b16 %v2772
        %v4348 = vunpack.c.l.b16 %v2773
        %v4349 = vunpack.c.l.b16 %v2774
        %v4350 = vunpack.c.l.b16 %v2775
        %v4351 = vunpack.c.l.b16 %v2776
        %v4352 = vunpack.c.l.b16 %v2777
        %v4353 = vunpack.c.l.b16 %v2778
        %v4354 = vunpack.c.l.b16 %v2779
        %v4355 = vunpack.c.l.b16 %v2780
        %v4356 = vunpack.c.l.b16 %v2781
        %v4357 = vunpack.c.l.b16 %v2782
        %v4358 = vunpack.c.l.b16 %v2783
        %v4359 = vunpack.c.l.b16 %v2784
        %v4360 = vunpack.c.l.b16 %v2785
        %v4361 = vunpack.c.l.b16 %v2786
        %v4362 = vunpack.c.l.b16 %v2787
        %v4363 = vunpack.c.l.b16 %v2788
        %v4364 = vunpack.c.l.b16 %v2789
        %v4365 = vunpack.c.l.b16 %v2790
        %v4366 = vunpack.c.l.b16 %v2791
        %v4367 = vunpack.c.l.b16 %v2792
        %v4368 = vunpack.c.l.b16 %v2793
        %v4369 = vunpack.c.l.b16 %v2794
        %v4370 = vunpack.c.l.b16 %v2795
        %v4371 = vunpack.c.l.b16 %v2796
        %v4372 = vunpack.c.l.b16 %v2797
        %v4373 = vunpack.c.l.b16 %v2798
        %v4374 = vunpack.c.l.b16 %v2799
        %v4375 = vunpack.c.l.b16 %v2800
        %v4376 = vunpack.c.l.b16 %v2801
        %v4377 = vunpack.c.l.b16 %v2802
        %v4378 = vunpack.c.l.b16 %v2803
        %v4379 = vunpack.c.l.b16 %v2804
        %v4380 = vunpack.c.l.b16 %v2805
        %v4381 = vunpack.c.l.b16 %v2806
        %v4382 = vunpack.c.l.b16 %v2807
        %v4383 = vunpack.c.l.b16 %v2808
        %v4384 = vunpack.c.l.b16 %v2809
        %v4385 = vunpack.c.l.b16 %v2810
        %v4386 = vunpack.c.l.b16 %v2811
        %v4387 = vunpack.c.l.b16 %v2812
        %v4388 = vunpack.c.l.b16 %v2813
        %v4389 = vunpack.c.l.b16 %v2814
        %v4390 = vunpack.c.l.b16 %v2815
        %v4391 = vunpack.c.l.b16 %v2816
        %v4392 = vunpack.c.l.b16 %v2817
        %v4393 = vunpack.c.l.b16 %v2818
        %v4394 = vunpack.c.l.b16 %v2819
        %v4395 = vunpack.c.l.b16 %v2820
        %v4396 = vunpack.c.l.b16 %v2821
        %v4397 = vunpack.c.l.b16 %v2822
        %v4398 = vunpack.c.l.b16 %v2823
        %v4399 = vunpack.c.l.b16 %v2824
        %v4400 = vunpack.c.l.b16 %v2825
        %v4401 = vunpack.c.l.b16 %v2826
        %v4402 = vunpack.c.l.b16 %v2827
        %v4403 = vunpack.c.l.b16 %v2828
        %v4404 = vunpack.c.l.b16 %v2829
        %v4405 = vunpack.c.l.b16 %v2830
        %v4406 = vunpack.c.l.b16 %v2831
        %v4407 = vunpack.c.l.b16 %v2832
        %v4408 = vunpack.c.l.b16 %v2833
        %v4409 = vunpack.c.l.b16 %v2834
        %v4410 = vunpack.c.l.b16 %v2835
        %v4411 = vunpack.c.l.b16 %v2836
        %v4412 = vunpack.c.l.b16 %v2837
        %v4413 = vunpack.c.l.b16 %v2838
        %v4414 = vunpack.c.l.b16 %v2839
        %v4415 = vunpack.c.l.b16 %v2840
        %v4416 = vunpack.c.l.b16 %v2841
        %v4417 = vunpack.c.l.b16 %v2842
        %v4418 = vunpack.c.l.b16 %v2843
        %v4419 = vunpack.c.l.b16 %v2844
        %v4420 = vunpack.c.l.b16 %v2845
        %v4421 = vunpack.c.l.b16 %v2846
        %v4422 = vunpack.c.l.b16 %v2847
        %v4423 = vunpack.c.l.b16 %v2848
        %v4424 = vunpack.c.l.b16 %v2849
        %v4425 = vunpack.c.l.b16 %v2850
        %v4426 = vunpack.c.l.b16 %v2851
        %v4427 = vunpack.c.l.b16 %v2852
        %v4428 = vunpack.c.l.b16 %v2853
        %v4429 = vunpack.c.l.b16 %v2854
        %v4430 = vunpack.c.l.b16 %v2855
        %v4431 = vunpack.c.l.b16 %v2856
        %v4432 = vunpack.c.l.b16 %v2857
        %v4433 = vunpack.c.l.b16 %v2858
        %v4434 = vpack.c.b16 %v3651, %v3650
        %v4435 = vpack.c.b16 %v3653, %v3652
        %v4436 = vpack.c.b16 %v3655, %v3654
        %v4437 = vpack.c.b16 %v3657, %v3656
        %v4438 = vpack.c.b16 %v3659, %v3658
        %v4439 = vpack.c.b16 %v3661, %v3660
        %v4440 = vpack.c.b16 %v3663, %v3662
        %v4441 = vpack.c.b16 %v3665, %v3664
        %v4442 = vpack.c.b16 %v3667, %v3666
        %v4443 = vpack.c.b16 %v3669, %v3668
        %v4444 = vpack.c.b16 %v3671, %v3670
        %v4445 = vpack.c.b16 %v3673, %v3672
        %v4446 = vpack.c.b16 %v3675, %v3674
        %v4447 = vpack.c.b16 %v3677, %v3676
        %v4448 = vpack.c.b16 %v3679, %v3678
        %v4449 = vpack.c.b16 %v3681, %v3680
        %v4450 = vpack.c.b16 %v3683, %v3682
        %v4451 = vpack.c.b16 %v3685, %v3684
        %v4452 = vpack.c.b16 %v3687, %v3686
        %v4453 = vpack.c.b16 %v3689, %v3688
        %v4454 = vpack.c.b16 %v3691, %v3690
        %v4455 = vpack.c.b16 %v3693, %v3692
        %v4456 = vpack.c.b16 %v3695, %v3694
        %v4457 = vpack.c.b16 %v3697, %v3696
        %v4458 = vpack.c.b16 %v3699, %v3698
        %v4459 = vpack.c.b16 %v3701, %v3700
        %v4460 = vpack.c.b16 %v3703, %v3702
        %v4461 = vpack.c.b16 %v3705, %v3704
        %v4462 = vpack.c.b16 %v3707, %v3706
        %v4463 = vpack.c.b16 %v3709, %v3708
        %v4464 = vpack.c.b16 %v3711, %v3710
        %v4465 = vpack.c.b16 %v3713, %v3712
        %v4466 = vpack.c.b16 %v3715, %v3714
        %v4467 = vpack.c.b16 %v3717, %v3716
        %v4468 = vpack.c.b16 %v3719, %v3718
        %v4469 = vpack.c.b16 %v3721, %v3720
        %v4470 = vpack.c.b16 %v3723, %v3722
        %v4471 = vpack.c.b16 %v3725, %v3724
        %v4472 = vpack.c.b16 %v3727, %v3726
        %v4473 = vpack.c.b16 %v3729, %v3728
        %v4474 = vpack.c.b16 %v3731, %v3730
        %v4475 = vpack.c.b16 %v3733, %v3732
        %v4476 = vpack.c.b16 %v3735, %v3734
        %v4477 = vpack.c.b16 %v3737, %v3736
        %v4478 = vpack.c.b16 %v3739, %v3738
        %v4479 = vpack.c.b16 %v3741, %v3740
        %v4480 = vpack.c.b16 %v3743, %v3742
        %v4481 = vpack.c.b16 %v3745, %v3744
        %v4482 = vpack.c.b16 %v3747, %v3746
        %v4483 = vpack.c.b16 %v3749, %v3748
        %v4484 = vpack.c.b16 %v3751, %v3750
        %v4485 = vpack.c.b16 %v3753, %v3752
        %v4486 = vpack.c.b16 %v3755, %v3754
        %v4487 = vpack.c.b16 %v3757, %v3756
        %v4488 = vpack.c.b16 %v3759, %v3758
        %v4489 = vpack.c.b16 %v3761, %v3760
        %v4490 = vpack.c.b16 %v3763, %v3762
        %v4491 = vpack.c.b16 %v3765, %v3764
        %v4492 = vpack.c.b16 %v3767, %v3766
        %v4493 = vpack.c.b16 %v3769, %v3768
        %v4494 = vpack.c.b16 %v3771, %v3770
        %v4495 = vpack.c.b16 %v3773, %v3772
        %v4496 = vpack.c.b16 %v3775, %v3774
        %v4497 = vpack.c.b16 %v3777, %v3776
        %v4498 = vpack.c.b16 %v3779, %v3778
        %v4499 = vpack.c.b16 %v3781, %v3780
        %v4500 = vpack.c.b16 %v3783, %v3782
        %v4501 = vpack.c.b16 %v3785, %v3784
        %v4502 = vpack.c.b16 %v3787, %v3786
        %v4503 = vpack.c.b16 %v3789, %v3788
        %v4504 = vpack.c.b16 %v3791, %v3790
        %v4505 = vpack.c.b16 %v3793, %v3792
        %v4506 = vpack.c.b16 %v3795, %v3794
        %v4507 = vpack.c.b16 %v3797, %v3796
        %v4508 = vpack.c.b16 %v3799, %v3798
        %v4509 = vpack.c.b16 %v3801, %v3800
        %v4510 = vpack.c.b16 %v3803, %v3802
        %v4511 = vpack.c.b16 %v3805, %v3804
        %v4512 = vpack.c.b16 %v3807, %v3806
        %v4513 = vpack.c.b16 %v3809, %v3808
        %v4514 = vpack.c.b16 %v3811, %v3810
        %v4515 = vpack.c.b16 %v3813, %v3812
        %v4516 = vpack.c.b16 %v3815, %v3814
        %v4517 = vpack.c.b16 %v3817, %v3816
        %v4518 = vpack.c.b16 %v3819, %v3818
        %v4519 = vpack.c.b16 %v3821, %v3820
        %v4520 = vpack.c.b16 %v3823, %v3822
        %v4521 = vpack.c.b16 %v3825, %v3824
        %v4522 = vpack.c.b16 %v3827, %v3826
        %v4523 = vpack.c.b16 %v3829, %v3828
        %v4524 = vpack.c.b16 %v3831, %v3830
        %v4525 = vpack.c.b16 %v3833, %v3832
        %v4526 = vpack.c.b16 %v3835, %v3834
        %v4527 = vpack.c.b16 %v3837, %v3836
        %v4528 = vpack.c.b16 %v3839, %v3838
        %v4529 = vpack.c.b16 %v3841, %v3840
        %v4530 = vpack.c.b16 %v3843, %v3842
        %v4531 = vpack.c.b16 %v3845, %v3844
        %v4532 = vpack.c.b16 %v3847, %v3846
        %v4533 = vpack.c.b16 %v3849, %v3848
        %v4534 = vpack.c.b16 %v3851, %v3850
        %v4535 = vpack.c.b16 %v3853, %v3852
        %v4536 = vpack.c.b16 %v3855, %v3854
        %v4537 = vpack.c.b16 %v3857, %v3856
        %v4538 = vpack.c.b16 %v3859, %v3858
        %v4539 = vpack.c.b16 %v3861, %v3860
        %v4540 = vpack.c.b16 %v3863, %v3862
        %v4541 = vpack.c.b16 %v3865, %v3864
        %v4542 = vpack.c.b16 %v3867, %v3866
        %v4543 = vpack.c.b16 %v3869, %v3868
        %v4544 = vpack.c.b16 %v3871, %v3870
        %v4545 = vpack.c.b16 %v3873, %v3872
        %v4546 = vpack.c.b16 %v3875, %v3874
        %v4547 = vpack.c.b16 %v3877, %v3876
        %v4548 = vpack.c.b16 %v3879, %v3878
        %v4549 = vpack.c.b16 %v3881, %v3880
        %v4550 = vpack.c.b16 %v3883, %v3882
        %v4551 = vpack.c.b16 %v3885, %v3884
        %v4552 = vpack.c.b16 %v3887, %v3886
        %v4553 = vpack.c.b16 %v3889, %v3888
        %v4554 = vpack.c.b16 %v3891, %v3890
        %v4555 = vpack.c.b16 %v3893, %v3892
        %v4556 = vpack.c.b16 %v3895, %v3894
        %v4557 = vpack.c.b16 %v3897, %v3896
        %v4558 = vpack.c.b16 %v3899, %v3898
        %v4559 = vpack.c.b16 %v3901, %v3900
        %v4560 = vpack.c.b16 %v3903, %v3902
        %v4561 = vpack.c.b16 %v3905, %v3904
        %v4562 = vpack.c.b16 %v3907, %v3906
        %v4563 = vpack.c.b16 %v3909, %v3908
        %v4564 = vpack.c.b16 %v3911, %v3910
        %v4565 = vpack.c.b16 %v3913, %v3912
        %v4566 = vpack.c.b16 %v3915, %v3914
        %v4567 = vpack.c.b16 %v3917, %v3916
        %v4568 = vpack.c.b16 %v3919, %v3918
        %v4569 = vpack.c.b16 %v3921, %v3920
        %v4570 = vpack.c.b16 %v3923, %v3922
        %v4571 = vpack.c.b16 %v3925, %v3924
        %v4572 = vpack.c.b16 %v3927, %v3926
        %v4573 = vpack.c.b16 %v3929, %v3928
        %v4574 = vpack.c.b16 %v3931, %v3930
        %v4575 = vpack.c.b16 %v3933, %v3932
        %v4576 = vpack.c.b16 %v3935, %v3934
        %v4577 = vpack.c.b16 %v3937, %v3936
        %v4578 = vpack.c.b16 %v3939, %v3938
        %v4579 = vpack.c.b16 %v3941, %v3940
        %v4580 = vpack.c.b16 %v3943, %v3942
        %v4581 = vpack.c.b16 %v3945, %v3944
        %v4582 = vpack.c.b16 %v3947, %v3946
        %v4583 = vpack.c.b16 %v3949, %v3948
        %v4584 = vpack.c.b16 %v3951, %v3950
        %v4585 = vpack.c.b16 %v3953, %v3952
        %v4586 = vpack.c.b16 %v3955, %v3954
        %v4587 = vpack.c.b16 %v3957, %v3956
        %v4588 = vpack.c.b16 %v3959, %v3958
        %v4589 = vpack.c.b16 %v3961, %v3960
        %v4590 = vpack.c.b16 %v3963, %v3962
        %v4591 = vpack.c.b16 %v3965, %v3964
        %v4592 = vpack.c.b16 %v3967, %v3966
        %v4593 = vpack.c.b16 %v3969, %v3968
        %v4594 = vpack.c.b16 %v3971, %v3970
        %v4595 = vpack.c.b16 %v3973, %v3972
        %v4596 = vpack.c.b16 %v3975, %v3974
        %v4597 = vpack.c.b16 %v3977, %v3976
        %v4598 = vpack.c.b16 %v3979, %v3978
        %v4599 = vpack.c.b16 %v3981, %v3980
        %v4600 = vpack.c.b16 %v3983, %v3982
        %v4601 = vpack.c.b16 %v3985, %v3984
        %v4602 = vpack.c.b16 %v3987, %v3986
        %v4603 = vpack.c.b16 %v3989, %v3988
        %v4604 = vpack.c.b16 %v3991, %v3990
        %v4605 = vpack.c.b16 %v3993, %v3992
        %v4606 = vpack.c.b16 %v3995, %v3994
        %v4607 = vpack.c.b16 %v3997, %v3996
        %v4608 = vpack.c.b16 %v3999, %v3998
        %v4609 = vpack.c.b16 %v4001, %v4000
        %v4610 = vpack.c.b16 %v4003, %v4002
        %v4611 = vpack.c.b16 %v4005, %v4004
        %v4612 = vpack.c.b16 %v4007, %v4006
        %v4613 = vpack.c.b16 %v4009, %v4008
        %v4614 = vpack.c.b16 %v4011, %v4010
        %v4615 = vpack.c.b16 %v4013, %v4012
        %v4616 = vpack.c.b16 %v4015, %v4014
        %v4617 = vpack.c.b16 %v4017, %v4016
        %v4618 = vpack.c.b16 %v4019, %v4018
        %v4619 = vpack.c.b16 %v4021, %v4020
        %v4620 = vpack.c.b16 %v4023, %v4022
        %v4621 = vpack.c.b16 %v4025, %v4024
        %v4622 = vpack.c.b16 %v4027, %v4026
        %v4623 = vpack.c.b16 %v4029, %v4028
        %v4624 = vpack.c.b16 %v4031, %v4030
        %v4625 = vpack.c.b16 %v4033, %v4032
        %v4626 = vpack.c.b16 %v4035, %v4034
        %v4627 = vpack.c.b16 %v4037, %v4036
        %v4628 = vpack.c.b16 %v4039, %v4038
        %v4629 = vpack.c.b16 %v4041, %v4040
        %v4630 = vpack.c.b16 %v4043, %v4042
        %v4631 = vpack.c.b16 %v4045, %v4044
        %v4632 = vpack.c.b16 %v4047, %v4046
        %v4633 = vpack.c.b16 %v4049, %v4048
        %v4634 = vpack.c.b16 %v4051, %v4050
        %v4635 = vpack.c.b16 %v4053, %v4052
        %v4636 = vpack.c.b16 %v4055, %v4054
        %v4637 = vpack.c.b16 %v4057, %v4056
        %v4638 = vpack.c.b16 %v4059, %v4058
        %v4639 = vpack.c.b16 %v4061, %v4060
        %v4640 = vpack.c.b16 %v4063, %v4062
        %v4641 = vpack.c.b16 %v4065, %v4064
        %v4642 = vpack.c.b16 %v4067, %v4066
        %v4643 = vpack.c.b16 %v4069, %v4068
        %v4644 = vpack.c.b16 %v4071, %v4070
        %v4645 = vpack.c.b16 %v4073, %v4072
        %v4646 = vpack.c.b16 %v4075, %v4074
        %v4647 = vpack.c.b16 %v4077, %v4076
        %v4648 = vpack.c.b16 %v4079, %v4078
        %v4649 = vpack.c.b16 %v4081, %v4080
        %v4650 = vpack.c.b16 %v4083, %v4082
        %v4651 = vpack.c.b16 %v4085, %v4084
        %v4652 = vpack.c.b16 %v4087, %v4086
        %v4653 = vpack.c.b16 %v4089, %v4088
        %v4654 = vpack.c.b16 %v4091, %v4090
        %v4655 = vpack.c.b16 %v4093, %v4092
        %v4656 = vpack.c.b16 %v4095, %v4094
        %v4657 = vpack.c.b16 %v4097, %v4096
        %v4658 = vpack.c.b16 %v4099, %v4098
        %v4659 = vpack.c.b16 %v4101, %v4100
        %v4660 = vpack.c.b16 %v4103, %v4102
        %v4661 = vpack.c.b16 %v4105, %v4104
        %v4662 = vpack.c.b16 %v4107, %v4106
        %v4663 = vpack.c.b16 %v4109, %v4108
        %v4664 = vpack.c.b16 %v4111, %v4110
        %v4665 = vpack.c.b16 %v4113, %v4112
        %v4666 = vpack.c.b16 %v4115, %v4114
        %v4667 = vpack.c.b16 %v4117, %v4116
        %v4668 = vpack.c.b16 %v4119, %v4118
        %v4669 = vpack.c.b16 %v4121, %v4120
        %v4670 = vpack.c.b16 %v4123, %v4122
        %v4671 = vpack.c.b16 %v4125, %v4124
        %v4672 = vpack.c.b16 %v4127, %v4126
        %v4673 = vpack.c.b16 %v4129, %v4128
        %v4674 = vpack.c.b16 %v4131, %v4130
        %v4675 = vpack.c.b16 %v4133, %v4132
        %v4676 = vpack.c.b16 %v4135, %v4134
        %v4677 = vpack.c.b16 %v4137, %v4136
        %v4678 = vpack.c.b16 %v4139, %v4138
        %v4679 = vpack.c.b16 %v4141, %v4140
        %v4680 = vpack.c.b16 %v4143, %v4142
        %v4681 = vpack.c.b16 %v4145, %v4144
        %v4682 = vpack.c.b16 %v4147, %v4146
        %v4683 = vpack.c.b16 %v4149, %v4148
        %v4684 = vpack.c.b16 %v4151, %v4150
        %v4685 = vpack.c.b16 %v4153, %v4152
        %v4686 = vpack.c.b16 %v4155, %v4154
        %v4687 = vpack.c.b16 %v4157, %v4156
        %v4688 = vpack.c.b16 %v4159, %v4158
        %v4689 = vpack.c.b16 %v4161, %v4160
        %v4690 = vpack.c.b16 %v4163, %v4162
        %v4691 = vpack.c.b16 %v4165, %v4164
        %v4692 = vpack.c.b16 %v4167, %v4166
        %v4693 = vpack.c.b16 %v4169, %v4168
        %v4694 = vpack.c.b16 %v4171, %v4170
        %v4695 = vpack.c.b16 %v4173, %v4172
        %v4696 = vpack.c.b16 %v4175, %v4174
        %v4697 = vpack.c.b16 %v4177, %v4176
        %v4698 = vpack.c.b16 %v4179, %v4178
        %v4699 = vpack.c.b16 %v4181, %v4180
        %v4700 = vpack.c.b16 %v4183, %v4182
        %v4701 = vpack.c.b16 %v4185, %v4184
        %v4702 = vpack.c.b16 %v4187, %v4186
        %v4703 = vpack.c.b16 %v4189, %v4188
        %v4704 = vpack.c.b16 %v4191, %v4190
        %v4705 = vpack.c.b16 %v4193, %v4192
        %v4706 = vpack.c.b16 %v4195, %v4194
        %v4707 = vpack.c.b16 %v4197, %v4196
        %v4708 = vpack.c.b16 %v4199, %v4198
        %v4709 = vpack.c.b16 %v4201, %v4200
        %v4710 = vpack.c.b16 %v4203, %v4202
        %v4711 = vpack.c.b16 %v4205, %v4204
        %v4712 = vpack.c.b16 %v4207, %v4206
        %v4713 = vpack.c.b16 %v4209, %v4208
        %v4714 = vpack.c.b16 %v4211, %v4210
        %v4715 = vpack.c.b16 %v4213, %v4212
        %v4716 = vpack.c.b16 %v4215, %v4214
        %v4717 = vpack.c.b16 %v4217, %v4216
        %v4718 = vpack.c.b16 %v4219, %v4218
        %v4719 = vpack.c.b16 %v4221, %v4220
        %v4720 = vpack.c.b16 %v4223, %v4222
        %v4721 = vpack.c.b16 %v4225, %v4224
        %v4722 = vpack.c.b16 %v4227, %v4226
        %v4723 = vpack.c.b16 %v4229, %v4228
        %v4724 = vpack.c.b16 %v4231, %v4230
        %v4725 = vpack.c.b16 %v4233, %v4232
        %v4726 = vpack.c.b16 %v4235, %v4234
        %v4727 = vpack.c.b16 %v4237, %v4236
        %v4728 = vpack.c.b16 %v4239, %v4238
        %v4729 = vpack.c.b16 %v4241, %v4240
        %v4730 = vpack.c.b16 %v4243, %v4242
        %v4731 = vpack.c.b16 %v4245, %v4244
        %v4732 = vpack.c.b16 %v4247, %v4246
        %v4733 = vpack.c.b16 %v4249, %v4248
        %v4734 = vpack.c.b16 %v4251, %v4250
        %v4735 = vpack.c.b16 %v4253, %v4252
        %v4736 = vpack.c.b16 %v4255, %v4254
        %v4737 = vpack.c.b16 %v4257, %v4256
        %v4738 = vpack.c.b16 %v4259, %v4258
        %v4739 = vpack.c.b16 %v4261, %v4260
        %v4740 = vpack.c.b16 %v4263, %v4262
        %v4741 = vpack.c.b16 %v4265, %v4264
        %v4742 = vpack.c.b16 %v4267, %v4266
        %v4743 = vpack.c.b16 %v4269, %v4268
        %v4744 = vpack.c.b16 %v4271, %v4270
        %v4745 = vpack.c.b16 %v4273, %v4272
        %v4746 = vpack.c.b16 %v4275, %v4274
        %v4747 = vpack.c.b16 %v4277, %v4276
        %v4748 = vpack.c.b16 %v4279, %v4278
        %v4749 = vpack.c.b16 %v4281, %v4280
        %v4750 = vpack.c.b16 %v4283, %v4282
        %v4751 = vpack.c.b16 %v4285, %v4284
        %v4752 = vpack.c.b16 %v4287, %v4286
        %v4753 = vpack.c.b16 %v4289, %v4288
        %v4754 = vpack.c.b16 %v4291, %v4290
        %v4755 = vpack.c.b16 %v4293, %v4292
        %v4756 = vpack.c.b16 %v4295, %v4294
        %v4757 = vpack.c.b16 %v4297, %v4296
        %v4758 = vpack.c.b16 %v4299, %v4298
        %v4759 = vpack.c.b16 %v4301, %v4300
        %v4760 = vpack.c.b16 %v4303, %v4302
        %v4761 = vpack.c.b16 %v4305, %v4304
        %v4762 = vpack.c.b16 %v4307, %v4306
        %v4763 = vpack.c.b16 %v4309, %v4308
        %v4764 = vpack.c.b16 %v4311, %v4310
        %v4765 = vpack.c.b16 %v4313, %v4312
        %v4766 = vpack.c.b16 %v4315, %v4314
        %v4767 = vpack.c.b16 %v4317, %v4316
        %v4768 = vpack.c.b16 %v4319, %v4318
        %v4769 = vpack.c.b16 %v4321, %v4320
        %v4770 = vpack.c.b16 %v4323, %v4322
        %v4771 = vpack.c.b16 %v4325, %v4324
        %v4772 = vpack.c.b16 %v4327, %v4326
        %v4773 = vpack.c.b16 %v4329, %v4328
        %v4774 = vpack.c.b16 %v4331, %v4330
        %v4775 = vpack.c.b16 %v4333, %v4332
        %v4776 = vpack.c.b16 %v4335, %v4334
        %v4777 = vpack.c.b16 %v4337, %v4336
        %v4778 = vpack.c.b16 %v4339, %v4338
        %v4779 = vpack.c.b16 %v4341, %v4340
        %v4780 = vpack.c.b16 %v4343, %v4342
        %v4781 = vpack.c.b16 %v4345, %v4344
        %v4782 = vpack.c.b16 %v4347, %v4346
        %v4783 = vpack.c.b16 %v4349, %v4348
        %v4784 = vpack.c.b16 %v4351, %v4350
        %v4785 = vpack.c.b16 %v4353, %v4352
        %v4786 = vpack.c.b16 %v4355, %v4354
        %v4787 = vpack.c.b16 %v4357, %v4356
        %v4788 = vpack.c.b16 %v4359, %v4358
        %v4789 = vpack.c.b16 %v4361, %v4360
        %v4790 = vpack.c.b16 %v4363, %v4362
        %v4791 = vpack.c.b16 %v4365, %v4364
        %v4792 = vpack.c.b16 %v4367, %v4366
        %v4793 = vpack.c.b16 %v4369, %v4368
        %v4794 = vpack.c.b16 %v4371, %v4370
        %v4795 = vpack.c.b16 %v4373, %v4372
        %v4796 = vpack.c.b16 %v4375, %v4374
        %v4797 = vpack.c.b16 %v4377, %v4376
        %v4798 = vpack.c.b16 %v4379, %v4378
        %v4799 = vpack.c.b16 %v4381, %v4380
        %v4800 = vpack.c.b16 %v4383, %v4382
        %v4801 = vpack.c.b16 %v4385, %v4384
        %v4802 = vpack.c.b16 %v4387, %v4386
        %v4803 = vpack.c.b16 %v4389, %v4388
        %v4804 = vpack.c.b16 %v4391, %v4390
        %v4805 = vpack.c.b16 %v4393, %v4392
        %v4806 = vpack.c.b16 %v4395, %v4394
        %v4807 = vpack.c.b16 %v4397, %v4396
        %v4808 = vpack.c.b16 %v4399, %v4398
        %v4809 = vpack.c.b16 %v4401, %v4400
        %v4810 = vpack.c.b16 %v4403, %v4402
        %v4811 = vpack.c.b16 %v4405, %v4404
        %v4812 = vpack.c.b16 %v4407, %v4406
        %v4813 = vpack.c.b16 %v4409, %v4408
        %v4814 = vpack.c.b16 %v4411, %v4410
        %v4815 = vpack.c.b16 %v4413, %v4412
        %v4816 = vpack.c.b16 %v4415, %v4414
        %v4817 = vpack.c.b16 %v4417, %v4416
        %v4818 = vpack.c.b16 %v4419, %v4418
        %v4819 = vpack.c.b16 %v4421, %v4420
        %v4820 = vpack.c.b16 %v4423, %v4422
        %v4821 = vpack.c.b16 %v4425, %v4424
        %v4822 = vpack.c.b16 %v4427, %v4426
        %v4823 = vpack.c.b16 %v4429, %v4428
        %v4824 = vpack.c.b16 %v4431, %v4430
        %v4825 = vpack.c.b16 %v4433, %v4432
        %5218 = vmatprep.subr.bf16.mxu0 0
        %5219 = vmatpush1.bf16.msra.mxu0 %v4434
        %5220 = vmatprep.subr.bf16.mxu0 0
        %5221 = vmatpush1.bf16.msra.mxu0 %v4435
        %5222 = vmatprep.subr.bf16.mxu0 0
        %5223 = vmatpush1.bf16.msra.mxu0 %v4436
        %5224 = vmatprep.subr.bf16.mxu0 0
        %5225 = vmatpush1.bf16.msra.mxu0 %v4437
        %5226 = vmatprep.subr.bf16.mxu0 0
        %5227 = vmatpush1.bf16.msra.mxu0 %v4438
        %5228 = vmatprep.subr.bf16.mxu0 0
        %5229 = vmatpush1.bf16.msra.mxu0 %v4439
        %5230 = vmatprep.subr.bf16.mxu0 0
        %5231 = vmatpush1.bf16.msra.mxu0 %v4440
        %5232 = vmatprep.subr.bf16.mxu0 0
        %5233 = vmatpush1.bf16.msra.mxu0 %v4441
        %5234 = vmatprep.subr.bf16.mxu0 0
        %5235 = vmatpush1.bf16.msra.mxu0 %v4442
        %5236 = vmatprep.subr.bf16.mxu0 0
        %5237 = vmatpush1.bf16.msra.mxu0 %v4443
        %5238 = vmatprep.subr.bf16.mxu0 0
        %5239 = vmatpush1.bf16.msra.mxu0 %v4444
        %5240 = vmatprep.subr.bf16.mxu0 0
        %5241 = vmatpush1.bf16.msra.mxu0 %v4445
        %5242 = vmatprep.subr.bf16.mxu0 0
        %5243 = vmatpush1.bf16.msra.mxu0 %v4446
        %5244 = vmatprep.subr.bf16.mxu0 0
        %5245 = vmatpush1.bf16.msra.mxu0 %v4447
        %5246 = vmatprep.subr.bf16.mxu0 0
        %5247 = vmatpush1.bf16.msra.mxu0 %v4448
        %5248 = vmatprep.subr.bf16.mxu0 0
        %5249 = vmatpush1.bf16.msra.mxu0 %v4449
        %5250 = vmatprep.mubr.bf16.mxu0 %v1980
        %5251 = vmatmul.mubr.bf16.gmra.mrb[0].mxu0 %v1978
        %v5252 = vpop.f32.mrb[0].mxu0
        %v5253 = vadd.f32 %v2864, %v5252
        %v5254 = vpop.f32.mrb[0].mxu0
        %v5255 = vpop.f32.mrb[0].mxu0
        %v5256 = vpop.f32.mrb[0].mxu0
        %5257 = vdwg.mxu0
        %5258 = vmatprep.subr.bf16.mxu0 0
        %5259 = vmatpush1.bf16.msra.mxu0 %v4450
        %5260 = vmatprep.subr.bf16.mxu0 0
        %5261 = vmatpush1.bf16.msra.mxu0 %v4451
        %5262 = vmatprep.subr.bf16.mxu0 0
        %5263 = vmatpush1.bf16.msra.mxu0 %v4452
        %5264 = vmatprep.subr.bf16.mxu0 0
        %5265 = vmatpush1.bf16.msra.mxu0 %v4453
        %5266 = vmatprep.subr.bf16.mxu0 0
        %5267 = vmatpush1.bf16.msra.mxu0 %v4454
        %5268 = vmatprep.subr.bf16.mxu0 0
        %5269 = vmatpush1.bf16.msra.mxu0 %v4455
        %5270 = vmatprep.subr.bf16.mxu0 0
        %5271 = vmatpush1.bf16.msra.mxu0 %v4456
        %5272 = vmatprep.subr.bf16.mxu0 0
        %5273 = vmatpush1.bf16.msra.mxu0 %v4457
        %5274 = vmatprep.subr.bf16.mxu0 0
        %5275 = vmatpush1.bf16.msra.mxu0 %v4458
        %5276 = vmatprep.subr.bf16.mxu0 0
        %5277 = vmatpush1.bf16.msra.mxu0 %v4459
        %5278 = vmatprep.subr.bf16.mxu0 0
        %5279 = vmatpush1.bf16.msra.mxu0 %v4460
        %5280 = vmatprep.subr.bf16.mxu0 0
        %5281 = vmatpush1.bf16.msra.mxu0 %v4461
        %5282 = vmatprep.subr.bf16.mxu0 0
        %5283 = vmatpush1.bf16.msra.mxu0 %v4462
        %5284 = vmatprep.subr.bf16.mxu0 0
        %5285 = vmatpush1.bf16.msra.mxu0 %v4463
        %5286 = vmatprep.subr.bf16.mxu0 0
        %5287 = vmatpush1.bf16.msra.mxu0 %v4464
        %5288 = vmatprep.subr.bf16.mxu0 0
        %5289 = vmatpush1.bf16.msra.mxu0 %v4465
        %5290 = vmatprep.mubr.bf16.mxu0 %v1984
        %5291 = vmatmul.mubr.bf16.gmra.mrb[0].mxu0 %v1982
        %v5292 = vpop.f32.mrb[0].mxu0
        %v5293 = vadd.f32 %v5253, %v5292
        %v5294 = vpop.f32.mrb[0].mxu0
        %v5295 = vpop.f32.mrb[0].mxu0
        %v5296 = vpop.f32.mrb[0].mxu0
        %5297 = vdwg.mxu0
        %5298 = vmatprep.subr.bf16.mxu0 0
        %5299 = vmatpush1.bf16.msra.mxu0 %v4466
        %5300 = vmatprep.subr.bf16.mxu0 0
        %5301 = vmatpush1.bf16.msra.mxu0 %v4467
        %5302 = vmatprep.subr.bf16.mxu0 0
        %5303 = vmatpush1.bf16.msra.mxu0 %v4468
        %5304 = vmatprep.subr.bf16.mxu0 0
        %5305 = vmatpush1.bf16.msra.mxu0 %v4469
        %5306 = vmatprep.subr.bf16.mxu0 0
        %5307 = vmatpush1.bf16.msra.mxu0 %v4470
        %5308 = vmatprep.subr.bf16.mxu0 0
        %5309 = vmatpush1.bf16.msra.mxu0 %v4471
        %5310 = vmatprep.subr.bf16.mxu0 0
        %5311 = vmatpush1.bf16.msra.mxu0 %v4472
        %5312 = vmatprep.subr.bf16.mxu0 0
        %5313 = vmatpush1.bf16.msra.mxu0 %v4473
        %5314 = vmatprep.subr.bf16.mxu0 0
        %5315 = vmatpush1.bf16.msra.mxu0 %v4474
        %5316 = vmatprep.subr.bf16.mxu0 0
        %5317 = vmatpush1.bf16.msra.mxu0 %v4475
        %5318 = vmatprep.subr.bf16.mxu0 0
        %5319 = vmatpush1.bf16.msra.mxu0 %v4476
        %5320 = vmatprep.subr.bf16.mxu0 0
        %5321 = vmatpush1.bf16.msra.mxu0 %v4477
        %5322 = vmatprep.subr.bf16.mxu0 0
        %5323 = vmatpush1.bf16.msra.mxu0 %v4478
        %5324 = vmatprep.subr.bf16.mxu0 0
        %5325 = vmatpush1.bf16.msra.mxu0 %v4479
        %5326 = vmatprep.subr.bf16.mxu0 0
        %5327 = vmatpush1.bf16.msra.mxu0 %v4480
        %5328 = vmatprep.subr.bf16.mxu0 0
        %5329 = vmatpush1.bf16.msra.mxu0 %v4481
        %5330 = vmatprep.mubr.bf16.mxu0 %v1988
        %5331 = vmatmul.mubr.bf16.gmra.mrb[0].mxu0 %v1986
        %v5332 = vpop.f32.mrb[0].mxu0
        %v5333 = vadd.f32 %v5293, %v5332
        %v5334 = vpop.f32.mrb[0].mxu0
        %v5335 = vpop.f32.mrb[0].mxu0
        %v5336 = vpop.f32.mrb[0].mxu0
        %5337 = vdwg.mxu0
        %5338 = vmatprep.subr.bf16.mxu0 0
        %5339 = vmatpush1.bf16.msra.mxu0 %v4482
        %5340 = vmatprep.subr.bf16.mxu0 0
        %5341 = vmatpush1.bf16.msra.mxu0 %v4483
        %5342 = vmatprep.subr.bf16.mxu0 0
        %5343 = vmatpush1.bf16.msra.mxu0 %v4484
        %5344 = vmatprep.subr.bf16.mxu0 0
        %5345 = vmatpush1.bf16.msra.mxu0 %v4485
        %5346 = vmatprep.subr.bf16.mxu0 0
        %5347 = vmatpush1.bf16.msra.mxu0 %v4486
        %5348 = vmatprep.subr.bf16.mxu0 0
        %5349 = vmatpush1.bf16.msra.mxu0 %v4487
        %5350 = vmatprep.subr.bf16.mxu0 0
        %5351 = vmatpush1.bf16.msra.mxu0 %v4488
        %5352 = vmatprep.subr.bf16.mxu0 0
        %5353 = vmatpush1.bf16.msra.mxu0 %v4489
        %5354 = vmatprep.subr.bf16.mxu0 0
        %5355 = vmatpush1.bf16.msra.mxu0 %v4490
        %5356 = vmatprep.subr.bf16.mxu0 0
        %5357 = vmatpush1.bf16.msra.mxu0 %v4491
        %5358 = vmatprep.subr.bf16.mxu0 0
        %5359 = vmatpush1.bf16.msra.mxu0 %v4492
        %5360 = vmatprep.subr.bf16.mxu0 0
        %5361 = vmatpush1.bf16.msra.mxu0 %v4493
        %5362 = vmatprep.subr.bf16.mxu0 0
        %5363 = vmatpush1.bf16.msra.mxu0 %v4494
        %5364 = vmatprep.subr.bf16.mxu0 0
        %5365 = vmatpush1.bf16.msra.mxu0 %v4495
        %5366 = vmatprep.subr.bf16.mxu0 0
        %5367 = vmatpush1.bf16.msra.mxu0 %v4496
        %5368 = vmatprep.subr.bf16.mxu0 0
        %5369 = vmatpush1.bf16.msra.mxu0 %v4497
        %5370 = vmatprep.mubr.bf16.mxu0 %v1992
        %5371 = vmatmul.mubr.bf16.gmra.mrb[0].mxu0 %v1990
        %v5372 = vpop.f32.mrb[0].mxu0
        %v5373 = vadd.f32 %v5333, %v5372
        %v5374 = vpop.f32.mrb[0].mxu0
        %v5375 = vpop.f32.mrb[0].mxu0
        %v5376 = vpop.f32.mrb[0].mxu0
        %5377 = vdwg.mxu0
        %5378 = vmatprep.subr.bf16.mxu0 0
        %5379 = vmatpush1.bf16.msra.mxu0 %v4498
        %5380 = vmatprep.subr.bf16.mxu0 0
        %5381 = vmatpush1.bf16.msra.mxu0 %v4499
        %5382 = vmatprep.subr.bf16.mxu0 0
        %5383 = vmatpush1.bf16.msra.mxu0 %v4500
        %5384 = vmatprep.subr.bf16.mxu0 0
        %5385 = vmatpush1.bf16.msra.mxu0 %v4501
        %5386 = vmatprep.subr.bf16.mxu0 0
        %5387 = vmatpush1.bf16.msra.mxu0 %v4502
        %5388 = vmatprep.subr.bf16.mxu0 0
        %5389 = vmatpush1.bf16.msra.mxu0 %v4503
        %5390 = vmatprep.subr.bf16.mxu0 0
        %5391 = vmatpush1.bf16.msra.mxu0 %v4504
        %5392 = vmatprep.subr.bf16.mxu0 0
        %5393 = vmatpush1.bf16.msra.mxu0 %v4505
        %5394 = vmatprep.subr.bf16.mxu0 0
        %5395 = vmatpush1.bf16.msra.mxu0 %v4506
        %5396 = vmatprep.subr.bf16.mxu0 0
        %5397 = vmatpush1.bf16.msra.mxu0 %v4507
        %5398 = vmatprep.subr.bf16.mxu0 0
        %5399 = vmatpush1.bf16.msra.mxu0 %v4508
        %5400 = vmatprep.subr.bf16.mxu0 0
        %5401 = vmatpush1.bf16.msra.mxu0 %v4509
        %5402 = vmatprep.subr.bf16.mxu0 0
        %5403 = vmatpush1.bf16.msra.mxu0 %v4510
        %5404 = vmatprep.subr.bf16.mxu0 0
        %5405 = vmatpush1.bf16.msra.mxu0 %v4511
        %5406 = vmatprep.subr.bf16.mxu0 0
        %5407 = vmatpush1.bf16.msra.mxu0 %v4512
        %5408 = vmatprep.subr.bf16.mxu0 0
        %5409 = vmatpush1.bf16.msra.mxu0 %v4513
        %5410 = vmatprep.mubr.bf16.mxu0 %v1996
        %5411 = vmatmul.mubr.bf16.gmra.mrb[0].mxu0 %v1994
        %v5412 = vpop.f32.mrb[0].mxu0
        %v5413 = vadd.f32 %v5373, %v5412
        %v5414 = vpop.f32.mrb[0].mxu0
        %v5415 = vpop.f32.mrb[0].mxu0
        %v5416 = vpop.f32.mrb[0].mxu0
        %5417 = vdwg.mxu0
        %5418 = vmatprep.subr.bf16.mxu0 0
        %5419 = vmatpush1.bf16.msra.mxu0 %v4514
        %5420 = vmatprep.subr.bf16.mxu0 0
        %5421 = vmatpush1.bf16.msra.mxu0 %v4515
        %5422 = vmatprep.subr.bf16.mxu0 0
        %5423 = vmatpush1.bf16.msra.mxu0 %v4516
        %5424 = vmatprep.subr.bf16.mxu0 0
        %5425 = vmatpush1.bf16.msra.mxu0 %v4517
        %5426 = vmatprep.subr.bf16.mxu0 0
        %5427 = vmatpush1.bf16.msra.mxu0 %v4518
        %5428 = vmatprep.subr.bf16.mxu0 0
        %5429 = vmatpush1.bf16.msra.mxu0 %v4519
        %5430 = vmatprep.subr.bf16.mxu0 0
        %5431 = vmatpush1.bf16.msra.mxu0 %v4520
        %5432 = vmatprep.subr.bf16.mxu0 0
        %5433 = vmatpush1.bf16.msra.mxu0 %v4521
        %5434 = vmatprep.subr.bf16.mxu0 0
        %5435 = vmatpush1.bf16.msra.mxu0 %v4522
        %5436 = vmatprep.subr.bf16.mxu0 0
        %5437 = vmatpush1.bf16.msra.mxu0 %v4523
        %5438 = vmatprep.subr.bf16.mxu0 0
        %5439 = vmatpush1.bf16.msra.mxu0 %v4524
        %5440 = vmatprep.subr.bf16.mxu0 0
        %5441 = vmatpush1.bf16.msra.mxu0 %v4525
        %5442 = vmatprep.subr.bf16.mxu0 0
        %5443 = vmatpush1.bf16.msra.mxu0 %v4526
        %5444 = vmatprep.subr.bf16.mxu0 0
        %5445 = vmatpush1.bf16.msra.mxu0 %v4527
        %5446 = vmatprep.subr.bf16.mxu0 0
        %5447 = vmatpush1.bf16.msra.mxu0 %v4528
        %5448 = vmatprep.subr.bf16.mxu0 0
        %5449 = vmatpush1.bf16.msra.mxu0 %v4529
        %5450 = vmatprep.mubr.bf16.mxu0 %v2000
        %5451 = vmatmul.mubr.bf16.gmra.mrb[0].mxu0 %v1998
        %v5452 = vpop.f32.mrb[0].mxu0
        %v5453 = vadd.f32 %v5413, %v5452
        %v5454 = vpop.f32.mrb[0].mxu0
        %v5455 = vpop.f32.mrb[0].mxu0
        %v5456 = vpop.f32.mrb[0].mxu0
        %5457 = vdwg.mxu0
        %5458 = vmatprep.subr.bf16.mxu0 0
        %5459 = vmatpush1.bf16.msra.mxu0 %v4530
        %5460 = vmatprep.subr.bf16.mxu0 0
        %5461 = vmatpush1.bf16.msra.mxu0 %v4531
        %5462 = vmatprep.subr.bf16.mxu0 0
        %5463 = vmatpush1.bf16.msra.mxu0 %v4532
        %5464 = vmatprep.subr.bf16.mxu0 0
        %5465 = vmatpush1.bf16.msra.mxu0 %v4533
        %5466 = vmatprep.subr.bf16.mxu0 0
        %5467 = vmatpush1.bf16.msra.mxu0 %v4534
        %5468 = vmatprep.subr.bf16.mxu0 0
        %5469 = vmatpush1.bf16.msra.mxu0 %v4535
        %5470 = vmatprep.subr.bf16.mxu0 0
        %5471 = vmatpush1.bf16.msra.mxu0 %v4536
        %5472 = vmatprep.subr.bf16.mxu0 0
        %5473 = vmatpush1.bf16.msra.mxu0 %v4537
        %5474 = vmatprep.subr.bf16.mxu0 0
        %5475 = vmatpush1.bf16.msra.mxu0 %v4538
        %5476 = vmatprep.subr.bf16.mxu0 0
        %5477 = vmatpush1.bf16.msra.mxu0 %v4539
        %5478 = vmatprep.subr.bf16.mxu0 0
        %5479 = vmatpush1.bf16.msra.mxu0 %v4540
        %5480 = vmatprep.subr.bf16.mxu0 0
        %5481 = vmatpush1.bf16.msra.mxu0 %v4541
        %5482 = vmatprep.subr.bf16.mxu0 0
        %5483 = vmatpush1.bf16.msra.mxu0 %v4542
        %5484 = vmatprep.subr.bf16.mxu0 0
        %5485 = vmatpush1.bf16.msra.mxu0 %v4543
        %5486 = vmatprep.subr.bf16.mxu0 0
        %5487 = vmatpush1.bf16.msra.mxu0 %v4544
        %5488 = vmatprep.subr.bf16.mxu0 0
        %5489 = vmatpush1.bf16.msra.mxu0 %v4545
        %5490 = vmatprep.mubr.bf16.mxu0 %v2004
        %5491 = vmatmul.mubr.bf16.gmra.mrb[0].mxu0 %v2002
        %v5492 = vpop.f32.mrb[0].mxu0
        %v5493 = vadd.f32 %v5453, %v5492
        %v5494 = vpop.f32.mrb[0].mxu0
        %v5495 = vpop.f32.mrb[0].mxu0
        %v5496 = vpop.f32.mrb[0].mxu0
        %5497 = vdwg.mxu0
        %5498 = vmatprep.subr.bf16.mxu0 0
        %5499 = vmatpush1.bf16.msra.mxu0 %v4546
        %5500 = vmatprep.subr.bf16.mxu0 0
        %5501 = vmatpush1.bf16.msra.mxu0 %v4547
        %5502 = vmatprep.subr.bf16.mxu0 0
        %5503 = vmatpush1.bf16.msra.mxu0 %v4548
        %5504 = vmatprep.subr.bf16.mxu0 0
        %5505 = vmatpush1.bf16.msra.mxu0 %v4549
        %5506 = vmatprep.subr.bf16.mxu0 0
        %5507 = vmatpush1.bf16.msra.mxu0 %v4550
        %5508 = vmatprep.subr.bf16.mxu0 0
        %5509 = vmatpush1.bf16.msra.mxu0 %v4551
        %5510 = vmatprep.subr.bf16.mxu0 0
        %5511 = vmatpush1.bf16.msra.mxu0 %v4552
        %5512 = vmatprep.subr.bf16.mxu0 0
        %5513 = vmatpush1.bf16.msra.mxu0 %v4553
        %5514 = vmatprep.subr.bf16.mxu0 0
        %5515 = vmatpush1.bf16.msra.mxu0 %v4554
        %5516 = vmatprep.subr.bf16.mxu0 0
        %5517 = vmatpush1.bf16.msra.mxu0 %v4555
        %5518 = vmatprep.subr.bf16.mxu0 0
        %5519 = vmatpush1.bf16.msra.mxu0 %v4556
        %5520 = vmatprep.subr.bf16.mxu0 0
        %5521 = vmatpush1.bf16.msra.mxu0 %v4557
        %5522 = vmatprep.subr.bf16.mxu0 0
        %5523 = vmatpush1.bf16.msra.mxu0 %v4558
        %5524 = vmatprep.subr.bf16.mxu0 0
        %5525 = vmatpush1.bf16.msra.mxu0 %v4559
        %5526 = vmatprep.subr.bf16.mxu0 0
        %5527 = vmatpush1.bf16.msra.mxu0 %v4560
        %5528 = vmatprep.subr.bf16.mxu0 0
        %5529 = vmatpush1.bf16.msra.mxu0 %v4561
        %5530 = vmatprep.mubr.bf16.mxu0 %v2008
        %5531 = vmatmul.mubr.bf16.gmra.mrb[0].mxu0 %v2006
        %v5532 = vpop.f32.mrb[0].mxu0
        %v5533 = vadd.f32 %v5493, %v5532
        %v5534 = vpop.f32.mrb[0].mxu0
        %v5535 = vpop.f32.mrb[0].mxu0
        %v5536 = vpop.f32.mrb[0].mxu0
        %5537 = vdwg.mxu0
        %5538 = vmatprep.subr.bf16.mxu0 0
        %5539 = vmatpush1.bf16.msra.mxu0 %v4562
        %5540 = vmatprep.subr.bf16.mxu0 0
        %5541 = vmatpush1.bf16.msra.mxu0 %v4563
        %5542 = vmatprep.subr.bf16.mxu0 0
        %5543 = vmatpush1.bf16.msra.mxu0 %v4564
        %5544 = vmatprep.subr.bf16.mxu0 0
        %5545 = vmatpush1.bf16.msra.mxu0 %v4565
        %5546 = vmatprep.subr.bf16.mxu0 0
        %5547 = vmatpush1.bf16.msra.mxu0 %v4566
        %5548 = vmatprep.subr.bf16.mxu0 0
        %5549 = vmatpush1.bf16.msra.mxu0 %v4567
        %5550 = vmatprep.subr.bf16.mxu0 0
        %5551 = vmatpush1.bf16.msra.mxu0 %v4568
        %5552 = vmatprep.subr.bf16.mxu0 0
        %5553 = vmatpush1.bf16.msra.mxu0 %v4569
        %5554 = vmatprep.subr.bf16.mxu0 0
        %5555 = vmatpush1.bf16.msra.mxu0 %v4570
        %5556 = vmatprep.subr.bf16.mxu0 0
        %5557 = vmatpush1.bf16.msra.mxu0 %v4571
        %5558 = vmatprep.subr.bf16.mxu0 0
        %5559 = vmatpush1.bf16.msra.mxu0 %v4572
        %5560 = vmatprep.subr.bf16.mxu0 0
        %5561 = vmatpush1.bf16.msra.mxu0 %v4573
        %5562 = vmatprep.subr.bf16.mxu0 0
        %5563 = vmatpush1.bf16.msra.mxu0 %v4574
        %5564 = vmatprep.subr.bf16.mxu0 0
        %5565 = vmatpush1.bf16.msra.mxu0 %v4575
        %5566 = vmatprep.subr.bf16.mxu0 0
        %5567 = vmatpush1.bf16.msra.mxu0 %v4576
        %5568 = vmatprep.subr.bf16.mxu0 0
        %5569 = vmatpush1.bf16.msra.mxu0 %v4577
        %5570 = vmatprep.mubr.bf16.mxu0 %v2012
        %5571 = vmatmul.mubr.bf16.gmra.mrb[0].mxu0 %v2010
        %v5572 = vpop.f32.mrb[0].mxu0
        %v5573 = vadd.f32 %v5533, %v5572
        %v5574 = vpop.f32.mrb[0].mxu0
        %v5575 = vpop.f32.mrb[0].mxu0
        %v5576 = vpop.f32.mrb[0].mxu0
        %5577 = vdwg.mxu0
        %5578 = vmatprep.subr.bf16.mxu0 0
        %5579 = vmatpush1.bf16.msra.mxu0 %v4578
        %5580 = vmatprep.subr.bf16.mxu0 0
        %5581 = vmatpush1.bf16.msra.mxu0 %v4579
        %5582 = vmatprep.subr.bf16.mxu0 0
        %5583 = vmatpush1.bf16.msra.mxu0 %v4580
        %5584 = vmatprep.subr.bf16.mxu0 0
        %5585 = vmatpush1.bf16.msra.mxu0 %v4581
        %5586 = vmatprep.subr.bf16.mxu0 0
        %5587 = vmatpush1.bf16.msra.mxu0 %v4582
        %5588 = vmatprep.subr.bf16.mxu0 0
        %5589 = vmatpush1.bf16.msra.mxu0 %v4583
        %5590 = vmatprep.subr.bf16.mxu0 0
        %5591 = vmatpush1.bf16.msra.mxu0 %v4584
        %5592 = vmatprep.subr.bf16.mxu0 0
        %5593 = vmatpush1.bf16.msra.mxu0 %v4585
        %5594 = vmatprep.subr.bf16.mxu0 0
        %5595 = vmatpush1.bf16.msra.mxu0 %v4586
        %5596 = vmatprep.subr.bf16.mxu0 0
        %5597 = vmatpush1.bf16.msra.mxu0 %v4587
        %5598 = vmatprep.subr.bf16.mxu0 0
        %5599 = vmatpush1.bf16.msra.mxu0 %v4588
        %5600 = vmatprep.subr.bf16.mxu0 0
        %5601 = vmatpush1.bf16.msra.mxu0 %v4589
        %5602 = vmatprep.subr.bf16.mxu0 0
        %5603 = vmatpush1.bf16.msra.mxu0 %v4590
        %5604 = vmatprep.subr.bf16.mxu0 0
        %5605 = vmatpush1.bf16.msra.mxu0 %v4591
        %5606 = vmatprep.subr.bf16.mxu0 0
        %5607 = vmatpush1.bf16.msra.mxu0 %v4592
        %5608 = vmatprep.subr.bf16.mxu0 0
        %5609 = vmatpush1.bf16.msra.mxu0 %v4593
        %5610 = vmatprep.mubr.bf16.mxu0 %v2016
        %5611 = vmatmul.mubr.bf16.gmra.mrb[0].mxu0 %v2014
        %v5612 = vpop.f32.mrb[0].mxu0
        %v5613 = vadd.f32 %v5573, %v5612
        %v5614 = vpop.f32.mrb[0].mxu0
        %v5615 = vpop.f32.mrb[0].mxu0
        %v5616 = vpop.f32.mrb[0].mxu0
        %5617 = vdwg.mxu0
        %5618 = vmatprep.subr.bf16.mxu0 0
        %5619 = vmatpush1.bf16.msra.mxu0 %v4594
        %5620 = vmatprep.subr.bf16.mxu0 0
        %5621 = vmatpush1.bf16.msra.mxu0 %v4595
        %5622 = vmatprep.subr.bf16.mxu0 0
        %5623 = vmatpush1.bf16.msra.mxu0 %v4596
        %5624 = vmatprep.subr.bf16.mxu0 0
        %5625 = vmatpush1.bf16.msra.mxu0 %v4597
        %5626 = vmatprep.subr.bf16.mxu0 0
        %5627 = vmatpush1.bf16.msra.mxu0 %v4598
        %5628 = vmatprep.subr.bf16.mxu0 0
        %5629 = vmatpush1.bf16.msra.mxu0 %v4599
        %5630 = vmatprep.subr.bf16.mxu0 0
        %5631 = vmatpush1.bf16.msra.mxu0 %v4600
        %5632 = vmatprep.subr.bf16.mxu0 0
        %5633 = vmatpush1.bf16.msra.mxu0 %v4601
        %5634 = vmatprep.subr.bf16.mxu0 0
        %5635 = vmatpush1.bf16.msra.mxu0 %v4602
        %5636 = vmatprep.subr.bf16.mxu0 0
        %5637 = vmatpush1.bf16.msra.mxu0 %v4603
        %5638 = vmatprep.subr.bf16.mxu0 0
        %5639 = vmatpush1.bf16.msra.mxu0 %v4604
        %5640 = vmatprep.subr.bf16.mxu0 0
        %5641 = vmatpush1.bf16.msra.mxu0 %v4605
        %5642 = vmatprep.subr.bf16.mxu0 0
        %5643 = vmatpush1.bf16.msra.mxu0 %v4606
        %5644 = vmatprep.subr.bf16.mxu0 0
        %5645 = vmatpush1.bf16.msra.mxu0 %v4607
        %5646 = vmatprep.subr.bf16.mxu0 0
        %5647 = vmatpush1.bf16.msra.mxu0 %v4608
        %5648 = vmatprep.subr.bf16.mxu0 0
        %5649 = vmatpush1.bf16.msra.mxu0 %v4609
        %5650 = vmatprep.mubr.bf16.mxu0 %v2020
        %5651 = vmatmul.mubr.bf16.gmra.mrb[0].mxu0 %v2018
        %v5652 = vpop.f32.mrb[0].mxu0
        %v5653 = vadd.f32 %v5613, %v5652
        %v5654 = vpop.f32.mrb[0].mxu0
        %v5655 = vpop.f32.mrb[0].mxu0
        %v5656 = vpop.f32.mrb[0].mxu0
        %5657 = vdwg.mxu0
        %5658 = vmatprep.subr.bf16.mxu0 0
        %5659 = vmatpush1.bf16.msra.mxu0 %v4610
        %5660 = vmatprep.subr.bf16.mxu0 0
        %5661 = vmatpush1.bf16.msra.mxu0 %v4611
        %5662 = vmatprep.subr.bf16.mxu0 0
        %5663 = vmatpush1.bf16.msra.mxu0 %v4612
        %5664 = vmatprep.subr.bf16.mxu0 0
        %5665 = vmatpush1.bf16.msra.mxu0 %v4613
        %5666 = vmatprep.subr.bf16.mxu0 0
        %5667 = vmatpush1.bf16.msra.mxu0 %v4614
        %5668 = vmatprep.subr.bf16.mxu0 0
        %5669 = vmatpush1.bf16.msra.mxu0 %v4615
        %5670 = vmatprep.subr.bf16.mxu0 0
        %5671 = vmatpush1.bf16.msra.mxu0 %v4616
        %5672 = vmatprep.subr.bf16.mxu0 0
        %5673 = vmatpush1.bf16.msra.mxu0 %v4617
        %5674 = vmatprep.subr.bf16.mxu0 0
        %5675 = vmatpush1.bf16.msra.mxu0 %v4618
        %5676 = vmatprep.subr.bf16.mxu0 0
        %5677 = vmatpush1.bf16.msra.mxu0 %v4619
        %5678 = vmatprep.subr.bf16.mxu0 0
        %5679 = vmatpush1.bf16.msra.mxu0 %v4620
        %5680 = vmatprep.subr.bf16.mxu0 0
        %5681 = vmatpush1.bf16.msra.mxu0 %v4621
        %5682 = vmatprep.subr.bf16.mxu0 0
        %5683 = vmatpush1.bf16.msra.mxu0 %v4622
        %5684 = vmatprep.subr.bf16.mxu0 0
        %5685 = vmatpush1.bf16.msra.mxu0 %v4623
        %5686 = vmatprep.subr.bf16.mxu0 0
        %5687 = vmatpush1.bf16.msra.mxu0 %v4624
        %5688 = vmatprep.subr.bf16.mxu0 0
        %5689 = vmatpush1.bf16.msra.mxu0 %v4625
        %5690 = vmatprep.mubr.bf16.mxu0 %v2024
        %5691 = vmatmul.mubr.bf16.gmra.mrb[0].mxu0 %v2022
        %v5692 = vpop.f32.mrb[0].mxu0
        %v5693 = vadd.f32 %v5653, %v5692
        %v5694 = vpop.f32.mrb[0].mxu0
        %v5695 = vpop.f32.mrb[0].mxu0
        %v5696 = vpop.f32.mrb[0].mxu0
        %5697 = vdwg.mxu0
        %5698 = vmatprep.subr.bf16.mxu0 0
        %5699 = vmatpush1.bf16.msra.mxu0 %v4626
        %5700 = vmatprep.subr.bf16.mxu0 0
        %5701 = vmatpush1.bf16.msra.mxu0 %v4627
        %5702 = vmatprep.subr.bf16.mxu0 0
        %5703 = vmatpush1.bf16.msra.mxu0 %v4628
        %5704 = vmatprep.subr.bf16.mxu0 0
        %5705 = vmatpush1.bf16.msra.mxu0 %v4629
        %5706 = vmatprep.subr.bf16.mxu0 0
        %5707 = vmatpush1.bf16.msra.mxu0 %v4630
        %5708 = vmatprep.subr.bf16.mxu0 0
        %5709 = vmatpush1.bf16.msra.mxu0 %v4631
        %5710 = vmatprep.subr.bf16.mxu0 0
        %5711 = vmatpush1.bf16.msra.mxu0 %v4632
        %5712 = vmatprep.subr.bf16.mxu0 0
        %5713 = vmatpush1.bf16.msra.mxu0 %v4633
        %5714 = vmatprep.subr.bf16.mxu0 0
        %5715 = vmatpush1.bf16.msra.mxu0 %v4634
        %5716 = vmatprep.subr.bf16.mxu0 0
        %5717 = vmatpush1.bf16.msra.mxu0 %v4635
        %5718 = vmatprep.subr.bf16.mxu0 0
        %5719 = vmatpush1.bf16.msra.mxu0 %v4636
        %5720 = vmatprep.subr.bf16.mxu0 0
        %5721 = vmatpush1.bf16.msra.mxu0 %v4637
        %5722 = vmatprep.subr.bf16.mxu0 0
        %5723 = vmatpush1.bf16.msra.mxu0 %v4638
        %5724 = vmatprep.subr.bf16.mxu0 0
        %5725 = vmatpush1.bf16.msra.mxu0 %v4639
        %5726 = vmatprep.subr.bf16.mxu0 0
        %5727 = vmatpush1.bf16.msra.mxu0 %v4640
        %5728 = vmatprep.subr.bf16.mxu0 0
        %5729 = vmatpush1.bf16.msra.mxu0 %v4641
        %5730 = vmatprep.mubr.bf16.mxu0 %v2028
        %5731 = vmatmul.mubr.bf16.gmra.mrb[0].mxu0 %v2026
        %v5732 = vpop.f32.mrb[0].mxu0
        %v5733 = vadd.f32 %v5693, %v5732
        %v5734 = vpop.f32.mrb[0].mxu0
        %v5735 = vpop.f32.mrb[0].mxu0
        %v5736 = vpop.f32.mrb[0].mxu0
        %5737 = vdwg.mxu0
        %5738 = vmatprep.subr.bf16.mxu0 0
        %5739 = vmatpush1.bf16.msra.mxu0 %v4642
        %5740 = vmatprep.subr.bf16.mxu0 0
        %5741 = vmatpush1.bf16.msra.mxu0 %v4643
        %5742 = vmatprep.subr.bf16.mxu0 0
        %5743 = vmatpush1.bf16.msra.mxu0 %v4644
        %5744 = vmatprep.subr.bf16.mxu0 0
        %5745 = vmatpush1.bf16.msra.mxu0 %v4645
        %5746 = vmatprep.subr.bf16.mxu0 0
        %5747 = vmatpush1.bf16.msra.mxu0 %v4646
        %5748 = vmatprep.subr.bf16.mxu0 0
        %5749 = vmatpush1.bf16.msra.mxu0 %v4647
        %5750 = vmatprep.subr.bf16.mxu0 0
        %5751 = vmatpush1.bf16.msra.mxu0 %v4648
        %5752 = vmatprep.subr.bf16.mxu0 0
        %5753 = vmatpush1.bf16.msra.mxu0 %v4649
        %5754 = vmatprep.subr.bf16.mxu0 0
        %5755 = vmatpush1.bf16.msra.mxu0 %v4650
        %5756 = vmatprep.subr.bf16.mxu0 0
        %5757 = vmatpush1.bf16.msra.mxu0 %v4651
        %5758 = vmatprep.subr.bf16.mxu0 0
        %5759 = vmatpush1.bf16.msra.mxu0 %v4652
        %5760 = vmatprep.subr.bf16.mxu0 0
        %5761 = vmatpush1.bf16.msra.mxu0 %v4653
        %5762 = vmatprep.subr.bf16.mxu0 0
        %5763 = vmatpush1.bf16.msra.mxu0 %v4654
        %5764 = vmatprep.subr.bf16.mxu0 0
        %5765 = vmatpush1.bf16.msra.mxu0 %v4655
        %5766 = vmatprep.subr.bf16.mxu0 0
        %5767 = vmatpush1.bf16.msra.mxu0 %v4656
        %5768 = vmatprep.subr.bf16.mxu0 0
        %5769 = vmatpush1.bf16.msra.mxu0 %v4657
        %5770 = vmatprep.mubr.bf16.mxu0 %v2032
        %5771 = vmatmul.mubr.bf16.gmra.mrb[0].mxu0 %v2030
        %v5772 = vpop.f32.mrb[0].mxu0
        %v5773 = vadd.f32 %v5733, %v5772
        %v5774 = vpop.f32.mrb[0].mxu0
        %v5775 = vpop.f32.mrb[0].mxu0
        %v5776 = vpop.f32.mrb[0].mxu0
        %5777 = vdwg.mxu0
        %5778 = vmatprep.subr.bf16.mxu0 0
        %5779 = vmatpush1.bf16.msra.mxu0 %v4658
        %5780 = vmatprep.subr.bf16.mxu0 0
        %5781 = vmatpush1.bf16.msra.mxu0 %v4659
        %5782 = vmatprep.subr.bf16.mxu0 0
        %5783 = vmatpush1.bf16.msra.mxu0 %v4660
        %5784 = vmatprep.subr.bf16.mxu0 0
        %5785 = vmatpush1.bf16.msra.mxu0 %v4661
        %5786 = vmatprep.subr.bf16.mxu0 0
        %5787 = vmatpush1.bf16.msra.mxu0 %v4662
        %5788 = vmatprep.subr.bf16.mxu0 0
        %5789 = vmatpush1.bf16.msra.mxu0 %v4663
        %5790 = vmatprep.subr.bf16.mxu0 0
        %5791 = vmatpush1.bf16.msra.mxu0 %v4664
        %5792 = vmatprep.subr.bf16.mxu0 0
        %5793 = vmatpush1.bf16.msra.mxu0 %v4665
        %5794 = vmatprep.subr.bf16.mxu0 0
        %5795 = vmatpush1.bf16.msra.mxu0 %v4666
        %5796 = vmatprep.subr.bf16.mxu0 0
        %5797 = vmatpush1.bf16.msra.mxu0 %v4667
        %5798 = vmatprep.subr.bf16.mxu0 0
        %5799 = vmatpush1.bf16.msra.mxu0 %v4668
        %5800 = vmatprep.subr.bf16.mxu0 0
        %5801 = vmatpush1.bf16.msra.mxu0 %v4669
        %5802 = vmatprep.subr.bf16.mxu0 0
        %5803 = vmatpush1.bf16.msra.mxu0 %v4670
        %5804 = vmatprep.subr.bf16.mxu0 0
        %5805 = vmatpush1.bf16.msra.mxu0 %v4671
        %5806 = vmatprep.subr.bf16.mxu0 0
        %5807 = vmatpush1.bf16.msra.mxu0 %v4672
        %5808 = vmatprep.subr.bf16.mxu0 0
        %5809 = vmatpush1.bf16.msra.mxu0 %v4673
        %5810 = vmatprep.mubr.bf16.mxu0 %v2036
        %5811 = vmatmul.mubr.bf16.gmra.mrb[0].mxu0 %v2034
        %v5812 = vpop.f32.mrb[0].mxu0
        %v5813 = vadd.f32 %v5773, %v5812
        %v5814 = vpop.f32.mrb[0].mxu0
        %v5815 = vpop.f32.mrb[0].mxu0
        %v5816 = vpop.f32.mrb[0].mxu0
        %5817 = vdwg.mxu0
        %5818 = vmatprep.subr.bf16.mxu0 0
        %5819 = vmatpush1.bf16.msra.mxu0 %v4674
        %5820 = vmatprep.subr.bf16.mxu0 0
        %5821 = vmatpush1.bf16.msra.mxu0 %v4675
        %5822 = vmatprep.subr.bf16.mxu0 0
        %5823 = vmatpush1.bf16.msra.mxu0 %v4676
        %5824 = vmatprep.subr.bf16.mxu0 0
        %5825 = vmatpush1.bf16.msra.mxu0 %v4677
        %5826 = vmatprep.subr.bf16.mxu0 0
        %5827 = vmatpush1.bf16.msra.mxu0 %v4678
        %5828 = vmatprep.subr.bf16.mxu0 0
        %5829 = vmatpush1.bf16.msra.mxu0 %v4679
        %5830 = vmatprep.subr.bf16.mxu0 0
        %5831 = vmatpush1.bf16.msra.mxu0 %v4680
        %5832 = vmatprep.subr.bf16.mxu0 0
        %5833 = vmatpush1.bf16.msra.mxu0 %v4681
        %5834 = vmatprep.subr.bf16.mxu0 0
        %5835 = vmatpush1.bf16.msra.mxu0 %v4682
        %5836 = vmatprep.subr.bf16.mxu0 0
        %5837 = vmatpush1.bf16.msra.mxu0 %v4683
        %5838 = vmatprep.subr.bf16.mxu0 0
        %5839 = vmatpush1.bf16.msra.mxu0 %v4684
        %5840 = vmatprep.subr.bf16.mxu0 0
        %5841 = vmatpush1.bf16.msra.mxu0 %v4685
        %5842 = vmatprep.subr.bf16.mxu0 0
        %5843 = vmatpush1.bf16.msra.mxu0 %v4686
        %5844 = vmatprep.subr.bf16.mxu0 0
        %5845 = vmatpush1.bf16.msra.mxu0 %v4687
        %5846 = vmatprep.subr.bf16.mxu0 0
        %5847 = vmatpush1.bf16.msra.mxu0 %v4688
        %5848 = vmatprep.subr.bf16.mxu0 0
        %5849 = vmatpush1.bf16.msra.mxu0 %v4689
        %5850 = vmatprep.mubr.bf16.mxu0 %v2040
        %5851 = vmatmul.mubr.bf16.gmra.mrb[0].mxu0 %v2038
        %v5852 = vpop.f32.mrb[0].mxu0
        %v5853 = vadd.f32 %v5813, %v5852
        %v5854 = vpop.f32.mrb[0].mxu0
        %v5855 = vpop.f32.mrb[0].mxu0
        %v5856 = vpop.f32.mrb[0].mxu0
        %5857 = vdwg.mxu0
        %5858 = vmatprep.subr.bf16.mxu0 0
        %5859 = vmatpush1.bf16.msra.mxu0 %v4690
        %5860 = vmatprep.subr.bf16.mxu0 0
        %5861 = vmatpush1.bf16.msra.mxu0 %v4691
        %5862 = vmatprep.subr.bf16.mxu0 0
        %5863 = vmatpush1.bf16.msra.mxu0 %v4692
        %5864 = vmatprep.subr.bf16.mxu0 0
        %5865 = vmatpush1.bf16.msra.mxu0 %v4693
        %5866 = vmatprep.subr.bf16.mxu0 0
        %5867 = vmatpush1.bf16.msra.mxu0 %v4694
        %5868 = vmatprep.subr.bf16.mxu0 0
        %5869 = vmatpush1.bf16.msra.mxu0 %v4695
        %5870 = vmatprep.subr.bf16.mxu0 0
        %5871 = vmatpush1.bf16.msra.mxu0 %v4696
        %5872 = vmatprep.subr.bf16.mxu0 0
        %5873 = vmatpush1.bf16.msra.mxu0 %v4697
        %5874 = vmatprep.subr.bf16.mxu0 0
        %5875 = vmatpush1.bf16.msra.mxu0 %v4698
        %5876 = vmatprep.subr.bf16.mxu0 0
        %5877 = vmatpush1.bf16.msra.mxu0 %v4699
        %5878 = vmatprep.subr.bf16.mxu0 0
        %5879 = vmatpush1.bf16.msra.mxu0 %v4700
        %5880 = vmatprep.subr.bf16.mxu0 0
        %5881 = vmatpush1.bf16.msra.mxu0 %v4701
        %5882 = vmatprep.subr.bf16.mxu0 0
        %5883 = vmatpush1.bf16.msra.mxu0 %v4702
        %5884 = vmatprep.subr.bf16.mxu0 0
        %5885 = vmatpush1.bf16.msra.mxu0 %v4703
        %5886 = vmatprep.subr.bf16.mxu0 0
        %5887 = vmatpush1.bf16.msra.mxu0 %v4704
        %5888 = vmatprep.subr.bf16.mxu0 0
        %5889 = vmatpush1.bf16.msra.mxu0 %v4705
        %5890 = vmatprep.mubr.bf16.mxu0 %v2044
        %5891 = vmatmul.mubr.bf16.gmra.mrb[0].mxu0 %v2042
        %v5892 = vpop.f32.mrb[0].mxu0
        %v5893 = vadd.f32 %v5853, %v5892
        %v5894 = vpop.f32.mrb[0].mxu0
        %v5895 = vpop.f32.mrb[0].mxu0
        %v5896 = vpop.f32.mrb[0].mxu0
        %5897 = vdwg.mxu0
        %5898 = vmatprep.subr.bf16.mxu0 0
        %5899 = vmatpush1.bf16.msra.mxu0 %v4706
        %5900 = vmatprep.subr.bf16.mxu0 0
        %5901 = vmatpush1.bf16.msra.mxu0 %v4707
        %5902 = vmatprep.subr.bf16.mxu0 0
        %5903 = vmatpush1.bf16.msra.mxu0 %v4708
        %5904 = vmatprep.subr.bf16.mxu0 0
        %5905 = vmatpush1.bf16.msra.mxu0 %v4709
        %5906 = vmatprep.subr.bf16.mxu0 0
        %5907 = vmatpush1.bf16.msra.mxu0 %v4710
        %5908 = vmatprep.subr.bf16.mxu0 0
        %5909 = vmatpush1.bf16.msra.mxu0 %v4711
        %5910 = vmatprep.subr.bf16.mxu0 0
        %5911 = vmatpush1.bf16.msra.mxu0 %v4712
        %5912 = vmatprep.subr.bf16.mxu0 0
        %5913 = vmatpush1.bf16.msra.mxu0 %v4713
        %5914 = vmatprep.subr.bf16.mxu0 0
        %5915 = vmatpush1.bf16.msra.mxu0 %v4714
        %5916 = vmatprep.subr.bf16.mxu0 0
        %5917 = vmatpush1.bf16.msra.mxu0 %v4715
        %5918 = vmatprep.subr.bf16.mxu0 0
        %5919 = vmatpush1.bf16.msra.mxu0 %v4716
        %5920 = vmatprep.subr.bf16.mxu0 0
        %5921 = vmatpush1.bf16.msra.mxu0 %v4717
        %5922 = vmatprep.subr.bf16.mxu0 0
        %5923 = vmatpush1.bf16.msra.mxu0 %v4718
        %5924 = vmatprep.subr.bf16.mxu0 0
        %5925 = vmatpush1.bf16.msra.mxu0 %v4719
        %5926 = vmatprep.subr.bf16.mxu0 0
        %5927 = vmatpush1.bf16.msra.mxu0 %v4720
        %5928 = vmatprep.subr.bf16.mxu0 0
        %5929 = vmatpush1.bf16.msra.mxu0 %v4721
        %5930 = vmatprep.mubr.bf16.mxu0 %v2048
        %5931 = vmatmul.mubr.bf16.gmra.mrb[0].mxu0 %v2046
        %v5932 = vpop.f32.mrb[0].mxu0
        %v5933 = vadd.f32 %v5893, %v5932
        %v5934 = vpop.f32.mrb[0].mxu0
        %v5935 = vpop.f32.mrb[0].mxu0
        %v5936 = vpop.f32.mrb[0].mxu0
        %5937 = vdwg.mxu0
        %5938 = vmatprep.subr.bf16.mxu0 0
        %5939 = vmatpush1.bf16.msra.mxu0 %v4722
        %5940 = vmatprep.subr.bf16.mxu0 0
        %5941 = vmatpush1.bf16.msra.mxu0 %v4723
        %5942 = vmatprep.subr.bf16.mxu0 0
        %5943 = vmatpush1.bf16.msra.mxu0 %v4724
        %5944 = vmatprep.subr.bf16.mxu0 0
        %5945 = vmatpush1.bf16.msra.mxu0 %v4725
        %5946 = vmatprep.subr.bf16.mxu0 0
        %5947 = vmatpush1.bf16.msra.mxu0 %v4726
        %5948 = vmatprep.subr.bf16.mxu0 0
        %5949 = vmatpush1.bf16.msra.mxu0 %v4727
        %5950 = vmatprep.subr.bf16.mxu0 0
        %5951 = vmatpush1.bf16.msra.mxu0 %v4728
        %5952 = vmatprep.subr.bf16.mxu0 0
        %5953 = vmatpush1.bf16.msra.mxu0 %v4729
        %5954 = vmatprep.subr.bf16.mxu0 0
        %5955 = vmatpush1.bf16.msra.mxu0 %v4730
        %5956 = vmatprep.subr.bf16.mxu0 0
        %5957 = vmatpush1.bf16.msra.mxu0 %v4731
        %5958 = vmatprep.subr.bf16.mxu0 0
        %5959 = vmatpush1.bf16.msra.mxu0 %v4732
        %5960 = vmatprep.subr.bf16.mxu0 0
        %5961 = vmatpush1.bf16.msra.mxu0 %v4733
        %5962 = vmatprep.subr.bf16.mxu0 0
        %5963 = vmatpush1.bf16.msra.mxu0 %v4734
        %5964 = vmatprep.subr.bf16.mxu0 0
        %5965 = vmatpush1.bf16.msra.mxu0 %v4735
        %5966 = vmatprep.subr.bf16.mxu0 0
        %5967 = vmatpush1.bf16.msra.mxu0 %v4736
        %5968 = vmatprep.subr.bf16.mxu0 0
        %5969 = vmatpush1.bf16.msra.mxu0 %v4737
        %5970 = vmatprep.mubr.bf16.mxu0 %v2052
        %5971 = vmatmul.mubr.bf16.gmra.mrb[0].mxu0 %v2050
        %v5972 = vpop.f32.mrb[0].mxu0
        %v5973 = vadd.f32 %v5933, %v5972
        %v5974 = vpop.f32.mrb[0].mxu0
        %v5975 = vpop.f32.mrb[0].mxu0
        %v5976 = vpop.f32.mrb[0].mxu0
        %5977 = vdwg.mxu0
        %5978 = vmatprep.subr.bf16.mxu0 0
        %5979 = vmatpush1.bf16.msra.mxu0 %v4738
        %5980 = vmatprep.subr.bf16.mxu0 0
        %5981 = vmatpush1.bf16.msra.mxu0 %v4739
        %5982 = vmatprep.subr.bf16.mxu0 0
        %5983 = vmatpush1.bf16.msra.mxu0 %v4740
        %5984 = vmatprep.subr.bf16.mxu0 0
        %5985 = vmatpush1.bf16.msra.mxu0 %v4741
        %5986 = vmatprep.subr.bf16.mxu0 0
        %5987 = vmatpush1.bf16.msra.mxu0 %v4742
        %5988 = vmatprep.subr.bf16.mxu0 0
        %5989 = vmatpush1.bf16.msra.mxu0 %v4743
        %5990 = vmatprep.subr.bf16.mxu0 0
        %5991 = vmatpush1.bf16.msra.mxu0 %v4744
        %5992 = vmatprep.subr.bf16.mxu0 0
        %5993 = vmatpush1.bf16.msra.mxu0 %v4745
        %5994 = vmatprep.subr.bf16.mxu0 0
        %5995 = vmatpush1.bf16.msra.mxu0 %v4746
        %5996 = vmatprep.subr.bf16.mxu0 0
        %5997 = vmatpush1.bf16.msra.mxu0 %v4747
        %5998 = vmatprep.subr.bf16.mxu0 0
        %5999 = vmatpush1.bf16.msra.mxu0 %v4748
        %6000 = vmatprep.subr.bf16.mxu0 0
        %6001 = vmatpush1.bf16.msra.mxu0 %v4749
        %6002 = vmatprep.subr.bf16.mxu0 0
        %6003 = vmatpush1.bf16.msra.mxu0 %v4750
        %6004 = vmatprep.subr.bf16.mxu0 0
        %6005 = vmatpush1.bf16.msra.mxu0 %v4751
        %6006 = vmatprep.subr.bf16.mxu0 0
        %6007 = vmatpush1.bf16.msra.mxu0 %v4752
        %6008 = vmatprep.subr.bf16.mxu0 0
        %6009 = vmatpush1.bf16.msra.mxu0 %v4753
        %6010 = vmatprep.mubr.bf16.mxu0 %v2056
        %6011 = vmatmul.mubr.bf16.gmra.mrb[0].mxu0 %v2054
        %v6012 = vpop.f32.mrb[0].mxu0
        %v6013 = vadd.f32 %v5973, %v6012
        %v6014 = vpop.f32.mrb[0].mxu0
        %v6015 = vpop.f32.mrb[0].mxu0
        %v6016 = vpop.f32.mrb[0].mxu0
        %6017 = vdwg.mxu0
        %6018 = vmatprep.subr.bf16.mxu0 0
        %6019 = vmatpush1.bf16.msra.mxu0 %v4754
        %6020 = vmatprep.subr.bf16.mxu0 0
        %6021 = vmatpush1.bf16.msra.mxu0 %v4755
        %6022 = vmatprep.subr.bf16.mxu0 0
        %6023 = vmatpush1.bf16.msra.mxu0 %v4756
        %6024 = vmatprep.subr.bf16.mxu0 0
        %6025 = vmatpush1.bf16.msra.mxu0 %v4757
        %6026 = vmatprep.subr.bf16.mxu0 0
        %6027 = vmatpush1.bf16.msra.mxu0 %v4758
        %6028 = vmatprep.subr.bf16.mxu0 0
        %6029 = vmatpush1.bf16.msra.mxu0 %v4759
        %6030 = vmatprep.subr.bf16.mxu0 0
        %6031 = vmatpush1.bf16.msra.mxu0 %v4760
        %6032 = vmatprep.subr.bf16.mxu0 0
        %6033 = vmatpush1.bf16.msra.mxu0 %v4761
        %6034 = vmatprep.subr.bf16.mxu0 0
        %6035 = vmatpush1.bf16.msra.mxu0 %v4762
        %6036 = vmatprep.subr.bf16.mxu0 0
        %6037 = vmatpush1.bf16.msra.mxu0 %v4763
        %6038 = vmatprep.subr.bf16.mxu0 0
        %6039 = vmatpush1.bf16.msra.mxu0 %v4764
        %6040 = vmatprep.subr.bf16.mxu0 0
        %6041 = vmatpush1.bf16.msra.mxu0 %v4765
        %6042 = vmatprep.subr.bf16.mxu0 0
        %6043 = vmatpush1.bf16.msra.mxu0 %v4766
        %6044 = vmatprep.subr.bf16.mxu0 0
        %6045 = vmatpush1.bf16.msra.mxu0 %v4767
        %6046 = vmatprep.subr.bf16.mxu0 0
        %6047 = vmatpush1.bf16.msra.mxu0 %v4768
        %6048 = vmatprep.subr.bf16.mxu0 0
        %6049 = vmatpush1.bf16.msra.mxu0 %v4769
        %6050 = vmatprep.mubr.bf16.mxu0 %v2060
        %6051 = vmatmul.mubr.bf16.gmra.mrb[0].mxu0 %v2058
        %v6052 = vpop.f32.mrb[0].mxu0
        %v6053 = vadd.f32 %v6013, %v6052
        %v6054 = vpop.f32.mrb[0].mxu0
        %v6055 = vpop.f32.mrb[0].mxu0
        %v6056 = vpop.f32.mrb[0].mxu0
        %6057 = vdwg.mxu0
        %6058 = vmatprep.subr.bf16.mxu0 0
        %6059 = vmatpush1.bf16.msra.mxu0 %v4770
        %6060 = vmatprep.subr.bf16.mxu0 0
        %6061 = vmatpush1.bf16.msra.mxu0 %v4771
        %6062 = vmatprep.subr.bf16.mxu0 0
        %6063 = vmatpush1.bf16.msra.mxu0 %v4772
        %6064 = vmatprep.subr.bf16.mxu0 0
        %6065 = vmatpush1.bf16.msra.mxu0 %v4773
        %6066 = vmatprep.subr.bf16.mxu0 0
        %6067 = vmatpush1.bf16.msra.mxu0 %v4774
        %6068 = vmatprep.subr.bf16.mxu0 0
        %6069 = vmatpush1.bf16.msra.mxu0 %v4775
        %6070 = vmatprep.subr.bf16.mxu0 0
        %6071 = vmatpush1.bf16.msra.mxu0 %v4776
        %6072 = vmatprep.subr.bf16.mxu0 0
        %6073 = vmatpush1.bf16.msra.mxu0 %v4777
        %6074 = vmatprep.subr.bf16.mxu0 0
        %6075 = vmatpush1.bf16.msra.mxu0 %v4778
        %6076 = vmatprep.subr.bf16.mxu0 0
        %6077 = vmatpush1.bf16.msra.mxu0 %v4779
        %6078 = vmatprep.subr.bf16.mxu0 0
        %6079 = vmatpush1.bf16.msra.mxu0 %v4780
        %6080 = vmatprep.subr.bf16.mxu0 0
        %6081 = vmatpush1.bf16.msra.mxu0 %v4781
        %6082 = vmatprep.subr.bf16.mxu0 0
        %6083 = vmatpush1.bf16.msra.mxu0 %v4782
        %6084 = vmatprep.subr.bf16.mxu0 0
        %6085 = vmatpush1.bf16.msra.mxu0 %v4783
        %6086 = vmatprep.subr.bf16.mxu0 0
        %6087 = vmatpush1.bf16.msra.mxu0 %v4784
        %6088 = vmatprep.subr.bf16.mxu0 0
        %6089 = vmatpush1.bf16.msra.mxu0 %v4785
        %6090 = vmatprep.mubr.bf16.mxu0 %v2064
        %6091 = vmatmul.mubr.bf16.gmra.mrb[0].mxu0 %v2062
        %v6092 = vpop.f32.mrb[0].mxu0
        %v6093 = vadd.f32 %v6053, %v6092
        %v6094 = vpop.f32.mrb[0].mxu0
        %v6095 = vpop.f32.mrb[0].mxu0
        %v6096 = vpop.f32.mrb[0].mxu0
        %6097 = vdwg.mxu0
        %6098 = vmatprep.subr.bf16.mxu0 0
        %6099 = vmatpush1.bf16.msra.mxu0 %v4786
        %6100 = vmatprep.subr.bf16.mxu0 0
        %6101 = vmatpush1.bf16.msra.mxu0 %v4787
        %6102 = vmatprep.subr.bf16.mxu0 0
        %6103 = vmatpush1.bf16.msra.mxu0 %v4788
        %6104 = vmatprep.subr.bf16.mxu0 0
        %6105 = vmatpush1.bf16.msra.mxu0 %v4789
        %6106 = vmatprep.subr.bf16.mxu0 0
        %6107 = vmatpush1.bf16.msra.mxu0 %v4790
        %6108 = vmatprep.subr.bf16.mxu0 0
        %6109 = vmatpush1.bf16.msra.mxu0 %v4791
        %6110 = vmatprep.subr.bf16.mxu0 0
        %6111 = vmatpush1.bf16.msra.mxu0 %v4792
        %6112 = vmatprep.subr.bf16.mxu0 0
        %6113 = vmatpush1.bf16.msra.mxu0 %v4793
        %6114 = vmatprep.subr.bf16.mxu0 0
        %6115 = vmatpush1.bf16.msra.mxu0 %v4794
        %6116 = vmatprep.subr.bf16.mxu0 0
        %6117 = vmatpush1.bf16.msra.mxu0 %v4795
        %6118 = vmatprep.subr.bf16.mxu0 0
        %6119 = vmatpush1.bf16.msra.mxu0 %v4796
        %6120 = vmatprep.subr.bf16.mxu0 0
        %6121 = vmatpush1.bf16.msra.mxu0 %v4797
        %6122 = vmatprep.subr.bf16.mxu0 0
        %6123 = vmatpush1.bf16.msra.mxu0 %v4798
        %6124 = vmatprep.subr.bf16.mxu0 0
        %6125 = vmatpush1.bf16.msra.mxu0 %v4799
        %6126 = vmatprep.subr.bf16.mxu0 0
        %6127 = vmatpush1.bf16.msra.mxu0 %v4800
        %6128 = vmatprep.subr.bf16.mxu0 0
        %6129 = vmatpush1.bf16.msra.mxu0 %v4801
        %6130 = vmatprep.mubr.bf16.mxu0 %v2068
        %6131 = vmatmul.mubr.bf16.gmra.mrb[0].mxu0 %v2066
        %v6132 = vpop.f32.mrb[0].mxu0
        %v6133 = vadd.f32 %v6093, %v6132
        %v6134 = vpop.f32.mrb[0].mxu0
        %v6135 = vpop.f32.mrb[0].mxu0
        %v6136 = vpop.f32.mrb[0].mxu0
        %6137 = vdwg.mxu0
        %6138 = vmatprep.subr.bf16.mxu0 0
        %6139 = vmatpush1.bf16.msra.mxu0 %v4802
        %6140 = vmatprep.subr.bf16.mxu0 0
        %6141 = vmatpush1.bf16.msra.mxu0 %v4803
        %6142 = vmatprep.subr.bf16.mxu0 0
        %6143 = vmatpush1.bf16.msra.mxu0 %v4804
        %6144 = vmatprep.subr.bf16.mxu0 0
        %6145 = vmatpush1.bf16.msra.mxu0 %v4805
        %6146 = vmatprep.subr.bf16.mxu0 0
        %6147 = vmatpush1.bf16.msra.mxu0 %v4806
        %6148 = vmatprep.subr.bf16.mxu0 0
        %6149 = vmatpush1.bf16.msra.mxu0 %v4807
        %6150 = vmatprep.subr.bf16.mxu0 0
        %6151 = vmatpush1.bf16.msra.mxu0 %v4808
        %6152 = vmatprep.subr.bf16.mxu0 0
        %6153 = vmatpush1.bf16.msra.mxu0 %v4809
        %6154 = vmatprep.subr.bf16.mxu0 0
        %6155 = vmatpush1.bf16.msra.mxu0 %v4810
        %6156 = vmatprep.subr.bf16.mxu0 0
        %6157 = vmatpush1.bf16.msra.mxu0 %v4811
        %6158 = vmatprep.subr.bf16.mxu0 0
        %6159 = vmatpush1.bf16.msra.mxu0 %v4812
        %6160 = vmatprep.subr.bf16.mxu0 0
        %6161 = vmatpush1.bf16.msra.mxu0 %v4813
        %6162 = vmatprep.subr.bf16.mxu0 0
        %6163 = vmatpush1.bf16.msra.mxu0 %v4814
        %6164 = vmatprep.subr.bf16.mxu0 0
        %6165 = vmatpush1.bf16.msra.mxu0 %v4815
        %6166 = vmatprep.subr.bf16.mxu0 0
        %6167 = vmatpush1.bf16.msra.mxu0 %v4816
        %6168 = vmatprep.subr.bf16.mxu0 0
        %6169 = vmatpush1.bf16.msra.mxu0 %v4817
        %6170 = vmatprep.mubr.bf16.mxu0 %v2072
        %6171 = vmatmul.mubr.bf16.gmra.mrb[0].mxu0 %v2070
        %v6172 = vpop.f32.mrb[0].mxu0
        %v6173 = vadd.f32 %v6133, %v6172
        %v6174 = vpop.f32.mrb[0].mxu0
        %v6175 = vpop.f32.mrb[0].mxu0
        %v6176 = vpop.f32.mrb[0].mxu0
        %6177 = vdwg.mxu0
        %6178 = vmatprep.subr.bf16.mxu0 0
        %6179 = vmatpush1.bf16.msra.mxu0 %v4818
        %6180 = vmatprep.subr.bf16.mxu0 0
        %6181 = vmatpush1.bf16.msra.mxu0 %v4819
        %6182 = vmatprep.subr.bf16.mxu0 0
        %6183 = vmatpush1.bf16.msra.mxu0 %v4820
        %6184 = vmatprep.subr.bf16.mxu0 0
        %6185 = vmatpush1.bf16.msra.mxu0 %v4821
        %6186 = vmatprep.subr.bf16.mxu0 0
        %6187 = vmatpush1.bf16.msra.mxu0 %v4822
        %6188 = vmatprep.subr.bf16.mxu0 0
        %6189 = vmatpush1.bf16.msra.mxu0 %v4823
        %6190 = vmatprep.subr.bf16.mxu0 0
        %6191 = vmatpush1.bf16.msra.mxu0 %v4824
        %6192 = vmatprep.subr.bf16.mxu0 0
        %6193 = vmatpush1.bf16.msra.mxu0 %v4825
        %6194 = vmatprep.subr.bf16.mxu0 0
        %6195 = vmatpush1.bf16.msra.mxu0 0
        %6196 = vmatprep.subr.bf16.mxu0 0
        %6197 = vmatpush1.bf16.msra.mxu0 0
        %6198 = vmatprep.subr.bf16.mxu0 0
        %6199 = vmatpush1.bf16.msra.mxu0 0
        %6200 = vmatprep.subr.bf16.mxu0 0
        %6201 = vmatpush1.bf16.msra.mxu0 0
        %6202 = vmatprep.subr.bf16.mxu0 0
        %6203 = vmatpush1.bf16.msra.mxu0 0
        %6204 = vmatprep.subr.bf16.mxu0 0
        %6205 = vmatpush1.bf16.msra.mxu0 0
        %6206 = vmatprep.subr.bf16.mxu0 0
        %6207 = vmatpush1.bf16.msra.mxu0 0
        %6208 = vmatprep.subr.bf16.mxu0 0
        %6209 = vmatpush1.bf16.msra.mxu0 0
        %6210 = vmatprep.mubr.bf16.mxu0 0
        %6211 = vmatmul.mubr.bf16.gmra.mrb[0].mxu0 %v2074
        %v6212 = vpop.f32.mrb[0].mxu0
        %v6213 = vadd.f32 %v6173, %v6212
        %v6214 = vpop.f32.mrb[0].mxu0
        %v6215 = vpop.f32.mrb[0].mxu0
        %v6216 = vpop.f32.mrb[0].mxu0
        %6217 = vdwg.mxu0
        %6218 = vst [vmem:[%s6] sm:$0xff] %v6213
      $region52: #{cnn_forward.3} parent=39 // pred_fallthru
        _
      // Predicated region
      $region53: #{cnn_forward.3} parent=39 // pred_check
        %p6219 = pneg %p141
      $region54: #{cnn_forward.3} parent=39 // pred_check_branch
        %6221 = sbr.rel (%p6219) target = $region56
      $region55: #{cnn_forward.3} parent=39 // pred_region
        _
      $region56: #{cnn_forward.3} parent=39 // pred_fallthru
        _
      // Predicated region
      $region57: #{cnn_forward.3} parent=39 // pred_check
        %p6222 = pneg %p162
      $region58: #{cnn_forward.3} parent=39 // pred_check_branch
        %6224 = sbr.rel (%p6222) target = $region60
      $region59: #{cnn_forward.3} parent=39 // pred_region
        _
      $region60: #{cnn_forward.3} parent=39 // pred_fallthru
        _
      // Predicated region
      $region61: #{cnn_forward.3} parent=39 // pred_check
        %p6225 = pneg %p141
      $region62: #{cnn_forward.3} parent=39 // pred_check_branch
        %6227 = sbr.rel (%p6225) target = $region64
      $region63: #{cnn_forward.3} parent=39 // pred_region
        _
      $region64: #{cnn_forward.3} parent=39 // pred_fallthru
        _
      // Predicated region
      $region65: #{cnn_forward.3} parent=39 // pred_check
        %p6228 = pneg %p162
      $region66: #{cnn_forward.3} parent=39 // pred_check_branch
        %6230 = sbr.rel (%p6228) target = $region68
      $region67: #{cnn_forward.3} parent=39 // pred_region
        _
      $region68: #{cnn_forward.3} parent=39 // pred_fallthru
        _
    $region40: #{cnn_forward.3} parent=5 // pred_fallthru
      _
    %p6231 = scmp.le.s32.totalorder 2, %s13
    // Predicated region
    $region69: #{cnn_forward.3} parent=5 // pred_check
      %p6232 = pneg %p6231
    $region70: #{cnn_forward.3} parent=5 // pred_check_branch
      %6234 = sbr.rel (%p6232) target = $region72
    $region71: #{cnn_forward.3} parent=5 // pred_region
      %s6235 = ssub.s32 %s13, 2
    $region72: #{cnn_forward.3} parent=5 // pred_fallthru
      _
  $region6: #{cnn_forward.3} parent=0 // loop_footer
    %s17 = sadd.s32 1, %s13
  $region7: #{cnn_forward.3} parent=0 // loop_footer_branch
    %12 = sbr.rel target = $region3
  $region8: #{cnn_forward.3} parent=0 // loop_exit
    _

</llo_original>
